<compile_context>
chip_gen: v7x
topology: tpu7x:2x2x1
jax: 0.10.0
libtpu: 0.0.40
codegen_flags: <defaults>
</compile_context>

<pallas_src>
from functools import partial

import jax
import jax.numpy as jnp
from jax import lax
from jax.experimental import pallas as pl
from jax.experimental.pallas import tpu as pltpu

LANE = 128
VMEM_LIMIT_BYTES = 48 * 1024 * 1024   # headroom under v7x's 64 MiB physical VMEM


def conv_block_kernel(x_ref, w1_ref, t2_ref, w2_ref, t2b_ref, w3_ref, t3_ref,
                      out_ref, x2_ref):
    Nb, H, W, Cin = x_ref.shape
    Cmed_p = w1_ref.shape[1]
    Cout = w3_ref.shape[1]
    Cmed = x2_ref.shape[-1]
    mm_dtype = w1_ref.dtype
    M = Nb * H * W

    # ---- conv1 (1x1, no bias) + bn2 (folded into w1/t2) + ReLU -------------
    xf = x_ref[...].reshape(M, Cin).astype(mm_dtype)
    h = jnp.dot(xf, w1_ref[...], preferred_element_type=jnp.float32)
    h = jnp.maximum(h + t2_ref[...], 0.0)
    h4 = h.astype(mm_dtype).reshape(Nb, H, W, Cmed_p)

    # ---- conv2 (3x3, pad=1, groups=1) + bias + bn2 (folded) + ReLU ---------
    # Build one zero-halo copy of h4, then accumulate the 9 taps directly on
    # the MXU.  No 9x-wide im2col is ever materialized: each tap is a static
    # slice of the halo buffer feeding a single matmul.
    zrow = jnp.zeros((Nb, 1, W, Cmed_p), mm_dtype)
    hp = jnp.concatenate([zrow, h4, zrow], axis=1)               # (Nb, H+2, W, C)
    zcol = jnp.zeros((Nb, H + 2, 1, Cmed_p), mm_dtype)
    hp = jnp.concatenate([zcol, hp, zcol], axis=2)               # (Nb, H+2, W+2, C)

    acc = None
    for ky in range(3):                    # static unroll -> 9 MXU calls
        for kx in range(3):
            tap = hp[:, ky:ky + H, kx:kx + W, :].reshape(M, Cmed_p)
            part = jnp.dot(tap, w2_ref[ky * 3 + kx],
                           preferred_element_type=jnp.float32)
            acc = part if acc is None else acc + part

    # bn2 shift + conv2 bias were folded into t2b on the host
    x2 = jnp.maximum(acc + t2b_ref[...], 0.0)                    # (M, Cmed_p) f32
    x2_ref[...] = x2[:, :Cmed].reshape(Nb, H, W, Cmed).astype(x2_ref.dtype)

    # ---- conv3 (1x1, no bias) + bn3 (folded) + identity shortcut + ReLU ----
    y = jnp.dot(x2.astype(mm_dtype), w3_ref[...],
                preferred_element_type=jnp.float32)
    res = x_ref[...].reshape(M, Cin).astype(jnp.float32)   # re-read, not held live
    y = y + t3_ref[...] + res
    out_ref[...] = jnp.maximum(y, 0.0).reshape(Nb, H, W, Cout).astype(out_ref.dtype)


def _round_up(x, m):
    return ((x + m - 1) // m) * m


def _pad_last(a, target):
    p = target - a.shape[-1]
    if p == 0:
        return a
    return jnp.pad(a, [(0, 0)] * (a.ndim - 1) + [(0, p)])


def _pick_batch_block(N, H, W, Cin, Cout, Cmed, Cmed_p,
                      x_dtype, c_dtype, o_dtype, budget_bytes):
    """Largest divisor Nb of N whose per-grid-step VMEM estimate fits."""
    xb = jnp.dtype(x_dtype).itemsize
    cb = jnp.dtype(c_dtype).itemsize
    ob = jnp.dtype(o_dtype).itemsize

    def step_bytes(nb):
        px = nb * H * W
        pipelined = 2 * px * (Cin * xb + Cout * ob + Cmed * ob)   # dbl-buffered I/O
        halo = nb * (H + 2) * (W + 2) * Cmed_p * cb               # zero-halo copy
        work = px * (Cmed_p * (2 * cb + 8) + Cin * cb + Cout * 4)  # taps + f32 accs
        return pipelined + halo + work

    best = 1
    for nb in range(1, N + 1):
        if N % nb == 0 and step_bytes(nb) <= budget_bytes:
            best = nb
    return best


def _prepare_kernel_params(params, compute_dtype):
    """Fold BN scales + conv2 bias into the weights/shifts and pad the medium
    channel dim up to the 128-lane width.  All host-side / trace-time work."""
    w1, w2, bias2, w3 = params['w1'], params['w2'], params['bias2'], params['w3']
    s2, t2, s3, t3 = params['s2'], params['t2'], params['s3'], params['t3']
    Cin, Cmed = w1.shape
    Cout = w3.shape[1]
    Cmed_p = _round_up(Cmed, LANE)

    # bn2 scale folded into conv1 AND conv2 weights (reference quirk: bn2 is
    # used after both); bn3 folded into conv3; conv2 bias into the bn2 shift.
    w1f = w1 * s2                      # (Cin, Cmed) * (1, Cmed)
    w2f = w2 * s2[0]                   # (3,3,Cmed,Cmed) * (Cmed,) on out axis
    w3f = w3 * s3
    t2b = bias2 * s2 + t2

    w1p = jnp.zeros((Cin, Cmed_p), jnp.float32).at[:, :Cmed].set(w1f)
    w2p = jnp.zeros((3, 3, Cmed_p, Cmed_p), jnp.float32
                    ).at[:, :, :Cmed, :Cmed].set(w2f)
    w3p = jnp.zeros((Cmed_p, Cout), jnp.float32).at[:Cmed, :].set(w3f)

    return dict(
        w1=w1p.astype(compute_dtype),
        w2=w2p.reshape(9, Cmed_p, Cmed_p).astype(compute_dtype),  # tap-major
        w3=w3p.astype(compute_dtype),
        t2=_pad_last(t2, Cmed_p).astype(jnp.float32),
        t2b=_pad_last(t2b, Cmed_p).astype(jnp.float32),
        t3=t3.astype(jnp.float32),
    )


def conv_block_forward_nhwc(x_nhwc, params, compute_dtype=jnp.bfloat16):
    """Core path (no layout transposes). Returns (out_nhwc, x2_nhwc)."""
    N, H, W, Cin = x_nhwc.shape
    Cmed = params['w1'].shape[1]
    Cout = params['w3'].shape[1]
    assert Cin == Cout, "identity shortcut requires in_planes == out_planes"

    kp = _prepare_kernel_params(params, compute_dtype)
    Cmed_p = kp['w1'].shape[1]
    out_dtype = compute_dtype

    cbytes = jnp.dtype(compute_dtype).itemsize
    weight_bytes = 2 * cbytes * (Cin * Cmed_p + 9 * Cmed_p * Cmed_p + Cmed_p * Cout)
    budget = int(0.85 * VMEM_LIMIT_BYTES) - weight_bytes
    Nb = _pick_batch_block(N, H, W, Cin, Cout, Cmed, Cmed_p,
                           x_nhwc.dtype, compute_dtype, out_dtype, budget)
    grid = (N // Nb,)

    def const_spec(shape):
        return pl.BlockSpec(shape, lambda b: (0,) * len(shape))

    out, x2 = pl.pallas_call(
        conv_block_kernel,
        out_shape=(jax.ShapeDtypeStruct((N, H, W, Cout), out_dtype),
                   jax.ShapeDtypeStruct((N, H, W, Cmed), out_dtype)),
        grid_spec=pltpu.PrefetchScalarGridSpec(
            num_scalar_prefetch=0,
            grid=grid,
            in_specs=[
                pl.BlockSpec((Nb, H, W, Cin), lambda b: (b, 0, 0, 0)),
                const_spec(kp['w1'].shape),
                const_spec(kp['t2'].shape),
                const_spec(kp['w2'].shape),
                const_spec(kp['t2b'].shape),
                const_spec(kp['w3'].shape),
                const_spec(kp['t3'].shape),
            ],
            out_specs=(
                pl.BlockSpec((Nb, H, W, Cout), lambda b: (b, 0, 0, 0)),
                pl.BlockSpec((Nb, H, W, Cmed), lambda b: (b, 0, 0, 0)),
            ),
        ),
        compiler_params=pltpu.CompilerParams(
            dimension_semantics=("parallel",),        # batch axis -> megacore
            vmem_limit_bytes=VMEM_LIMIT_BYTES),
    )(x_nhwc, kp['w1'], kp['t2'], kp['w2'], kp['t2b'], kp['w3'], kp['t3'])

    return out, x2


@partial(jax.jit, static_argnames=("compute_dtype",))
def conv_block_forward(x_nchw, params, compute_dtype=jnp.bfloat16):
    """PyTorch-compatible NCHW wrapper."""
    x_nhwc = jnp.transpose(x_nchw, (0, 2, 3, 1))
    out, x2 = conv_block_forward_nhwc(x_nhwc, params, compute_dtype)
    return (jnp.transpose(out, (0, 3, 1, 2)),
            jnp.transpose(x2, (0, 3, 1, 2)))


def ref_forward(x_nchw, params):
    """Pure-JAX reference for correctness checking."""
    x = jnp.transpose(x_nchw, (0, 2, 3, 1))  # NHWC
    h = jnp.einsum('nhwc,cd->nhwd', x, params['w1'])
    h = jnp.maximum(h * params['s2'][0] + params['t2'][0], 0.0)
    h2 = lax.conv_general_dilated(
        h, params['w2'], window_strides=(1, 1), padding='SAME',
        dimension_numbers=('NHWC', 'HWIO', 'NHWC')) + params['bias2'][0]
    x2 = jnp.maximum(h2 * params['s2'][0] + params['t2'][0], 0.0)
    y = jnp.einsum('nhwc,cd->nhwd', x2, params['w3'])
    y = jnp.maximum(y * params['s3'][0] + params['t3'][0] + x, 0.0)
    return (jnp.transpose(y, (0, 3, 1, 2)),
            jnp.transpose(x2, (0, 3, 1, 2)))


def init_params(key, in_planes, out_planes):
    med = out_planes // 4            # expansion = 4
    eps = 1e-5
    ks = jax.random.split(key, 12)
    w1 = 0.1 * jax.random.normal(ks[0], (in_planes, med), jnp.float32)
    w2 = 0.1 * jax.random.normal(ks[1], (3, 3, med, med), jnp.float32)  # HWIO
    bias2 = 0.1 * jax.random.normal(ks[2], (1, med), jnp.float32)
    w3 = 0.1 * jax.random.normal(ks[3], (med, out_planes), jnp.float32)
    # bn2 (eval): fold gamma/beta/running stats into scale/shift
    g2 = 1.0 + 0.1 * jax.random.normal(ks[4], (med,), jnp.float32)
    b2 = 0.1 * jax.random.normal(ks[5], (med,), jnp.float32)
    m2 = 0.1 * jax.random.normal(ks[6], (med,), jnp.float32)
    v2 = 1.0 + 0.1 * jax.random.uniform(ks[7], (med,), jnp.float32)
    inv2 = g2 / jnp.sqrt(v2 + eps)
    s2 = inv2.reshape(1, med)
    t2 = (b2 - m2 * inv2).reshape(1, med)
    # bn3 (eval)
    g3 = 1.0 + 0.1 * jax.random.normal(ks[8], (out_planes,), jnp.float32)
    b3 = 0.1 * jax.random.normal(ks[9], (out_planes,), jnp.float32)
    m3 = 0.1 * jax.random.normal(ks[10], (out_planes,), jnp.float32)
    v3 = 1.0 + 0.1 * jax.random.uniform(ks[11], (out_planes,), jnp.float32)
    inv3 = g3 / jnp.sqrt(v3 + eps)
    s3 = inv3.reshape(1, out_planes)
    t3 = (b3 - m3 * inv3).reshape(1, out_planes)
    return dict(w1=w1, w2=w2, bias2=bias2, w3=w3, s2=s2, t2=t2, s3=s3, t3=t3)


if __name__ == "__main__":
    key = jax.random.PRNGKey(0)
    kx, kparam = jax.random.split(key)
    # residual add with identity shortcut (down_sampling=False) -> Cin == Cout
    N, C, H, W = 2, 32, 16, 16        # med_planes = 32 // 4 = 8
    x = jax.random.normal(kx, (N, C, H, W), jnp.float32)
    params = init_params(kparam, C, C)

    ref_out, ref_x2 = ref_forward(x, params)

    # 1) exact-precision run (f32 matmul inputs) -> tight correctness gate
    out32, x2_32 = conv_block_forward(x, params, compute_dtype=jnp.float32)
    jax.block_until_ready((out32, x2_32))
    assert out32.shape == ref_out.shape and x2_32.shape == ref_x2.shape
    assert jnp.allclose(out32, ref_out, atol=1e-4, rtol=1e-4), "output mismatch"
    assert jnp.allclose(x2_32, ref_x2, atol=1e-4, rtol=1e-4), "x2 mismatch"

    # 2) default fast path (bf16 matmul inputs / bf16 outputs) -> loose check
    out_bf, x2_bf = conv_block_forward(x, params)
    jax.block_until_ready((out_bf, x2_bf))
    assert jnp.allclose(out_bf.astype(jnp.float32), ref_out, atol=1e-1, rtol=1e-1), \
        "bf16 output mismatch"
    assert jnp.allclose(x2_bf.astype(jnp.float32), ref_x2, atol=1e-1, rtol=1e-1), \
        "bf16 x2 mismatch"

    print("KERNEL_OK")
</pallas_src>

<mosaic_0001>
module attributes {stable_mosaic.version = 11 : i64} {
  func.func @conv_block_kernel(%arg0: i32, %arg1: memref<2x16x16x32xf32, #tpu.memory_space<vmem>>, %arg2: memref<32x128xf32, #tpu.memory_space<vmem>>, %arg3: memref<1x128xf32, #tpu.memory_space<vmem>>, %arg4: memref<9x128x128xf32, #tpu.memory_space<vmem>>, %arg5: memref<1x128xf32, #tpu.memory_space<vmem>>, %arg6: memref<128x32xf32, #tpu.memory_space<vmem>>, %arg7: memref<1x32xf32, #tpu.memory_space<vmem>>, %arg8: memref<2x16x16x32xf32, #tpu.memory_space<vmem>>, %arg9: memref<2x16x16x8xf32, #tpu.memory_space<vmem>>) attributes {dimension_semantics = [#tpu.dimension_semantics<parallel>], iteration_bounds = array<i64: 1>, scalar_prefetch = 0 : i64, scratch_operands = 0 : i64, tpu.core_type = #tpu.core_type<tc>, window_params = [{transform_indices = @transform_0, window_bounds = array<i64: 2, 16, 16, 32>}, {pipeline_mode = #tpu.pipeline_mode<synchronous>, transform_indices = @transform_1, window_bounds = array<i64: 32, 128>}, {pipeline_mode = #tpu.pipeline_mode<synchronous>, transform_indices = @transform_2, window_bounds = array<i64: 1, 128>}, {pipeline_mode = #tpu.pipeline_mode<synchronous>, transform_indices = @transform_3, window_bounds = array<i64: 9, 128, 128>}, {pipeline_mode = #tpu.pipeline_mode<synchronous>, transform_indices = @transform_4, window_bounds = array<i64: 1, 128>}, {pipeline_mode = #tpu.pipeline_mode<synchronous>, transform_indices = @transform_5, window_bounds = array<i64: 128, 32>}, {pipeline_mode = #tpu.pipeline_mode<synchronous>, transform_indices = @transform_6, window_bounds = array<i64: 1, 32>}, {transform_indices = @transform_7, window_bounds = array<i64: 2, 16, 16, 32>}, {transform_indices = @transform_8, window_bounds = array<i64: 2, 16, 16, 8>}]} {
    %c0 = arith.constant 0 : index
    %c0_0 = arith.constant 0 : index
    %c0_1 = arith.constant 0 : index
    %c0_2 = arith.constant 0 : index
    %0 = vector.load %arg1[%c0, %c0_0, %c0_1, %c0_2] : memref<2x16x16x32xf32, #tpu.memory_space<vmem>>, vector<2x16x16x32xf32>
    %1 = vector.shape_cast %0 : vector<2x16x16x32xf32> to vector<512x32xf32>
    %c0_3 = arith.constant 0 : index
    %c0_4 = arith.constant 0 : index
    %2 = vector.load %arg2[%c0_3, %c0_4] : memref<32x128xf32, #tpu.memory_space<vmem>>, vector<32x128xf32>
    %cst = arith.constant dense<0.000000e+00> : vector<512x128xf32>
    %3 = tpu.matmul %1, %2, %cst {dimension_numbers = #tpu.dot_dimension_numbers<[1], [0], [0], [1], [0, 0, 1, 1], [], []>} : vector<512x32xf32>, vector<32x128xf32>, vector<512x128xf32> -> vector<512x128xf32>
    %c0_5 = arith.constant 0 : index
    %c0_6 = arith.constant 0 : index
    %4 = vector.load %arg3[%c0_5, %c0_6] : memref<1x128xf32, #tpu.memory_space<vmem>>, vector<1x128xf32>
    %5 = vector.broadcast %4 : vector<1x128xf32> to vector<512x128xf32>
    %6 = arith.addf %3, %5 : vector<512x128xf32>
    %cst_7 = arith.constant 0.000000e+00 : f32
    %7 = vector.broadcast %cst_7 : f32 to vector<512x128xf32>
    %8 = arith.maximumf %6, %7 : vector<512x128xf32>
    %9 = vector.shape_cast %8 : vector<512x128xf32> to vector<2x16x16x128xf32>
    %cst_8 = arith.constant 0.000000e+00 : f32
    %10 = vector.broadcast %cst_8 : f32 to vector<2x1x16x128xf32>
    %11 = tpu.concatenate %10, %9, %10 in 1 : vector<2x1x16x128xf32>, vector<2x16x16x128xf32>, vector<2x1x16x128xf32> -> vector<2x18x16x128xf32>
    %cst_9 = arith.constant 0.000000e+00 : f32
    %12 = vector.broadcast %cst_9 : f32 to vector<2x18x1x128xf32>
    %13 = tpu.concatenate %12, %11, %12 in 2 : vector<2x18x1x128xf32>, vector<2x18x16x128xf32>, vector<2x18x1x128xf32> -> vector<2x18x18x128xf32>
    %14 = vector.extract_strided_slice %13 {offsets = [0, 0, 0, 0], sizes = [2, 16, 16, 128], strides = [1, 1, 1, 1]} : vector<2x18x18x128xf32> to vector<2x16x16x128xf32>
    %15 = vector.shape_cast %14 : vector<2x16x16x128xf32> to vector<512x128xf32>
    %c0_10 = arith.constant 0 : index
    %c0_11 = arith.constant 0 : index
    %c0_12 = arith.constant 0 : index
    %16 = vector.load %arg4[%c0_10, %c0_11, %c0_12] : memref<9x128x128xf32, #tpu.memory_space<vmem>>, vector<1x128x128xf32>
    %17 = vector.shape_cast %16 : vector<1x128x128xf32> to vector<128x128xf32>
    %cst_13 = arith.constant dense<0.000000e+00> : vector<512x128xf32>
    %18 = tpu.matmul %15, %17, %cst_13 {dimension_numbers = #tpu.dot_dimension_numbers<[1], [0], [0], [1], [0, 0, 1, 1], [], []>} : vector<512x128xf32>, vector<128x128xf32>, vector<512x128xf32> -> vector<512x128xf32>
    %19 = vector.extract_strided_slice %13 {offsets = [0, 0, 1, 0], sizes = [2, 16, 16, 128], strides = [1, 1, 1, 1]} : vector<2x18x18x128xf32> to vector<2x16x16x128xf32>
    %20 = vector.shape_cast %19 : vector<2x16x16x128xf32> to vector<512x128xf32>
    %c1 = arith.constant 1 : index
    %c0_14 = arith.constant 0 : index
    %c0_15 = arith.constant 0 : index
    %21 = vector.load %arg4[%c1, %c0_14, %c0_15] : memref<9x128x128xf32, #tpu.memory_space<vmem>>, vector<1x128x128xf32>
    %22 = vector.shape_cast %21 : vector<1x128x128xf32> to vector<128x128xf32>
    %cst_16 = arith.constant dense<0.000000e+00> : vector<512x128xf32>
    %23 = tpu.matmul %20, %22, %cst_16 {dimension_numbers = #tpu.dot_dimension_numbers<[1], [0], [0], [1], [0, 0, 1, 1], [], []>} : vector<512x128xf32>, vector<128x128xf32>, vector<512x128xf32> -> vector<512x128xf32>
    %24 = arith.addf %18, %23 : vector<512x128xf32>
    %25 = vector.extract_strided_slice %13 {offsets = [0, 0, 2, 0], sizes = [2, 16, 16, 128], strides = [1, 1, 1, 1]} : vector<2x18x18x128xf32> to vector<2x16x16x128xf32>
    %26 = vector.shape_cast %25 : vector<2x16x16x128xf32> to vector<512x128xf32>
    %c2 = arith.constant 2 : index
    %c0_17 = arith.constant 0 : index
    %c0_18 = arith.constant 0 : index
    %27 = vector.load %arg4[%c2, %c0_17, %c0_18] : memref<9x128x128xf32, #tpu.memory_space<vmem>>, vector<1x128x128xf32>
    %28 = vector.shape_cast %27 : vector<1x128x128xf32> to vector<128x128xf32>
    %cst_19 = arith.constant dense<0.000000e+00> : vector<512x128xf32>
    %29 = tpu.matmul %26, %28, %cst_19 {dimension_numbers = #tpu.dot_dimension_numbers<[1], [0], [0], [1], [0, 0, 1, 1], [], []>} : vector<512x128xf32>, vector<128x128xf32>, vector<512x128xf32> -> vector<512x128xf32>
    %30 = arith.addf %24, %29 : vector<512x128xf32>
    %31 = vector.extract_strided_slice %13 {offsets = [0, 1, 0, 0], sizes = [2, 16, 16, 128], strides = [1, 1, 1, 1]} : vector<2x18x18x128xf32> to vector<2x16x16x128xf32>
    %32 = vector.shape_cast %31 : vector<2x16x16x128xf32> to vector<512x128xf32>
    %c3 = arith.constant 3 : index
    %c0_20 = arith.constant 0 : index
    %c0_21 = arith.constant 0 : index
    %33 = vector.load %arg4[%c3, %c0_20, %c0_21] : memref<9x128x128xf32, #tpu.memory_space<vmem>>, vector<1x128x128xf32>
    %34 = vector.shape_cast %33 : vector<1x128x128xf32> to vector<128x128xf32>
    %cst_22 = arith.constant dense<0.000000e+00> : vector<512x128xf32>
    %35 = tpu.matmul %32, %34, %cst_22 {dimension_numbers = #tpu.dot_dimension_numbers<[1], [0], [0], [1], [0, 0, 1, 1], [], []>} : vector<512x128xf32>, vector<128x128xf32>, vector<512x128xf32> -> vector<512x128xf32>
    %36 = arith.addf %30, %35 : vector<512x128xf32>
    %37 = vector.extract_strided_slice %13 {offsets = [0, 1, 1, 0], sizes = [2, 16, 16, 128], strides = [1, 1, 1, 1]} : vector<2x18x18x128xf32> to vector<2x16x16x128xf32>
    %38 = vector.shape_cast %37 : vector<2x16x16x128xf32> to vector<512x128xf32>
    %c4 = arith.constant 4 : index
    %c0_23 = arith.constant 0 : index
    %c0_24 = arith.constant 0 : index
    %39 = vector.load %arg4[%c4, %c0_23, %c0_24] : memref<9x128x128xf32, #tpu.memory_space<vmem>>, vector<1x128x128xf32>
    %40 = vector.shape_cast %39 : vector<1x128x128xf32> to vector<128x128xf32>
    %cst_25 = arith.constant dense<0.000000e+00> : vector<512x128xf32>
    %41 = tpu.matmul %38, %40, %cst_25 {dimension_numbers = #tpu.dot_dimension_numbers<[1], [0], [0], [1], [0, 0, 1, 1], [], []>} : vector<512x128xf32>, vector<128x128xf32>, vector<512x128xf32> -> vector<512x128xf32>
    %42 = arith.addf %36, %41 : vector<512x128xf32>
    %43 = vector.extract_strided_slice %13 {offsets = [0, 1, 2, 0], sizes = [2, 16, 16, 128], strides = [1, 1, 1, 1]} : vector<2x18x18x128xf32> to vector<2x16x16x128xf32>
    %44 = vector.shape_cast %43 : vector<2x16x16x128xf32> to vector<512x128xf32>
    %c5 = arith.constant 5 : index
    %c0_26 = arith.constant 0 : index
    %c0_27 = arith.constant 0 : index
    %45 = vector.load %arg4[%c5, %c0_26, %c0_27] : memref<9x128x128xf32, #tpu.memory_space<vmem>>, vector<1x128x128xf32>
    %46 = vector.shape_cast %45 : vector<1x128x128xf32> to vector<128x128xf32>
    %cst_28 = arith.constant dense<0.000000e+00> : vector<512x128xf32>
    %47 = tpu.matmul %44, %46, %cst_28 {dimension_numbers = #tpu.dot_dimension_numbers<[1], [0], [0], [1], [0, 0, 1, 1], [], []>} : vector<512x128xf32>, vector<128x128xf32>, vector<512x128xf32> -> vector<512x128xf32>
    %48 = arith.addf %42, %47 : vector<512x128xf32>
    %49 = vector.extract_strided_slice %13 {offsets = [0, 2, 0, 0], sizes = [2, 16, 16, 128], strides = [1, 1, 1, 1]} : vector<2x18x18x128xf32> to vector<2x16x16x128xf32>
    %50 = vector.shape_cast %49 : vector<2x16x16x128xf32> to vector<512x128xf32>
    %c6 = arith.constant 6 : index
    %c0_29 = arith.constant 0 : index
    %c0_30 = arith.constant 0 : index
    %51 = vector.load %arg4[%c6, %c0_29, %c0_30] : memref<9x128x128xf32, #tpu.memory_space<vmem>>, vector<1x128x128xf32>
    %52 = vector.shape_cast %51 : vector<1x128x128xf32> to vector<128x128xf32>
    %cst_31 = arith.constant dense<0.000000e+00> : vector<512x128xf32>
    %53 = tpu.matmul %50, %52, %cst_31 {dimension_numbers = #tpu.dot_dimension_numbers<[1], [0], [0], [1], [0, 0, 1, 1], [], []>} : vector<512x128xf32>, vector<128x128xf32>, vector<512x128xf32> -> vector<512x128xf32>
    %54 = arith.addf %48, %53 : vector<512x128xf32>
    %55 = vector.extract_strided_slice %13 {offsets = [0, 2, 1, 0], sizes = [2, 16, 16, 128], strides = [1, 1, 1, 1]} : vector<2x18x18x128xf32> to vector<2x16x16x128xf32>
    %56 = vector.shape_cast %55 : vector<2x16x16x128xf32> to vector<512x128xf32>
    %c7 = arith.constant 7 : index
    %c0_32 = arith.constant 0 : index
    %c0_33 = arith.constant 0 : index
    %57 = vector.load %arg4[%c7, %c0_32, %c0_33] : memref<9x128x128xf32, #tpu.memory_space<vmem>>, vector<1x128x128xf32>
    %58 = vector.shape_cast %57 : vector<1x128x128xf32> to vector<128x128xf32>
    %cst_34 = arith.constant dense<0.000000e+00> : vector<512x128xf32>
    %59 = tpu.matmul %56, %58, %cst_34 {dimension_numbers = #tpu.dot_dimension_numbers<[1], [0], [0], [1], [0, 0, 1, 1], [], []>} : vector<512x128xf32>, vector<128x128xf32>, vector<512x128xf32> -> vector<512x128xf32>
    %60 = arith.addf %54, %59 : vector<512x128xf32>
    %61 = vector.extract_strided_slice %13 {offsets = [0, 2, 2, 0], sizes = [2, 16, 16, 128], strides = [1, 1, 1, 1]} : vector<2x18x18x128xf32> to vector<2x16x16x128xf32>
    %62 = vector.shape_cast %61 : vector<2x16x16x128xf32> to vector<512x128xf32>
    %c8 = arith.constant 8 : index
    %c0_35 = arith.constant 0 : index
    %c0_36 = arith.constant 0 : index
    %63 = vector.load %arg4[%c8, %c0_35, %c0_36] : memref<9x128x128xf32, #tpu.memory_space<vmem>>, vector<1x128x128xf32>
    %64 = vector.shape_cast %63 : vector<1x128x128xf32> to vector<128x128xf32>
    %cst_37 = arith.constant dense<0.000000e+00> : vector<512x128xf32>
    %65 = tpu.matmul %62, %64, %cst_37 {dimension_numbers = #tpu.dot_dimension_numbers<[1], [0], [0], [1], [0, 0, 1, 1], [], []>} : vector<512x128xf32>, vector<128x128xf32>, vector<512x128xf32> -> vector<512x128xf32>
    %66 = arith.addf %60, %65 : vector<512x128xf32>
    %c0_38 = arith.constant 0 : index
    %c0_39 = arith.constant 0 : index
    %67 = vector.load %arg5[%c0_38, %c0_39] : memref<1x128xf32, #tpu.memory_space<vmem>>, vector<1x128xf32>
    %68 = vector.broadcast %67 : vector<1x128xf32> to vector<512x128xf32>
    %69 = arith.addf %66, %68 : vector<512x128xf32>
    %cst_40 = arith.constant 0.000000e+00 : f32
    %70 = vector.broadcast %cst_40 : f32 to vector<512x128xf32>
    %71 = arith.maximumf %69, %70 : vector<512x128xf32>
    %72 = vector.extract_strided_slice %71 {offsets = [0, 0], sizes = [512, 8], strides = [1, 1]} : vector<512x128xf32> to vector<512x8xf32>
    %73 = vector.shape_cast %72 : vector<512x8xf32> to vector<2x16x16x8xf32>
    %c0_41 = arith.constant 0 : index
    %c0_42 = arith.constant 0 : index
    %c0_43 = arith.constant 0 : index
    %c0_44 = arith.constant 0 : index
    %74 = vector.load %arg9[%c0_41, %c0_42, %c0_43, %c0_44] : memref<2x16x16x8xf32, #tpu.memory_space<vmem>>, vector<2x16x16x8xf32>
    tpu.vector_store %arg9[%c0_41, %c0_42, %c0_43, %c0_44], %73 {strides = array<i32>} : memref<2x16x16x8xf32, #tpu.memory_space<vmem>>, vector<2x16x16x8xf32>,
    %c0_45 = arith.constant 0 : index
    %c0_46 = arith.constant 0 : index
    %75 = vector.load %arg6[%c0_45, %c0_46] : memref<128x32xf32, #tpu.memory_space<vmem>>, vector<128x32xf32>
    %cst_47 = arith.constant dense<0.000000e+00> : vector<512x32xf32>
    %76 = tpu.matmul %71, %75, %cst_47 {dimension_numbers = #tpu.dot_dimension_numbers<[1], [0], [0], [1], [0, 0, 1, 1], [], []>} : vector<512x128xf32>, vector<128x32xf32>, vector<512x32xf32> -> vector<512x32xf32>
    %c0_48 = arith.constant 0 : index
    %c0_49 = arith.constant 0 : index
    %c0_50 = arith.constant 0 : index
    %c0_51 = arith.constant 0 : index
    %77 = vector.load %arg1[%c0_48, %c0_49, %c0_50, %c0_51] : memref<2x16x16x32xf32, #tpu.memory_space<vmem>>, vector<2x16x16x32xf32>
    %78 = vector.shape_cast %77 : vector<2x16x16x32xf32> to vector<512x32xf32>
    %c0_52 = arith.constant 0 : index
    %c0_53 = arith.constant 0 : index
    %79 = vector.load %arg7[%c0_52, %c0_53] : memref<1x32xf32, #tpu.memory_space<vmem>>, vector<1x32xf32>
    %80 = vector.broadcast %79 : vector<1x32xf32> to vector<512x32xf32>
    %81 = arith.addf %76, %80 : vector<512x32xf32>
    %82 = arith.addf %81, %78 : vector<512x32xf32>
    %cst_54 = arith.constant 0.000000e+00 : f32
    %83 = vector.broadcast %cst_54 : f32 to vector<512x32xf32>
    %84 = arith.maximumf %82, %83 : vector<512x32xf32>
    %85 = vector.shape_cast %84 : vector<512x32xf32> to vector<2x16x16x32xf32>
    %c0_55 = arith.constant 0 : index
    %c0_56 = arith.constant 0 : index
    %c0_57 = arith.constant 0 : index
    %c0_58 = arith.constant 0 : index
    %86 = vector.load %arg8[%c0_55, %c0_56, %c0_57, %c0_58] : memref<2x16x16x32xf32, #tpu.memory_space<vmem>>, vector<2x16x16x32xf32>
    tpu.vector_store %arg8[%c0_55, %c0_56, %c0_57, %c0_58], %85 {strides = array<i32>} : memref<2x16x16x32xf32, #tpu.memory_space<vmem>>, vector<2x16x16x32xf32>,
    return
  }
  func.func @transform_0(%arg0: i32) -> (i32, i32, i32, i32) {
    %c0_i32 = arith.constant 0 : i32
    %c0_i32_0 = arith.constant 0 : i32
    %c0_i32_1 = arith.constant 0 : i32
    %c0_i32_2 = arith.constant 0 : i32
    return %arg0, %c0_i32, %c0_i32_0, %c0_i32_1 : i32, i32, i32, i32
  }
  func.func @transform_1(%arg0: i32) -> (i32, i32) {
    %c0_i32 = arith.constant 0 : i32
    %c0_i32_0 = arith.constant 0 : i32
    %c0_i32_1 = arith.constant 0 : i32
    return %c0_i32, %c0_i32_0 : i32, i32
  }
  func.func @transform_2(%arg0: i32) -> (i32, i32) {
    %c0_i32 = arith.constant 0 : i32
    %c0_i32_0 = arith.constant 0 : i32
    %c0_i32_1 = arith.constant 0 : i32
    return %c0_i32, %c0_i32_0 : i32, i32
  }
  func.func @transform_3(%arg0: i32) -> (i32, i32, i32) {
    %c0_i32 = arith.constant 0 : i32
    %c0_i32_0 = arith.constant 0 : i32
    %c0_i32_1 = arith.constant 0 : i32
    %c0_i32_2 = arith.constant 0 : i32
    return %c0_i32, %c0_i32_0, %c0_i32_1 : i32, i32, i32
  }
  func.func @transform_4(%arg0: i32) -> (i32, i32) {
    %c0_i32 = arith.constant 0 : i32
    %c0_i32_0 = arith.constant 0 : i32
    %c0_i32_1 = arith.constant 0 : i32
    return %c0_i32, %c0_i32_0 : i32, i32
  }
  func.func @transform_5(%arg0: i32) -> (i32, i32) {
    %c0_i32 = arith.constant 0 : i32
    %c0_i32_0 = arith.constant 0 : i32
    %c0_i32_1 = arith.constant 0 : i32
    return %c0_i32, %c0_i32_0 : i32, i32
  }
  func.func @transform_6(%arg0: i32) -> (i32, i32) {
    %c0_i32 = arith.constant 0 : i32
    %c0_i32_0 = arith.constant 0 : i32
    %c0_i32_1 = arith.constant 0 : i32
    return %c0_i32, %c0_i32_0 : i32, i32
  }
  func.func @transform_7(%arg0: i32) -> (i32, i32, i32, i32) {
    %c0_i32 = arith.constant 0 : i32
    %c0_i32_0 = arith.constant 0 : i32
    %c0_i32_1 = arith.constant 0 : i32
    %c0_i32_2 = arith.constant 0 : i32
    return %arg0, %c0_i32, %c0_i32_0, %c0_i32_1 : i32, i32, i32, i32
  }
  func.func @transform_8(%arg0: i32) -> (i32, i32, i32, i32) {
    %c0_i32 = arith.constant 0 : i32
    %c0_i32_0 = arith.constant 0 : i32
    %c0_i32_1 = arith.constant 0 : i32
    %c0_i32_2 = arith.constant 0 : i32
    return %arg0, %c0_i32, %c0_i32_0, %c0_i32_1 : i32, i32, i32, i32
  }
}

</mosaic_0001>

<llo_original>
// kernel: conv_block_forward.1
$region0: #{conv_block_forward.1}
  #allocation0 [shape = 'u32[]', space=smem, size = 0x4, offset = 0x4, fixed_abs, tag = 'smem constant byte address 0x4 - core index']
  #allocation1 [shape = 'u32[144,128]{1,0:T(1,128)}', space=vmem, size = 0x12000, scoped, tag = 'internal scratch']
  %s0 = inlined_call_operand.vmem [shape: f32[2,16,16,32], index: 0, kind: input, shape index: {}]
  %s1 = inlined_call_operand.vmem [shape: f32[32,128], index: 1, kind: input, shape index: {}]
  %s2 = inlined_call_operand.vmem [shape: f32[1,128], index: 2, kind: input, shape index: {}]
  %s3 = inlined_call_operand.vmem [shape: f32[9,128,128], index: 3, kind: input, shape index: {}]
  %s4 = inlined_call_operand.vmem [shape: f32[1,128], index: 4, kind: input, shape index: {}]
  %s5 = inlined_call_operand.vmem [shape: f32[128,32], index: 5, kind: input, shape index: {}]
  %s6 = inlined_call_operand.vmem [shape: f32[1,32], index: 6, kind: input, shape index: {}]
  %s7 = inlined_call_operand.hbm [shape: f32[2,16,16,32], index: 7, kind: output, shape index: {0}]
  %s8 = inlined_call_operand.vmem [shape: f32[2,16,16,8], index: 8, kind: output, shape index: {1}]
  %9 = xla_tuple %s7, %s8
  %s10 = sld [smem:[#allocation0]]
  $region46: #{conv_block_forward.1} parent=0
    _
  %s12 = ssub.s32 1, %s10
  %s13 = scalar_select 0, %s12, %s10
  $region1: #{conv_block_forward.1} parent=0
    #allocation2 [shape = 'u8[262144]{0}', space=vmem, size = 0x40000, scoped, tag = 'output window, operand 0, single buffered']
    #allocation3 [shape = 's32[1]{0}', space=sflag, size = 0x4, scoped, tag = 'scoped memory for conv_block_forward.1']
    %14 = vsyncpa [#allocation3], 0
    // Predicated region
    $region2: #{conv_block_forward.1} parent=1 // pred_check
      _
    $region3: #{conv_block_forward.1} parent=1 // pred_check_branch
      %16 = sbr.rel (0) target = $region5
    $region4: #{conv_block_forward.1} parent=1 // pred_region
      _
    $region5: #{conv_block_forward.1} parent=1 // pred_fallthru
      _
    // Predicated region
    $region6: #{conv_block_forward.1} parent=1 // pred_check
      _
    $region7: #{conv_block_forward.1} parent=1 // pred_check_branch
      %18 = sbr.rel (0) target = $region9
    $region8: #{conv_block_forward.1} parent=1 // pred_region
      _
    $region9: #{conv_block_forward.1} parent=1 // pred_fallthru
      _
    // Predicated region
    $region10: #{conv_block_forward.1} parent=1 // pred_check
      _
    $region11: #{conv_block_forward.1} parent=1 // pred_check_branch
      %20 = sbr.rel (0) target = $region13
    $region12: #{conv_block_forward.1} parent=1 // pred_region
      _
    $region13: #{conv_block_forward.1} parent=1 // pred_fallthru
      _
    // Predicated region
    $region14: #{conv_block_forward.1} parent=1 // pred_check
      _
    $region15: #{conv_block_forward.1} parent=1 // pred_check_branch
      %22 = sbr.rel (0) target = $region17
    $region16: #{conv_block_forward.1} parent=1 // pred_region
      _
    $region17: #{conv_block_forward.1} parent=1 // pred_fallthru
      _
    // Predicated region
    $region18: #{conv_block_forward.1} parent=1 // pred_check
      _
    $region19: #{conv_block_forward.1} parent=1 // pred_check_branch
      %24 = sbr.rel (0) target = $region21
    $region20: #{conv_block_forward.1} parent=1 // pred_region
      _
    $region21: #{conv_block_forward.1} parent=1 // pred_fallthru
      _
    // Predicated region
    $region22: #{conv_block_forward.1} parent=1 // pred_check
      _
    $region23: #{conv_block_forward.1} parent=1 // pred_check_branch
      %26 = sbr.rel (0) target = $region25
    $region24: #{conv_block_forward.1} parent=1 // pred_region
      _
    $region25: #{conv_block_forward.1} parent=1 // pred_fallthru
      _
    // Predicated region
    $region26: #{conv_block_forward.1} parent=1 // pred_check
      _
    $region27: #{conv_block_forward.1} parent=1 // pred_check_branch
      %28 = sbr.rel (0) target = $region29
    $region28: #{conv_block_forward.1} parent=1 // pred_region
      _
    $region29: #{conv_block_forward.1} parent=1 // pred_fallthru
      _
    %v29 = vld [vmem:[%s0] sm:$0xff]
    %v30 = vld [vmem:[%s0 + $0x8] sm:$0xff]
    %v31 = vld [vmem:[%s0 + $0x10] sm:$0xff]
    %v32 = vld [vmem:[%s0 + $0x18] sm:$0xff]
    %v33 = vld [vmem:[%s0 + $0x20] sm:$0xff]
    %v34 = vld [vmem:[%s0 + $0x28] sm:$0xff]
    %v35 = vld [vmem:[%s0 + $0x30] sm:$0xff]
    %v36 = vld [vmem:[%s0 + $0x38] sm:$0xff]
    %v37 = vld [vmem:[%s0 + $0x40] sm:$0xff]
    %v38 = vld [vmem:[%s0 + $0x48] sm:$0xff]
    %v39 = vld [vmem:[%s0 + $0x50] sm:$0xff]
    %v40 = vld [vmem:[%s0 + $0x58] sm:$0xff]
    %v41 = vld [vmem:[%s0 + $0x60] sm:$0xff]
    %v42 = vld [vmem:[%s0 + $0x68] sm:$0xff]
    %v43 = vld [vmem:[%s0 + $0x70] sm:$0xff]
    %v44 = vld [vmem:[%s0 + $0x78] sm:$0xff]
    %v45 = vld [vmem:[%s0 + $0x80] sm:$0xff]
    %v46 = vld [vmem:[%s0 + $0x88] sm:$0xff]
    %v47 = vld [vmem:[%s0 + $0x90] sm:$0xff]
    %v48 = vld [vmem:[%s0 + $0x98] sm:$0xff]
    %v49 = vld [vmem:[%s0 + $0xa0] sm:$0xff]
    %v50 = vld [vmem:[%s0 + $0xa8] sm:$0xff]
    %v51 = vld [vmem:[%s0 + $0xb0] sm:$0xff]
    %v52 = vld [vmem:[%s0 + $0xb8] sm:$0xff]
    %v53 = vld [vmem:[%s0 + $0xc0] sm:$0xff]
    %v54 = vld [vmem:[%s0 + $0xc8] sm:$0xff]
    %v55 = vld [vmem:[%s0 + $0xd0] sm:$0xff]
    %v56 = vld [vmem:[%s0 + $0xd8] sm:$0xff]
    %v57 = vld [vmem:[%s0 + $0xe0] sm:$0xff]
    %v58 = vld [vmem:[%s0 + $0xe8] sm:$0xff]
    %v59 = vld [vmem:[%s0 + $0xf0] sm:$0xff]
    %v60 = vld [vmem:[%s0 + $0xf8] sm:$0xff]
    %v61 = vld [vmem:[%s0 + $0x100] sm:$0xff]
    %v62 = vld [vmem:[%s0 + $0x108] sm:$0xff]
    %v63 = vld [vmem:[%s0 + $0x110] sm:$0xff]
    %v64 = vld [vmem:[%s0 + $0x118] sm:$0xff]
    %v65 = vld [vmem:[%s0 + $0x120] sm:$0xff]
    %v66 = vld [vmem:[%s0 + $0x128] sm:$0xff]
    %v67 = vld [vmem:[%s0 + $0x130] sm:$0xff]
    %v68 = vld [vmem:[%s0 + $0x138] sm:$0xff]
    %v69 = vld [vmem:[%s0 + $0x140] sm:$0xff]
    %v70 = vld [vmem:[%s0 + $0x148] sm:$0xff]
    %v71 = vld [vmem:[%s0 + $0x150] sm:$0xff]
    %v72 = vld [vmem:[%s0 + $0x158] sm:$0xff]
    %v73 = vld [vmem:[%s0 + $0x160] sm:$0xff]
    %v74 = vld [vmem:[%s0 + $0x168] sm:$0xff]
    %v75 = vld [vmem:[%s0 + $0x170] sm:$0xff]
    %v76 = vld [vmem:[%s0 + $0x178] sm:$0xff]
    %v77 = vld [vmem:[%s0 + $0x180] sm:$0xff]
    %v78 = vld [vmem:[%s0 + $0x188] sm:$0xff]
    %v79 = vld [vmem:[%s0 + $0x190] sm:$0xff]
    %v80 = vld [vmem:[%s0 + $0x198] sm:$0xff]
    %v81 = vld [vmem:[%s0 + $0x1a0] sm:$0xff]
    %v82 = vld [vmem:[%s0 + $0x1a8] sm:$0xff]
    %v83 = vld [vmem:[%s0 + $0x1b0] sm:$0xff]
    %v84 = vld [vmem:[%s0 + $0x1b8] sm:$0xff]
    %v85 = vld [vmem:[%s0 + $0x1c0] sm:$0xff]
    %v86 = vld [vmem:[%s0 + $0x1c8] sm:$0xff]
    %v87 = vld [vmem:[%s0 + $0x1d0] sm:$0xff]
    %v88 = vld [vmem:[%s0 + $0x1d8] sm:$0xff]
    %v89 = vld [vmem:[%s0 + $0x1e0] sm:$0xff]
    %v90 = vld [vmem:[%s0 + $0x1e8] sm:$0xff]
    %v91 = vld [vmem:[%s0 + $0x1f0] sm:$0xff]
    %v92 = vld [vmem:[%s0 + $0x1f8] sm:$0xff]
    %v93 = vld [vmem:[%s1] sm:$0xff]
    %v94 = vld [vmem:[%s1 + $0x8] sm:$0xff]
    %v95 = vld [vmem:[%s1 + $0x10] sm:$0xff]
    %v96 = vld [vmem:[%s1 + $0x18] sm:$0xff]
    %v97 = vld [vmem:[%s2] sm:$0x1]
    %v99 = vlaneseq
    %v100 = vshrl.u32 %v99, 7
    %v101 = vsub.s32 0, %v100
    %v102 = vrot.slane %v97, %v101
    %vm104 = vcmask 261120
    %v106 = vsel %vm104, %v29, 0
    %v109 = vsel %vm104, %v30, 0
    %v112 = vsel %vm104, %v31, 0
    %v115 = vsel %vm104, %v32, 0
    %v118 = vsel %vm104, %v33, 0
    %v121 = vsel %vm104, %v34, 0
    %v124 = vsel %vm104, %v35, 0
    %v127 = vsel %vm104, %v36, 0
    %v130 = vsel %vm104, %v37, 0
    %v133 = vsel %vm104, %v38, 0
    %v136 = vsel %vm104, %v39, 0
    %v139 = vsel %vm104, %v40, 0
    %v142 = vsel %vm104, %v41, 0
    %v145 = vsel %vm104, %v42, 0
    %v148 = vsel %vm104, %v43, 0
    %v151 = vsel %vm104, %v44, 0
    %v154 = vsel %vm104, %v45, 0
    %v157 = vsel %vm104, %v46, 0
    %v160 = vsel %vm104, %v47, 0
    %v163 = vsel %vm104, %v48, 0
    %v166 = vsel %vm104, %v49, 0
    %v169 = vsel %vm104, %v50, 0
    %v172 = vsel %vm104, %v51, 0
    %v175 = vsel %vm104, %v52, 0
    %v178 = vsel %vm104, %v53, 0
    %v181 = vsel %vm104, %v54, 0
    %v184 = vsel %vm104, %v55, 0
    %v187 = vsel %vm104, %v56, 0
    %v190 = vsel %vm104, %v57, 0
    %v193 = vsel %vm104, %v58, 0
    %v196 = vsel %vm104, %v59, 0
    %v199 = vsel %vm104, %v60, 0
    %v202 = vsel %vm104, %v61, 0
    %v205 = vsel %vm104, %v62, 0
    %v208 = vsel %vm104, %v63, 0
    %v211 = vsel %vm104, %v64, 0
    %v214 = vsel %vm104, %v65, 0
    %v217 = vsel %vm104, %v66, 0
    %v220 = vsel %vm104, %v67, 0
    %v223 = vsel %vm104, %v68, 0
    %v226 = vsel %vm104, %v69, 0
    %v229 = vsel %vm104, %v70, 0
    %v232 = vsel %vm104, %v71, 0
    %v235 = vsel %vm104, %v72, 0
    %v238 = vsel %vm104, %v73, 0
    %v241 = vsel %vm104, %v74, 0
    %v244 = vsel %vm104, %v75, 0
    %v247 = vsel %vm104, %v76, 0
    %v250 = vsel %vm104, %v77, 0
    %v253 = vsel %vm104, %v78, 0
    %v256 = vsel %vm104, %v79, 0
    %v259 = vsel %vm104, %v80, 0
    %v262 = vsel %vm104, %v81, 0
    %v265 = vsel %vm104, %v82, 0
    %v268 = vsel %vm104, %v83, 0
    %v271 = vsel %vm104, %v84, 0
    %v274 = vsel %vm104, %v85, 0
    %v277 = vsel %vm104, %v86, 0
    %v280 = vsel %vm104, %v87, 0
    %v283 = vsel %vm104, %v88, 0
    %v286 = vsel %vm104, %v89, 0
    %v289 = vsel %vm104, %v90, 0
    %v292 = vsel %vm104, %v91, 0
    %v295 = vsel %vm104, %v92, 0
    %297 = vmatprep.subr.mxu0 0.0
    %298 = vmatpush1.msra.mxu0 %v93
    %299 = vmatprep.subr.mxu0 0.0
    %300 = vmatpush1.msra.mxu0 %v94
    %301 = vmatprep.subr.mxu0 0.0
    %302 = vmatpush1.msra.mxu0 %v95
    %303 = vmatprep.subr.mxu0 0.0
    %304 = vmatpush1.msra.mxu0 %v96
    %305 = vmatprep.subr.mxu0 0.0
    %306 = vmatpush1.msra.mxu0 0.0
    %307 = vmatprep.subr.mxu0 0.0
    %308 = vmatpush1.msra.mxu0 0.0
    %309 = vmatprep.subr.mxu0 0.0
    %310 = vmatpush1.msra.mxu0 0.0
    %311 = vmatprep.subr.mxu0 0.0
    %312 = vmatpush1.msra.mxu0 0.0
    %313 = vmatprep.subr.mxu0 0.0
    %314 = vmatpush1.msra.mxu0 0.0
    %315 = vmatprep.subr.mxu0 0.0
    %316 = vmatpush1.msra.mxu0 0.0
    %317 = vmatprep.subr.mxu0 0.0
    %318 = vmatpush1.msra.mxu0 0.0
    %319 = vmatprep.subr.mxu0 0.0
    %320 = vmatpush1.msra.mxu0 0.0
    %321 = vmatprep.subr.mxu0 0.0
    %322 = vmatpush1.msra.mxu0 0.0
    %323 = vmatprep.subr.mxu0 0.0
    %324 = vmatpush1.msra.mxu0 0.0
    %325 = vmatprep.subr.mxu0 0.0
    %326 = vmatpush1.msra.mxu0 0.0
    %327 = vmatprep.subr.mxu0 0.0
    %328 = vmatpush1.msra.mxu0 0.0
    %329 = vmatprep.subr.mxu0 0.0
    %330 = vmatpush1.msra.mxu0 0.0
    %331 = vmatprep.subr.mxu0 0.0
    %332 = vmatpush1.msra.mxu0 0.0
    %333 = vmatprep.subr.mxu0 0.0
    %334 = vmatpush1.msra.mxu0 0.0
    %335 = vmatprep.subr.mxu0 0.0
    %336 = vmatpush1.msra.mxu0 0.0
    %337 = vmatprep.subr.mxu0 0.0
    %338 = vmatpush1.msra.mxu0 0.0
    %339 = vmatprep.subr.mxu0 0.0
    %340 = vmatpush1.msra.mxu0 0.0
    %341 = vmatprep.subr.mxu0 0.0
    %342 = vmatpush1.msra.mxu0 0.0
    %343 = vmatprep.subr.mxu0 0.0
    %344 = vmatpush1.msra.mxu0 0.0
    %345 = vmatprep.subr.mxu0 0.0
    %346 = vmatpush1.msra.mxu0 0.0
    %347 = vmatprep.subr.mxu0 0.0
    %348 = vmatpush1.msra.mxu0 0.0
    %349 = vmatprep.subr.mxu0 0.0
    %350 = vmatpush1.msra.mxu0 0.0
    %351 = vmatprep.subr.mxu0 0.0
    %352 = vmatpush1.msra.mxu0 0.0
    %353 = vmatprep.subr.mxu0 0.0
    %354 = vmatpush1.msra.mxu0 0.0
    %355 = vmatprep.subr.mxu0 0.0
    %356 = vmatpush1.msra.mxu0 0.0
    %357 = vmatprep.subr.mxu0 0.0
    %358 = vmatpush1.msra.mxu0 0.0
    %359 = vmatprep.subr.mxu0 0.0
    %360 = vmatpush1.msra.mxu0 0.0
    %361 = vmatprep.mubr.f32.mxu0 0.0
    %362 = vmatmul.mubr.f32.gmra.mrb[0].mxu0 %v106
    %v363 = vpop.f32.mrb[0].mxu0
    %v364 = vadd.f32 %v102, %v363
    %v365 = vpop.f32.mrb[0].mxu0
    %366 = vmatprep.mubr.f32.mxu0 0.0
    %367 = vmatmul.mubr.f32.gmra.mrb[0].mxu0 %v109
    %v368 = vpop.f32.mrb[0].mxu0
    %v369 = vadd.f32 %v102, %v368
    %v370 = vpop.f32.mrb[0].mxu0
    %371 = vmatprep.mubr.f32.mxu0 0.0
    %372 = vmatmul.mubr.f32.gmra.mrb[0].mxu0 %v112
    %v373 = vpop.f32.mrb[0].mxu0
    %v374 = vadd.f32 %v102, %v373
    %v375 = vpop.f32.mrb[0].mxu0
    %376 = vmatprep.mubr.f32.mxu0 0.0
    %377 = vmatmul.mubr.f32.gmra.mrb[0].mxu0 %v115
    %v378 = vpop.f32.mrb[0].mxu0
    %v379 = vadd.f32 %v102, %v378
    %v380 = vpop.f32.mrb[0].mxu0
    %381 = vmatprep.mubr.f32.mxu0 0.0
    %382 = vmatmul.mubr.f32.gmra.mrb[0].mxu0 %v118
    %v383 = vpop.f32.mrb[0].mxu0
    %v384 = vadd.f32 %v102, %v383
    %v385 = vpop.f32.mrb[0].mxu0
    %386 = vmatprep.mubr.f32.mxu0 0.0
    %387 = vmatmul.mubr.f32.gmra.mrb[0].mxu0 %v121
    %v388 = vpop.f32.mrb[0].mxu0
    %v389 = vadd.f32 %v102, %v388
    %v390 = vpop.f32.mrb[0].mxu0
    %391 = vmatprep.mubr.f32.mxu0 0.0
    %392 = vmatmul.mubr.f32.gmra.mrb[0].mxu0 %v124
    %v393 = vpop.f32.mrb[0].mxu0
    %v394 = vadd.f32 %v102, %v393
    %v395 = vpop.f32.mrb[0].mxu0
    %396 = vmatprep.mubr.f32.mxu0 0.0
    %397 = vmatmul.mubr.f32.gmra.mrb[0].mxu0 %v127
    %v398 = vpop.f32.mrb[0].mxu0
    %v399 = vadd.f32 %v102, %v398
    %v400 = vpop.f32.mrb[0].mxu0
    %401 = vmatprep.mubr.f32.mxu0 0.0
    %402 = vmatmul.mubr.f32.gmra.mrb[0].mxu0 %v130
    %v403 = vpop.f32.mrb[0].mxu0
    %v404 = vadd.f32 %v102, %v403
    %v405 = vpop.f32.mrb[0].mxu0
    %406 = vmatprep.mubr.f32.mxu0 0.0
    %407 = vmatmul.mubr.f32.gmra.mrb[0].mxu0 %v133
    %v408 = vpop.f32.mrb[0].mxu0
    %v409 = vadd.f32 %v102, %v408
    %v410 = vpop.f32.mrb[0].mxu0
    %411 = vmatprep.mubr.f32.mxu0 0.0
    %412 = vmatmul.mubr.f32.gmra.mrb[0].mxu0 %v136
    %v413 = vpop.f32.mrb[0].mxu0
    %v414 = vadd.f32 %v102, %v413
    %v415 = vpop.f32.mrb[0].mxu0
    %416 = vmatprep.mubr.f32.mxu0 0.0
    %417 = vmatmul.mubr.f32.gmra.mrb[0].mxu0 %v139
    %v418 = vpop.f32.mrb[0].mxu0
    %v419 = vadd.f32 %v102, %v418
    %v420 = vpop.f32.mrb[0].mxu0
    %421 = vmatprep.mubr.f32.mxu0 0.0
    %422 = vmatmul.mubr.f32.gmra.mrb[0].mxu0 %v142
    %v423 = vpop.f32.mrb[0].mxu0
    %v424 = vadd.f32 %v102, %v423
    %v425 = vpop.f32.mrb[0].mxu0
    %426 = vmatprep.mubr.f32.mxu0 0.0
    %427 = vmatmul.mubr.f32.gmra.mrb[0].mxu0 %v145
    %v428 = vpop.f32.mrb[0].mxu0
    %v429 = vadd.f32 %v102, %v428
    %v430 = vpop.f32.mrb[0].mxu0
    %431 = vmatprep.mubr.f32.mxu0 0.0
    %432 = vmatmul.mubr.f32.gmra.mrb[0].mxu0 %v148
    %v433 = vpop.f32.mrb[0].mxu0
    %v434 = vadd.f32 %v102, %v433
    %v435 = vpop.f32.mrb[0].mxu0
    %436 = vmatprep.mubr.f32.mxu0 0.0
    %437 = vmatmul.mubr.f32.gmra.mrb[0].mxu0 %v151
    %v438 = vpop.f32.mrb[0].mxu0
    %v439 = vadd.f32 %v102, %v438
    %v440 = vpop.f32.mrb[0].mxu0
    %441 = vmatprep.mubr.f32.mxu0 0.0
    %442 = vmatmul.mubr.f32.gmra.mrb[0].mxu0 %v154
    %v443 = vpop.f32.mrb[0].mxu0
    %v444 = vadd.f32 %v102, %v443
    %v445 = vpop.f32.mrb[0].mxu0
    %446 = vmatprep.mubr.f32.mxu0 0.0
    %447 = vmatmul.mubr.f32.gmra.mrb[0].mxu0 %v157
    %v448 = vpop.f32.mrb[0].mxu0
    %v449 = vadd.f32 %v102, %v448
    %v450 = vpop.f32.mrb[0].mxu0
    %451 = vmatprep.mubr.f32.mxu0 0.0
    %452 = vmatmul.mubr.f32.gmra.mrb[0].mxu0 %v160
    %v453 = vpop.f32.mrb[0].mxu0
    %v454 = vadd.f32 %v102, %v453
    %v455 = vpop.f32.mrb[0].mxu0
    %456 = vmatprep.mubr.f32.mxu0 0.0
    %457 = vmatmul.mubr.f32.gmra.mrb[0].mxu0 %v163
    %v458 = vpop.f32.mrb[0].mxu0
    %v459 = vadd.f32 %v102, %v458
    %v460 = vpop.f32.mrb[0].mxu0
    %461 = vmatprep.mubr.f32.mxu0 0.0
    %462 = vmatmul.mubr.f32.gmra.mrb[0].mxu0 %v166
    %v463 = vpop.f32.mrb[0].mxu0
    %v464 = vadd.f32 %v102, %v463
    %v465 = vpop.f32.mrb[0].mxu0
    %466 = vmatprep.mubr.f32.mxu0 0.0
    %467 = vmatmul.mubr.f32.gmra.mrb[0].mxu0 %v169
    %v468 = vpop.f32.mrb[0].mxu0
    %v469 = vadd.f32 %v102, %v468
    %v470 = vpop.f32.mrb[0].mxu0
    %471 = vmatprep.mubr.f32.mxu0 0.0
    %472 = vmatmul.mubr.f32.gmra.mrb[0].mxu0 %v172
    %v473 = vpop.f32.mrb[0].mxu0
    %v474 = vadd.f32 %v102, %v473
    %v475 = vpop.f32.mrb[0].mxu0
    %476 = vmatprep.mubr.f32.mxu0 0.0
    %477 = vmatmul.mubr.f32.gmra.mrb[0].mxu0 %v175
    %v478 = vpop.f32.mrb[0].mxu0
    %v479 = vadd.f32 %v102, %v478
    %v480 = vpop.f32.mrb[0].mxu0
    %481 = vmatprep.mubr.f32.mxu0 0.0
    %482 = vmatmul.mubr.f32.gmra.mrb[0].mxu0 %v178
    %v483 = vpop.f32.mrb[0].mxu0
    %v484 = vadd.f32 %v102, %v483
    %v485 = vpop.f32.mrb[0].mxu0
    %486 = vmatprep.mubr.f32.mxu0 0.0
    %487 = vmatmul.mubr.f32.gmra.mrb[0].mxu0 %v181
    %v488 = vpop.f32.mrb[0].mxu0
    %v489 = vadd.f32 %v102, %v488
    %v490 = vpop.f32.mrb[0].mxu0
    %491 = vmatprep.mubr.f32.mxu0 0.0
    %492 = vmatmul.mubr.f32.gmra.mrb[0].mxu0 %v184
    %v493 = vpop.f32.mrb[0].mxu0
    %v494 = vadd.f32 %v102, %v493
    %v495 = vpop.f32.mrb[0].mxu0
    %496 = vmatprep.mubr.f32.mxu0 0.0
    %497 = vmatmul.mubr.f32.gmra.mrb[0].mxu0 %v187
    %v498 = vpop.f32.mrb[0].mxu0
    %v499 = vadd.f32 %v102, %v498
    %v500 = vpop.f32.mrb[0].mxu0
    %501 = vmatprep.mubr.f32.mxu0 0.0
    %502 = vmatmul.mubr.f32.gmra.mrb[0].mxu0 %v190
    %v503 = vpop.f32.mrb[0].mxu0
    %v504 = vadd.f32 %v102, %v503
    %v505 = vpop.f32.mrb[0].mxu0
    %506 = vmatprep.mubr.f32.mxu0 0.0
    %507 = vmatmul.mubr.f32.gmra.mrb[0].mxu0 %v193
    %v508 = vpop.f32.mrb[0].mxu0
    %v509 = vadd.f32 %v102, %v508
    %v510 = vpop.f32.mrb[0].mxu0
    %511 = vmatprep.mubr.f32.mxu0 0.0
    %512 = vmatmul.mubr.f32.gmra.mrb[0].mxu0 %v196
    %v513 = vpop.f32.mrb[0].mxu0
    %v514 = vadd.f32 %v102, %v513
    %v515 = vpop.f32.mrb[0].mxu0
    %516 = vmatprep.mubr.f32.mxu0 0.0
    %517 = vmatmul.mubr.f32.gmra.mrb[0].mxu0 %v199
    %v518 = vpop.f32.mrb[0].mxu0
    %v519 = vadd.f32 %v102, %v518
    %v520 = vpop.f32.mrb[0].mxu0
    %521 = vmatprep.mubr.f32.mxu0 0.0
    %522 = vmatmul.mubr.f32.gmra.mrb[0].mxu0 %v202
    %v523 = vpop.f32.mrb[0].mxu0
    %v524 = vadd.f32 %v102, %v523
    %v525 = vpop.f32.mrb[0].mxu0
    %526 = vmatprep.mubr.f32.mxu0 0.0
    %527 = vmatmul.mubr.f32.gmra.mrb[0].mxu0 %v205
    %v528 = vpop.f32.mrb[0].mxu0
    %v529 = vadd.f32 %v102, %v528
    %v530 = vpop.f32.mrb[0].mxu0
    %531 = vmatprep.mubr.f32.mxu0 0.0
    %532 = vmatmul.mubr.f32.gmra.mrb[0].mxu0 %v208
    %v533 = vpop.f32.mrb[0].mxu0
    %v534 = vadd.f32 %v102, %v533
    %v535 = vpop.f32.mrb[0].mxu0
    %536 = vmatprep.mubr.f32.mxu0 0.0
    %537 = vmatmul.mubr.f32.gmra.mrb[0].mxu0 %v211
    %v538 = vpop.f32.mrb[0].mxu0
    %v539 = vadd.f32 %v102, %v538
    %v540 = vpop.f32.mrb[0].mxu0
    %541 = vmatprep.mubr.f32.mxu0 0.0
    %542 = vmatmul.mubr.f32.gmra.mrb[0].mxu0 %v214
    %v543 = vpop.f32.mrb[0].mxu0
    %v544 = vadd.f32 %v102, %v543
    %v545 = vpop.f32.mrb[0].mxu0
    %546 = vmatprep.mubr.f32.mxu0 0.0
    %547 = vmatmul.mubr.f32.gmra.mrb[0].mxu0 %v217
    %v548 = vpop.f32.mrb[0].mxu0
    %v549 = vadd.f32 %v102, %v548
    %v550 = vpop.f32.mrb[0].mxu0
    %551 = vmatprep.mubr.f32.mxu0 0.0
    %552 = vmatmul.mubr.f32.gmra.mrb[0].mxu0 %v220
    %v553 = vpop.f32.mrb[0].mxu0
    %v554 = vadd.f32 %v102, %v553
    %v555 = vpop.f32.mrb[0].mxu0
    %556 = vmatprep.mubr.f32.mxu0 0.0
    %557 = vmatmul.mubr.f32.gmra.mrb[0].mxu0 %v223
    %v558 = vpop.f32.mrb[0].mxu0
    %v559 = vadd.f32 %v102, %v558
    %v560 = vpop.f32.mrb[0].mxu0
    %561 = vmatprep.mubr.f32.mxu0 0.0
    %562 = vmatmul.mubr.f32.gmra.mrb[0].mxu0 %v226
    %v563 = vpop.f32.mrb[0].mxu0
    %v564 = vadd.f32 %v102, %v563
    %v565 = vpop.f32.mrb[0].mxu0
    %566 = vmatprep.mubr.f32.mxu0 0.0
    %567 = vmatmul.mubr.f32.gmra.mrb[0].mxu0 %v229
    %v568 = vpop.f32.mrb[0].mxu0
    %v569 = vadd.f32 %v102, %v568
    %v570 = vpop.f32.mrb[0].mxu0
    %571 = vmatprep.mubr.f32.mxu0 0.0
    %572 = vmatmul.mubr.f32.gmra.mrb[0].mxu0 %v232
    %v573 = vpop.f32.mrb[0].mxu0
    %v574 = vadd.f32 %v102, %v573
    %v575 = vpop.f32.mrb[0].mxu0
    %576 = vmatprep.mubr.f32.mxu0 0.0
    %577 = vmatmul.mubr.f32.gmra.mrb[0].mxu0 %v235
    %v578 = vpop.f32.mrb[0].mxu0
    %v579 = vadd.f32 %v102, %v578
    %v580 = vpop.f32.mrb[0].mxu0
    %581 = vmatprep.mubr.f32.mxu0 0.0
    %582 = vmatmul.mubr.f32.gmra.mrb[0].mxu0 %v238
    %v583 = vpop.f32.mrb[0].mxu0
    %v584 = vadd.f32 %v102, %v583
    %v585 = vpop.f32.mrb[0].mxu0
    %586 = vmatprep.mubr.f32.mxu0 0.0
    %587 = vmatmul.mubr.f32.gmra.mrb[0].mxu0 %v241
    %v588 = vpop.f32.mrb[0].mxu0
    %v589 = vadd.f32 %v102, %v588
    %v590 = vpop.f32.mrb[0].mxu0
    %591 = vmatprep.mubr.f32.mxu0 0.0
    %592 = vmatmul.mubr.f32.gmra.mrb[0].mxu0 %v244
    %v593 = vpop.f32.mrb[0].mxu0
    %v594 = vadd.f32 %v102, %v593
    %v595 = vpop.f32.mrb[0].mxu0
    %596 = vmatprep.mubr.f32.mxu0 0.0
    %597 = vmatmul.mubr.f32.gmra.mrb[0].mxu0 %v247
    %v598 = vpop.f32.mrb[0].mxu0
    %v599 = vadd.f32 %v102, %v598
    %v600 = vpop.f32.mrb[0].mxu0
    %601 = vmatprep.mubr.f32.mxu0 0.0
    %602 = vmatmul.mubr.f32.gmra.mrb[0].mxu0 %v250
    %v603 = vpop.f32.mrb[0].mxu0
    %v604 = vadd.f32 %v102, %v603
    %v605 = vpop.f32.mrb[0].mxu0
    %606 = vmatprep.mubr.f32.mxu0 0.0
    %607 = vmatmul.mubr.f32.gmra.mrb[0].mxu0 %v253
    %v608 = vpop.f32.mrb[0].mxu0
    %v609 = vadd.f32 %v102, %v608
    %v610 = vpop.f32.mrb[0].mxu0
    %611 = vmatprep.mubr.f32.mxu0 0.0
    %612 = vmatmul.mubr.f32.gmra.mrb[0].mxu0 %v256
    %v613 = vpop.f32.mrb[0].mxu0
    %v614 = vadd.f32 %v102, %v613
    %v615 = vpop.f32.mrb[0].mxu0
    %616 = vmatprep.mubr.f32.mxu0 0.0
    %617 = vmatmul.mubr.f32.gmra.mrb[0].mxu0 %v259
    %v618 = vpop.f32.mrb[0].mxu0
    %v619 = vadd.f32 %v102, %v618
    %v620 = vpop.f32.mrb[0].mxu0
    %621 = vmatprep.mubr.f32.mxu0 0.0
    %622 = vmatmul.mubr.f32.gmra.mrb[0].mxu0 %v262
    %v623 = vpop.f32.mrb[0].mxu0
    %v624 = vadd.f32 %v102, %v623
    %v625 = vpop.f32.mrb[0].mxu0
    %626 = vmatprep.mubr.f32.mxu0 0.0
    %627 = vmatmul.mubr.f32.gmra.mrb[0].mxu0 %v265
    %v628 = vpop.f32.mrb[0].mxu0
    %v629 = vadd.f32 %v102, %v628
    %v630 = vpop.f32.mrb[0].mxu0
    %631 = vmatprep.mubr.f32.mxu0 0.0
    %632 = vmatmul.mubr.f32.gmra.mrb[0].mxu0 %v268
    %v633 = vpop.f32.mrb[0].mxu0
    %v634 = vadd.f32 %v102, %v633
    %v635 = vpop.f32.mrb[0].mxu0
    %636 = vmatprep.mubr.f32.mxu0 0.0
    %637 = vmatmul.mubr.f32.gmra.mrb[0].mxu0 %v271
    %v638 = vpop.f32.mrb[0].mxu0
    %v639 = vadd.f32 %v102, %v638
    %v640 = vpop.f32.mrb[0].mxu0
    %641 = vmatprep.mubr.f32.mxu0 0.0
    %642 = vmatmul.mubr.f32.gmra.mrb[0].mxu0 %v274
    %v643 = vpop.f32.mrb[0].mxu0
    %v644 = vadd.f32 %v102, %v643
    %v645 = vpop.f32.mrb[0].mxu0
    %646 = vmatprep.mubr.f32.mxu0 0.0
    %647 = vmatmul.mubr.f32.gmra.mrb[0].mxu0 %v277
    %v648 = vpop.f32.mrb[0].mxu0
    %v649 = vadd.f32 %v102, %v648
    %v650 = vpop.f32.mrb[0].mxu0
    %651 = vmatprep.mubr.f32.mxu0 0.0
    %652 = vmatmul.mubr.f32.gmra.mrb[0].mxu0 %v280
    %v653 = vpop.f32.mrb[0].mxu0
    %v654 = vadd.f32 %v102, %v653
    %v655 = vpop.f32.mrb[0].mxu0
    %656 = vmatprep.mubr.f32.mxu0 0.0
    %657 = vmatmul.mubr.f32.gmra.mrb[0].mxu0 %v283
    %v658 = vpop.f32.mrb[0].mxu0
    %v659 = vadd.f32 %v102, %v658
    %v660 = vpop.f32.mrb[0].mxu0
    %661 = vmatprep.mubr.f32.mxu0 0.0
    %662 = vmatmul.mubr.f32.gmra.mrb[0].mxu0 %v286
    %v663 = vpop.f32.mrb[0].mxu0
    %v664 = vadd.f32 %v102, %v663
    %v665 = vpop.f32.mrb[0].mxu0
    %666 = vmatprep.mubr.f32.mxu0 0.0
    %667 = vmatmul.mubr.f32.gmra.mrb[0].mxu0 %v289
    %v668 = vpop.f32.mrb[0].mxu0
    %v669 = vadd.f32 %v102, %v668
    %v670 = vpop.f32.mrb[0].mxu0
    %671 = vmatprep.mubr.f32.mxu0 0.0
    %672 = vmatmul.mubr.f32.gmra.mrb[0].mxu0 %v292
    %v673 = vpop.f32.mrb[0].mxu0
    %v674 = vadd.f32 %v102, %v673
    %v675 = vpop.f32.mrb[0].mxu0
    %676 = vmatprep.mubr.f32.mxu0 0.0
    %677 = vmatmul.mubr.f32.gmra.mrb[0].mxu0 %v295
    %v678 = vpop.f32.mrb[0].mxu0
    %v679 = vadd.f32 %v102, %v678
    %v680 = vpop.f32.mrb[0].mxu0
    %681 = vdwg.mxu0
    %v682 = vmax.f32 %v364, 0.0
    %v683 = vmax.f32 %v369, 0.0
    %v684 = vmax.f32 %v374, 0.0
    %v685 = vmax.f32 %v379, 0.0
    %v686 = vmax.f32 %v384, 0.0
    %v687 = vmax.f32 %v389, 0.0
    %v688 = vmax.f32 %v394, 0.0
    %v689 = vmax.f32 %v399, 0.0
    %v690 = vmax.f32 %v404, 0.0
    %v691 = vmax.f32 %v409, 0.0
    %v692 = vmax.f32 %v414, 0.0
    %v693 = vmax.f32 %v419, 0.0
    %v694 = vmax.f32 %v424, 0.0
    %v695 = vmax.f32 %v429, 0.0
    %v696 = vmax.f32 %v434, 0.0
    %v697 = vmax.f32 %v439, 0.0
    %v698 = vmax.f32 %v444, 0.0
    %v699 = vmax.f32 %v449, 0.0
    %v700 = vmax.f32 %v454, 0.0
    %v701 = vmax.f32 %v459, 0.0
    %v702 = vmax.f32 %v464, 0.0
    %v703 = vmax.f32 %v469, 0.0
    %v704 = vmax.f32 %v474, 0.0
    %v705 = vmax.f32 %v479, 0.0
    %v706 = vmax.f32 %v484, 0.0
    %v707 = vmax.f32 %v489, 0.0
    %v708 = vmax.f32 %v494, 0.0
    %v709 = vmax.f32 %v499, 0.0
    %v710 = vmax.f32 %v504, 0.0
    %v711 = vmax.f32 %v509, 0.0
    %v712 = vmax.f32 %v514, 0.0
    %v713 = vmax.f32 %v519, 0.0
    %v714 = vmax.f32 %v524, 0.0
    %v715 = vmax.f32 %v529, 0.0
    %v716 = vmax.f32 %v534, 0.0
    %v717 = vmax.f32 %v539, 0.0
    %v718 = vmax.f32 %v544, 0.0
    %v719 = vmax.f32 %v549, 0.0
    %v720 = vmax.f32 %v554, 0.0
    %v721 = vmax.f32 %v559, 0.0
    %v722 = vmax.f32 %v564, 0.0
    %v723 = vmax.f32 %v569, 0.0
    %v724 = vmax.f32 %v574, 0.0
    %v725 = vmax.f32 %v579, 0.0
    %v726 = vmax.f32 %v584, 0.0
    %v727 = vmax.f32 %v589, 0.0
    %v728 = vmax.f32 %v594, 0.0
    %v729 = vmax.f32 %v599, 0.0
    %v730 = vmax.f32 %v604, 0.0
    %v731 = vmax.f32 %v609, 0.0
    %v732 = vmax.f32 %v614, 0.0
    %v733 = vmax.f32 %v619, 0.0
    %v734 = vmax.f32 %v624, 0.0
    %v735 = vmax.f32 %v629, 0.0
    %v736 = vmax.f32 %v634, 0.0
    %v737 = vmax.f32 %v639, 0.0
    %v738 = vmax.f32 %v644, 0.0
    %v739 = vmax.f32 %v649, 0.0
    %v740 = vmax.f32 %v654, 0.0
    %v741 = vmax.f32 %v659, 0.0
    %v742 = vmax.f32 %v664, 0.0
    %v743 = vmax.f32 %v669, 0.0
    %v744 = vmax.f32 %v674, 0.0
    %v745 = vmax.f32 %v679, 0.0
    %vm811 = vcmask 1040384
    %v812 = vrot.slane 0.0, 7
    %v813 = vsel %vm811, %v812, %v812
    %v814 = vrot.slane %v682, 7
    %v815 = vrot.slane %v683, 7
    %v816 = vsel %vm811, %v814, %v815
    %v817 = vrot.slane %v684, 7
    %v818 = vrot.slane %v685, 7
    %v819 = vsel %vm811, %v817, %v818
    %v820 = vrot.slane %v686, 7
    %v821 = vrot.slane %v687, 7
    %v822 = vsel %vm811, %v820, %v821
    %v823 = vrot.slane %v688, 7
    %v824 = vrot.slane %v689, 7
    %v825 = vsel %vm811, %v823, %v824
    %v826 = vrot.slane %v690, 7
    %v827 = vrot.slane %v691, 7
    %v828 = vsel %vm811, %v826, %v827
    %v829 = vrot.slane %v692, 7
    %v830 = vrot.slane %v693, 7
    %v831 = vsel %vm811, %v829, %v830
    %v832 = vrot.slane %v694, 7
    %v833 = vrot.slane %v695, 7
    %v834 = vsel %vm811, %v832, %v833
    %v835 = vrot.slane %v696, 7
    %v836 = vrot.slane %v697, 7
    %v837 = vsel %vm811, %v835, %v836
    %v838 = vrot.slane %v698, 7
    %v839 = vrot.slane %v699, 7
    %v840 = vsel %vm811, %v838, %v839
    %v841 = vrot.slane %v700, 7
    %v842 = vrot.slane %v701, 7
    %v843 = vsel %vm811, %v841, %v842
    %v844 = vrot.slane %v702, 7
    %v845 = vrot.slane %v703, 7
    %v846 = vsel %vm811, %v844, %v845
    %v847 = vrot.slane %v704, 7
    %v848 = vrot.slane %v705, 7
    %v849 = vsel %vm811, %v847, %v848
    %v850 = vrot.slane %v706, 7
    %v851 = vrot.slane %v707, 7
    %v852 = vsel %vm811, %v850, %v851
    %v853 = vrot.slane %v708, 7
    %v854 = vrot.slane %v709, 7
    %v855 = vsel %vm811, %v853, %v854
    %v856 = vrot.slane %v710, 7
    %v857 = vrot.slane %v711, 7
    %v858 = vsel %vm811, %v856, %v857
    %v859 = vrot.slane %v712, 7
    %v860 = vrot.slane %v713, 7
    %v861 = vsel %vm811, %v859, %v860
    %v862 = vrot.slane %v714, 7
    %v863 = vrot.slane %v715, 7
    %v864 = vsel %vm811, %v862, %v863
    %v865 = vrot.slane %v716, 7
    %v866 = vrot.slane %v717, 7
    %v867 = vsel %vm811, %v865, %v866
    %v868 = vrot.slane %v718, 7
    %v869 = vrot.slane %v719, 7
    %v870 = vsel %vm811, %v868, %v869
    %v871 = vrot.slane %v720, 7
    %v872 = vrot.slane %v721, 7
    %v873 = vsel %vm811, %v871, %v872
    %v874 = vrot.slane %v722, 7
    %v875 = vrot.slane %v723, 7
    %v876 = vsel %vm811, %v874, %v875
    %v877 = vrot.slane %v724, 7
    %v878 = vrot.slane %v725, 7
    %v879 = vsel %vm811, %v877, %v878
    %v880 = vrot.slane %v726, 7
    %v881 = vrot.slane %v727, 7
    %v882 = vsel %vm811, %v880, %v881
    %v883 = vrot.slane %v728, 7
    %v884 = vrot.slane %v729, 7
    %v885 = vsel %vm811, %v883, %v884
    %v886 = vrot.slane %v730, 7
    %v887 = vrot.slane %v731, 7
    %v888 = vsel %vm811, %v886, %v887
    %v889 = vrot.slane %v732, 7
    %v890 = vrot.slane %v733, 7
    %v891 = vsel %vm811, %v889, %v890
    %v892 = vrot.slane %v734, 7
    %v893 = vrot.slane %v735, 7
    %v894 = vsel %vm811, %v892, %v893
    %v895 = vrot.slane %v736, 7
    %v896 = vrot.slane %v737, 7
    %v897 = vsel %vm811, %v895, %v896
    %v898 = vrot.slane %v738, 7
    %v899 = vrot.slane %v739, 7
    %v900 = vsel %vm811, %v898, %v899
    %v901 = vrot.slane %v740, 7
    %v902 = vrot.slane %v741, 7
    %v903 = vsel %vm811, %v901, %v902
    %v904 = vrot.slane %v742, 7
    %v905 = vrot.slane %v743, 7
    %v906 = vsel %vm811, %v904, %v905
    %v907 = vrot.slane %v744, 7
    %v908 = vrot.slane %v745, 7
    %v909 = vsel %vm811, %v907, %v908
    %v1008 = vsel %vm811, 0.0, %v812
    %v1009 = vsel %vm811, 0.0, %v814
    %v1010 = vsel %vm811, 0.0, %v817
    %v1011 = vsel %vm811, 0.0, %v820
    %v1012 = vsel %vm811, 0.0, %v823
    %v1013 = vsel %vm811, 0.0, %v826
    %v1014 = vsel %vm811, 0.0, %v829
    %v1015 = vsel %vm811, 0.0, %v832
    %v1016 = vsel %vm811, 0.0, %v835
    %v1017 = vsel %vm811, 0.0, %v838
    %v1018 = vsel %vm811, 0.0, %v841
    %v1019 = vsel %vm811, 0.0, %v844
    %v1020 = vsel %vm811, 0.0, %v847
    %v1021 = vsel %vm811, 0.0, %v850
    %v1022 = vsel %vm811, 0.0, %v853
    %v1023 = vsel %vm811, 0.0, %v856
    %v1024 = vsel %vm811, 0.0, %v859
    %v1025 = vsel %vm811, 0.0, %v862
    %v1026 = vsel %vm811, 0.0, %v865
    %v1027 = vsel %vm811, 0.0, %v868
    %v1028 = vsel %vm811, 0.0, %v871
    %v1029 = vsel %vm811, 0.0, %v874
    %v1030 = vsel %vm811, 0.0, %v877
    %v1031 = vsel %vm811, 0.0, %v880
    %v1032 = vsel %vm811, 0.0, %v883
    %v1033 = vsel %vm811, 0.0, %v886
    %v1034 = vsel %vm811, 0.0, %v889
    %v1035 = vsel %vm811, 0.0, %v892
    %v1036 = vsel %vm811, 0.0, %v895
    %v1037 = vsel %vm811, 0.0, %v898
    %v1038 = vsel %vm811, 0.0, %v901
    %v1039 = vsel %vm811, 0.0, %v904
    %v1040 = vsel %vm811, 0.0, %v907
    %v1041 = vsel %vm811, %v812, 0.0
    %v1042 = vsel %vm811, %v815, 0.0
    %v1043 = vsel %vm811, %v818, 0.0
    %v1044 = vsel %vm811, %v821, 0.0
    %v1045 = vsel %vm811, %v824, 0.0
    %v1046 = vsel %vm811, %v827, 0.0
    %v1047 = vsel %vm811, %v830, 0.0
    %v1048 = vsel %vm811, %v833, 0.0
    %v1049 = vsel %vm811, %v836, 0.0
    %v1050 = vsel %vm811, %v839, 0.0
    %v1051 = vsel %vm811, %v842, 0.0
    %v1052 = vsel %vm811, %v845, 0.0
    %v1053 = vsel %vm811, %v848, 0.0
    %v1054 = vsel %vm811, %v851, 0.0
    %v1055 = vsel %vm811, %v854, 0.0
    %v1056 = vsel %vm811, %v857, 0.0
    %v1057 = vsel %vm811, %v860, 0.0
    %v1058 = vsel %vm811, %v863, 0.0
    %v1059 = vsel %vm811, %v866, 0.0
    %v1060 = vsel %vm811, %v869, 0.0
    %v1061 = vsel %vm811, %v872, 0.0
    %v1062 = vsel %vm811, %v875, 0.0
    %v1063 = vsel %vm811, %v878, 0.0
    %v1064 = vsel %vm811, %v881, 0.0
    %v1065 = vsel %vm811, %v884, 0.0
    %v1066 = vsel %vm811, %v887, 0.0
    %v1067 = vsel %vm811, %v890, 0.0
    %v1068 = vsel %vm811, %v893, 0.0
    %v1069 = vsel %vm811, %v896, 0.0
    %v1070 = vsel %vm811, %v899, 0.0
    %v1071 = vsel %vm811, %v902, 0.0
    %v1072 = vsel %vm811, %v905, 0.0
    %v1073 = vsel %vm811, %v908, 0.0
    %v1074 = vld [vmem:[%s3] sm:$0xff]
    %v1075 = vld [vmem:[%s3 + $0x8] sm:$0xff]
    %v1076 = vld [vmem:[%s3 + $0x10] sm:$0xff]
    %v1077 = vld [vmem:[%s3 + $0x18] sm:$0xff]
    %v1078 = vld [vmem:[%s3 + $0x20] sm:$0xff]
    %v1079 = vld [vmem:[%s3 + $0x28] sm:$0xff]
    %v1080 = vld [vmem:[%s3 + $0x30] sm:$0xff]
    %v1081 = vld [vmem:[%s3 + $0x38] sm:$0xff]
    %v1082 = vld [vmem:[%s3 + $0x40] sm:$0xff]
    %v1083 = vld [vmem:[%s3 + $0x48] sm:$0xff]
    %v1084 = vld [vmem:[%s3 + $0x50] sm:$0xff]
    %v1085 = vld [vmem:[%s3 + $0x58] sm:$0xff]
    %v1086 = vld [vmem:[%s3 + $0x60] sm:$0xff]
    %v1087 = vld [vmem:[%s3 + $0x68] sm:$0xff]
    %v1088 = vld [vmem:[%s3 + $0x70] sm:$0xff]
    %v1089 = vld [vmem:[%s3 + $0x78] sm:$0xff]
    %vm1152 = vcmask 1046528
    %v1153 = vrot.slane %v1008, 1
    %v1154 = vrot.slane %v813, 1
    %v1155 = vsel %vm1152, %v1153, %v1154
    %v1156 = vrot.slane %v1041, 1
    %v1157 = vsel %vm1152, %v1154, %v1156
    %v1158 = vrot.slane %v1009, 1
    %v1159 = vrot.slane %v816, 1
    %v1160 = vsel %vm1152, %v1158, %v1159
    %v1161 = vrot.slane %v1042, 1
    %v1162 = vsel %vm1152, %v1159, %v1161
    %v1163 = vrot.slane %v1010, 1
    %v1164 = vrot.slane %v819, 1
    %v1165 = vsel %vm1152, %v1163, %v1164
    %v1166 = vrot.slane %v1043, 1
    %v1167 = vsel %vm1152, %v1164, %v1166
    %v1168 = vrot.slane %v1011, 1
    %v1169 = vrot.slane %v822, 1
    %v1170 = vsel %vm1152, %v1168, %v1169
    %v1171 = vrot.slane %v1044, 1
    %v1172 = vsel %vm1152, %v1169, %v1171
    %v1173 = vrot.slane %v1012, 1
    %v1174 = vrot.slane %v825, 1
    %v1175 = vsel %vm1152, %v1173, %v1174
    %v1176 = vrot.slane %v1045, 1
    %v1177 = vsel %vm1152, %v1174, %v1176
    %v1178 = vrot.slane %v1013, 1
    %v1179 = vrot.slane %v828, 1
    %v1180 = vsel %vm1152, %v1178, %v1179
    %v1181 = vrot.slane %v1046, 1
    %v1182 = vsel %vm1152, %v1179, %v1181
    %v1183 = vrot.slane %v1014, 1
    %v1184 = vrot.slane %v831, 1
    %v1185 = vsel %vm1152, %v1183, %v1184
    %v1186 = vrot.slane %v1047, 1
    %v1187 = vsel %vm1152, %v1184, %v1186
    %v1188 = vrot.slane %v1015, 1
    %v1189 = vrot.slane %v834, 1
    %v1190 = vsel %vm1152, %v1188, %v1189
    %v1191 = vrot.slane %v1048, 1
    %v1192 = vsel %vm1152, %v1189, %v1191
    %v1193 = vrot.slane %v1016, 1
    %v1194 = vrot.slane %v837, 1
    %v1195 = vsel %vm1152, %v1193, %v1194
    %v1196 = vrot.slane %v1049, 1
    %v1197 = vsel %vm1152, %v1194, %v1196
    %v1198 = vrot.slane %v1017, 1
    %v1199 = vrot.slane %v840, 1
    %v1200 = vsel %vm1152, %v1198, %v1199
    %v1201 = vrot.slane %v1050, 1
    %v1202 = vsel %vm1152, %v1199, %v1201
    %v1203 = vrot.slane %v1018, 1
    %v1204 = vrot.slane %v843, 1
    %v1205 = vsel %vm1152, %v1203, %v1204
    %v1206 = vrot.slane %v1051, 1
    %v1207 = vsel %vm1152, %v1204, %v1206
    %v1208 = vrot.slane %v1019, 1
    %v1209 = vrot.slane %v846, 1
    %v1210 = vsel %vm1152, %v1208, %v1209
    %v1211 = vrot.slane %v1052, 1
    %v1212 = vsel %vm1152, %v1209, %v1211
    %v1213 = vrot.slane %v1020, 1
    %v1214 = vrot.slane %v849, 1
    %v1215 = vsel %vm1152, %v1213, %v1214
    %v1216 = vrot.slane %v1053, 1
    %v1217 = vsel %vm1152, %v1214, %v1216
    %v1218 = vrot.slane %v1021, 1
    %v1219 = vrot.slane %v852, 1
    %v1220 = vsel %vm1152, %v1218, %v1219
    %v1221 = vrot.slane %v1054, 1
    %v1222 = vsel %vm1152, %v1219, %v1221
    %v1223 = vrot.slane %v1022, 1
    %v1224 = vrot.slane %v855, 1
    %v1225 = vsel %vm1152, %v1223, %v1224
    %v1226 = vrot.slane %v1055, 1
    %v1227 = vsel %vm1152, %v1224, %v1226
    %v1228 = vrot.slane %v1023, 1
    %v1229 = vrot.slane %v858, 1
    %v1230 = vsel %vm1152, %v1228, %v1229
    %v1231 = vrot.slane %v1056, 1
    %v1232 = vsel %vm1152, %v1229, %v1231
    %v1233 = vrot.slane %v1025, 1
    %v1234 = vrot.slane %v864, 1
    %v1235 = vsel %vm1152, %v1233, %v1234
    %v1236 = vrot.slane %v1058, 1
    %v1237 = vsel %vm1152, %v1234, %v1236
    %v1238 = vrot.slane %v1026, 1
    %v1239 = vrot.slane %v867, 1
    %v1240 = vsel %vm1152, %v1238, %v1239
    %v1241 = vrot.slane %v1059, 1
    %v1242 = vsel %vm1152, %v1239, %v1241
    %v1243 = vrot.slane %v1027, 1
    %v1244 = vrot.slane %v870, 1
    %v1245 = vsel %vm1152, %v1243, %v1244
    %v1246 = vrot.slane %v1060, 1
    %v1247 = vsel %vm1152, %v1244, %v1246
    %v1248 = vrot.slane %v1028, 1
    %v1249 = vrot.slane %v873, 1
    %v1250 = vsel %vm1152, %v1248, %v1249
    %v1251 = vrot.slane %v1061, 1
    %v1252 = vsel %vm1152, %v1249, %v1251
    %v1253 = vrot.slane %v1029, 1
    %v1254 = vrot.slane %v876, 1
    %v1255 = vsel %vm1152, %v1253, %v1254
    %v1256 = vrot.slane %v1062, 1
    %v1257 = vsel %vm1152, %v1254, %v1256
    %v1258 = vrot.slane %v1030, 1
    %v1259 = vrot.slane %v879, 1
    %v1260 = vsel %vm1152, %v1258, %v1259
    %v1261 = vrot.slane %v1063, 1
    %v1262 = vsel %vm1152, %v1259, %v1261
    %v1263 = vrot.slane %v1031, 1
    %v1264 = vrot.slane %v882, 1
    %v1265 = vsel %vm1152, %v1263, %v1264
    %v1266 = vrot.slane %v1064, 1
    %v1267 = vsel %vm1152, %v1264, %v1266
    %v1268 = vrot.slane %v1032, 1
    %v1269 = vrot.slane %v885, 1
    %v1270 = vsel %vm1152, %v1268, %v1269
    %v1271 = vrot.slane %v1065, 1
    %v1272 = vsel %vm1152, %v1269, %v1271
    %v1273 = vrot.slane %v1033, 1
    %v1274 = vrot.slane %v888, 1
    %v1275 = vsel %vm1152, %v1273, %v1274
    %v1276 = vrot.slane %v1066, 1
    %v1277 = vsel %vm1152, %v1274, %v1276
    %v1278 = vrot.slane %v1034, 1
    %v1279 = vrot.slane %v891, 1
    %v1280 = vsel %vm1152, %v1278, %v1279
    %v1281 = vrot.slane %v1067, 1
    %v1282 = vsel %vm1152, %v1279, %v1281
    %v1283 = vrot.slane %v1035, 1
    %v1284 = vrot.slane %v894, 1
    %v1285 = vsel %vm1152, %v1283, %v1284
    %v1286 = vrot.slane %v1068, 1
    %v1287 = vsel %vm1152, %v1284, %v1286
    %v1288 = vrot.slane %v1036, 1
    %v1289 = vrot.slane %v897, 1
    %v1290 = vsel %vm1152, %v1288, %v1289
    %v1291 = vrot.slane %v1069, 1
    %v1292 = vsel %vm1152, %v1289, %v1291
    %v1293 = vrot.slane %v1037, 1
    %v1294 = vrot.slane %v900, 1
    %v1295 = vsel %vm1152, %v1293, %v1294
    %v1296 = vrot.slane %v1070, 1
    %v1297 = vsel %vm1152, %v1294, %v1296
    %v1298 = vrot.slane %v1038, 1
    %v1299 = vrot.slane %v903, 1
    %v1300 = vsel %vm1152, %v1298, %v1299
    %v1301 = vrot.slane %v1071, 1
    %v1302 = vsel %vm1152, %v1299, %v1301
    %v1303 = vrot.slane %v1039, 1
    %v1304 = vrot.slane %v906, 1
    %v1305 = vsel %vm1152, %v1303, %v1304
    %v1306 = vrot.slane %v1072, 1
    %v1307 = vsel %vm1152, %v1304, %v1306
    %s1370 = scalar_lea.vmem %s3, 128
    %v1371 = vld [vmem:[%s1370] sm:$0xff]
    %v1372 = vld [vmem:[%s1370 + $0x8] sm:$0xff]
    %v1373 = vld [vmem:[%s1370 + $0x10] sm:$0xff]
    %v1374 = vld [vmem:[%s1370 + $0x18] sm:$0xff]
    %v1375 = vld [vmem:[%s1370 + $0x20] sm:$0xff]
    %v1376 = vld [vmem:[%s1370 + $0x28] sm:$0xff]
    %v1377 = vld [vmem:[%s1370 + $0x30] sm:$0xff]
    %v1378 = vld [vmem:[%s1370 + $0x38] sm:$0xff]
    %v1379 = vld [vmem:[%s1370 + $0x40] sm:$0xff]
    %v1380 = vld [vmem:[%s1370 + $0x48] sm:$0xff]
    %v1381 = vld [vmem:[%s1370 + $0x50] sm:$0xff]
    %v1382 = vld [vmem:[%s1370 + $0x58] sm:$0xff]
    %v1383 = vld [vmem:[%s1370 + $0x60] sm:$0xff]
    %v1384 = vld [vmem:[%s1370 + $0x68] sm:$0xff]
    %v1385 = vld [vmem:[%s1370 + $0x70] sm:$0xff]
    %v1386 = vld [vmem:[%s1370 + $0x78] sm:$0xff]
    %1387 = vmatprep.subr.mxu0 0.0
    %1388 = vmatpush1.msra.mxu0 %v1371
    %1389 = vmatprep.subr.mxu0 0.0
    %1390 = vmatpush1.msra.mxu0 %v1372
    %1391 = vmatprep.subr.mxu0 0.0
    %1392 = vmatpush1.msra.mxu0 %v1373
    %1393 = vmatprep.subr.mxu0 0.0
    %1394 = vmatpush1.msra.mxu0 %v1374
    %1395 = vmatprep.subr.mxu0 0.0
    %1396 = vmatpush1.msra.mxu0 %v1375
    %1397 = vmatprep.subr.mxu0 0.0
    %1398 = vmatpush1.msra.mxu0 %v1376
    %1399 = vmatprep.subr.mxu0 0.0
    %1400 = vmatpush1.msra.mxu0 %v1377
    %1401 = vmatprep.subr.mxu0 0.0
    %1402 = vmatpush1.msra.mxu0 %v1378
    %1403 = vmatprep.subr.mxu0 0.0
    %1404 = vmatpush1.msra.mxu0 %v1379
    %1405 = vmatprep.subr.mxu0 0.0
    %1406 = vmatpush1.msra.mxu0 %v1380
    %1407 = vmatprep.subr.mxu0 0.0
    %1408 = vmatpush1.msra.mxu0 %v1381
    %1409 = vmatprep.subr.mxu0 0.0
    %1410 = vmatpush1.msra.mxu0 %v1382
    %1411 = vmatprep.subr.mxu0 0.0
    %1412 = vmatpush1.msra.mxu0 %v1383
    %1413 = vmatprep.subr.mxu0 0.0
    %1414 = vmatpush1.msra.mxu0 %v1384
    %1415 = vmatprep.subr.mxu0 0.0
    %1416 = vmatpush1.msra.mxu0 %v1385
    %1417 = vmatprep.subr.mxu0 0.0
    %1418 = vmatpush1.msra.mxu0 %v1386
    %1419 = vmatprep.subr.mxu0 0.0
    %1420 = vmatpush1.msra.mxu0 0.0
    %1421 = vmatprep.subr.mxu0 0.0
    %1422 = vmatpush1.msra.mxu0 0.0
    %1423 = vmatprep.subr.mxu0 0.0
    %1424 = vmatpush1.msra.mxu0 0.0
    %1425 = vmatprep.subr.mxu0 0.0
    %1426 = vmatpush1.msra.mxu0 0.0
    %1427 = vmatprep.subr.mxu0 0.0
    %1428 = vmatpush1.msra.mxu0 0.0
    %1429 = vmatprep.subr.mxu0 0.0
    %1430 = vmatpush1.msra.mxu0 0.0
    %1431 = vmatprep.subr.mxu0 0.0
    %1432 = vmatpush1.msra.mxu0 0.0
    %1433 = vmatprep.subr.mxu0 0.0
    %1434 = vmatpush1.msra.mxu0 0.0
    %1435 = vmatprep.subr.mxu0 0.0
    %1436 = vmatpush1.msra.mxu0 0.0
    %1437 = vmatprep.subr.mxu0 0.0
    %1438 = vmatpush1.msra.mxu0 0.0
    %1439 = vmatprep.subr.mxu0 0.0
    %1440 = vmatpush1.msra.mxu0 0.0
    %1441 = vmatprep.subr.mxu0 0.0
    %1442 = vmatpush1.msra.mxu0 0.0
    %1443 = vmatprep.subr.mxu0 0.0
    %1444 = vmatpush1.msra.mxu0 0.0
    %1445 = vmatprep.subr.mxu0 0.0
    %1446 = vmatpush1.msra.mxu0 0.0
    %1447 = vmatprep.subr.mxu0 0.0
    %1448 = vmatpush1.msra.mxu0 0.0
    %1449 = vmatprep.subr.mxu0 0.0
    %1450 = vmatpush1.msra.mxu0 0.0
    %1451 = vmatprep.mubr.f32.mxu0 0.0
    %1452 = vmatmul.mubr.f32.gmra.mrb[0].mxu0 %v1155
    %v1453 = vpop.f32.mrb[0].mxu0
    %v1454 = vadd.f32 0.0, %v1453
    %v1455 = vpop.f32.mrb[0].mxu0
    %1456 = vmatprep.mubr.f32.mxu0 0.0
    %1457 = vmatmul.mubr.f32.gmra.mrb[0].mxu0 %v1157
    %v1458 = vpop.f32.mrb[0].mxu0
    %v1459 = vadd.f32 0.0, %v1458
    %v1460 = vpop.f32.mrb[0].mxu0
    %1461 = vmatprep.mubr.f32.mxu0 0.0
    %1462 = vmatmul.mubr.f32.gmra.mrb[0].mxu0 %v1160
    %v1463 = vpop.f32.mrb[0].mxu0
    %v1464 = vadd.f32 0.0, %v1463
    %v1465 = vpop.f32.mrb[0].mxu0
    %1466 = vmatprep.mubr.f32.mxu0 0.0
    %1467 = vmatmul.mubr.f32.gmra.mrb[0].mxu0 %v1162
    %v1468 = vpop.f32.mrb[0].mxu0
    %v1469 = vadd.f32 0.0, %v1468
    %v1470 = vpop.f32.mrb[0].mxu0
    %1471 = vmatprep.mubr.f32.mxu0 0.0
    %1472 = vmatmul.mubr.f32.gmra.mrb[0].mxu0 %v1165
    %v1473 = vpop.f32.mrb[0].mxu0
    %v1474 = vadd.f32 0.0, %v1473
    %v1475 = vpop.f32.mrb[0].mxu0
    %1476 = vmatprep.mubr.f32.mxu0 0.0
    %1477 = vmatmul.mubr.f32.gmra.mrb[0].mxu0 %v1167
    %v1478 = vpop.f32.mrb[0].mxu0
    %v1479 = vadd.f32 0.0, %v1478
    %v1480 = vpop.f32.mrb[0].mxu0
    %1481 = vmatprep.mubr.f32.mxu0 0.0
    %1482 = vmatmul.mubr.f32.gmra.mrb[0].mxu0 %v1170
    %v1483 = vpop.f32.mrb[0].mxu0
    %v1484 = vadd.f32 0.0, %v1483
    %v1485 = vpop.f32.mrb[0].mxu0
    %1486 = vmatprep.mubr.f32.mxu0 0.0
    %1487 = vmatmul.mubr.f32.gmra.mrb[0].mxu0 %v1172
    %v1488 = vpop.f32.mrb[0].mxu0
    %v1489 = vadd.f32 0.0, %v1488
    %v1490 = vpop.f32.mrb[0].mxu0
    %1491 = vmatprep.mubr.f32.mxu0 0.0
    %1492 = vmatmul.mubr.f32.gmra.mrb[0].mxu0 %v1175
    %v1493 = vpop.f32.mrb[0].mxu0
    %v1494 = vadd.f32 0.0, %v1493
    %v1495 = vpop.f32.mrb[0].mxu0
    %1496 = vmatprep.mubr.f32.mxu0 0.0
    %1497 = vmatmul.mubr.f32.gmra.mrb[0].mxu0 %v1177
    %v1498 = vpop.f32.mrb[0].mxu0
    %v1499 = vadd.f32 0.0, %v1498
    %v1500 = vpop.f32.mrb[0].mxu0
    %1501 = vmatprep.mubr.f32.mxu0 0.0
    %1502 = vmatmul.mubr.f32.gmra.mrb[0].mxu0 %v1180
    %v1503 = vpop.f32.mrb[0].mxu0
    %v1504 = vadd.f32 0.0, %v1503
    %v1505 = vpop.f32.mrb[0].mxu0
    %1506 = vmatprep.mubr.f32.mxu0 0.0
    %1507 = vmatmul.mubr.f32.gmra.mrb[0].mxu0 %v1182
    %v1508 = vpop.f32.mrb[0].mxu0
    %v1509 = vadd.f32 0.0, %v1508
    %v1510 = vpop.f32.mrb[0].mxu0
    %1511 = vmatprep.mubr.f32.mxu0 0.0
    %1512 = vmatmul.mubr.f32.gmra.mrb[0].mxu0 %v1185
    %v1513 = vpop.f32.mrb[0].mxu0
    %v1514 = vadd.f32 0.0, %v1513
    %v1515 = vpop.f32.mrb[0].mxu0
    %1516 = vmatprep.mubr.f32.mxu0 0.0
    %1517 = vmatmul.mubr.f32.gmra.mrb[0].mxu0 %v1187
    %v1518 = vpop.f32.mrb[0].mxu0
    %v1519 = vadd.f32 0.0, %v1518
    %v1520 = vpop.f32.mrb[0].mxu0
    %1521 = vmatprep.mubr.f32.mxu0 0.0
    %1522 = vmatmul.mubr.f32.gmra.mrb[0].mxu0 %v1190
    %v1523 = vpop.f32.mrb[0].mxu0
    %v1524 = vadd.f32 0.0, %v1523
    %v1525 = vpop.f32.mrb[0].mxu0
    %1526 = vmatprep.mubr.f32.mxu0 0.0
    %1527 = vmatmul.mubr.f32.gmra.mrb[0].mxu0 %v1192
    %v1528 = vpop.f32.mrb[0].mxu0
    %v1529 = vadd.f32 0.0, %v1528
    %v1530 = vpop.f32.mrb[0].mxu0
    %1531 = vmatprep.mubr.f32.mxu0 0.0
    %1532 = vmatmul.mubr.f32.gmra.mrb[0].mxu0 %v1195
    %v1533 = vpop.f32.mrb[0].mxu0
    %v1534 = vadd.f32 0.0, %v1533
    %v1535 = vpop.f32.mrb[0].mxu0
    %1536 = vmatprep.mubr.f32.mxu0 0.0
    %1537 = vmatmul.mubr.f32.gmra.mrb[0].mxu0 %v1197
    %v1538 = vpop.f32.mrb[0].mxu0
    %v1539 = vadd.f32 0.0, %v1538
    %v1540 = vpop.f32.mrb[0].mxu0
    %1541 = vmatprep.mubr.f32.mxu0 0.0
    %1542 = vmatmul.mubr.f32.gmra.mrb[0].mxu0 %v1200
    %v1543 = vpop.f32.mrb[0].mxu0
    %v1544 = vadd.f32 0.0, %v1543
    %v1545 = vpop.f32.mrb[0].mxu0
    %1546 = vmatprep.mubr.f32.mxu0 0.0
    %1547 = vmatmul.mubr.f32.gmra.mrb[0].mxu0 %v1202
    %v1548 = vpop.f32.mrb[0].mxu0
    %v1549 = vadd.f32 0.0, %v1548
    %v1550 = vpop.f32.mrb[0].mxu0
    %1551 = vmatprep.mubr.f32.mxu0 0.0
    %1552 = vmatmul.mubr.f32.gmra.mrb[0].mxu0 %v1205
    %v1553 = vpop.f32.mrb[0].mxu0
    %v1554 = vadd.f32 0.0, %v1553
    %v1555 = vpop.f32.mrb[0].mxu0
    %1556 = vmatprep.mubr.f32.mxu0 0.0
    %1557 = vmatmul.mubr.f32.gmra.mrb[0].mxu0 %v1207
    %v1558 = vpop.f32.mrb[0].mxu0
    %v1559 = vadd.f32 0.0, %v1558
    %v1560 = vpop.f32.mrb[0].mxu0
    %1561 = vmatprep.mubr.f32.mxu0 0.0
    %1562 = vmatmul.mubr.f32.gmra.mrb[0].mxu0 %v1210
    %v1563 = vpop.f32.mrb[0].mxu0
    %v1564 = vadd.f32 0.0, %v1563
    %v1565 = vpop.f32.mrb[0].mxu0
    %1566 = vmatprep.mubr.f32.mxu0 0.0
    %1567 = vmatmul.mubr.f32.gmra.mrb[0].mxu0 %v1212
    %v1568 = vpop.f32.mrb[0].mxu0
    %v1569 = vadd.f32 0.0, %v1568
    %v1570 = vpop.f32.mrb[0].mxu0
    %1571 = vmatprep.mubr.f32.mxu0 0.0
    %1572 = vmatmul.mubr.f32.gmra.mrb[0].mxu0 %v1215
    %v1573 = vpop.f32.mrb[0].mxu0
    %v1574 = vadd.f32 0.0, %v1573
    %v1575 = vpop.f32.mrb[0].mxu0
    %1576 = vmatprep.mubr.f32.mxu0 0.0
    %1577 = vmatmul.mubr.f32.gmra.mrb[0].mxu0 %v1217
    %v1578 = vpop.f32.mrb[0].mxu0
    %v1579 = vadd.f32 0.0, %v1578
    %v1580 = vpop.f32.mrb[0].mxu0
    %1581 = vmatprep.mubr.f32.mxu0 0.0
    %1582 = vmatmul.mubr.f32.gmra.mrb[0].mxu0 %v1220
    %v1583 = vpop.f32.mrb[0].mxu0
    %v1584 = vadd.f32 0.0, %v1583
    %v1585 = vpop.f32.mrb[0].mxu0
    %1586 = vmatprep.mubr.f32.mxu0 0.0
    %1587 = vmatmul.mubr.f32.gmra.mrb[0].mxu0 %v1222
    %v1588 = vpop.f32.mrb[0].mxu0
    %v1589 = vadd.f32 0.0, %v1588
    %v1590 = vpop.f32.mrb[0].mxu0
    %1591 = vmatprep.mubr.f32.mxu0 0.0
    %1592 = vmatmul.mubr.f32.gmra.mrb[0].mxu0 %v1225
    %v1593 = vpop.f32.mrb[0].mxu0
    %v1594 = vadd.f32 0.0, %v1593
    %v1595 = vpop.f32.mrb[0].mxu0
    %1596 = vmatprep.mubr.f32.mxu0 0.0
    %1597 = vmatmul.mubr.f32.gmra.mrb[0].mxu0 %v1227
    %v1598 = vpop.f32.mrb[0].mxu0
    %v1599 = vadd.f32 0.0, %v1598
    %v1600 = vpop.f32.mrb[0].mxu0
    %1601 = vmatprep.mubr.f32.mxu0 0.0
    %1602 = vmatmul.mubr.f32.gmra.mrb[0].mxu0 %v1230
    %v1603 = vpop.f32.mrb[0].mxu0
    %v1604 = vadd.f32 0.0, %v1603
    %v1605 = vpop.f32.mrb[0].mxu0
    %1606 = vmatprep.mubr.f32.mxu0 0.0
    %1607 = vmatmul.mubr.f32.gmra.mrb[0].mxu0 %v1232
    %v1608 = vpop.f32.mrb[0].mxu0
    %v1609 = vadd.f32 0.0, %v1608
    %v1610 = vpop.f32.mrb[0].mxu0
    %1611 = vmatprep.mubr.f32.mxu0 0.0
    %1612 = vmatmul.mubr.f32.gmra.mrb[0].mxu0 %v1155
    %v1613 = vpop.f32.mrb[0].mxu0
    %v1614 = vadd.f32 0.0, %v1613
    %v1615 = vpop.f32.mrb[0].mxu0
    %1616 = vmatprep.mubr.f32.mxu0 0.0
    %1617 = vmatmul.mubr.f32.gmra.mrb[0].mxu0 %v1157
    %v1618 = vpop.f32.mrb[0].mxu0
    %v1619 = vadd.f32 0.0, %v1618
    %v1620 = vpop.f32.mrb[0].mxu0
    %1621 = vmatprep.mubr.f32.mxu0 0.0
    %1622 = vmatmul.mubr.f32.gmra.mrb[0].mxu0 %v1235
    %v1623 = vpop.f32.mrb[0].mxu0
    %v1624 = vadd.f32 0.0, %v1623
    %v1625 = vpop.f32.mrb[0].mxu0
    %1626 = vmatprep.mubr.f32.mxu0 0.0
    %1627 = vmatmul.mubr.f32.gmra.mrb[0].mxu0 %v1237
    %v1628 = vpop.f32.mrb[0].mxu0
    %v1629 = vadd.f32 0.0, %v1628
    %v1630 = vpop.f32.mrb[0].mxu0
    %1631 = vmatprep.mubr.f32.mxu0 0.0
    %1632 = vmatmul.mubr.f32.gmra.mrb[0].mxu0 %v1240
    %v1633 = vpop.f32.mrb[0].mxu0
    %v1634 = vadd.f32 0.0, %v1633
    %v1635 = vpop.f32.mrb[0].mxu0
    %1636 = vmatprep.mubr.f32.mxu0 0.0
    %1637 = vmatmul.mubr.f32.gmra.mrb[0].mxu0 %v1242
    %v1638 = vpop.f32.mrb[0].mxu0
    %v1639 = vadd.f32 0.0, %v1638
    %v1640 = vpop.f32.mrb[0].mxu0
    %1641 = vmatprep.mubr.f32.mxu0 0.0
    %1642 = vmatmul.mubr.f32.gmra.mrb[0].mxu0 %v1245
    %v1643 = vpop.f32.mrb[0].mxu0
    %v1644 = vadd.f32 0.0, %v1643
    %v1645 = vpop.f32.mrb[0].mxu0
    %1646 = vmatprep.mubr.f32.mxu0 0.0
    %1647 = vmatmul.mubr.f32.gmra.mrb[0].mxu0 %v1247
    %v1648 = vpop.f32.mrb[0].mxu0
    %v1649 = vadd.f32 0.0, %v1648
    %v1650 = vpop.f32.mrb[0].mxu0
    %1651 = vmatprep.mubr.f32.mxu0 0.0
    %1652 = vmatmul.mubr.f32.gmra.mrb[0].mxu0 %v1250
    %v1653 = vpop.f32.mrb[0].mxu0
    %v1654 = vadd.f32 0.0, %v1653
    %v1655 = vpop.f32.mrb[0].mxu0
    %1656 = vmatprep.mubr.f32.mxu0 0.0
    %1657 = vmatmul.mubr.f32.gmra.mrb[0].mxu0 %v1252
    %v1658 = vpop.f32.mrb[0].mxu0
    %v1659 = vadd.f32 0.0, %v1658
    %v1660 = vpop.f32.mrb[0].mxu0
    %1661 = vmatprep.mubr.f32.mxu0 0.0
    %1662 = vmatmul.mubr.f32.gmra.mrb[0].mxu0 %v1255
    %v1663 = vpop.f32.mrb[0].mxu0
    %v1664 = vadd.f32 0.0, %v1663
    %v1665 = vpop.f32.mrb[0].mxu0
    %1666 = vmatprep.mubr.f32.mxu0 0.0
    %1667 = vmatmul.mubr.f32.gmra.mrb[0].mxu0 %v1257
    %v1668 = vpop.f32.mrb[0].mxu0
    %v1669 = vadd.f32 0.0, %v1668
    %v1670 = vpop.f32.mrb[0].mxu0
    %1671 = vmatprep.mubr.f32.mxu0 0.0
    %1672 = vmatmul.mubr.f32.gmra.mrb[0].mxu0 %v1260
    %v1673 = vpop.f32.mrb[0].mxu0
    %v1674 = vadd.f32 0.0, %v1673
    %v1675 = vpop.f32.mrb[0].mxu0
    %1676 = vmatprep.mubr.f32.mxu0 0.0
    %1677 = vmatmul.mubr.f32.gmra.mrb[0].mxu0 %v1262
    %v1678 = vpop.f32.mrb[0].mxu0
    %v1679 = vadd.f32 0.0, %v1678
    %v1680 = vpop.f32.mrb[0].mxu0
    %1681 = vmatprep.mubr.f32.mxu0 0.0
    %1682 = vmatmul.mubr.f32.gmra.mrb[0].mxu0 %v1265
    %v1683 = vpop.f32.mrb[0].mxu0
    %v1684 = vadd.f32 0.0, %v1683
    %v1685 = vpop.f32.mrb[0].mxu0
    %1686 = vmatprep.mubr.f32.mxu0 0.0
    %1687 = vmatmul.mubr.f32.gmra.mrb[0].mxu0 %v1267
    %v1688 = vpop.f32.mrb[0].mxu0
    %v1689 = vadd.f32 0.0, %v1688
    %v1690 = vpop.f32.mrb[0].mxu0
    %1691 = vmatprep.mubr.f32.mxu0 0.0
    %1692 = vmatmul.mubr.f32.gmra.mrb[0].mxu0 %v1270
    %v1693 = vpop.f32.mrb[0].mxu0
    %v1694 = vadd.f32 0.0, %v1693
    %v1695 = vpop.f32.mrb[0].mxu0
    %1696 = vmatprep.mubr.f32.mxu0 0.0
    %1697 = vmatmul.mubr.f32.gmra.mrb[0].mxu0 %v1272
    %v1698 = vpop.f32.mrb[0].mxu0
    %v1699 = vadd.f32 0.0, %v1698
    %v1700 = vpop.f32.mrb[0].mxu0
    %1701 = vmatprep.mubr.f32.mxu0 0.0
    %1702 = vmatmul.mubr.f32.gmra.mrb[0].mxu0 %v1275
    %v1703 = vpop.f32.mrb[0].mxu0
    %v1704 = vadd.f32 0.0, %v1703
    %v1705 = vpop.f32.mrb[0].mxu0
    %1706 = vmatprep.mubr.f32.mxu0 0.0
    %1707 = vmatmul.mubr.f32.gmra.mrb[0].mxu0 %v1277
    %v1708 = vpop.f32.mrb[0].mxu0
    %v1709 = vadd.f32 0.0, %v1708
    %v1710 = vpop.f32.mrb[0].mxu0
    %1711 = vmatprep.mubr.f32.mxu0 0.0
    %1712 = vmatmul.mubr.f32.gmra.mrb[0].mxu0 %v1280
    %v1713 = vpop.f32.mrb[0].mxu0
    %v1714 = vadd.f32 0.0, %v1713
    %v1715 = vpop.f32.mrb[0].mxu0
    %1716 = vmatprep.mubr.f32.mxu0 0.0
    %1717 = vmatmul.mubr.f32.gmra.mrb[0].mxu0 %v1282
    %v1718 = vpop.f32.mrb[0].mxu0
    %v1719 = vadd.f32 0.0, %v1718
    %v1720 = vpop.f32.mrb[0].mxu0
    %1721 = vmatprep.mubr.f32.mxu0 0.0
    %1722 = vmatmul.mubr.f32.gmra.mrb[0].mxu0 %v1285
    %v1723 = vpop.f32.mrb[0].mxu0
    %v1724 = vadd.f32 0.0, %v1723
    %v1725 = vpop.f32.mrb[0].mxu0
    %1726 = vmatprep.mubr.f32.mxu0 0.0
    %1727 = vmatmul.mubr.f32.gmra.mrb[0].mxu0 %v1287
    %v1728 = vpop.f32.mrb[0].mxu0
    %v1729 = vadd.f32 0.0, %v1728
    %v1730 = vpop.f32.mrb[0].mxu0
    %1731 = vmatprep.mubr.f32.mxu0 0.0
    %1732 = vmatmul.mubr.f32.gmra.mrb[0].mxu0 %v1290
    %v1733 = vpop.f32.mrb[0].mxu0
    %v1734 = vadd.f32 0.0, %v1733
    %v1735 = vpop.f32.mrb[0].mxu0
    %1736 = vmatprep.mubr.f32.mxu0 0.0
    %1737 = vmatmul.mubr.f32.gmra.mrb[0].mxu0 %v1292
    %v1738 = vpop.f32.mrb[0].mxu0
    %v1739 = vadd.f32 0.0, %v1738
    %v1740 = vpop.f32.mrb[0].mxu0
    %1741 = vmatprep.mubr.f32.mxu0 0.0
    %1742 = vmatmul.mubr.f32.gmra.mrb[0].mxu0 %v1295
    %v1743 = vpop.f32.mrb[0].mxu0
    %v1744 = vadd.f32 0.0, %v1743
    %v1745 = vpop.f32.mrb[0].mxu0
    %1746 = vmatprep.mubr.f32.mxu0 0.0
    %1747 = vmatmul.mubr.f32.gmra.mrb[0].mxu0 %v1297
    %v1748 = vpop.f32.mrb[0].mxu0
    %v1749 = vadd.f32 0.0, %v1748
    %v1750 = vpop.f32.mrb[0].mxu0
    %1751 = vmatprep.mubr.f32.mxu0 0.0
    %1752 = vmatmul.mubr.f32.gmra.mrb[0].mxu0 %v1300
    %v1753 = vpop.f32.mrb[0].mxu0
    %v1754 = vadd.f32 0.0, %v1753
    %v1755 = vpop.f32.mrb[0].mxu0
    %1756 = vmatprep.mubr.f32.mxu0 0.0
    %1757 = vmatmul.mubr.f32.gmra.mrb[0].mxu0 %v1302
    %v1758 = vpop.f32.mrb[0].mxu0
    %v1759 = vadd.f32 0.0, %v1758
    %v1760 = vpop.f32.mrb[0].mxu0
    %1761 = vmatprep.mubr.f32.mxu0 0.0
    %1762 = vmatmul.mubr.f32.gmra.mrb[0].mxu0 %v1305
    %v1763 = vpop.f32.mrb[0].mxu0
    %v1764 = vadd.f32 0.0, %v1763
    %v1765 = vpop.f32.mrb[0].mxu0
    %1766 = vmatprep.mubr.f32.mxu0 0.0
    %1767 = vmatmul.mubr.f32.gmra.mrb[0].mxu0 %v1307
    %v1768 = vpop.f32.mrb[0].mxu0
    %v1769 = vadd.f32 0.0, %v1768
    %v1770 = vpop.f32.mrb[0].mxu0
    %1771 = vdwg.mxu0
    %1772 = vmatprep.subr.mxu0 0.0
    %1773 = vmatpush1.msra.mxu0 %v1074
    %1774 = vmatprep.subr.mxu0 0.0
    %1775 = vmatpush1.msra.mxu0 %v1075
    %1776 = vmatprep.subr.mxu0 0.0
    %1777 = vmatpush1.msra.mxu0 %v1076
    %1778 = vmatprep.subr.mxu0 0.0
    %1779 = vmatpush1.msra.mxu0 %v1077
    %1780 = vmatprep.subr.mxu0 0.0
    %1781 = vmatpush1.msra.mxu0 %v1078
    %1782 = vmatprep.subr.mxu0 0.0
    %1783 = vmatpush1.msra.mxu0 %v1079
    %1784 = vmatprep.subr.mxu0 0.0
    %1785 = vmatpush1.msra.mxu0 %v1080
    %1786 = vmatprep.subr.mxu0 0.0
    %1787 = vmatpush1.msra.mxu0 %v1081
    %1788 = vmatprep.subr.mxu0 0.0
    %1789 = vmatpush1.msra.mxu0 %v1082
    %1790 = vmatprep.subr.mxu0 0.0
    %1791 = vmatpush1.msra.mxu0 %v1083
    %1792 = vmatprep.subr.mxu0 0.0
    %1793 = vmatpush1.msra.mxu0 %v1084
    %1794 = vmatprep.subr.mxu0 0.0
    %1795 = vmatpush1.msra.mxu0 %v1085
    %1796 = vmatprep.subr.mxu0 0.0
    %1797 = vmatpush1.msra.mxu0 %v1086
    %1798 = vmatprep.subr.mxu0 0.0
    %1799 = vmatpush1.msra.mxu0 %v1087
    %1800 = vmatprep.subr.mxu0 0.0
    %1801 = vmatpush1.msra.mxu0 %v1088
    %1802 = vmatprep.subr.mxu0 0.0
    %1803 = vmatpush1.msra.mxu0 %v1089
    %1804 = vmatprep.subr.mxu0 0.0
    %1805 = vmatpush1.msra.mxu0 0.0
    %1806 = vmatprep.subr.mxu0 0.0
    %1807 = vmatpush1.msra.mxu0 0.0
    %1808 = vmatprep.subr.mxu0 0.0
    %1809 = vmatpush1.msra.mxu0 0.0
    %1810 = vmatprep.subr.mxu0 0.0
    %1811 = vmatpush1.msra.mxu0 0.0
    %1812 = vmatprep.subr.mxu0 0.0
    %1813 = vmatpush1.msra.mxu0 0.0
    %1814 = vmatprep.subr.mxu0 0.0
    %1815 = vmatpush1.msra.mxu0 0.0
    %1816 = vmatprep.subr.mxu0 0.0
    %1817 = vmatpush1.msra.mxu0 0.0
    %1818 = vmatprep.subr.mxu0 0.0
    %1819 = vmatpush1.msra.mxu0 0.0
    %1820 = vmatprep.subr.mxu0 0.0
    %1821 = vmatpush1.msra.mxu0 0.0
    %1822 = vmatprep.subr.mxu0 0.0
    %1823 = vmatpush1.msra.mxu0 0.0
    %1824 = vmatprep.subr.mxu0 0.0
    %1825 = vmatpush1.msra.mxu0 0.0
    %1826 = vmatprep.subr.mxu0 0.0
    %1827 = vmatpush1.msra.mxu0 0.0
    %1828 = vmatprep.subr.mxu0 0.0
    %1829 = vmatpush1.msra.mxu0 0.0
    %1830 = vmatprep.subr.mxu0 0.0
    %1831 = vmatpush1.msra.mxu0 0.0
    %1832 = vmatprep.subr.mxu0 0.0
    %1833 = vmatpush1.msra.mxu0 0.0
    %1834 = vmatprep.subr.mxu0 0.0
    %1835 = vmatpush1.msra.mxu0 0.0
    %1836 = vmatprep.mubr.f32.mxu0 0.0
    %1837 = vmatmul.mubr.f32.gmra.mrb[0].mxu0 %v1008
    %v1838 = vpop.f32.mrb[0].mxu0
    %v1839 = vadd.f32 %v1454, %v1838
    %v1840 = vpop.f32.mrb[0].mxu0
    %1841 = vmatprep.mubr.f32.mxu0 0.0
    %1842 = vmatmul.mubr.f32.gmra.mrb[0].mxu0 %v813
    %v1843 = vpop.f32.mrb[0].mxu0
    %v1844 = vadd.f32 %v1459, %v1843
    %v1845 = vpop.f32.mrb[0].mxu0
    %1846 = vmatprep.mubr.f32.mxu0 0.0
    %1847 = vmatmul.mubr.f32.gmra.mrb[0].mxu0 %v1009
    %v1848 = vpop.f32.mrb[0].mxu0
    %v1849 = vadd.f32 %v1464, %v1848
    %v1850 = vpop.f32.mrb[0].mxu0
    %1851 = vmatprep.mubr.f32.mxu0 0.0
    %1852 = vmatmul.mubr.f32.gmra.mrb[0].mxu0 %v816
    %v1853 = vpop.f32.mrb[0].mxu0
    %v1854 = vadd.f32 %v1469, %v1853
    %v1855 = vpop.f32.mrb[0].mxu0
    %1856 = vmatprep.mubr.f32.mxu0 0.0
    %1857 = vmatmul.mubr.f32.gmra.mrb[0].mxu0 %v1010
    %v1858 = vpop.f32.mrb[0].mxu0
    %v1859 = vadd.f32 %v1474, %v1858
    %v1860 = vpop.f32.mrb[0].mxu0
    %1861 = vmatprep.mubr.f32.mxu0 0.0
    %1862 = vmatmul.mubr.f32.gmra.mrb[0].mxu0 %v819
    %v1863 = vpop.f32.mrb[0].mxu0
    %v1864 = vadd.f32 %v1479, %v1863
    %v1865 = vpop.f32.mrb[0].mxu0
    %1866 = vmatprep.mubr.f32.mxu0 0.0
    %1867 = vmatmul.mubr.f32.gmra.mrb[0].mxu0 %v1011
    %v1868 = vpop.f32.mrb[0].mxu0
    %v1869 = vadd.f32 %v1484, %v1868
    %v1870 = vpop.f32.mrb[0].mxu0
    %1871 = vmatprep.mubr.f32.mxu0 0.0
    %1872 = vmatmul.mubr.f32.gmra.mrb[0].mxu0 %v822
    %v1873 = vpop.f32.mrb[0].mxu0
    %v1874 = vadd.f32 %v1489, %v1873
    %v1875 = vpop.f32.mrb[0].mxu0
    %1876 = vmatprep.mubr.f32.mxu0 0.0
    %1877 = vmatmul.mubr.f32.gmra.mrb[0].mxu0 %v1012
    %v1878 = vpop.f32.mrb[0].mxu0
    %v1879 = vadd.f32 %v1494, %v1878
    %v1880 = vpop.f32.mrb[0].mxu0
    %1881 = vmatprep.mubr.f32.mxu0 0.0
    %1882 = vmatmul.mubr.f32.gmra.mrb[0].mxu0 %v825
    %v1883 = vpop.f32.mrb[0].mxu0
    %v1884 = vadd.f32 %v1499, %v1883
    %v1885 = vpop.f32.mrb[0].mxu0
    %1886 = vmatprep.mubr.f32.mxu0 0.0
    %1887 = vmatmul.mubr.f32.gmra.mrb[0].mxu0 %v1013
    %v1888 = vpop.f32.mrb[0].mxu0
    %v1889 = vadd.f32 %v1504, %v1888
    %v1890 = vpop.f32.mrb[0].mxu0
    %1891 = vmatprep.mubr.f32.mxu0 0.0
    %1892 = vmatmul.mubr.f32.gmra.mrb[0].mxu0 %v828
    %v1893 = vpop.f32.mrb[0].mxu0
    %v1894 = vadd.f32 %v1509, %v1893
    %v1895 = vpop.f32.mrb[0].mxu0
    %1896 = vmatprep.mubr.f32.mxu0 0.0
    %1897 = vmatmul.mubr.f32.gmra.mrb[0].mxu0 %v1014
    %v1898 = vpop.f32.mrb[0].mxu0
    %v1899 = vadd.f32 %v1514, %v1898
    %v1900 = vpop.f32.mrb[0].mxu0
    %1901 = vmatprep.mubr.f32.mxu0 0.0
    %1902 = vmatmul.mubr.f32.gmra.mrb[0].mxu0 %v831
    %v1903 = vpop.f32.mrb[0].mxu0
    %v1904 = vadd.f32 %v1519, %v1903
    %v1905 = vpop.f32.mrb[0].mxu0
    %1906 = vmatprep.mubr.f32.mxu0 0.0
    %1907 = vmatmul.mubr.f32.gmra.mrb[0].mxu0 %v1015
    %v1908 = vpop.f32.mrb[0].mxu0
    %v1909 = vadd.f32 %v1524, %v1908
    %v1910 = vpop.f32.mrb[0].mxu0
    %1911 = vmatprep.mubr.f32.mxu0 0.0
    %1912 = vmatmul.mubr.f32.gmra.mrb[0].mxu0 %v834
    %v1913 = vpop.f32.mrb[0].mxu0
    %v1914 = vadd.f32 %v1529, %v1913
    %v1915 = vpop.f32.mrb[0].mxu0
    %1916 = vmatprep.mubr.f32.mxu0 0.0
    %1917 = vmatmul.mubr.f32.gmra.mrb[0].mxu0 %v1016
    %v1918 = vpop.f32.mrb[0].mxu0
    %v1919 = vadd.f32 %v1534, %v1918
    %v1920 = vpop.f32.mrb[0].mxu0
    %1921 = vmatprep.mubr.f32.mxu0 0.0
    %1922 = vmatmul.mubr.f32.gmra.mrb[0].mxu0 %v837
    %v1923 = vpop.f32.mrb[0].mxu0
    %v1924 = vadd.f32 %v1539, %v1923
    %v1925 = vpop.f32.mrb[0].mxu0
    %1926 = vmatprep.mubr.f32.mxu0 0.0
    %1927 = vmatmul.mubr.f32.gmra.mrb[0].mxu0 %v1017
    %v1928 = vpop.f32.mrb[0].mxu0
    %v1929 = vadd.f32 %v1544, %v1928
    %v1930 = vpop.f32.mrb[0].mxu0
    %1931 = vmatprep.mubr.f32.mxu0 0.0
    %1932 = vmatmul.mubr.f32.gmra.mrb[0].mxu0 %v840
    %v1933 = vpop.f32.mrb[0].mxu0
    %v1934 = vadd.f32 %v1549, %v1933
    %v1935 = vpop.f32.mrb[0].mxu0
    %1936 = vmatprep.mubr.f32.mxu0 0.0
    %1937 = vmatmul.mubr.f32.gmra.mrb[0].mxu0 %v1018
    %v1938 = vpop.f32.mrb[0].mxu0
    %v1939 = vadd.f32 %v1554, %v1938
    %v1940 = vpop.f32.mrb[0].mxu0
    %1941 = vmatprep.mubr.f32.mxu0 0.0
    %1942 = vmatmul.mubr.f32.gmra.mrb[0].mxu0 %v843
    %v1943 = vpop.f32.mrb[0].mxu0
    %v1944 = vadd.f32 %v1559, %v1943
    %v1945 = vpop.f32.mrb[0].mxu0
    %1946 = vmatprep.mubr.f32.mxu0 0.0
    %1947 = vmatmul.mubr.f32.gmra.mrb[0].mxu0 %v1019
    %v1948 = vpop.f32.mrb[0].mxu0
    %v1949 = vadd.f32 %v1564, %v1948
    %v1950 = vpop.f32.mrb[0].mxu0
    %1951 = vmatprep.mubr.f32.mxu0 0.0
    %1952 = vmatmul.mubr.f32.gmra.mrb[0].mxu0 %v846
    %v1953 = vpop.f32.mrb[0].mxu0
    %v1954 = vadd.f32 %v1569, %v1953
    %v1955 = vpop.f32.mrb[0].mxu0
    %1956 = vmatprep.mubr.f32.mxu0 0.0
    %1957 = vmatmul.mubr.f32.gmra.mrb[0].mxu0 %v1020
    %v1958 = vpop.f32.mrb[0].mxu0
    %v1959 = vadd.f32 %v1574, %v1958
    %v1960 = vpop.f32.mrb[0].mxu0
    %1961 = vmatprep.mubr.f32.mxu0 0.0
    %1962 = vmatmul.mubr.f32.gmra.mrb[0].mxu0 %v849
    %v1963 = vpop.f32.mrb[0].mxu0
    %v1964 = vadd.f32 %v1579, %v1963
    %v1965 = vpop.f32.mrb[0].mxu0
    %1966 = vmatprep.mubr.f32.mxu0 0.0
    %1967 = vmatmul.mubr.f32.gmra.mrb[0].mxu0 %v1021
    %v1968 = vpop.f32.mrb[0].mxu0
    %v1969 = vadd.f32 %v1584, %v1968
    %v1970 = vpop.f32.mrb[0].mxu0
    %1971 = vmatprep.mubr.f32.mxu0 0.0
    %1972 = vmatmul.mubr.f32.gmra.mrb[0].mxu0 %v852
    %v1973 = vpop.f32.mrb[0].mxu0
    %v1974 = vadd.f32 %v1589, %v1973
    %v1975 = vpop.f32.mrb[0].mxu0
    %1976 = vmatprep.mubr.f32.mxu0 0.0
    %1977 = vmatmul.mubr.f32.gmra.mrb[0].mxu0 %v1022
    %v1978 = vpop.f32.mrb[0].mxu0
    %v1979 = vadd.f32 %v1594, %v1978
    %v1980 = vpop.f32.mrb[0].mxu0
    %1981 = vmatprep.mubr.f32.mxu0 0.0
    %1982 = vmatmul.mubr.f32.gmra.mrb[0].mxu0 %v855
    %v1983 = vpop.f32.mrb[0].mxu0
    %v1984 = vadd.f32 %v1599, %v1983
    %v1985 = vpop.f32.mrb[0].mxu0
    %1986 = vmatprep.mubr.f32.mxu0 0.0
    %1987 = vmatmul.mubr.f32.gmra.mrb[0].mxu0 %v1023
    %v1988 = vpop.f32.mrb[0].mxu0
    %v1989 = vadd.f32 %v1604, %v1988
    %v1990 = vpop.f32.mrb[0].mxu0
    %1991 = vmatprep.mubr.f32.mxu0 0.0
    %1992 = vmatmul.mubr.f32.gmra.mrb[0].mxu0 %v858
    %v1993 = vpop.f32.mrb[0].mxu0
    %v1994 = vadd.f32 %v1609, %v1993
    %v1995 = vpop.f32.mrb[0].mxu0
    %1996 = vmatprep.mubr.f32.mxu0 0.0
    %1997 = vmatmul.mubr.f32.gmra.mrb[0].mxu0 %v1008
    %v1998 = vpop.f32.mrb[0].mxu0
    %v1999 = vadd.f32 %v1614, %v1998
    %v2000 = vpop.f32.mrb[0].mxu0
    %2001 = vmatprep.mubr.f32.mxu0 0.0
    %2002 = vmatmul.mubr.f32.gmra.mrb[0].mxu0 %v813
    %v2003 = vpop.f32.mrb[0].mxu0
    %v2004 = vadd.f32 %v1619, %v2003
    %v2005 = vpop.f32.mrb[0].mxu0
    %2006 = vmatprep.mubr.f32.mxu0 0.0
    %2007 = vmatmul.mubr.f32.gmra.mrb[0].mxu0 %v1025
    %v2008 = vpop.f32.mrb[0].mxu0
    %v2009 = vadd.f32 %v1624, %v2008
    %v2010 = vpop.f32.mrb[0].mxu0
    %2011 = vmatprep.mubr.f32.mxu0 0.0
    %2012 = vmatmul.mubr.f32.gmra.mrb[0].mxu0 %v864
    %v2013 = vpop.f32.mrb[0].mxu0
    %v2014 = vadd.f32 %v1629, %v2013
    %v2015 = vpop.f32.mrb[0].mxu0
    %2016 = vmatprep.mubr.f32.mxu0 0.0
    %2017 = vmatmul.mubr.f32.gmra.mrb[0].mxu0 %v1026
    %v2018 = vpop.f32.mrb[0].mxu0
    %v2019 = vadd.f32 %v1634, %v2018
    %v2020 = vpop.f32.mrb[0].mxu0
    %2021 = vmatprep.mubr.f32.mxu0 0.0
    %2022 = vmatmul.mubr.f32.gmra.mrb[0].mxu0 %v867
    %v2023 = vpop.f32.mrb[0].mxu0
    %v2024 = vadd.f32 %v1639, %v2023
    %v2025 = vpop.f32.mrb[0].mxu0
    %2026 = vmatprep.mubr.f32.mxu0 0.0
    %2027 = vmatmul.mubr.f32.gmra.mrb[0].mxu0 %v1027
    %v2028 = vpop.f32.mrb[0].mxu0
    %v2029 = vadd.f32 %v1644, %v2028
    %v2030 = vpop.f32.mrb[0].mxu0
    %2031 = vmatprep.mubr.f32.mxu0 0.0
    %2032 = vmatmul.mubr.f32.gmra.mrb[0].mxu0 %v870
    %v2033 = vpop.f32.mrb[0].mxu0
    %v2034 = vadd.f32 %v1649, %v2033
    %v2035 = vpop.f32.mrb[0].mxu0
    %2036 = vmatprep.mubr.f32.mxu0 0.0
    %2037 = vmatmul.mubr.f32.gmra.mrb[0].mxu0 %v1028
    %v2038 = vpop.f32.mrb[0].mxu0
    %v2039 = vadd.f32 %v1654, %v2038
    %v2040 = vpop.f32.mrb[0].mxu0
    %2041 = vmatprep.mubr.f32.mxu0 0.0
    %2042 = vmatmul.mubr.f32.gmra.mrb[0].mxu0 %v873
    %v2043 = vpop.f32.mrb[0].mxu0
    %v2044 = vadd.f32 %v1659, %v2043
    %v2045 = vpop.f32.mrb[0].mxu0
    %2046 = vmatprep.mubr.f32.mxu0 0.0
    %2047 = vmatmul.mubr.f32.gmra.mrb[0].mxu0 %v1029
    %v2048 = vpop.f32.mrb[0].mxu0
    %v2049 = vadd.f32 %v1664, %v2048
    %v2050 = vpop.f32.mrb[0].mxu0
    %2051 = vmatprep.mubr.f32.mxu0 0.0
    %2052 = vmatmul.mubr.f32.gmra.mrb[0].mxu0 %v876
    %v2053 = vpop.f32.mrb[0].mxu0
    %v2054 = vadd.f32 %v1669, %v2053
    %v2055 = vpop.f32.mrb[0].mxu0
    %2056 = vmatprep.mubr.f32.mxu0 0.0
    %2057 = vmatmul.mubr.f32.gmra.mrb[0].mxu0 %v1030
    %v2058 = vpop.f32.mrb[0].mxu0
    %v2059 = vadd.f32 %v1674, %v2058
    %v2060 = vpop.f32.mrb[0].mxu0
    %2061 = vmatprep.mubr.f32.mxu0 0.0
    %2062 = vmatmul.mubr.f32.gmra.mrb[0].mxu0 %v879
    %v2063 = vpop.f32.mrb[0].mxu0
    %v2064 = vadd.f32 %v1679, %v2063
    %v2065 = vpop.f32.mrb[0].mxu0
    %2066 = vmatprep.mubr.f32.mxu0 0.0
    %2067 = vmatmul.mubr.f32.gmra.mrb[0].mxu0 %v1031
    %v2068 = vpop.f32.mrb[0].mxu0
    %v2069 = vadd.f32 %v1684, %v2068
    %v2070 = vpop.f32.mrb[0].mxu0
    %2071 = vmatprep.mubr.f32.mxu0 0.0
    %2072 = vmatmul.mubr.f32.gmra.mrb[0].mxu0 %v882
    %v2073 = vpop.f32.mrb[0].mxu0
    %v2074 = vadd.f32 %v1689, %v2073
    %v2075 = vpop.f32.mrb[0].mxu0
    %2076 = vmatprep.mubr.f32.mxu0 0.0
    %2077 = vmatmul.mubr.f32.gmra.mrb[0].mxu0 %v1032
    %v2078 = vpop.f32.mrb[0].mxu0
    %v2079 = vadd.f32 %v1694, %v2078
    %v2080 = vpop.f32.mrb[0].mxu0
    %2081 = vmatprep.mubr.f32.mxu0 0.0
    %2082 = vmatmul.mubr.f32.gmra.mrb[0].mxu0 %v885
    %v2083 = vpop.f32.mrb[0].mxu0
    %v2084 = vadd.f32 %v1699, %v2083
    %v2085 = vpop.f32.mrb[0].mxu0
    %2086 = vmatprep.mubr.f32.mxu0 0.0
    %2087 = vmatmul.mubr.f32.gmra.mrb[0].mxu0 %v1033
    %v2088 = vpop.f32.mrb[0].mxu0
    %v2089 = vadd.f32 %v1704, %v2088
    %v2090 = vpop.f32.mrb[0].mxu0
    %2091 = vmatprep.mubr.f32.mxu0 0.0
    %2092 = vmatmul.mubr.f32.gmra.mrb[0].mxu0 %v888
    %v2093 = vpop.f32.mrb[0].mxu0
    %v2094 = vadd.f32 %v1709, %v2093
    %v2095 = vpop.f32.mrb[0].mxu0
    %2096 = vmatprep.mubr.f32.mxu0 0.0
    %2097 = vmatmul.mubr.f32.gmra.mrb[0].mxu0 %v1034
    %v2098 = vpop.f32.mrb[0].mxu0
    %v2099 = vadd.f32 %v1714, %v2098
    %v2100 = vpop.f32.mrb[0].mxu0
    %2101 = vmatprep.mubr.f32.mxu0 0.0
    %2102 = vmatmul.mubr.f32.gmra.mrb[0].mxu0 %v891
    %v2103 = vpop.f32.mrb[0].mxu0
    %v2104 = vadd.f32 %v1719, %v2103
    %v2105 = vpop.f32.mrb[0].mxu0
    %2106 = vmatprep.mubr.f32.mxu0 0.0
    %2107 = vmatmul.mubr.f32.gmra.mrb[0].mxu0 %v1035
    %v2108 = vpop.f32.mrb[0].mxu0
    %v2109 = vadd.f32 %v1724, %v2108
    %v2110 = vpop.f32.mrb[0].mxu0
    %2111 = vmatprep.mubr.f32.mxu0 0.0
    %2112 = vmatmul.mubr.f32.gmra.mrb[0].mxu0 %v894
    %v2113 = vpop.f32.mrb[0].mxu0
    %v2114 = vadd.f32 %v1729, %v2113
    %v2115 = vpop.f32.mrb[0].mxu0
    %2116 = vmatprep.mubr.f32.mxu0 0.0
    %2117 = vmatmul.mubr.f32.gmra.mrb[0].mxu0 %v1036
    %v2118 = vpop.f32.mrb[0].mxu0
    %v2119 = vadd.f32 %v1734, %v2118
    %v2120 = vpop.f32.mrb[0].mxu0
    %2121 = vmatprep.mubr.f32.mxu0 0.0
    %2122 = vmatmul.mubr.f32.gmra.mrb[0].mxu0 %v897
    %v2123 = vpop.f32.mrb[0].mxu0
    %v2124 = vadd.f32 %v1739, %v2123
    %v2125 = vpop.f32.mrb[0].mxu0
    %2126 = vmatprep.mubr.f32.mxu0 0.0
    %2127 = vmatmul.mubr.f32.gmra.mrb[0].mxu0 %v1037
    %v2128 = vpop.f32.mrb[0].mxu0
    %v2129 = vadd.f32 %v1744, %v2128
    %v2130 = vpop.f32.mrb[0].mxu0
    %2131 = vmatprep.mubr.f32.mxu0 0.0
    %2132 = vmatmul.mubr.f32.gmra.mrb[0].mxu0 %v900
    %v2133 = vpop.f32.mrb[0].mxu0
    %v2134 = vadd.f32 %v1749, %v2133
    %v2135 = vpop.f32.mrb[0].mxu0
    %2136 = vmatprep.mubr.f32.mxu0 0.0
    %2137 = vmatmul.mubr.f32.gmra.mrb[0].mxu0 %v1038
    %v2138 = vpop.f32.mrb[0].mxu0
    %v2139 = vadd.f32 %v1754, %v2138
    %v2140 = vpop.f32.mrb[0].mxu0
    %2141 = vmatprep.mubr.f32.mxu0 0.0
    %2142 = vmatmul.mubr.f32.gmra.mrb[0].mxu0 %v903
    %v2143 = vpop.f32.mrb[0].mxu0
    %v2144 = vadd.f32 %v1759, %v2143
    %v2145 = vpop.f32.mrb[0].mxu0
    %2146 = vmatprep.mubr.f32.mxu0 0.0
    %2147 = vmatmul.mubr.f32.gmra.mrb[0].mxu0 %v1039
    %v2148 = vpop.f32.mrb[0].mxu0
    %v2149 = vadd.f32 %v1764, %v2148
    %v2150 = vpop.f32.mrb[0].mxu0
    %2151 = vmatprep.mubr.f32.mxu0 0.0
    %2152 = vmatmul.mubr.f32.gmra.mrb[0].mxu0 %v906
    %v2153 = vpop.f32.mrb[0].mxu0
    %v2154 = vadd.f32 %v1769, %v2153
    %v2155 = vpop.f32.mrb[0].mxu0
    %2156 = vdwg.mxu0
    %vm2157 = vcmask 1045504
    %v2158 = vrot.slane %v1008, 2
    %v2159 = vrot.slane %v813, 2
    %v2160 = vsel %vm2157, %v2158, %v2159
    %v2161 = vrot.slane %v1041, 2
    %v2162 = vsel %vm2157, %v2159, %v2161
    %v2163 = vrot.slane %v1009, 2
    %v2164 = vrot.slane %v816, 2
    %v2165 = vsel %vm2157, %v2163, %v2164
    %v2166 = vrot.slane %v1042, 2
    %v2167 = vsel %vm2157, %v2164, %v2166
    %v2168 = vrot.slane %v1010, 2
    %v2169 = vrot.slane %v819, 2
    %v2170 = vsel %vm2157, %v2168, %v2169
    %v2171 = vrot.slane %v1043, 2
    %v2172 = vsel %vm2157, %v2169, %v2171
    %v2173 = vrot.slane %v1011, 2
    %v2174 = vrot.slane %v822, 2
    %v2175 = vsel %vm2157, %v2173, %v2174
    %v2176 = vrot.slane %v1044, 2
    %v2177 = vsel %vm2157, %v2174, %v2176
    %v2178 = vrot.slane %v1012, 2
    %v2179 = vrot.slane %v825, 2
    %v2180 = vsel %vm2157, %v2178, %v2179
    %v2181 = vrot.slane %v1045, 2
    %v2182 = vsel %vm2157, %v2179, %v2181
    %v2183 = vrot.slane %v1013, 2
    %v2184 = vrot.slane %v828, 2
    %v2185 = vsel %vm2157, %v2183, %v2184
    %v2186 = vrot.slane %v1046, 2
    %v2187 = vsel %vm2157, %v2184, %v2186
    %v2188 = vrot.slane %v1014, 2
    %v2189 = vrot.slane %v831, 2
    %v2190 = vsel %vm2157, %v2188, %v2189
    %v2191 = vrot.slane %v1047, 2
    %v2192 = vsel %vm2157, %v2189, %v2191
    %v2193 = vrot.slane %v1015, 2
    %v2194 = vrot.slane %v834, 2
    %v2195 = vsel %vm2157, %v2193, %v2194
    %v2196 = vrot.slane %v1048, 2
    %v2197 = vsel %vm2157, %v2194, %v2196
    %v2198 = vrot.slane %v1016, 2
    %v2199 = vrot.slane %v837, 2
    %v2200 = vsel %vm2157, %v2198, %v2199
    %v2201 = vrot.slane %v1049, 2
    %v2202 = vsel %vm2157, %v2199, %v2201
    %v2203 = vrot.slane %v1017, 2
    %v2204 = vrot.slane %v840, 2
    %v2205 = vsel %vm2157, %v2203, %v2204
    %v2206 = vrot.slane %v1050, 2
    %v2207 = vsel %vm2157, %v2204, %v2206
    %v2208 = vrot.slane %v1018, 2
    %v2209 = vrot.slane %v843, 2
    %v2210 = vsel %vm2157, %v2208, %v2209
    %v2211 = vrot.slane %v1051, 2
    %v2212 = vsel %vm2157, %v2209, %v2211
    %v2213 = vrot.slane %v1019, 2
    %v2214 = vrot.slane %v846, 2
    %v2215 = vsel %vm2157, %v2213, %v2214
    %v2216 = vrot.slane %v1052, 2
    %v2217 = vsel %vm2157, %v2214, %v2216
    %v2218 = vrot.slane %v1020, 2
    %v2219 = vrot.slane %v849, 2
    %v2220 = vsel %vm2157, %v2218, %v2219
    %v2221 = vrot.slane %v1053, 2
    %v2222 = vsel %vm2157, %v2219, %v2221
    %v2223 = vrot.slane %v1021, 2
    %v2224 = vrot.slane %v852, 2
    %v2225 = vsel %vm2157, %v2223, %v2224
    %v2226 = vrot.slane %v1054, 2
    %v2227 = vsel %vm2157, %v2224, %v2226
    %v2228 = vrot.slane %v1022, 2
    %v2229 = vrot.slane %v855, 2
    %v2230 = vsel %vm2157, %v2228, %v2229
    %v2231 = vrot.slane %v1055, 2
    %v2232 = vsel %vm2157, %v2229, %v2231
    %v2233 = vrot.slane %v1023, 2
    %v2234 = vrot.slane %v858, 2
    %v2235 = vsel %vm2157, %v2233, %v2234
    %v2236 = vrot.slane %v1056, 2
    %v2237 = vsel %vm2157, %v2234, %v2236
    %v2238 = vrot.slane %v1025, 2
    %v2239 = vrot.slane %v864, 2
    %v2240 = vsel %vm2157, %v2238, %v2239
    %v2241 = vrot.slane %v1058, 2
    %v2242 = vsel %vm2157, %v2239, %v2241
    %v2243 = vrot.slane %v1026, 2
    %v2244 = vrot.slane %v867, 2
    %v2245 = vsel %vm2157, %v2243, %v2244
    %v2246 = vrot.slane %v1059, 2
    %v2247 = vsel %vm2157, %v2244, %v2246
    %v2248 = vrot.slane %v1027, 2
    %v2249 = vrot.slane %v870, 2
    %v2250 = vsel %vm2157, %v2248, %v2249
    %v2251 = vrot.slane %v1060, 2
    %v2252 = vsel %vm2157, %v2249, %v2251
    %v2253 = vrot.slane %v1028, 2
    %v2254 = vrot.slane %v873, 2
    %v2255 = vsel %vm2157, %v2253, %v2254
    %v2256 = vrot.slane %v1061, 2
    %v2257 = vsel %vm2157, %v2254, %v2256
    %v2258 = vrot.slane %v1029, 2
    %v2259 = vrot.slane %v876, 2
    %v2260 = vsel %vm2157, %v2258, %v2259
    %v2261 = vrot.slane %v1062, 2
    %v2262 = vsel %vm2157, %v2259, %v2261
    %v2263 = vrot.slane %v1030, 2
    %v2264 = vrot.slane %v879, 2
    %v2265 = vsel %vm2157, %v2263, %v2264
    %v2266 = vrot.slane %v1063, 2
    %v2267 = vsel %vm2157, %v2264, %v2266
    %v2268 = vrot.slane %v1031, 2
    %v2269 = vrot.slane %v882, 2
    %v2270 = vsel %vm2157, %v2268, %v2269
    %v2271 = vrot.slane %v1064, 2
    %v2272 = vsel %vm2157, %v2269, %v2271
    %v2273 = vrot.slane %v1032, 2
    %v2274 = vrot.slane %v885, 2
    %v2275 = vsel %vm2157, %v2273, %v2274
    %v2276 = vrot.slane %v1065, 2
    %v2277 = vsel %vm2157, %v2274, %v2276
    %v2278 = vrot.slane %v1033, 2
    %v2279 = vrot.slane %v888, 2
    %v2280 = vsel %vm2157, %v2278, %v2279
    %v2281 = vrot.slane %v1066, 2
    %v2282 = vsel %vm2157, %v2279, %v2281
    %v2283 = vrot.slane %v1034, 2
    %v2284 = vrot.slane %v891, 2
    %v2285 = vsel %vm2157, %v2283, %v2284
    %v2286 = vrot.slane %v1067, 2
    %v2287 = vsel %vm2157, %v2284, %v2286
    %v2288 = vrot.slane %v1035, 2
    %v2289 = vrot.slane %v894, 2
    %v2290 = vsel %vm2157, %v2288, %v2289
    %v2291 = vrot.slane %v1068, 2
    %v2292 = vsel %vm2157, %v2289, %v2291
    %v2293 = vrot.slane %v1036, 2
    %v2294 = vrot.slane %v897, 2
    %v2295 = vsel %vm2157, %v2293, %v2294
    %v2296 = vrot.slane %v1069, 2
    %v2297 = vsel %vm2157, %v2294, %v2296
    %v2298 = vrot.slane %v1037, 2
    %v2299 = vrot.slane %v900, 2
    %v2300 = vsel %vm2157, %v2298, %v2299
    %v2301 = vrot.slane %v1070, 2
    %v2302 = vsel %vm2157, %v2299, %v2301
    %v2303 = vrot.slane %v1038, 2
    %v2304 = vrot.slane %v903, 2
    %v2305 = vsel %vm2157, %v2303, %v2304
    %v2306 = vrot.slane %v1071, 2
    %v2307 = vsel %vm2157, %v2304, %v2306
    %v2308 = vrot.slane %v1039, 2
    %v2309 = vrot.slane %v906, 2
    %v2310 = vsel %vm2157, %v2308, %v2309
    %v2311 = vrot.slane %v1072, 2
    %v2312 = vsel %vm2157, %v2309, %v2311
    %s2375 = scalar_lea.vmem %s3, 256
    %v2376 = vld [vmem:[%s2375] sm:$0xff]
    %v2377 = vld [vmem:[%s2375 + $0x8] sm:$0xff]
    %v2378 = vld [vmem:[%s2375 + $0x10] sm:$0xff]
    %v2379 = vld [vmem:[%s2375 + $0x18] sm:$0xff]
    %v2380 = vld [vmem:[%s2375 + $0x20] sm:$0xff]
    %v2381 = vld [vmem:[%s2375 + $0x28] sm:$0xff]
    %v2382 = vld [vmem:[%s2375 + $0x30] sm:$0xff]
    %v2383 = vld [vmem:[%s2375 + $0x38] sm:$0xff]
    %v2384 = vld [vmem:[%s2375 + $0x40] sm:$0xff]
    %v2385 = vld [vmem:[%s2375 + $0x48] sm:$0xff]
    %v2386 = vld [vmem:[%s2375 + $0x50] sm:$0xff]
    %v2387 = vld [vmem:[%s2375 + $0x58] sm:$0xff]
    %v2388 = vld [vmem:[%s2375 + $0x60] sm:$0xff]
    %v2389 = vld [vmem:[%s2375 + $0x68] sm:$0xff]
    %v2390 = vld [vmem:[%s2375 + $0x70] sm:$0xff]
    %v2391 = vld [vmem:[%s2375 + $0x78] sm:$0xff]
    %2392 = vmatprep.subr.mxu0 0.0
    %2393 = vmatpush1.msra.mxu0 %v2376
    %2394 = vmatprep.subr.mxu0 0.0
    %2395 = vmatpush1.msra.mxu0 %v2377
    %2396 = vmatprep.subr.mxu0 0.0
    %2397 = vmatpush1.msra.mxu0 %v2378
    %2398 = vmatprep.subr.mxu0 0.0
    %2399 = vmatpush1.msra.mxu0 %v2379
    %2400 = vmatprep.subr.mxu0 0.0
    %2401 = vmatpush1.msra.mxu0 %v2380
    %2402 = vmatprep.subr.mxu0 0.0
    %2403 = vmatpush1.msra.mxu0 %v2381
    %2404 = vmatprep.subr.mxu0 0.0
    %2405 = vmatpush1.msra.mxu0 %v2382
    %2406 = vmatprep.subr.mxu0 0.0
    %2407 = vmatpush1.msra.mxu0 %v2383
    %2408 = vmatprep.subr.mxu0 0.0
    %2409 = vmatpush1.msra.mxu0 %v2384
    %2410 = vmatprep.subr.mxu0 0.0
    %2411 = vmatpush1.msra.mxu0 %v2385
    %2412 = vmatprep.subr.mxu0 0.0
    %2413 = vmatpush1.msra.mxu0 %v2386
    %2414 = vmatprep.subr.mxu0 0.0
    %2415 = vmatpush1.msra.mxu0 %v2387
    %2416 = vmatprep.subr.mxu0 0.0
    %2417 = vmatpush1.msra.mxu0 %v2388
    %2418 = vmatprep.subr.mxu0 0.0
    %2419 = vmatpush1.msra.mxu0 %v2389
    %2420 = vmatprep.subr.mxu0 0.0
    %2421 = vmatpush1.msra.mxu0 %v2390
    %2422 = vmatprep.subr.mxu0 0.0
    %2423 = vmatpush1.msra.mxu0 %v2391
    %2424 = vmatprep.subr.mxu0 0.0
    %2425 = vmatpush1.msra.mxu0 0.0
    %2426 = vmatprep.subr.mxu0 0.0
    %2427 = vmatpush1.msra.mxu0 0.0
    %2428 = vmatprep.subr.mxu0 0.0
    %2429 = vmatpush1.msra.mxu0 0.0
    %2430 = vmatprep.subr.mxu0 0.0
    %2431 = vmatpush1.msra.mxu0 0.0
    %2432 = vmatprep.subr.mxu0 0.0
    %2433 = vmatpush1.msra.mxu0 0.0
    %2434 = vmatprep.subr.mxu0 0.0
    %2435 = vmatpush1.msra.mxu0 0.0
    %2436 = vmatprep.subr.mxu0 0.0
    %2437 = vmatpush1.msra.mxu0 0.0
    %2438 = vmatprep.subr.mxu0 0.0
    %2439 = vmatpush1.msra.mxu0 0.0
    %2440 = vmatprep.subr.mxu0 0.0
    %2441 = vmatpush1.msra.mxu0 0.0
    %2442 = vmatprep.subr.mxu0 0.0
    %2443 = vmatpush1.msra.mxu0 0.0
    %2444 = vmatprep.subr.mxu0 0.0
    %2445 = vmatpush1.msra.mxu0 0.0
    %2446 = vmatprep.subr.mxu0 0.0
    %2447 = vmatpush1.msra.mxu0 0.0
    %2448 = vmatprep.subr.mxu0 0.0
    %2449 = vmatpush1.msra.mxu0 0.0
    %2450 = vmatprep.subr.mxu0 0.0
    %2451 = vmatpush1.msra.mxu0 0.0
    %2452 = vmatprep.subr.mxu0 0.0
    %2453 = vmatpush1.msra.mxu0 0.0
    %2454 = vmatprep.subr.mxu0 0.0
    %2455 = vmatpush1.msra.mxu0 0.0
    %2456 = vmatprep.mubr.f32.mxu0 0.0
    %2457 = vmatmul.mubr.f32.gmra.mrb[0].mxu0 %v2160
    %v2458 = vpop.f32.mrb[0].mxu0
    %v2459 = vadd.f32 0.0, %v2458
    %v2460 = vpop.f32.mrb[0].mxu0
    %2461 = vmatprep.mubr.f32.mxu0 0.0
    %2462 = vmatmul.mubr.f32.gmra.mrb[0].mxu0 %v2162
    %v2463 = vpop.f32.mrb[0].mxu0
    %v2464 = vadd.f32 0.0, %v2463
    %v2465 = vpop.f32.mrb[0].mxu0
    %2466 = vmatprep.mubr.f32.mxu0 0.0
    %2467 = vmatmul.mubr.f32.gmra.mrb[0].mxu0 %v2165
    %v2468 = vpop.f32.mrb[0].mxu0
    %v2469 = vadd.f32 0.0, %v2468
    %v2470 = vpop.f32.mrb[0].mxu0
    %2471 = vmatprep.mubr.f32.mxu0 0.0
    %2472 = vmatmul.mubr.f32.gmra.mrb[0].mxu0 %v2167
    %v2473 = vpop.f32.mrb[0].mxu0
    %v2474 = vadd.f32 0.0, %v2473
    %v2475 = vpop.f32.mrb[0].mxu0
    %2476 = vmatprep.mubr.f32.mxu0 0.0
    %2477 = vmatmul.mubr.f32.gmra.mrb[0].mxu0 %v2170
    %v2478 = vpop.f32.mrb[0].mxu0
    %v2479 = vadd.f32 0.0, %v2478
    %v2480 = vpop.f32.mrb[0].mxu0
    %2481 = vmatprep.mubr.f32.mxu0 0.0
    %2482 = vmatmul.mubr.f32.gmra.mrb[0].mxu0 %v2172
    %v2483 = vpop.f32.mrb[0].mxu0
    %v2484 = vadd.f32 0.0, %v2483
    %v2485 = vpop.f32.mrb[0].mxu0
    %2486 = vmatprep.mubr.f32.mxu0 0.0
    %2487 = vmatmul.mubr.f32.gmra.mrb[0].mxu0 %v2175
    %v2488 = vpop.f32.mrb[0].mxu0
    %v2489 = vadd.f32 0.0, %v2488
    %v2490 = vpop.f32.mrb[0].mxu0
    %2491 = vmatprep.mubr.f32.mxu0 0.0
    %2492 = vmatmul.mubr.f32.gmra.mrb[0].mxu0 %v2177
    %v2493 = vpop.f32.mrb[0].mxu0
    %v2494 = vadd.f32 0.0, %v2493
    %v2495 = vpop.f32.mrb[0].mxu0
    %2496 = vmatprep.mubr.f32.mxu0 0.0
    %2497 = vmatmul.mubr.f32.gmra.mrb[0].mxu0 %v2180
    %v2498 = vpop.f32.mrb[0].mxu0
    %v2499 = vadd.f32 0.0, %v2498
    %v2500 = vpop.f32.mrb[0].mxu0
    %2501 = vmatprep.mubr.f32.mxu0 0.0
    %2502 = vmatmul.mubr.f32.gmra.mrb[0].mxu0 %v2182
    %v2503 = vpop.f32.mrb[0].mxu0
    %v2504 = vadd.f32 0.0, %v2503
    %v2505 = vpop.f32.mrb[0].mxu0
    %2506 = vmatprep.mubr.f32.mxu0 0.0
    %2507 = vmatmul.mubr.f32.gmra.mrb[0].mxu0 %v2185
    %v2508 = vpop.f32.mrb[0].mxu0
    %v2509 = vadd.f32 0.0, %v2508
    %v2510 = vpop.f32.mrb[0].mxu0
    %2511 = vmatprep.mubr.f32.mxu0 0.0
    %2512 = vmatmul.mubr.f32.gmra.mrb[0].mxu0 %v2187
    %v2513 = vpop.f32.mrb[0].mxu0
    %v2514 = vadd.f32 0.0, %v2513
    %v2515 = vpop.f32.mrb[0].mxu0
    %2516 = vmatprep.mubr.f32.mxu0 0.0
    %2517 = vmatmul.mubr.f32.gmra.mrb[0].mxu0 %v2190
    %v2518 = vpop.f32.mrb[0].mxu0
    %v2519 = vadd.f32 0.0, %v2518
    %v2520 = vpop.f32.mrb[0].mxu0
    %2521 = vmatprep.mubr.f32.mxu0 0.0
    %2522 = vmatmul.mubr.f32.gmra.mrb[0].mxu0 %v2192
    %v2523 = vpop.f32.mrb[0].mxu0
    %v2524 = vadd.f32 0.0, %v2523
    %v2525 = vpop.f32.mrb[0].mxu0
    %2526 = vmatprep.mubr.f32.mxu0 0.0
    %2527 = vmatmul.mubr.f32.gmra.mrb[0].mxu0 %v2195
    %v2528 = vpop.f32.mrb[0].mxu0
    %v2529 = vadd.f32 0.0, %v2528
    %v2530 = vpop.f32.mrb[0].mxu0
    %2531 = vmatprep.mubr.f32.mxu0 0.0
    %2532 = vmatmul.mubr.f32.gmra.mrb[0].mxu0 %v2197
    %v2533 = vpop.f32.mrb[0].mxu0
    %v2534 = vadd.f32 0.0, %v2533
    %v2535 = vpop.f32.mrb[0].mxu0
    %2536 = vmatprep.mubr.f32.mxu0 0.0
    %2537 = vmatmul.mubr.f32.gmra.mrb[0].mxu0 %v2200
    %v2538 = vpop.f32.mrb[0].mxu0
    %v2539 = vadd.f32 0.0, %v2538
    %v2540 = vpop.f32.mrb[0].mxu0
    %2541 = vmatprep.mubr.f32.mxu0 0.0
    %2542 = vmatmul.mubr.f32.gmra.mrb[0].mxu0 %v2202
    %v2543 = vpop.f32.mrb[0].mxu0
    %v2544 = vadd.f32 0.0, %v2543
    %v2545 = vpop.f32.mrb[0].mxu0
    %2546 = vmatprep.mubr.f32.mxu0 0.0
    %2547 = vmatmul.mubr.f32.gmra.mrb[0].mxu0 %v2205
    %v2548 = vpop.f32.mrb[0].mxu0
    %v2549 = vadd.f32 0.0, %v2548
    %v2550 = vpop.f32.mrb[0].mxu0
    %2551 = vmatprep.mubr.f32.mxu0 0.0
    %2552 = vmatmul.mubr.f32.gmra.mrb[0].mxu0 %v2207
    %v2553 = vpop.f32.mrb[0].mxu0
    %v2554 = vadd.f32 0.0, %v2553
    %v2555 = vpop.f32.mrb[0].mxu0
    %2556 = vmatprep.mubr.f32.mxu0 0.0
    %2557 = vmatmul.mubr.f32.gmra.mrb[0].mxu0 %v2210
    %v2558 = vpop.f32.mrb[0].mxu0
    %v2559 = vadd.f32 0.0, %v2558
    %v2560 = vpop.f32.mrb[0].mxu0
    %2561 = vmatprep.mubr.f32.mxu0 0.0
    %2562 = vmatmul.mubr.f32.gmra.mrb[0].mxu0 %v2212
    %v2563 = vpop.f32.mrb[0].mxu0
    %v2564 = vadd.f32 0.0, %v2563
    %v2565 = vpop.f32.mrb[0].mxu0
    %2566 = vmatprep.mubr.f32.mxu0 0.0
    %2567 = vmatmul.mubr.f32.gmra.mrb[0].mxu0 %v2215
    %v2568 = vpop.f32.mrb[0].mxu0
    %v2569 = vadd.f32 0.0, %v2568
    %v2570 = vpop.f32.mrb[0].mxu0
    %2571 = vmatprep.mubr.f32.mxu0 0.0
    %2572 = vmatmul.mubr.f32.gmra.mrb[0].mxu0 %v2217
    %v2573 = vpop.f32.mrb[0].mxu0
    %v2574 = vadd.f32 0.0, %v2573
    %v2575 = vpop.f32.mrb[0].mxu0
    %2576 = vmatprep.mubr.f32.mxu0 0.0
    %2577 = vmatmul.mubr.f32.gmra.mrb[0].mxu0 %v2220
    %v2578 = vpop.f32.mrb[0].mxu0
    %v2579 = vadd.f32 0.0, %v2578
    %v2580 = vpop.f32.mrb[0].mxu0
    %2581 = vmatprep.mubr.f32.mxu0 0.0
    %2582 = vmatmul.mubr.f32.gmra.mrb[0].mxu0 %v2222
    %v2583 = vpop.f32.mrb[0].mxu0
    %v2584 = vadd.f32 0.0, %v2583
    %v2585 = vpop.f32.mrb[0].mxu0
    %2586 = vmatprep.mubr.f32.mxu0 0.0
    %2587 = vmatmul.mubr.f32.gmra.mrb[0].mxu0 %v2225
    %v2588 = vpop.f32.mrb[0].mxu0
    %v2589 = vadd.f32 0.0, %v2588
    %v2590 = vpop.f32.mrb[0].mxu0
    %2591 = vmatprep.mubr.f32.mxu0 0.0
    %2592 = vmatmul.mubr.f32.gmra.mrb[0].mxu0 %v2227
    %v2593 = vpop.f32.mrb[0].mxu0
    %v2594 = vadd.f32 0.0, %v2593
    %v2595 = vpop.f32.mrb[0].mxu0
    %2596 = vmatprep.mubr.f32.mxu0 0.0
    %2597 = vmatmul.mubr.f32.gmra.mrb[0].mxu0 %v2230
    %v2598 = vpop.f32.mrb[0].mxu0
    %v2599 = vadd.f32 0.0, %v2598
    %v2600 = vpop.f32.mrb[0].mxu0
    %2601 = vmatprep.mubr.f32.mxu0 0.0
    %2602 = vmatmul.mubr.f32.gmra.mrb[0].mxu0 %v2232
    %v2603 = vpop.f32.mrb[0].mxu0
    %v2604 = vadd.f32 0.0, %v2603
    %v2605 = vpop.f32.mrb[0].mxu0
    %2606 = vmatprep.mubr.f32.mxu0 0.0
    %2607 = vmatmul.mubr.f32.gmra.mrb[0].mxu0 %v2235
    %v2608 = vpop.f32.mrb[0].mxu0
    %v2609 = vadd.f32 0.0, %v2608
    %v2610 = vpop.f32.mrb[0].mxu0
    %2611 = vmatprep.mubr.f32.mxu0 0.0
    %2612 = vmatmul.mubr.f32.gmra.mrb[0].mxu0 %v2237
    %v2613 = vpop.f32.mrb[0].mxu0
    %v2614 = vadd.f32 0.0, %v2613
    %v2615 = vpop.f32.mrb[0].mxu0
    %2616 = vmatprep.mubr.f32.mxu0 0.0
    %2617 = vmatmul.mubr.f32.gmra.mrb[0].mxu0 %v2160
    %v2618 = vpop.f32.mrb[0].mxu0
    %v2619 = vadd.f32 0.0, %v2618
    %v2620 = vpop.f32.mrb[0].mxu0
    %2621 = vmatprep.mubr.f32.mxu0 0.0
    %2622 = vmatmul.mubr.f32.gmra.mrb[0].mxu0 %v2162
    %v2623 = vpop.f32.mrb[0].mxu0
    %v2624 = vadd.f32 0.0, %v2623
    %v2625 = vpop.f32.mrb[0].mxu0
    %2626 = vmatprep.mubr.f32.mxu0 0.0
    %2627 = vmatmul.mubr.f32.gmra.mrb[0].mxu0 %v2240
    %v2628 = vpop.f32.mrb[0].mxu0
    %v2629 = vadd.f32 0.0, %v2628
    %v2630 = vpop.f32.mrb[0].mxu0
    %2631 = vmatprep.mubr.f32.mxu0 0.0
    %2632 = vmatmul.mubr.f32.gmra.mrb[0].mxu0 %v2242
    %v2633 = vpop.f32.mrb[0].mxu0
    %v2634 = vadd.f32 0.0, %v2633
    %v2635 = vpop.f32.mrb[0].mxu0
    %2636 = vmatprep.mubr.f32.mxu0 0.0
    %2637 = vmatmul.mubr.f32.gmra.mrb[0].mxu0 %v2245
    %v2638 = vpop.f32.mrb[0].mxu0
    %v2639 = vadd.f32 0.0, %v2638
    %v2640 = vpop.f32.mrb[0].mxu0
    %2641 = vmatprep.mubr.f32.mxu0 0.0
    %2642 = vmatmul.mubr.f32.gmra.mrb[0].mxu0 %v2247
    %v2643 = vpop.f32.mrb[0].mxu0
    %v2644 = vadd.f32 0.0, %v2643
    %v2645 = vpop.f32.mrb[0].mxu0
    %2646 = vmatprep.mubr.f32.mxu0 0.0
    %2647 = vmatmul.mubr.f32.gmra.mrb[0].mxu0 %v2250
    %v2648 = vpop.f32.mrb[0].mxu0
    %v2649 = vadd.f32 0.0, %v2648
    %v2650 = vpop.f32.mrb[0].mxu0
    %2651 = vmatprep.mubr.f32.mxu0 0.0
    %2652 = vmatmul.mubr.f32.gmra.mrb[0].mxu0 %v2252
    %v2653 = vpop.f32.mrb[0].mxu0
    %v2654 = vadd.f32 0.0, %v2653
    %v2655 = vpop.f32.mrb[0].mxu0
    %2656 = vmatprep.mubr.f32.mxu0 0.0
    %2657 = vmatmul.mubr.f32.gmra.mrb[0].mxu0 %v2255
    %v2658 = vpop.f32.mrb[0].mxu0
    %v2659 = vadd.f32 0.0, %v2658
    %v2660 = vpop.f32.mrb[0].mxu0
    %2661 = vmatprep.mubr.f32.mxu0 0.0
    %2662 = vmatmul.mubr.f32.gmra.mrb[0].mxu0 %v2257
    %v2663 = vpop.f32.mrb[0].mxu0
    %v2664 = vadd.f32 0.0, %v2663
    %v2665 = vpop.f32.mrb[0].mxu0
    %2666 = vmatprep.mubr.f32.mxu0 0.0
    %2667 = vmatmul.mubr.f32.gmra.mrb[0].mxu0 %v2260
    %v2668 = vpop.f32.mrb[0].mxu0
    %v2669 = vadd.f32 0.0, %v2668
    %v2670 = vpop.f32.mrb[0].mxu0
    %2671 = vmatprep.mubr.f32.mxu0 0.0
    %2672 = vmatmul.mubr.f32.gmra.mrb[0].mxu0 %v2262
    %v2673 = vpop.f32.mrb[0].mxu0
    %v2674 = vadd.f32 0.0, %v2673
    %v2675 = vpop.f32.mrb[0].mxu0
    %2676 = vmatprep.mubr.f32.mxu0 0.0
    %2677 = vmatmul.mubr.f32.gmra.mrb[0].mxu0 %v2265
    %v2678 = vpop.f32.mrb[0].mxu0
    %v2679 = vadd.f32 0.0, %v2678
    %v2680 = vpop.f32.mrb[0].mxu0
    %2681 = vmatprep.mubr.f32.mxu0 0.0
    %2682 = vmatmul.mubr.f32.gmra.mrb[0].mxu0 %v2267
    %v2683 = vpop.f32.mrb[0].mxu0
    %v2684 = vadd.f32 0.0, %v2683
    %v2685 = vpop.f32.mrb[0].mxu0
    %2686 = vmatprep.mubr.f32.mxu0 0.0
    %2687 = vmatmul.mubr.f32.gmra.mrb[0].mxu0 %v2270
    %v2688 = vpop.f32.mrb[0].mxu0
    %v2689 = vadd.f32 0.0, %v2688
    %v2690 = vpop.f32.mrb[0].mxu0
    %2691 = vmatprep.mubr.f32.mxu0 0.0
    %2692 = vmatmul.mubr.f32.gmra.mrb[0].mxu0 %v2272
    %v2693 = vpop.f32.mrb[0].mxu0
    %v2694 = vadd.f32 0.0, %v2693
    %v2695 = vpop.f32.mrb[0].mxu0
    %2696 = vmatprep.mubr.f32.mxu0 0.0
    %2697 = vmatmul.mubr.f32.gmra.mrb[0].mxu0 %v2275
    %v2698 = vpop.f32.mrb[0].mxu0
    %v2699 = vadd.f32 0.0, %v2698
    %v2700 = vpop.f32.mrb[0].mxu0
    %2701 = vmatprep.mubr.f32.mxu0 0.0
    %2702 = vmatmul.mubr.f32.gmra.mrb[0].mxu0 %v2277
    %v2703 = vpop.f32.mrb[0].mxu0
    %v2704 = vadd.f32 0.0, %v2703
    %v2705 = vpop.f32.mrb[0].mxu0
    %2706 = vmatprep.mubr.f32.mxu0 0.0
    %2707 = vmatmul.mubr.f32.gmra.mrb[0].mxu0 %v2280
    %v2708 = vpop.f32.mrb[0].mxu0
    %v2709 = vadd.f32 0.0, %v2708
    %v2710 = vpop.f32.mrb[0].mxu0
    %2711 = vmatprep.mubr.f32.mxu0 0.0
    %2712 = vmatmul.mubr.f32.gmra.mrb[0].mxu0 %v2282
    %v2713 = vpop.f32.mrb[0].mxu0
    %v2714 = vadd.f32 0.0, %v2713
    %v2715 = vpop.f32.mrb[0].mxu0
    %2716 = vmatprep.mubr.f32.mxu0 0.0
    %2717 = vmatmul.mubr.f32.gmra.mrb[0].mxu0 %v2285
    %v2718 = vpop.f32.mrb[0].mxu0
    %v2719 = vadd.f32 0.0, %v2718
    %v2720 = vpop.f32.mrb[0].mxu0
    %2721 = vmatprep.mubr.f32.mxu0 0.0
    %2722 = vmatmul.mubr.f32.gmra.mrb[0].mxu0 %v2287
    %v2723 = vpop.f32.mrb[0].mxu0
    %v2724 = vadd.f32 0.0, %v2723
    %v2725 = vpop.f32.mrb[0].mxu0
    %2726 = vmatprep.mubr.f32.mxu0 0.0
    %2727 = vmatmul.mubr.f32.gmra.mrb[0].mxu0 %v2290
    %v2728 = vpop.f32.mrb[0].mxu0
    %v2729 = vadd.f32 0.0, %v2728
    %v2730 = vpop.f32.mrb[0].mxu0
    %2731 = vmatprep.mubr.f32.mxu0 0.0
    %2732 = vmatmul.mubr.f32.gmra.mrb[0].mxu0 %v2292
    %v2733 = vpop.f32.mrb[0].mxu0
    %v2734 = vadd.f32 0.0, %v2733
    %v2735 = vpop.f32.mrb[0].mxu0
    %2736 = vmatprep.mubr.f32.mxu0 0.0
    %2737 = vmatmul.mubr.f32.gmra.mrb[0].mxu0 %v2295
    %v2738 = vpop.f32.mrb[0].mxu0
    %v2739 = vadd.f32 0.0, %v2738
    %v2740 = vpop.f32.mrb[0].mxu0
    %2741 = vmatprep.mubr.f32.mxu0 0.0
    %2742 = vmatmul.mubr.f32.gmra.mrb[0].mxu0 %v2297
    %v2743 = vpop.f32.mrb[0].mxu0
    %v2744 = vadd.f32 0.0, %v2743
    %v2745 = vpop.f32.mrb[0].mxu0
    %2746 = vmatprep.mubr.f32.mxu0 0.0
    %2747 = vmatmul.mubr.f32.gmra.mrb[0].mxu0 %v2300
    %v2748 = vpop.f32.mrb[0].mxu0
    %v2749 = vadd.f32 0.0, %v2748
    %v2750 = vpop.f32.mrb[0].mxu0
    %2751 = vmatprep.mubr.f32.mxu0 0.0
    %2752 = vmatmul.mubr.f32.gmra.mrb[0].mxu0 %v2302
    %v2753 = vpop.f32.mrb[0].mxu0
    %v2754 = vadd.f32 0.0, %v2753
    %v2755 = vpop.f32.mrb[0].mxu0
    %2756 = vmatprep.mubr.f32.mxu0 0.0
    %2757 = vmatmul.mubr.f32.gmra.mrb[0].mxu0 %v2305
    %v2758 = vpop.f32.mrb[0].mxu0
    %v2759 = vadd.f32 0.0, %v2758
    %v2760 = vpop.f32.mrb[0].mxu0
    %2761 = vmatprep.mubr.f32.mxu0 0.0
    %2762 = vmatmul.mubr.f32.gmra.mrb[0].mxu0 %v2307
    %v2763 = vpop.f32.mrb[0].mxu0
    %v2764 = vadd.f32 0.0, %v2763
    %v2765 = vpop.f32.mrb[0].mxu0
    %2766 = vmatprep.mubr.f32.mxu0 0.0
    %2767 = vmatmul.mubr.f32.gmra.mrb[0].mxu0 %v2310
    %v2768 = vpop.f32.mrb[0].mxu0
    %v2769 = vadd.f32 0.0, %v2768
    %v2770 = vpop.f32.mrb[0].mxu0
    %2771 = vmatprep.mubr.f32.mxu0 0.0
    %2772 = vmatmul.mubr.f32.gmra.mrb[0].mxu0 %v2312
    %v2773 = vpop.f32.mrb[0].mxu0
    %v2774 = vadd.f32 0.0, %v2773
    %v2775 = vpop.f32.mrb[0].mxu0
    %2776 = vdwg.mxu0
    %v2777 = vadd.f32 %v1839, %v2459
    %v2778 = vadd.f32 %v1844, %v2464
    %v2779 = vadd.f32 %v1849, %v2469
    %v2780 = vadd.f32 %v1854, %v2474
    %v2781 = vadd.f32 %v1859, %v2479
    %v2782 = vadd.f32 %v1864, %v2484
    %v2783 = vadd.f32 %v1869, %v2489
    %v2784 = vadd.f32 %v1874, %v2494
    %v2785 = vadd.f32 %v1879, %v2499
    %v2786 = vadd.f32 %v1884, %v2504
    %v2787 = vadd.f32 %v1889, %v2509
    %v2788 = vadd.f32 %v1894, %v2514
    %v2789 = vadd.f32 %v1899, %v2519
    %v2790 = vadd.f32 %v1904, %v2524
    %v2791 = vadd.f32 %v1909, %v2529
    %v2792 = vadd.f32 %v1914, %v2534
    %v2793 = vadd.f32 %v1919, %v2539
    %v2794 = vadd.f32 %v1924, %v2544
    %v2795 = vadd.f32 %v1929, %v2549
    %v2796 = vadd.f32 %v1934, %v2554
    %v2797 = vadd.f32 %v1939, %v2559
    %v2798 = vadd.f32 %v1944, %v2564
    %v2799 = vadd.f32 %v1949, %v2569
    %v2800 = vadd.f32 %v1954, %v2574
    %v2801 = vadd.f32 %v1959, %v2579
    %v2802 = vadd.f32 %v1964, %v2584
    %v2803 = vadd.f32 %v1969, %v2589
    %v2804 = vadd.f32 %v1974, %v2594
    %v2805 = vadd.f32 %v1979, %v2599
    %v2806 = vadd.f32 %v1984, %v2604
    %v2807 = vadd.f32 %v1989, %v2609
    %v2808 = vadd.f32 %v1994, %v2614
    %v2809 = vadd.f32 %v1999, %v2619
    %v2810 = vadd.f32 %v2004, %v2624
    %v2811 = vadd.f32 %v2009, %v2629
    %v2812 = vadd.f32 %v2014, %v2634
    %v2813 = vadd.f32 %v2019, %v2639
    %v2814 = vadd.f32 %v2024, %v2644
    %v2815 = vadd.f32 %v2029, %v2649
    %v2816 = vadd.f32 %v2034, %v2654
    %v2817 = vadd.f32 %v2039, %v2659
    %v2818 = vadd.f32 %v2044, %v2664
    %v2819 = vadd.f32 %v2049, %v2669
    %v2820 = vadd.f32 %v2054, %v2674
    %v2821 = vadd.f32 %v2059, %v2679
    %v2822 = vadd.f32 %v2064, %v2684
    %v2823 = vadd.f32 %v2069, %v2689
    %v2824 = vadd.f32 %v2074, %v2694
    %v2825 = vadd.f32 %v2079, %v2699
    %v2826 = vadd.f32 %v2084, %v2704
    %v2827 = vadd.f32 %v2089, %v2709
    %v2828 = vadd.f32 %v2094, %v2714
    %v2829 = vadd.f32 %v2099, %v2719
    %v2830 = vadd.f32 %v2104, %v2724
    %v2831 = vadd.f32 %v2109, %v2729
    %v2832 = vadd.f32 %v2114, %v2734
    %v2833 = vadd.f32 %v2119, %v2739
    %v2834 = vadd.f32 %v2124, %v2744
    %v2835 = vadd.f32 %v2129, %v2749
    %v2836 = vadd.f32 %v2134, %v2754
    %v2837 = vadd.f32 %v2139, %v2759
    %v2838 = vadd.f32 %v2144, %v2764
    %v2839 = vadd.f32 %v2149, %v2769
    %v2840 = vadd.f32 %v2154, %v2774
    %s2841 = scalar_lea.vmem %s3, 384
    %v2842 = vld [vmem:[%s2841] sm:$0xff]
    %v2843 = vld [vmem:[%s2841 + $0x8] sm:$0xff]
    %v2844 = vld [vmem:[%s2841 + $0x10] sm:$0xff]
    %v2845 = vld [vmem:[%s2841 + $0x18] sm:$0xff]
    %v2846 = vld [vmem:[%s2841 + $0x20] sm:$0xff]
    %v2847 = vld [vmem:[%s2841 + $0x28] sm:$0xff]
    %v2848 = vld [vmem:[%s2841 + $0x30] sm:$0xff]
    %v2849 = vld [vmem:[%s2841 + $0x38] sm:$0xff]
    %v2850 = vld [vmem:[%s2841 + $0x40] sm:$0xff]
    %v2851 = vld [vmem:[%s2841 + $0x48] sm:$0xff]
    %v2852 = vld [vmem:[%s2841 + $0x50] sm:$0xff]
    %v2853 = vld [vmem:[%s2841 + $0x58] sm:$0xff]
    %v2854 = vld [vmem:[%s2841 + $0x60] sm:$0xff]
    %v2855 = vld [vmem:[%s2841 + $0x68] sm:$0xff]
    %v2856 = vld [vmem:[%s2841 + $0x70] sm:$0xff]
    %v2857 = vld [vmem:[%s2841 + $0x78] sm:$0xff]
    %2858 = vmatprep.subr.mxu0 0.0
    %2859 = vmatpush1.msra.mxu0 %v2842
    %2860 = vmatprep.subr.mxu0 0.0
    %2861 = vmatpush1.msra.mxu0 %v2843
    %2862 = vmatprep.subr.mxu0 0.0
    %2863 = vmatpush1.msra.mxu0 %v2844
    %2864 = vmatprep.subr.mxu0 0.0
    %2865 = vmatpush1.msra.mxu0 %v2845
    %2866 = vmatprep.subr.mxu0 0.0
    %2867 = vmatpush1.msra.mxu0 %v2846
    %2868 = vmatprep.subr.mxu0 0.0
    %2869 = vmatpush1.msra.mxu0 %v2847
    %2870 = vmatprep.subr.mxu0 0.0
    %2871 = vmatpush1.msra.mxu0 %v2848
    %2872 = vmatprep.subr.mxu0 0.0
    %2873 = vmatpush1.msra.mxu0 %v2849
    %2874 = vmatprep.subr.mxu0 0.0
    %2875 = vmatpush1.msra.mxu0 %v2850
    %2876 = vmatprep.subr.mxu0 0.0
    %2877 = vmatpush1.msra.mxu0 %v2851
    %2878 = vmatprep.subr.mxu0 0.0
    %2879 = vmatpush1.msra.mxu0 %v2852
    %2880 = vmatprep.subr.mxu0 0.0
    %2881 = vmatpush1.msra.mxu0 %v2853
    %2882 = vmatprep.subr.mxu0 0.0
    %2883 = vmatpush1.msra.mxu0 %v2854
    %2884 = vmatprep.subr.mxu0 0.0
    %2885 = vmatpush1.msra.mxu0 %v2855
    %2886 = vmatprep.subr.mxu0 0.0
    %2887 = vmatpush1.msra.mxu0 %v2856
    %2888 = vmatprep.subr.mxu0 0.0
    %2889 = vmatpush1.msra.mxu0 %v2857
    %2890 = vmatprep.subr.mxu0 0.0
    %2891 = vmatpush1.msra.mxu0 0.0
    %2892 = vmatprep.subr.mxu0 0.0
    %2893 = vmatpush1.msra.mxu0 0.0
    %2894 = vmatprep.subr.mxu0 0.0
    %2895 = vmatpush1.msra.mxu0 0.0
    %2896 = vmatprep.subr.mxu0 0.0
    %2897 = vmatpush1.msra.mxu0 0.0
    %2898 = vmatprep.subr.mxu0 0.0
    %2899 = vmatpush1.msra.mxu0 0.0
    %2900 = vmatprep.subr.mxu0 0.0
    %2901 = vmatpush1.msra.mxu0 0.0
    %2902 = vmatprep.subr.mxu0 0.0
    %2903 = vmatpush1.msra.mxu0 0.0
    %2904 = vmatprep.subr.mxu0 0.0
    %2905 = vmatpush1.msra.mxu0 0.0
    %2906 = vmatprep.subr.mxu0 0.0
    %2907 = vmatpush1.msra.mxu0 0.0
    %2908 = vmatprep.subr.mxu0 0.0
    %2909 = vmatpush1.msra.mxu0 0.0
    %2910 = vmatprep.subr.mxu0 0.0
    %2911 = vmatpush1.msra.mxu0 0.0
    %2912 = vmatprep.subr.mxu0 0.0
    %2913 = vmatpush1.msra.mxu0 0.0
    %2914 = vmatprep.subr.mxu0 0.0
    %2915 = vmatpush1.msra.mxu0 0.0
    %2916 = vmatprep.subr.mxu0 0.0
    %2917 = vmatpush1.msra.mxu0 0.0
    %2918 = vmatprep.subr.mxu0 0.0
    %2919 = vmatpush1.msra.mxu0 0.0
    %2920 = vmatprep.subr.mxu0 0.0
    %2921 = vmatpush1.msra.mxu0 0.0
    %2922 = vmatprep.mubr.f32.mxu0 0.0
    %2923 = vmatmul.mubr.f32.gmra.mrb[0].mxu0 %v1009
    %v2924 = vpop.f32.mrb[0].mxu0
    %v2925 = vadd.f32 0.0, %v2924
    %v2926 = vpop.f32.mrb[0].mxu0
    %2927 = vmatprep.mubr.f32.mxu0 0.0
    %2928 = vmatmul.mubr.f32.gmra.mrb[0].mxu0 %v816
    %v2929 = vpop.f32.mrb[0].mxu0
    %v2930 = vadd.f32 0.0, %v2929
    %v2931 = vpop.f32.mrb[0].mxu0
    %2932 = vmatprep.mubr.f32.mxu0 0.0
    %2933 = vmatmul.mubr.f32.gmra.mrb[0].mxu0 %v1010
    %v2934 = vpop.f32.mrb[0].mxu0
    %v2935 = vadd.f32 0.0, %v2934
    %v2936 = vpop.f32.mrb[0].mxu0
    %2937 = vmatprep.mubr.f32.mxu0 0.0
    %2938 = vmatmul.mubr.f32.gmra.mrb[0].mxu0 %v819
    %v2939 = vpop.f32.mrb[0].mxu0
    %v2940 = vadd.f32 0.0, %v2939
    %v2941 = vpop.f32.mrb[0].mxu0
    %2942 = vmatprep.mubr.f32.mxu0 0.0
    %2943 = vmatmul.mubr.f32.gmra.mrb[0].mxu0 %v1011
    %v2944 = vpop.f32.mrb[0].mxu0
    %v2945 = vadd.f32 0.0, %v2944
    %v2946 = vpop.f32.mrb[0].mxu0
    %2947 = vmatprep.mubr.f32.mxu0 0.0
    %2948 = vmatmul.mubr.f32.gmra.mrb[0].mxu0 %v822
    %v2949 = vpop.f32.mrb[0].mxu0
    %v2950 = vadd.f32 0.0, %v2949
    %v2951 = vpop.f32.mrb[0].mxu0
    %2952 = vmatprep.mubr.f32.mxu0 0.0
    %2953 = vmatmul.mubr.f32.gmra.mrb[0].mxu0 %v1012
    %v2954 = vpop.f32.mrb[0].mxu0
    %v2955 = vadd.f32 0.0, %v2954
    %v2956 = vpop.f32.mrb[0].mxu0
    %2957 = vmatprep.mubr.f32.mxu0 0.0
    %2958 = vmatmul.mubr.f32.gmra.mrb[0].mxu0 %v825
    %v2959 = vpop.f32.mrb[0].mxu0
    %v2960 = vadd.f32 0.0, %v2959
    %v2961 = vpop.f32.mrb[0].mxu0
    %2962 = vmatprep.mubr.f32.mxu0 0.0
    %2963 = vmatmul.mubr.f32.gmra.mrb[0].mxu0 %v1013
    %v2964 = vpop.f32.mrb[0].mxu0
    %v2965 = vadd.f32 0.0, %v2964
    %v2966 = vpop.f32.mrb[0].mxu0
    %2967 = vmatprep.mubr.f32.mxu0 0.0
    %2968 = vmatmul.mubr.f32.gmra.mrb[0].mxu0 %v828
    %v2969 = vpop.f32.mrb[0].mxu0
    %v2970 = vadd.f32 0.0, %v2969
    %v2971 = vpop.f32.mrb[0].mxu0
    %2972 = vmatprep.mubr.f32.mxu0 0.0
    %2973 = vmatmul.mubr.f32.gmra.mrb[0].mxu0 %v1014
    %v2974 = vpop.f32.mrb[0].mxu0
    %v2975 = vadd.f32 0.0, %v2974
    %v2976 = vpop.f32.mrb[0].mxu0
    %2977 = vmatprep.mubr.f32.mxu0 0.0
    %2978 = vmatmul.mubr.f32.gmra.mrb[0].mxu0 %v831
    %v2979 = vpop.f32.mrb[0].mxu0
    %v2980 = vadd.f32 0.0, %v2979
    %v2981 = vpop.f32.mrb[0].mxu0
    %2982 = vmatprep.mubr.f32.mxu0 0.0
    %2983 = vmatmul.mubr.f32.gmra.mrb[0].mxu0 %v1015
    %v2984 = vpop.f32.mrb[0].mxu0
    %v2985 = vadd.f32 0.0, %v2984
    %v2986 = vpop.f32.mrb[0].mxu0
    %2987 = vmatprep.mubr.f32.mxu0 0.0
    %2988 = vmatmul.mubr.f32.gmra.mrb[0].mxu0 %v834
    %v2989 = vpop.f32.mrb[0].mxu0
    %v2990 = vadd.f32 0.0, %v2989
    %v2991 = vpop.f32.mrb[0].mxu0
    %2992 = vmatprep.mubr.f32.mxu0 0.0
    %2993 = vmatmul.mubr.f32.gmra.mrb[0].mxu0 %v1016
    %v2994 = vpop.f32.mrb[0].mxu0
    %v2995 = vadd.f32 0.0, %v2994
    %v2996 = vpop.f32.mrb[0].mxu0
    %2997 = vmatprep.mubr.f32.mxu0 0.0
    %2998 = vmatmul.mubr.f32.gmra.mrb[0].mxu0 %v837
    %v2999 = vpop.f32.mrb[0].mxu0
    %v3000 = vadd.f32 0.0, %v2999
    %v3001 = vpop.f32.mrb[0].mxu0
    %3002 = vmatprep.mubr.f32.mxu0 0.0
    %3003 = vmatmul.mubr.f32.gmra.mrb[0].mxu0 %v1017
    %v3004 = vpop.f32.mrb[0].mxu0
    %v3005 = vadd.f32 0.0, %v3004
    %v3006 = vpop.f32.mrb[0].mxu0
    %3007 = vmatprep.mubr.f32.mxu0 0.0
    %3008 = vmatmul.mubr.f32.gmra.mrb[0].mxu0 %v840
    %v3009 = vpop.f32.mrb[0].mxu0
    %v3010 = vadd.f32 0.0, %v3009
    %v3011 = vpop.f32.mrb[0].mxu0
    %3012 = vmatprep.mubr.f32.mxu0 0.0
    %3013 = vmatmul.mubr.f32.gmra.mrb[0].mxu0 %v1018
    %v3014 = vpop.f32.mrb[0].mxu0
    %v3015 = vadd.f32 0.0, %v3014
    %v3016 = vpop.f32.mrb[0].mxu0
    %3017 = vmatprep.mubr.f32.mxu0 0.0
    %3018 = vmatmul.mubr.f32.gmra.mrb[0].mxu0 %v843
    %v3019 = vpop.f32.mrb[0].mxu0
    %v3020 = vadd.f32 0.0, %v3019
    %v3021 = vpop.f32.mrb[0].mxu0
    %3022 = vmatprep.mubr.f32.mxu0 0.0
    %3023 = vmatmul.mubr.f32.gmra.mrb[0].mxu0 %v1019
    %v3024 = vpop.f32.mrb[0].mxu0
    %v3025 = vadd.f32 0.0, %v3024
    %v3026 = vpop.f32.mrb[0].mxu0
    %3027 = vmatprep.mubr.f32.mxu0 0.0
    %3028 = vmatmul.mubr.f32.gmra.mrb[0].mxu0 %v846
    %v3029 = vpop.f32.mrb[0].mxu0
    %v3030 = vadd.f32 0.0, %v3029
    %v3031 = vpop.f32.mrb[0].mxu0
    %3032 = vmatprep.mubr.f32.mxu0 0.0
    %3033 = vmatmul.mubr.f32.gmra.mrb[0].mxu0 %v1020
    %v3034 = vpop.f32.mrb[0].mxu0
    %v3035 = vadd.f32 0.0, %v3034
    %v3036 = vpop.f32.mrb[0].mxu0
    %3037 = vmatprep.mubr.f32.mxu0 0.0
    %3038 = vmatmul.mubr.f32.gmra.mrb[0].mxu0 %v849
    %v3039 = vpop.f32.mrb[0].mxu0
    %v3040 = vadd.f32 0.0, %v3039
    %v3041 = vpop.f32.mrb[0].mxu0
    %3042 = vmatprep.mubr.f32.mxu0 0.0
    %3043 = vmatmul.mubr.f32.gmra.mrb[0].mxu0 %v1021
    %v3044 = vpop.f32.mrb[0].mxu0
    %v3045 = vadd.f32 0.0, %v3044
    %v3046 = vpop.f32.mrb[0].mxu0
    %3047 = vmatprep.mubr.f32.mxu0 0.0
    %3048 = vmatmul.mubr.f32.gmra.mrb[0].mxu0 %v852
    %v3049 = vpop.f32.mrb[0].mxu0
    %v3050 = vadd.f32 0.0, %v3049
    %v3051 = vpop.f32.mrb[0].mxu0
    %3052 = vmatprep.mubr.f32.mxu0 0.0
    %3053 = vmatmul.mubr.f32.gmra.mrb[0].mxu0 %v1022
    %v3054 = vpop.f32.mrb[0].mxu0
    %v3055 = vadd.f32 0.0, %v3054
    %v3056 = vpop.f32.mrb[0].mxu0
    %3057 = vmatprep.mubr.f32.mxu0 0.0
    %3058 = vmatmul.mubr.f32.gmra.mrb[0].mxu0 %v855
    %v3059 = vpop.f32.mrb[0].mxu0
    %v3060 = vadd.f32 0.0, %v3059
    %v3061 = vpop.f32.mrb[0].mxu0
    %3062 = vmatprep.mubr.f32.mxu0 0.0
    %3063 = vmatmul.mubr.f32.gmra.mrb[0].mxu0 %v1023
    %v3064 = vpop.f32.mrb[0].mxu0
    %v3065 = vadd.f32 0.0, %v3064
    %v3066 = vpop.f32.mrb[0].mxu0
    %3067 = vmatprep.mubr.f32.mxu0 0.0
    %3068 = vmatmul.mubr.f32.gmra.mrb[0].mxu0 %v858
    %v3069 = vpop.f32.mrb[0].mxu0
    %v3070 = vadd.f32 0.0, %v3069
    %v3071 = vpop.f32.mrb[0].mxu0
    %3072 = vmatprep.mubr.f32.mxu0 0.0
    %3073 = vmatmul.mubr.f32.gmra.mrb[0].mxu0 %v1024
    %v3074 = vpop.f32.mrb[0].mxu0
    %v3075 = vadd.f32 0.0, %v3074
    %v3076 = vpop.f32.mrb[0].mxu0
    %3077 = vmatprep.mubr.f32.mxu0 0.0
    %3078 = vmatmul.mubr.f32.gmra.mrb[0].mxu0 %v861
    %v3079 = vpop.f32.mrb[0].mxu0
    %v3080 = vadd.f32 0.0, %v3079
    %v3081 = vpop.f32.mrb[0].mxu0
    %3082 = vmatprep.mubr.f32.mxu0 0.0
    %3083 = vmatmul.mubr.f32.gmra.mrb[0].mxu0 %v1025
    %v3084 = vpop.f32.mrb[0].mxu0
    %v3085 = vadd.f32 0.0, %v3084
    %v3086 = vpop.f32.mrb[0].mxu0
    %3087 = vmatprep.mubr.f32.mxu0 0.0
    %3088 = vmatmul.mubr.f32.gmra.mrb[0].mxu0 %v864
    %v3089 = vpop.f32.mrb[0].mxu0
    %v3090 = vadd.f32 0.0, %v3089
    %v3091 = vpop.f32.mrb[0].mxu0
    %3092 = vmatprep.mubr.f32.mxu0 0.0
    %3093 = vmatmul.mubr.f32.gmra.mrb[0].mxu0 %v1026
    %v3094 = vpop.f32.mrb[0].mxu0
    %v3095 = vadd.f32 0.0, %v3094
    %v3096 = vpop.f32.mrb[0].mxu0
    %3097 = vmatprep.mubr.f32.mxu0 0.0
    %3098 = vmatmul.mubr.f32.gmra.mrb[0].mxu0 %v867
    %v3099 = vpop.f32.mrb[0].mxu0
    %v3100 = vadd.f32 0.0, %v3099
    %v3101 = vpop.f32.mrb[0].mxu0
    %3102 = vmatprep.mubr.f32.mxu0 0.0
    %3103 = vmatmul.mubr.f32.gmra.mrb[0].mxu0 %v1027
    %v3104 = vpop.f32.mrb[0].mxu0
    %v3105 = vadd.f32 0.0, %v3104
    %v3106 = vpop.f32.mrb[0].mxu0
    %3107 = vmatprep.mubr.f32.mxu0 0.0
    %3108 = vmatmul.mubr.f32.gmra.mrb[0].mxu0 %v870
    %v3109 = vpop.f32.mrb[0].mxu0
    %v3110 = vadd.f32 0.0, %v3109
    %v3111 = vpop.f32.mrb[0].mxu0
    %3112 = vmatprep.mubr.f32.mxu0 0.0
    %3113 = vmatmul.mubr.f32.gmra.mrb[0].mxu0 %v1028
    %v3114 = vpop.f32.mrb[0].mxu0
    %v3115 = vadd.f32 0.0, %v3114
    %v3116 = vpop.f32.mrb[0].mxu0
    %3117 = vmatprep.mubr.f32.mxu0 0.0
    %3118 = vmatmul.mubr.f32.gmra.mrb[0].mxu0 %v873
    %v3119 = vpop.f32.mrb[0].mxu0
    %v3120 = vadd.f32 0.0, %v3119
    %v3121 = vpop.f32.mrb[0].mxu0
    %3122 = vmatprep.mubr.f32.mxu0 0.0
    %3123 = vmatmul.mubr.f32.gmra.mrb[0].mxu0 %v1029
    %v3124 = vpop.f32.mrb[0].mxu0
    %v3125 = vadd.f32 0.0, %v3124
    %v3126 = vpop.f32.mrb[0].mxu0
    %3127 = vmatprep.mubr.f32.mxu0 0.0
    %3128 = vmatmul.mubr.f32.gmra.mrb[0].mxu0 %v876
    %v3129 = vpop.f32.mrb[0].mxu0
    %v3130 = vadd.f32 0.0, %v3129
    %v3131 = vpop.f32.mrb[0].mxu0
    %3132 = vmatprep.mubr.f32.mxu0 0.0
    %3133 = vmatmul.mubr.f32.gmra.mrb[0].mxu0 %v1030
    %v3134 = vpop.f32.mrb[0].mxu0
    %v3135 = vadd.f32 0.0, %v3134
    %v3136 = vpop.f32.mrb[0].mxu0
    %3137 = vmatprep.mubr.f32.mxu0 0.0
    %3138 = vmatmul.mubr.f32.gmra.mrb[0].mxu0 %v879
    %v3139 = vpop.f32.mrb[0].mxu0
    %v3140 = vadd.f32 0.0, %v3139
    %v3141 = vpop.f32.mrb[0].mxu0
    %3142 = vmatprep.mubr.f32.mxu0 0.0
    %3143 = vmatmul.mubr.f32.gmra.mrb[0].mxu0 %v1031
    %v3144 = vpop.f32.mrb[0].mxu0
    %v3145 = vadd.f32 0.0, %v3144
    %v3146 = vpop.f32.mrb[0].mxu0
    %3147 = vmatprep.mubr.f32.mxu0 0.0
    %3148 = vmatmul.mubr.f32.gmra.mrb[0].mxu0 %v882
    %v3149 = vpop.f32.mrb[0].mxu0
    %v3150 = vadd.f32 0.0, %v3149
    %v3151 = vpop.f32.mrb[0].mxu0
    %3152 = vmatprep.mubr.f32.mxu0 0.0
    %3153 = vmatmul.mubr.f32.gmra.mrb[0].mxu0 %v1032
    %v3154 = vpop.f32.mrb[0].mxu0
    %v3155 = vadd.f32 0.0, %v3154
    %v3156 = vpop.f32.mrb[0].mxu0
    %3157 = vmatprep.mubr.f32.mxu0 0.0
    %3158 = vmatmul.mubr.f32.gmra.mrb[0].mxu0 %v885
    %v3159 = vpop.f32.mrb[0].mxu0
    %v3160 = vadd.f32 0.0, %v3159
    %v3161 = vpop.f32.mrb[0].mxu0
    %3162 = vmatprep.mubr.f32.mxu0 0.0
    %3163 = vmatmul.mubr.f32.gmra.mrb[0].mxu0 %v1033
    %v3164 = vpop.f32.mrb[0].mxu0
    %v3165 = vadd.f32 0.0, %v3164
    %v3166 = vpop.f32.mrb[0].mxu0
    %3167 = vmatprep.mubr.f32.mxu0 0.0
    %3168 = vmatmul.mubr.f32.gmra.mrb[0].mxu0 %v888
    %v3169 = vpop.f32.mrb[0].mxu0
    %v3170 = vadd.f32 0.0, %v3169
    %v3171 = vpop.f32.mrb[0].mxu0
    %3172 = vmatprep.mubr.f32.mxu0 0.0
    %3173 = vmatmul.mubr.f32.gmra.mrb[0].mxu0 %v1034
    %v3174 = vpop.f32.mrb[0].mxu0
    %v3175 = vadd.f32 0.0, %v3174
    %v3176 = vpop.f32.mrb[0].mxu0
    %3177 = vmatprep.mubr.f32.mxu0 0.0
    %3178 = vmatmul.mubr.f32.gmra.mrb[0].mxu0 %v891
    %v3179 = vpop.f32.mrb[0].mxu0
    %v3180 = vadd.f32 0.0, %v3179
    %v3181 = vpop.f32.mrb[0].mxu0
    %3182 = vmatprep.mubr.f32.mxu0 0.0
    %3183 = vmatmul.mubr.f32.gmra.mrb[0].mxu0 %v1035
    %v3184 = vpop.f32.mrb[0].mxu0
    %v3185 = vadd.f32 0.0, %v3184
    %v3186 = vpop.f32.mrb[0].mxu0
    %3187 = vmatprep.mubr.f32.mxu0 0.0
    %3188 = vmatmul.mubr.f32.gmra.mrb[0].mxu0 %v894
    %v3189 = vpop.f32.mrb[0].mxu0
    %v3190 = vadd.f32 0.0, %v3189
    %v3191 = vpop.f32.mrb[0].mxu0
    %3192 = vmatprep.mubr.f32.mxu0 0.0
    %3193 = vmatmul.mubr.f32.gmra.mrb[0].mxu0 %v1036
    %v3194 = vpop.f32.mrb[0].mxu0
    %v3195 = vadd.f32 0.0, %v3194
    %v3196 = vpop.f32.mrb[0].mxu0
    %3197 = vmatprep.mubr.f32.mxu0 0.0
    %3198 = vmatmul.mubr.f32.gmra.mrb[0].mxu0 %v897
    %v3199 = vpop.f32.mrb[0].mxu0
    %v3200 = vadd.f32 0.0, %v3199
    %v3201 = vpop.f32.mrb[0].mxu0
    %3202 = vmatprep.mubr.f32.mxu0 0.0
    %3203 = vmatmul.mubr.f32.gmra.mrb[0].mxu0 %v1037
    %v3204 = vpop.f32.mrb[0].mxu0
    %v3205 = vadd.f32 0.0, %v3204
    %v3206 = vpop.f32.mrb[0].mxu0
    %3207 = vmatprep.mubr.f32.mxu0 0.0
    %3208 = vmatmul.mubr.f32.gmra.mrb[0].mxu0 %v900
    %v3209 = vpop.f32.mrb[0].mxu0
    %v3210 = vadd.f32 0.0, %v3209
    %v3211 = vpop.f32.mrb[0].mxu0
    %3212 = vmatprep.mubr.f32.mxu0 0.0
    %3213 = vmatmul.mubr.f32.gmra.mrb[0].mxu0 %v1038
    %v3214 = vpop.f32.mrb[0].mxu0
    %v3215 = vadd.f32 0.0, %v3214
    %v3216 = vpop.f32.mrb[0].mxu0
    %3217 = vmatprep.mubr.f32.mxu0 0.0
    %3218 = vmatmul.mubr.f32.gmra.mrb[0].mxu0 %v903
    %v3219 = vpop.f32.mrb[0].mxu0
    %v3220 = vadd.f32 0.0, %v3219
    %v3221 = vpop.f32.mrb[0].mxu0
    %3222 = vmatprep.mubr.f32.mxu0 0.0
    %3223 = vmatmul.mubr.f32.gmra.mrb[0].mxu0 %v1039
    %v3224 = vpop.f32.mrb[0].mxu0
    %v3225 = vadd.f32 0.0, %v3224
    %v3226 = vpop.f32.mrb[0].mxu0
    %3227 = vmatprep.mubr.f32.mxu0 0.0
    %3228 = vmatmul.mubr.f32.gmra.mrb[0].mxu0 %v906
    %v3229 = vpop.f32.mrb[0].mxu0
    %v3230 = vadd.f32 0.0, %v3229
    %v3231 = vpop.f32.mrb[0].mxu0
    %3232 = vmatprep.mubr.f32.mxu0 0.0
    %3233 = vmatmul.mubr.f32.gmra.mrb[0].mxu0 %v1040
    %v3234 = vpop.f32.mrb[0].mxu0
    %v3235 = vadd.f32 0.0, %v3234
    %v3236 = vpop.f32.mrb[0].mxu0
    %3237 = vmatprep.mubr.f32.mxu0 0.0
    %3238 = vmatmul.mubr.f32.gmra.mrb[0].mxu0 %v909
    %v3239 = vpop.f32.mrb[0].mxu0
    %v3240 = vadd.f32 0.0, %v3239
    %v3241 = vpop.f32.mrb[0].mxu0
    %3242 = vdwg.mxu0
    %v3243 = vadd.f32 %v2777, %v2925
    %v3244 = vadd.f32 %v2778, %v2930
    %v3245 = vadd.f32 %v2779, %v2935
    %v3246 = vadd.f32 %v2780, %v2940
    %v3247 = vadd.f32 %v2781, %v2945
    %v3248 = vadd.f32 %v2782, %v2950
    %v3249 = vadd.f32 %v2783, %v2955
    %v3250 = vadd.f32 %v2784, %v2960
    %v3251 = vadd.f32 %v2785, %v2965
    %v3252 = vadd.f32 %v2786, %v2970
    %v3253 = vadd.f32 %v2787, %v2975
    %v3254 = vadd.f32 %v2788, %v2980
    %v3255 = vadd.f32 %v2789, %v2985
    %v3256 = vadd.f32 %v2790, %v2990
    %v3257 = vadd.f32 %v2791, %v2995
    %v3258 = vadd.f32 %v2792, %v3000
    %v3259 = vadd.f32 %v2793, %v3005
    %v3260 = vadd.f32 %v2794, %v3010
    %v3261 = vadd.f32 %v2795, %v3015
    %v3262 = vadd.f32 %v2796, %v3020
    %v3263 = vadd.f32 %v2797, %v3025
    %v3264 = vadd.f32 %v2798, %v3030
    %v3265 = vadd.f32 %v2799, %v3035
    %v3266 = vadd.f32 %v2800, %v3040
    %v3267 = vadd.f32 %v2801, %v3045
    %v3268 = vadd.f32 %v2802, %v3050
    %v3269 = vadd.f32 %v2803, %v3055
    %v3270 = vadd.f32 %v2804, %v3060
    %v3271 = vadd.f32 %v2805, %v3065
    %v3272 = vadd.f32 %v2806, %v3070
    %v3273 = vadd.f32 %v2807, %v3075
    %v3274 = vadd.f32 %v2808, %v3080
    %v3275 = vadd.f32 %v2809, %v3085
    %v3276 = vadd.f32 %v2810, %v3090
    %v3277 = vadd.f32 %v2811, %v3095
    %v3278 = vadd.f32 %v2812, %v3100
    %v3279 = vadd.f32 %v2813, %v3105
    %v3280 = vadd.f32 %v2814, %v3110
    %v3281 = vadd.f32 %v2815, %v3115
    %v3282 = vadd.f32 %v2816, %v3120
    %v3283 = vadd.f32 %v2817, %v3125
    %v3284 = vadd.f32 %v2818, %v3130
    %v3285 = vadd.f32 %v2819, %v3135
    %v3286 = vadd.f32 %v2820, %v3140
    %v3287 = vadd.f32 %v2821, %v3145
    %v3288 = vadd.f32 %v2822, %v3150
    %v3289 = vadd.f32 %v2823, %v3155
    %v3290 = vadd.f32 %v2824, %v3160
    %v3291 = vadd.f32 %v2825, %v3165
    %v3292 = vadd.f32 %v2826, %v3170
    %v3293 = vadd.f32 %v2827, %v3175
    %v3294 = vadd.f32 %v2828, %v3180
    %v3295 = vadd.f32 %v2829, %v3185
    %v3296 = vadd.f32 %v2830, %v3190
    %v3297 = vadd.f32 %v2831, %v3195
    %v3298 = vadd.f32 %v2832, %v3200
    %v3299 = vadd.f32 %v2833, %v3205
    %v3300 = vadd.f32 %v2834, %v3210
    %v3301 = vadd.f32 %v2835, %v3215
    %v3302 = vadd.f32 %v2836, %v3220
    %v3303 = vadd.f32 %v2837, %v3225
    %v3304 = vadd.f32 %v2838, %v3230
    %v3305 = vadd.f32 %v2839, %v3235
    %v3306 = vadd.f32 %v2840, %v3240
    %v3311 = vrot.slane %v1024, 1
    %v3312 = vrot.slane %v861, 1
    %v3313 = vsel %vm1152, %v3311, %v3312
    %v3314 = vrot.slane %v1057, 1
    %v3315 = vsel %vm1152, %v3312, %v3314
    %v3316 = vrot.slane %v1040, 1
    %v3317 = vrot.slane %v909, 1
    %v3318 = vsel %vm1152, %v3316, %v3317
    %v3319 = vrot.slane %v1073, 1
    %v3320 = vsel %vm1152, %v3317, %v3319
    %s3325 = scalar_lea.vmem %s3, 512
    %v3326 = vld [vmem:[%s3325] sm:$0xff]
    %v3327 = vld [vmem:[%s3325 + $0x8] sm:$0xff]
    %v3328 = vld [vmem:[%s3325 + $0x10] sm:$0xff]
    %v3329 = vld [vmem:[%s3325 + $0x18] sm:$0xff]
    %v3330 = vld [vmem:[%s3325 + $0x20] sm:$0xff]
    %v3331 = vld [vmem:[%s3325 + $0x28] sm:$0xff]
    %v3332 = vld [vmem:[%s3325 + $0x30] sm:$0xff]
    %v3333 = vld [vmem:[%s3325 + $0x38] sm:$0xff]
    %v3334 = vld [vmem:[%s3325 + $0x40] sm:$0xff]
    %v3335 = vld [vmem:[%s3325 + $0x48] sm:$0xff]
    %v3336 = vld [vmem:[%s3325 + $0x50] sm:$0xff]
    %v3337 = vld [vmem:[%s3325 + $0x58] sm:$0xff]
    %v3338 = vld [vmem:[%s3325 + $0x60] sm:$0xff]
    %v3339 = vld [vmem:[%s3325 + $0x68] sm:$0xff]
    %v3340 = vld [vmem:[%s3325 + $0x70] sm:$0xff]
    %v3341 = vld [vmem:[%s3325 + $0x78] sm:$0xff]
    %3342 = vmatprep.subr.mxu0 0.0
    %3343 = vmatpush1.msra.mxu0 %v3326
    %3344 = vmatprep.subr.mxu0 0.0
    %3345 = vmatpush1.msra.mxu0 %v3327
    %3346 = vmatprep.subr.mxu0 0.0
    %3347 = vmatpush1.msra.mxu0 %v3328
    %3348 = vmatprep.subr.mxu0 0.0
    %3349 = vmatpush1.msra.mxu0 %v3329
    %3350 = vmatprep.subr.mxu0 0.0
    %3351 = vmatpush1.msra.mxu0 %v3330
    %3352 = vmatprep.subr.mxu0 0.0
    %3353 = vmatpush1.msra.mxu0 %v3331
    %3354 = vmatprep.subr.mxu0 0.0
    %3355 = vmatpush1.msra.mxu0 %v3332
    %3356 = vmatprep.subr.mxu0 0.0
    %3357 = vmatpush1.msra.mxu0 %v3333
    %3358 = vmatprep.subr.mxu0 0.0
    %3359 = vmatpush1.msra.mxu0 %v3334
    %3360 = vmatprep.subr.mxu0 0.0
    %3361 = vmatpush1.msra.mxu0 %v3335
    %3362 = vmatprep.subr.mxu0 0.0
    %3363 = vmatpush1.msra.mxu0 %v3336
    %3364 = vmatprep.subr.mxu0 0.0
    %3365 = vmatpush1.msra.mxu0 %v3337
    %3366 = vmatprep.subr.mxu0 0.0
    %3367 = vmatpush1.msra.mxu0 %v3338
    %3368 = vmatprep.subr.mxu0 0.0
    %3369 = vmatpush1.msra.mxu0 %v3339
    %3370 = vmatprep.subr.mxu0 0.0
    %3371 = vmatpush1.msra.mxu0 %v3340
    %3372 = vmatprep.subr.mxu0 0.0
    %3373 = vmatpush1.msra.mxu0 %v3341
    %3374 = vmatprep.subr.mxu0 0.0
    %3375 = vmatpush1.msra.mxu0 0.0
    %3376 = vmatprep.subr.mxu0 0.0
    %3377 = vmatpush1.msra.mxu0 0.0
    %3378 = vmatprep.subr.mxu0 0.0
    %3379 = vmatpush1.msra.mxu0 0.0
    %3380 = vmatprep.subr.mxu0 0.0
    %3381 = vmatpush1.msra.mxu0 0.0
    %3382 = vmatprep.subr.mxu0 0.0
    %3383 = vmatpush1.msra.mxu0 0.0
    %3384 = vmatprep.subr.mxu0 0.0
    %3385 = vmatpush1.msra.mxu0 0.0
    %3386 = vmatprep.subr.mxu0 0.0
    %3387 = vmatpush1.msra.mxu0 0.0
    %3388 = vmatprep.subr.mxu0 0.0
    %3389 = vmatpush1.msra.mxu0 0.0
    %3390 = vmatprep.subr.mxu0 0.0
    %3391 = vmatpush1.msra.mxu0 0.0
    %3392 = vmatprep.subr.mxu0 0.0
    %3393 = vmatpush1.msra.mxu0 0.0
    %3394 = vmatprep.subr.mxu0 0.0
    %3395 = vmatpush1.msra.mxu0 0.0
    %3396 = vmatprep.subr.mxu0 0.0
    %3397 = vmatpush1.msra.mxu0 0.0
    %3398 = vmatprep.subr.mxu0 0.0
    %3399 = vmatpush1.msra.mxu0 0.0
    %3400 = vmatprep.subr.mxu0 0.0
    %3401 = vmatpush1.msra.mxu0 0.0
    %3402 = vmatprep.subr.mxu0 0.0
    %3403 = vmatpush1.msra.mxu0 0.0
    %3404 = vmatprep.subr.mxu0 0.0
    %3405 = vmatpush1.msra.mxu0 0.0
    %3406 = vmatprep.mubr.f32.mxu0 0.0
    %3407 = vmatmul.mubr.f32.gmra.mrb[0].mxu0 %v1160
    %v3408 = vpop.f32.mrb[0].mxu0
    %v3409 = vadd.f32 0.0, %v3408
    %v3410 = vpop.f32.mrb[0].mxu0
    %3411 = vmatprep.mubr.f32.mxu0 0.0
    %3412 = vmatmul.mubr.f32.gmra.mrb[0].mxu0 %v1162
    %v3413 = vpop.f32.mrb[0].mxu0
    %v3414 = vadd.f32 0.0, %v3413
    %v3415 = vpop.f32.mrb[0].mxu0
    %3416 = vmatprep.mubr.f32.mxu0 0.0
    %3417 = vmatmul.mubr.f32.gmra.mrb[0].mxu0 %v1165
    %v3418 = vpop.f32.mrb[0].mxu0
    %v3419 = vadd.f32 0.0, %v3418
    %v3420 = vpop.f32.mrb[0].mxu0
    %3421 = vmatprep.mubr.f32.mxu0 0.0
    %3422 = vmatmul.mubr.f32.gmra.mrb[0].mxu0 %v1167
    %v3423 = vpop.f32.mrb[0].mxu0
    %v3424 = vadd.f32 0.0, %v3423
    %v3425 = vpop.f32.mrb[0].mxu0
    %3426 = vmatprep.mubr.f32.mxu0 0.0
    %3427 = vmatmul.mubr.f32.gmra.mrb[0].mxu0 %v1170
    %v3428 = vpop.f32.mrb[0].mxu0
    %v3429 = vadd.f32 0.0, %v3428
    %v3430 = vpop.f32.mrb[0].mxu0
    %3431 = vmatprep.mubr.f32.mxu0 0.0
    %3432 = vmatmul.mubr.f32.gmra.mrb[0].mxu0 %v1172
    %v3433 = vpop.f32.mrb[0].mxu0
    %v3434 = vadd.f32 0.0, %v3433
    %v3435 = vpop.f32.mrb[0].mxu0
    %3436 = vmatprep.mubr.f32.mxu0 0.0
    %3437 = vmatmul.mubr.f32.gmra.mrb[0].mxu0 %v1175
    %v3438 = vpop.f32.mrb[0].mxu0
    %v3439 = vadd.f32 0.0, %v3438
    %v3440 = vpop.f32.mrb[0].mxu0
    %3441 = vmatprep.mubr.f32.mxu0 0.0
    %3442 = vmatmul.mubr.f32.gmra.mrb[0].mxu0 %v1177
    %v3443 = vpop.f32.mrb[0].mxu0
    %v3444 = vadd.f32 0.0, %v3443
    %v3445 = vpop.f32.mrb[0].mxu0
    %3446 = vmatprep.mubr.f32.mxu0 0.0
    %3447 = vmatmul.mubr.f32.gmra.mrb[0].mxu0 %v1180
    %v3448 = vpop.f32.mrb[0].mxu0
    %v3449 = vadd.f32 0.0, %v3448
    %v3450 = vpop.f32.mrb[0].mxu0
    %3451 = vmatprep.mubr.f32.mxu0 0.0
    %3452 = vmatmul.mubr.f32.gmra.mrb[0].mxu0 %v1182
    %v3453 = vpop.f32.mrb[0].mxu0
    %v3454 = vadd.f32 0.0, %v3453
    %v3455 = vpop.f32.mrb[0].mxu0
    %3456 = vmatprep.mubr.f32.mxu0 0.0
    %3457 = vmatmul.mubr.f32.gmra.mrb[0].mxu0 %v1185
    %v3458 = vpop.f32.mrb[0].mxu0
    %v3459 = vadd.f32 0.0, %v3458
    %v3460 = vpop.f32.mrb[0].mxu0
    %3461 = vmatprep.mubr.f32.mxu0 0.0
    %3462 = vmatmul.mubr.f32.gmra.mrb[0].mxu0 %v1187
    %v3463 = vpop.f32.mrb[0].mxu0
    %v3464 = vadd.f32 0.0, %v3463
    %v3465 = vpop.f32.mrb[0].mxu0
    %3466 = vmatprep.mubr.f32.mxu0 0.0
    %3467 = vmatmul.mubr.f32.gmra.mrb[0].mxu0 %v1190
    %v3468 = vpop.f32.mrb[0].mxu0
    %v3469 = vadd.f32 0.0, %v3468
    %v3470 = vpop.f32.mrb[0].mxu0
    %3471 = vmatprep.mubr.f32.mxu0 0.0
    %3472 = vmatmul.mubr.f32.gmra.mrb[0].mxu0 %v1192
    %v3473 = vpop.f32.mrb[0].mxu0
    %v3474 = vadd.f32 0.0, %v3473
    %v3475 = vpop.f32.mrb[0].mxu0
    %3476 = vmatprep.mubr.f32.mxu0 0.0
    %3477 = vmatmul.mubr.f32.gmra.mrb[0].mxu0 %v1195
    %v3478 = vpop.f32.mrb[0].mxu0
    %v3479 = vadd.f32 0.0, %v3478
    %v3480 = vpop.f32.mrb[0].mxu0
    %3481 = vmatprep.mubr.f32.mxu0 0.0
    %3482 = vmatmul.mubr.f32.gmra.mrb[0].mxu0 %v1197
    %v3483 = vpop.f32.mrb[0].mxu0
    %v3484 = vadd.f32 0.0, %v3483
    %v3485 = vpop.f32.mrb[0].mxu0
    %3486 = vmatprep.mubr.f32.mxu0 0.0
    %3487 = vmatmul.mubr.f32.gmra.mrb[0].mxu0 %v1200
    %v3488 = vpop.f32.mrb[0].mxu0
    %v3489 = vadd.f32 0.0, %v3488
    %v3490 = vpop.f32.mrb[0].mxu0
    %3491 = vmatprep.mubr.f32.mxu0 0.0
    %3492 = vmatmul.mubr.f32.gmra.mrb[0].mxu0 %v1202
    %v3493 = vpop.f32.mrb[0].mxu0
    %v3494 = vadd.f32 0.0, %v3493
    %v3495 = vpop.f32.mrb[0].mxu0
    %3496 = vmatprep.mubr.f32.mxu0 0.0
    %3497 = vmatmul.mubr.f32.gmra.mrb[0].mxu0 %v1205
    %v3498 = vpop.f32.mrb[0].mxu0
    %v3499 = vadd.f32 0.0, %v3498
    %v3500 = vpop.f32.mrb[0].mxu0
    %3501 = vmatprep.mubr.f32.mxu0 0.0
    %3502 = vmatmul.mubr.f32.gmra.mrb[0].mxu0 %v1207
    %v3503 = vpop.f32.mrb[0].mxu0
    %v3504 = vadd.f32 0.0, %v3503
    %v3505 = vpop.f32.mrb[0].mxu0
    %3506 = vmatprep.mubr.f32.mxu0 0.0
    %3507 = vmatmul.mubr.f32.gmra.mrb[0].mxu0 %v1210
    %v3508 = vpop.f32.mrb[0].mxu0
    %v3509 = vadd.f32 0.0, %v3508
    %v3510 = vpop.f32.mrb[0].mxu0
    %3511 = vmatprep.mubr.f32.mxu0 0.0
    %3512 = vmatmul.mubr.f32.gmra.mrb[0].mxu0 %v1212
    %v3513 = vpop.f32.mrb[0].mxu0
    %v3514 = vadd.f32 0.0, %v3513
    %v3515 = vpop.f32.mrb[0].mxu0
    %3516 = vmatprep.mubr.f32.mxu0 0.0
    %3517 = vmatmul.mubr.f32.gmra.mrb[0].mxu0 %v1215
    %v3518 = vpop.f32.mrb[0].mxu0
    %v3519 = vadd.f32 0.0, %v3518
    %v3520 = vpop.f32.mrb[0].mxu0
    %3521 = vmatprep.mubr.f32.mxu0 0.0
    %3522 = vmatmul.mubr.f32.gmra.mrb[0].mxu0 %v1217
    %v3523 = vpop.f32.mrb[0].mxu0
    %v3524 = vadd.f32 0.0, %v3523
    %v3525 = vpop.f32.mrb[0].mxu0
    %3526 = vmatprep.mubr.f32.mxu0 0.0
    %3527 = vmatmul.mubr.f32.gmra.mrb[0].mxu0 %v1220
    %v3528 = vpop.f32.mrb[0].mxu0
    %v3529 = vadd.f32 0.0, %v3528
    %v3530 = vpop.f32.mrb[0].mxu0
    %3531 = vmatprep.mubr.f32.mxu0 0.0
    %3532 = vmatmul.mubr.f32.gmra.mrb[0].mxu0 %v1222
    %v3533 = vpop.f32.mrb[0].mxu0
    %v3534 = vadd.f32 0.0, %v3533
    %v3535 = vpop.f32.mrb[0].mxu0
    %3536 = vmatprep.mubr.f32.mxu0 0.0
    %3537 = vmatmul.mubr.f32.gmra.mrb[0].mxu0 %v1225
    %v3538 = vpop.f32.mrb[0].mxu0
    %v3539 = vadd.f32 0.0, %v3538
    %v3540 = vpop.f32.mrb[0].mxu0
    %3541 = vmatprep.mubr.f32.mxu0 0.0
    %3542 = vmatmul.mubr.f32.gmra.mrb[0].mxu0 %v1227
    %v3543 = vpop.f32.mrb[0].mxu0
    %v3544 = vadd.f32 0.0, %v3543
    %v3545 = vpop.f32.mrb[0].mxu0
    %3546 = vmatprep.mubr.f32.mxu0 0.0
    %3547 = vmatmul.mubr.f32.gmra.mrb[0].mxu0 %v1230
    %v3548 = vpop.f32.mrb[0].mxu0
    %v3549 = vadd.f32 0.0, %v3548
    %v3550 = vpop.f32.mrb[0].mxu0
    %3551 = vmatprep.mubr.f32.mxu0 0.0
    %3552 = vmatmul.mubr.f32.gmra.mrb[0].mxu0 %v1232
    %v3553 = vpop.f32.mrb[0].mxu0
    %v3554 = vadd.f32 0.0, %v3553
    %v3555 = vpop.f32.mrb[0].mxu0
    %3556 = vmatprep.mubr.f32.mxu0 0.0
    %3557 = vmatmul.mubr.f32.gmra.mrb[0].mxu0 %v3313
    %v3558 = vpop.f32.mrb[0].mxu0
    %v3559 = vadd.f32 0.0, %v3558
    %v3560 = vpop.f32.mrb[0].mxu0
    %3561 = vmatprep.mubr.f32.mxu0 0.0
    %3562 = vmatmul.mubr.f32.gmra.mrb[0].mxu0 %v3315
    %v3563 = vpop.f32.mrb[0].mxu0
    %v3564 = vadd.f32 0.0, %v3563
    %v3565 = vpop.f32.mrb[0].mxu0
    %3566 = vmatprep.mubr.f32.mxu0 0.0
    %3567 = vmatmul.mubr.f32.gmra.mrb[0].mxu0 %v1235
    %v3568 = vpop.f32.mrb[0].mxu0
    %v3569 = vadd.f32 0.0, %v3568
    %v3570 = vpop.f32.mrb[0].mxu0
    %3571 = vmatprep.mubr.f32.mxu0 0.0
    %3572 = vmatmul.mubr.f32.gmra.mrb[0].mxu0 %v1237
    %v3573 = vpop.f32.mrb[0].mxu0
    %v3574 = vadd.f32 0.0, %v3573
    %v3575 = vpop.f32.mrb[0].mxu0
    %3576 = vmatprep.mubr.f32.mxu0 0.0
    %3577 = vmatmul.mubr.f32.gmra.mrb[0].mxu0 %v1240
    %v3578 = vpop.f32.mrb[0].mxu0
    %v3579 = vadd.f32 0.0, %v3578
    %v3580 = vpop.f32.mrb[0].mxu0
    %3581 = vmatprep.mubr.f32.mxu0 0.0
    %3582 = vmatmul.mubr.f32.gmra.mrb[0].mxu0 %v1242
    %v3583 = vpop.f32.mrb[0].mxu0
    %v3584 = vadd.f32 0.0, %v3583
    %v3585 = vpop.f32.mrb[0].mxu0
    %3586 = vmatprep.mubr.f32.mxu0 0.0
    %3587 = vmatmul.mubr.f32.gmra.mrb[0].mxu0 %v1245
    %v3588 = vpop.f32.mrb[0].mxu0
    %v3589 = vadd.f32 0.0, %v3588
    %v3590 = vpop.f32.mrb[0].mxu0
    %3591 = vmatprep.mubr.f32.mxu0 0.0
    %3592 = vmatmul.mubr.f32.gmra.mrb[0].mxu0 %v1247
    %v3593 = vpop.f32.mrb[0].mxu0
    %v3594 = vadd.f32 0.0, %v3593
    %v3595 = vpop.f32.mrb[0].mxu0
    %3596 = vmatprep.mubr.f32.mxu0 0.0
    %3597 = vmatmul.mubr.f32.gmra.mrb[0].mxu0 %v1250
    %v3598 = vpop.f32.mrb[0].mxu0
    %v3599 = vadd.f32 0.0, %v3598
    %v3600 = vpop.f32.mrb[0].mxu0
    %3601 = vmatprep.mubr.f32.mxu0 0.0
    %3602 = vmatmul.mubr.f32.gmra.mrb[0].mxu0 %v1252
    %v3603 = vpop.f32.mrb[0].mxu0
    %v3604 = vadd.f32 0.0, %v3603
    %v3605 = vpop.f32.mrb[0].mxu0
    %3606 = vmatprep.mubr.f32.mxu0 0.0
    %3607 = vmatmul.mubr.f32.gmra.mrb[0].mxu0 %v1255
    %v3608 = vpop.f32.mrb[0].mxu0
    %v3609 = vadd.f32 0.0, %v3608
    %v3610 = vpop.f32.mrb[0].mxu0
    %3611 = vmatprep.mubr.f32.mxu0 0.0
    %3612 = vmatmul.mubr.f32.gmra.mrb[0].mxu0 %v1257
    %v3613 = vpop.f32.mrb[0].mxu0
    %v3614 = vadd.f32 0.0, %v3613
    %v3615 = vpop.f32.mrb[0].mxu0
    %3616 = vmatprep.mubr.f32.mxu0 0.0
    %3617 = vmatmul.mubr.f32.gmra.mrb[0].mxu0 %v1260
    %v3618 = vpop.f32.mrb[0].mxu0
    %v3619 = vadd.f32 0.0, %v3618
    %v3620 = vpop.f32.mrb[0].mxu0
    %3621 = vmatprep.mubr.f32.mxu0 0.0
    %3622 = vmatmul.mubr.f32.gmra.mrb[0].mxu0 %v1262
    %v3623 = vpop.f32.mrb[0].mxu0
    %v3624 = vadd.f32 0.0, %v3623
    %v3625 = vpop.f32.mrb[0].mxu0
    %3626 = vmatprep.mubr.f32.mxu0 0.0
    %3627 = vmatmul.mubr.f32.gmra.mrb[0].mxu0 %v1265
    %v3628 = vpop.f32.mrb[0].mxu0
    %v3629 = vadd.f32 0.0, %v3628
    %v3630 = vpop.f32.mrb[0].mxu0
    %3631 = vmatprep.mubr.f32.mxu0 0.0
    %3632 = vmatmul.mubr.f32.gmra.mrb[0].mxu0 %v1267
    %v3633 = vpop.f32.mrb[0].mxu0
    %v3634 = vadd.f32 0.0, %v3633
    %v3635 = vpop.f32.mrb[0].mxu0
    %3636 = vmatprep.mubr.f32.mxu0 0.0
    %3637 = vmatmul.mubr.f32.gmra.mrb[0].mxu0 %v1270
    %v3638 = vpop.f32.mrb[0].mxu0
    %v3639 = vadd.f32 0.0, %v3638
    %v3640 = vpop.f32.mrb[0].mxu0
    %3641 = vmatprep.mubr.f32.mxu0 0.0
    %3642 = vmatmul.mubr.f32.gmra.mrb[0].mxu0 %v1272
    %v3643 = vpop.f32.mrb[0].mxu0
    %v3644 = vadd.f32 0.0, %v3643
    %v3645 = vpop.f32.mrb[0].mxu0
    %3646 = vmatprep.mubr.f32.mxu0 0.0
    %3647 = vmatmul.mubr.f32.gmra.mrb[0].mxu0 %v1275
    %v3648 = vpop.f32.mrb[0].mxu0
    %v3649 = vadd.f32 0.0, %v3648
    %v3650 = vpop.f32.mrb[0].mxu0
    %3651 = vmatprep.mubr.f32.mxu0 0.0
    %3652 = vmatmul.mubr.f32.gmra.mrb[0].mxu0 %v1277
    %v3653 = vpop.f32.mrb[0].mxu0
    %v3654 = vadd.f32 0.0, %v3653
    %v3655 = vpop.f32.mrb[0].mxu0
    %3656 = vmatprep.mubr.f32.mxu0 0.0
    %3657 = vmatmul.mubr.f32.gmra.mrb[0].mxu0 %v1280
    %v3658 = vpop.f32.mrb[0].mxu0
    %v3659 = vadd.f32 0.0, %v3658
    %v3660 = vpop.f32.mrb[0].mxu0
    %3661 = vmatprep.mubr.f32.mxu0 0.0
    %3662 = vmatmul.mubr.f32.gmra.mrb[0].mxu0 %v1282
    %v3663 = vpop.f32.mrb[0].mxu0
    %v3664 = vadd.f32 0.0, %v3663
    %v3665 = vpop.f32.mrb[0].mxu0
    %3666 = vmatprep.mubr.f32.mxu0 0.0
    %3667 = vmatmul.mubr.f32.gmra.mrb[0].mxu0 %v1285
    %v3668 = vpop.f32.mrb[0].mxu0
    %v3669 = vadd.f32 0.0, %v3668
    %v3670 = vpop.f32.mrb[0].mxu0
    %3671 = vmatprep.mubr.f32.mxu0 0.0
    %3672 = vmatmul.mubr.f32.gmra.mrb[0].mxu0 %v1287
    %v3673 = vpop.f32.mrb[0].mxu0
    %v3674 = vadd.f32 0.0, %v3673
    %v3675 = vpop.f32.mrb[0].mxu0
    %3676 = vmatprep.mubr.f32.mxu0 0.0
    %3677 = vmatmul.mubr.f32.gmra.mrb[0].mxu0 %v1290
    %v3678 = vpop.f32.mrb[0].mxu0
    %v3679 = vadd.f32 0.0, %v3678
    %v3680 = vpop.f32.mrb[0].mxu0
    %3681 = vmatprep.mubr.f32.mxu0 0.0
    %3682 = vmatmul.mubr.f32.gmra.mrb[0].mxu0 %v1292
    %v3683 = vpop.f32.mrb[0].mxu0
    %v3684 = vadd.f32 0.0, %v3683
    %v3685 = vpop.f32.mrb[0].mxu0
    %3686 = vmatprep.mubr.f32.mxu0 0.0
    %3687 = vmatmul.mubr.f32.gmra.mrb[0].mxu0 %v1295
    %v3688 = vpop.f32.mrb[0].mxu0
    %v3689 = vadd.f32 0.0, %v3688
    %v3690 = vpop.f32.mrb[0].mxu0
    %3691 = vmatprep.mubr.f32.mxu0 0.0
    %3692 = vmatmul.mubr.f32.gmra.mrb[0].mxu0 %v1297
    %v3693 = vpop.f32.mrb[0].mxu0
    %v3694 = vadd.f32 0.0, %v3693
    %v3695 = vpop.f32.mrb[0].mxu0
    %3696 = vmatprep.mubr.f32.mxu0 0.0
    %3697 = vmatmul.mubr.f32.gmra.mrb[0].mxu0 %v1300
    %v3698 = vpop.f32.mrb[0].mxu0
    %v3699 = vadd.f32 0.0, %v3698
    %v3700 = vpop.f32.mrb[0].mxu0
    %3701 = vmatprep.mubr.f32.mxu0 0.0
    %3702 = vmatmul.mubr.f32.gmra.mrb[0].mxu0 %v1302
    %v3703 = vpop.f32.mrb[0].mxu0
    %v3704 = vadd.f32 0.0, %v3703
    %v3705 = vpop.f32.mrb[0].mxu0
    %3706 = vmatprep.mubr.f32.mxu0 0.0
    %3707 = vmatmul.mubr.f32.gmra.mrb[0].mxu0 %v1305
    %v3708 = vpop.f32.mrb[0].mxu0
    %v3709 = vadd.f32 0.0, %v3708
    %v3710 = vpop.f32.mrb[0].mxu0
    %3711 = vmatprep.mubr.f32.mxu0 0.0
    %3712 = vmatmul.mubr.f32.gmra.mrb[0].mxu0 %v1307
    %v3713 = vpop.f32.mrb[0].mxu0
    %v3714 = vadd.f32 0.0, %v3713
    %v3715 = vpop.f32.mrb[0].mxu0
    %3716 = vmatprep.mubr.f32.mxu0 0.0
    %3717 = vmatmul.mubr.f32.gmra.mrb[0].mxu0 %v3318
    %v3718 = vpop.f32.mrb[0].mxu0
    %v3719 = vadd.f32 0.0, %v3718
    %v3720 = vpop.f32.mrb[0].mxu0
    %3721 = vmatprep.mubr.f32.mxu0 0.0
    %3722 = vmatmul.mubr.f32.gmra.mrb[0].mxu0 %v3320
    %v3723 = vpop.f32.mrb[0].mxu0
    %v3724 = vadd.f32 0.0, %v3723
    %v3725 = vpop.f32.mrb[0].mxu0
    %3726 = vdwg.mxu0
    %v3727 = vadd.f32 %v3243, %v3409
    %v3728 = vadd.f32 %v3244, %v3414
    %v3729 = vadd.f32 %v3245, %v3419
    %v3730 = vadd.f32 %v3246, %v3424
    %v3731 = vadd.f32 %v3247, %v3429
    %v3732 = vadd.f32 %v3248, %v3434
    %v3733 = vadd.f32 %v3249, %v3439
    %v3734 = vadd.f32 %v3250, %v3444
    %v3735 = vadd.f32 %v3251, %v3449
    %v3736 = vadd.f32 %v3252, %v3454
    %v3737 = vadd.f32 %v3253, %v3459
    %v3738 = vadd.f32 %v3254, %v3464
    %v3739 = vadd.f32 %v3255, %v3469
    %v3740 = vadd.f32 %v3256, %v3474
    %v3741 = vadd.f32 %v3257, %v3479
    %v3742 = vadd.f32 %v3258, %v3484
    %v3743 = vadd.f32 %v3259, %v3489
    %v3744 = vadd.f32 %v3260, %v3494
    %v3745 = vadd.f32 %v3261, %v3499
    %v3746 = vadd.f32 %v3262, %v3504
    %v3747 = vadd.f32 %v3263, %v3509
    %v3748 = vadd.f32 %v3264, %v3514
    %v3749 = vadd.f32 %v3265, %v3519
    %v3750 = vadd.f32 %v3266, %v3524
    %v3751 = vadd.f32 %v3267, %v3529
    %v3752 = vadd.f32 %v3268, %v3534
    %v3753 = vadd.f32 %v3269, %v3539
    %v3754 = vadd.f32 %v3270, %v3544
    %v3755 = vadd.f32 %v3271, %v3549
    %v3756 = vadd.f32 %v3272, %v3554
    %v3757 = vadd.f32 %v3273, %v3559
    %v3758 = vadd.f32 %v3274, %v3564
    %v3759 = vadd.f32 %v3275, %v3569
    %v3760 = vadd.f32 %v3276, %v3574
    %v3761 = vadd.f32 %v3277, %v3579
    %v3762 = vadd.f32 %v3278, %v3584
    %v3763 = vadd.f32 %v3279, %v3589
    %v3764 = vadd.f32 %v3280, %v3594
    %v3765 = vadd.f32 %v3281, %v3599
    %v3766 = vadd.f32 %v3282, %v3604
    %v3767 = vadd.f32 %v3283, %v3609
    %v3768 = vadd.f32 %v3284, %v3614
    %v3769 = vadd.f32 %v3285, %v3619
    %v3770 = vadd.f32 %v3286, %v3624
    %v3771 = vadd.f32 %v3287, %v3629
    %v3772 = vadd.f32 %v3288, %v3634
    %v3773 = vadd.f32 %v3289, %v3639
    %v3774 = vadd.f32 %v3290, %v3644
    %v3775 = vadd.f32 %v3291, %v3649
    %v3776 = vadd.f32 %v3292, %v3654
    %v3777 = vadd.f32 %v3293, %v3659
    %v3778 = vadd.f32 %v3294, %v3664
    %v3779 = vadd.f32 %v3295, %v3669
    %v3780 = vadd.f32 %v3296, %v3674
    %v3781 = vadd.f32 %v3297, %v3679
    %v3782 = vadd.f32 %v3298, %v3684
    %v3783 = vadd.f32 %v3299, %v3689
    %v3784 = vadd.f32 %v3300, %v3694
    %v3785 = vadd.f32 %v3301, %v3699
    %v3786 = vadd.f32 %v3302, %v3704
    %v3787 = vadd.f32 %v3303, %v3709
    %v3788 = vadd.f32 %v3304, %v3714
    %v3789 = vadd.f32 %v3305, %v3719
    %v3790 = vadd.f32 %v3306, %v3724
    %v3791 = vrot.slane %v1024, 2
    %v3792 = vrot.slane %v861, 2
    %v3793 = vsel %vm2157, %v3791, %v3792
    %v3794 = vrot.slane %v1057, 2
    %v3795 = vsel %vm2157, %v3792, %v3794
    %v3796 = vrot.slane %v1040, 2
    %v3797 = vrot.slane %v909, 2
    %v3798 = vsel %vm2157, %v3796, %v3797
    %v3799 = vrot.slane %v1073, 2
    %v3800 = vsel %vm2157, %v3797, %v3799
    %s3805 = scalar_lea.vmem %s3, 640
    %v3806 = vld [vmem:[%s3805] sm:$0xff]
    %v3807 = vld [vmem:[%s3805 + $0x8] sm:$0xff]
    %v3808 = vld [vmem:[%s3805 + $0x10] sm:$0xff]
    %v3809 = vld [vmem:[%s3805 + $0x18] sm:$0xff]
    %v3810 = vld [vmem:[%s3805 + $0x20] sm:$0xff]
    %v3811 = vld [vmem:[%s3805 + $0x28] sm:$0xff]
    %v3812 = vld [vmem:[%s3805 + $0x30] sm:$0xff]
    %v3813 = vld [vmem:[%s3805 + $0x38] sm:$0xff]
    %v3814 = vld [vmem:[%s3805 + $0x40] sm:$0xff]
    %v3815 = vld [vmem:[%s3805 + $0x48] sm:$0xff]
    %v3816 = vld [vmem:[%s3805 + $0x50] sm:$0xff]
    %v3817 = vld [vmem:[%s3805 + $0x58] sm:$0xff]
    %v3818 = vld [vmem:[%s3805 + $0x60] sm:$0xff]
    %v3819 = vld [vmem:[%s3805 + $0x68] sm:$0xff]
    %v3820 = vld [vmem:[%s3805 + $0x70] sm:$0xff]
    %v3821 = vld [vmem:[%s3805 + $0x78] sm:$0xff]
    %3822 = vmatprep.subr.mxu0 0.0
    %3823 = vmatpush1.msra.mxu0 %v3806
    %3824 = vmatprep.subr.mxu0 0.0
    %3825 = vmatpush1.msra.mxu0 %v3807
    %3826 = vmatprep.subr.mxu0 0.0
    %3827 = vmatpush1.msra.mxu0 %v3808
    %3828 = vmatprep.subr.mxu0 0.0
    %3829 = vmatpush1.msra.mxu0 %v3809
    %3830 = vmatprep.subr.mxu0 0.0
    %3831 = vmatpush1.msra.mxu0 %v3810
    %3832 = vmatprep.subr.mxu0 0.0
    %3833 = vmatpush1.msra.mxu0 %v3811
    %3834 = vmatprep.subr.mxu0 0.0
    %3835 = vmatpush1.msra.mxu0 %v3812
    %3836 = vmatprep.subr.mxu0 0.0
    %3837 = vmatpush1.msra.mxu0 %v3813
    %3838 = vmatprep.subr.mxu0 0.0
    %3839 = vmatpush1.msra.mxu0 %v3814
    %3840 = vmatprep.subr.mxu0 0.0
    %3841 = vmatpush1.msra.mxu0 %v3815
    %3842 = vmatprep.subr.mxu0 0.0
    %3843 = vmatpush1.msra.mxu0 %v3816
    %3844 = vmatprep.subr.mxu0 0.0
    %3845 = vmatpush1.msra.mxu0 %v3817
    %3846 = vmatprep.subr.mxu0 0.0
    %3847 = vmatpush1.msra.mxu0 %v3818
    %3848 = vmatprep.subr.mxu0 0.0
    %3849 = vmatpush1.msra.mxu0 %v3819
    %3850 = vmatprep.subr.mxu0 0.0
    %3851 = vmatpush1.msra.mxu0 %v3820
    %3852 = vmatprep.subr.mxu0 0.0
    %3853 = vmatpush1.msra.mxu0 %v3821
    %3854 = vmatprep.subr.mxu0 0.0
    %3855 = vmatpush1.msra.mxu0 0.0
    %3856 = vmatprep.subr.mxu0 0.0
    %3857 = vmatpush1.msra.mxu0 0.0
    %3858 = vmatprep.subr.mxu0 0.0
    %3859 = vmatpush1.msra.mxu0 0.0
    %3860 = vmatprep.subr.mxu0 0.0
    %3861 = vmatpush1.msra.mxu0 0.0
    %3862 = vmatprep.subr.mxu0 0.0
    %3863 = vmatpush1.msra.mxu0 0.0
    %3864 = vmatprep.subr.mxu0 0.0
    %3865 = vmatpush1.msra.mxu0 0.0
    %3866 = vmatprep.subr.mxu0 0.0
    %3867 = vmatpush1.msra.mxu0 0.0
    %3868 = vmatprep.subr.mxu0 0.0
    %3869 = vmatpush1.msra.mxu0 0.0
    %3870 = vmatprep.subr.mxu0 0.0
    %3871 = vmatpush1.msra.mxu0 0.0
    %3872 = vmatprep.subr.mxu0 0.0
    %3873 = vmatpush1.msra.mxu0 0.0
    %3874 = vmatprep.subr.mxu0 0.0
    %3875 = vmatpush1.msra.mxu0 0.0
    %3876 = vmatprep.subr.mxu0 0.0
    %3877 = vmatpush1.msra.mxu0 0.0
    %3878 = vmatprep.subr.mxu0 0.0
    %3879 = vmatpush1.msra.mxu0 0.0
    %3880 = vmatprep.subr.mxu0 0.0
    %3881 = vmatpush1.msra.mxu0 0.0
    %3882 = vmatprep.subr.mxu0 0.0
    %3883 = vmatpush1.msra.mxu0 0.0
    %3884 = vmatprep.subr.mxu0 0.0
    %3885 = vmatpush1.msra.mxu0 0.0
    %3886 = vmatprep.mubr.f32.mxu0 0.0
    %3887 = vmatmul.mubr.f32.gmra.mrb[0].mxu0 %v2165
    %v3888 = vpop.f32.mrb[0].mxu0
    %v3889 = vadd.f32 0.0, %v3888
    %v3890 = vpop.f32.mrb[0].mxu0
    %3891 = vmatprep.mubr.f32.mxu0 0.0
    %3892 = vmatmul.mubr.f32.gmra.mrb[0].mxu0 %v2167
    %v3893 = vpop.f32.mrb[0].mxu0
    %v3894 = vadd.f32 0.0, %v3893
    %v3895 = vpop.f32.mrb[0].mxu0
    %3896 = vmatprep.mubr.f32.mxu0 0.0
    %3897 = vmatmul.mubr.f32.gmra.mrb[0].mxu0 %v2170
    %v3898 = vpop.f32.mrb[0].mxu0
    %v3899 = vadd.f32 0.0, %v3898
    %v3900 = vpop.f32.mrb[0].mxu0
    %3901 = vmatprep.mubr.f32.mxu0 0.0
    %3902 = vmatmul.mubr.f32.gmra.mrb[0].mxu0 %v2172
    %v3903 = vpop.f32.mrb[0].mxu0
    %v3904 = vadd.f32 0.0, %v3903
    %v3905 = vpop.f32.mrb[0].mxu0
    %3906 = vmatprep.mubr.f32.mxu0 0.0
    %3907 = vmatmul.mubr.f32.gmra.mrb[0].mxu0 %v2175
    %v3908 = vpop.f32.mrb[0].mxu0
    %v3909 = vadd.f32 0.0, %v3908
    %v3910 = vpop.f32.mrb[0].mxu0
    %3911 = vmatprep.mubr.f32.mxu0 0.0
    %3912 = vmatmul.mubr.f32.gmra.mrb[0].mxu0 %v2177
    %v3913 = vpop.f32.mrb[0].mxu0
    %v3914 = vadd.f32 0.0, %v3913
    %v3915 = vpop.f32.mrb[0].mxu0
    %3916 = vmatprep.mubr.f32.mxu0 0.0
    %3917 = vmatmul.mubr.f32.gmra.mrb[0].mxu0 %v2180
    %v3918 = vpop.f32.mrb[0].mxu0
    %v3919 = vadd.f32 0.0, %v3918
    %v3920 = vpop.f32.mrb[0].mxu0
    %3921 = vmatprep.mubr.f32.mxu0 0.0
    %3922 = vmatmul.mubr.f32.gmra.mrb[0].mxu0 %v2182
    %v3923 = vpop.f32.mrb[0].mxu0
    %v3924 = vadd.f32 0.0, %v3923
    %v3925 = vpop.f32.mrb[0].mxu0
    %3926 = vmatprep.mubr.f32.mxu0 0.0
    %3927 = vmatmul.mubr.f32.gmra.mrb[0].mxu0 %v2185
    %v3928 = vpop.f32.mrb[0].mxu0
    %v3929 = vadd.f32 0.0, %v3928
    %v3930 = vpop.f32.mrb[0].mxu0
    %3931 = vmatprep.mubr.f32.mxu0 0.0
    %3932 = vmatmul.mubr.f32.gmra.mrb[0].mxu0 %v2187
    %v3933 = vpop.f32.mrb[0].mxu0
    %v3934 = vadd.f32 0.0, %v3933
    %v3935 = vpop.f32.mrb[0].mxu0
    %3936 = vmatprep.mubr.f32.mxu0 0.0
    %3937 = vmatmul.mubr.f32.gmra.mrb[0].mxu0 %v2190
    %v3938 = vpop.f32.mrb[0].mxu0
    %v3939 = vadd.f32 0.0, %v3938
    %v3940 = vpop.f32.mrb[0].mxu0
    %3941 = vmatprep.mubr.f32.mxu0 0.0
    %3942 = vmatmul.mubr.f32.gmra.mrb[0].mxu0 %v2192
    %v3943 = vpop.f32.mrb[0].mxu0
    %v3944 = vadd.f32 0.0, %v3943
    %v3945 = vpop.f32.mrb[0].mxu0
    %3946 = vmatprep.mubr.f32.mxu0 0.0
    %3947 = vmatmul.mubr.f32.gmra.mrb[0].mxu0 %v2195
    %v3948 = vpop.f32.mrb[0].mxu0
    %v3949 = vadd.f32 0.0, %v3948
    %v3950 = vpop.f32.mrb[0].mxu0
    %3951 = vmatprep.mubr.f32.mxu0 0.0
    %3952 = vmatmul.mubr.f32.gmra.mrb[0].mxu0 %v2197
    %v3953 = vpop.f32.mrb[0].mxu0
    %v3954 = vadd.f32 0.0, %v3953
    %v3955 = vpop.f32.mrb[0].mxu0
    %3956 = vmatprep.mubr.f32.mxu0 0.0
    %3957 = vmatmul.mubr.f32.gmra.mrb[0].mxu0 %v2200
    %v3958 = vpop.f32.mrb[0].mxu0
    %v3959 = vadd.f32 0.0, %v3958
    %v3960 = vpop.f32.mrb[0].mxu0
    %3961 = vmatprep.mubr.f32.mxu0 0.0
    %3962 = vmatmul.mubr.f32.gmra.mrb[0].mxu0 %v2202
    %v3963 = vpop.f32.mrb[0].mxu0
    %v3964 = vadd.f32 0.0, %v3963
    %v3965 = vpop.f32.mrb[0].mxu0
    %3966 = vmatprep.mubr.f32.mxu0 0.0
    %3967 = vmatmul.mubr.f32.gmra.mrb[0].mxu0 %v2205
    %v3968 = vpop.f32.mrb[0].mxu0
    %v3969 = vadd.f32 0.0, %v3968
    %v3970 = vpop.f32.mrb[0].mxu0
    %3971 = vmatprep.mubr.f32.mxu0 0.0
    %3972 = vmatmul.mubr.f32.gmra.mrb[0].mxu0 %v2207
    %v3973 = vpop.f32.mrb[0].mxu0
    %v3974 = vadd.f32 0.0, %v3973
    %v3975 = vpop.f32.mrb[0].mxu0
    %3976 = vmatprep.mubr.f32.mxu0 0.0
    %3977 = vmatmul.mubr.f32.gmra.mrb[0].mxu0 %v2210
    %v3978 = vpop.f32.mrb[0].mxu0
    %v3979 = vadd.f32 0.0, %v3978
    %v3980 = vpop.f32.mrb[0].mxu0
    %3981 = vmatprep.mubr.f32.mxu0 0.0
    %3982 = vmatmul.mubr.f32.gmra.mrb[0].mxu0 %v2212
    %v3983 = vpop.f32.mrb[0].mxu0
    %v3984 = vadd.f32 0.0, %v3983
    %v3985 = vpop.f32.mrb[0].mxu0
    %3986 = vmatprep.mubr.f32.mxu0 0.0
    %3987 = vmatmul.mubr.f32.gmra.mrb[0].mxu0 %v2215
    %v3988 = vpop.f32.mrb[0].mxu0
    %v3989 = vadd.f32 0.0, %v3988
    %v3990 = vpop.f32.mrb[0].mxu0
    %3991 = vmatprep.mubr.f32.mxu0 0.0
    %3992 = vmatmul.mubr.f32.gmra.mrb[0].mxu0 %v2217
    %v3993 = vpop.f32.mrb[0].mxu0
    %v3994 = vadd.f32 0.0, %v3993
    %v3995 = vpop.f32.mrb[0].mxu0
    %3996 = vmatprep.mubr.f32.mxu0 0.0
    %3997 = vmatmul.mubr.f32.gmra.mrb[0].mxu0 %v2220
    %v3998 = vpop.f32.mrb[0].mxu0
    %v3999 = vadd.f32 0.0, %v3998
    %v4000 = vpop.f32.mrb[0].mxu0
    %4001 = vmatprep.mubr.f32.mxu0 0.0
    %4002 = vmatmul.mubr.f32.gmra.mrb[0].mxu0 %v2222
    %v4003 = vpop.f32.mrb[0].mxu0
    %v4004 = vadd.f32 0.0, %v4003
    %v4005 = vpop.f32.mrb[0].mxu0
    %4006 = vmatprep.mubr.f32.mxu0 0.0
    %4007 = vmatmul.mubr.f32.gmra.mrb[0].mxu0 %v2225
    %v4008 = vpop.f32.mrb[0].mxu0
    %v4009 = vadd.f32 0.0, %v4008
    %v4010 = vpop.f32.mrb[0].mxu0
    %4011 = vmatprep.mubr.f32.mxu0 0.0
    %4012 = vmatmul.mubr.f32.gmra.mrb[0].mxu0 %v2227
    %v4013 = vpop.f32.mrb[0].mxu0
    %v4014 = vadd.f32 0.0, %v4013
    %v4015 = vpop.f32.mrb[0].mxu0
    %4016 = vmatprep.mubr.f32.mxu0 0.0
    %4017 = vmatmul.mubr.f32.gmra.mrb[0].mxu0 %v2230
    %v4018 = vpop.f32.mrb[0].mxu0
    %v4019 = vadd.f32 0.0, %v4018
    %v4020 = vpop.f32.mrb[0].mxu0
    %4021 = vmatprep.mubr.f32.mxu0 0.0
    %4022 = vmatmul.mubr.f32.gmra.mrb[0].mxu0 %v2232
    %v4023 = vpop.f32.mrb[0].mxu0
    %v4024 = vadd.f32 0.0, %v4023
    %v4025 = vpop.f32.mrb[0].mxu0
    %4026 = vmatprep.mubr.f32.mxu0 0.0
    %4027 = vmatmul.mubr.f32.gmra.mrb[0].mxu0 %v2235
    %v4028 = vpop.f32.mrb[0].mxu0
    %v4029 = vadd.f32 0.0, %v4028
    %v4030 = vpop.f32.mrb[0].mxu0
    %4031 = vmatprep.mubr.f32.mxu0 0.0
    %4032 = vmatmul.mubr.f32.gmra.mrb[0].mxu0 %v2237
    %v4033 = vpop.f32.mrb[0].mxu0
    %v4034 = vadd.f32 0.0, %v4033
    %v4035 = vpop.f32.mrb[0].mxu0
    %4036 = vmatprep.mubr.f32.mxu0 0.0
    %4037 = vmatmul.mubr.f32.gmra.mrb[0].mxu0 %v3793
    %v4038 = vpop.f32.mrb[0].mxu0
    %v4039 = vadd.f32 0.0, %v4038
    %v4040 = vpop.f32.mrb[0].mxu0
    %4041 = vmatprep.mubr.f32.mxu0 0.0
    %4042 = vmatmul.mubr.f32.gmra.mrb[0].mxu0 %v3795
    %v4043 = vpop.f32.mrb[0].mxu0
    %v4044 = vadd.f32 0.0, %v4043
    %v4045 = vpop.f32.mrb[0].mxu0
    %4046 = vmatprep.mubr.f32.mxu0 0.0
    %4047 = vmatmul.mubr.f32.gmra.mrb[0].mxu0 %v2240
    %v4048 = vpop.f32.mrb[0].mxu0
    %v4049 = vadd.f32 0.0, %v4048
    %v4050 = vpop.f32.mrb[0].mxu0
    %4051 = vmatprep.mubr.f32.mxu0 0.0
    %4052 = vmatmul.mubr.f32.gmra.mrb[0].mxu0 %v2242
    %v4053 = vpop.f32.mrb[0].mxu0
    %v4054 = vadd.f32 0.0, %v4053
    %v4055 = vpop.f32.mrb[0].mxu0
    %4056 = vmatprep.mubr.f32.mxu0 0.0
    %4057 = vmatmul.mubr.f32.gmra.mrb[0].mxu0 %v2245
    %v4058 = vpop.f32.mrb[0].mxu0
    %v4059 = vadd.f32 0.0, %v4058
    %v4060 = vpop.f32.mrb[0].mxu0
    %4061 = vmatprep.mubr.f32.mxu0 0.0
    %4062 = vmatmul.mubr.f32.gmra.mrb[0].mxu0 %v2247
    %v4063 = vpop.f32.mrb[0].mxu0
    %v4064 = vadd.f32 0.0, %v4063
    %v4065 = vpop.f32.mrb[0].mxu0
    %4066 = vmatprep.mubr.f32.mxu0 0.0
    %4067 = vmatmul.mubr.f32.gmra.mrb[0].mxu0 %v2250
    %v4068 = vpop.f32.mrb[0].mxu0
    %v4069 = vadd.f32 0.0, %v4068
    %v4070 = vpop.f32.mrb[0].mxu0
    %4071 = vmatprep.mubr.f32.mxu0 0.0
    %4072 = vmatmul.mubr.f32.gmra.mrb[0].mxu0 %v2252
    %v4073 = vpop.f32.mrb[0].mxu0
    %v4074 = vadd.f32 0.0, %v4073
    %v4075 = vpop.f32.mrb[0].mxu0
    %4076 = vmatprep.mubr.f32.mxu0 0.0
    %4077 = vmatmul.mubr.f32.gmra.mrb[0].mxu0 %v2255
    %v4078 = vpop.f32.mrb[0].mxu0
    %v4079 = vadd.f32 0.0, %v4078
    %v4080 = vpop.f32.mrb[0].mxu0
    %4081 = vmatprep.mubr.f32.mxu0 0.0
    %4082 = vmatmul.mubr.f32.gmra.mrb[0].mxu0 %v2257
    %v4083 = vpop.f32.mrb[0].mxu0
    %v4084 = vadd.f32 0.0, %v4083
    %v4085 = vpop.f32.mrb[0].mxu0
    %4086 = vmatprep.mubr.f32.mxu0 0.0
    %4087 = vmatmul.mubr.f32.gmra.mrb[0].mxu0 %v2260
    %v4088 = vpop.f32.mrb[0].mxu0
    %v4089 = vadd.f32 0.0, %v4088
    %v4090 = vpop.f32.mrb[0].mxu0
    %4091 = vmatprep.mubr.f32.mxu0 0.0
    %4092 = vmatmul.mubr.f32.gmra.mrb[0].mxu0 %v2262
    %v4093 = vpop.f32.mrb[0].mxu0
    %v4094 = vadd.f32 0.0, %v4093
    %v4095 = vpop.f32.mrb[0].mxu0
    %4096 = vmatprep.mubr.f32.mxu0 0.0
    %4097 = vmatmul.mubr.f32.gmra.mrb[0].mxu0 %v2265
    %v4098 = vpop.f32.mrb[0].mxu0
    %v4099 = vadd.f32 0.0, %v4098
    %v4100 = vpop.f32.mrb[0].mxu0
    %4101 = vmatprep.mubr.f32.mxu0 0.0
    %4102 = vmatmul.mubr.f32.gmra.mrb[0].mxu0 %v2267
    %v4103 = vpop.f32.mrb[0].mxu0
    %v4104 = vadd.f32 0.0, %v4103
    %v4105 = vpop.f32.mrb[0].mxu0
    %4106 = vmatprep.mubr.f32.mxu0 0.0
    %4107 = vmatmul.mubr.f32.gmra.mrb[0].mxu0 %v2270
    %v4108 = vpop.f32.mrb[0].mxu0
    %v4109 = vadd.f32 0.0, %v4108
    %v4110 = vpop.f32.mrb[0].mxu0
    %4111 = vmatprep.mubr.f32.mxu0 0.0
    %4112 = vmatmul.mubr.f32.gmra.mrb[0].mxu0 %v2272
    %v4113 = vpop.f32.mrb[0].mxu0
    %v4114 = vadd.f32 0.0, %v4113
    %v4115 = vpop.f32.mrb[0].mxu0
    %4116 = vmatprep.mubr.f32.mxu0 0.0
    %4117 = vmatmul.mubr.f32.gmra.mrb[0].mxu0 %v2275
    %v4118 = vpop.f32.mrb[0].mxu0
    %v4119 = vadd.f32 0.0, %v4118
    %v4120 = vpop.f32.mrb[0].mxu0
    %4121 = vmatprep.mubr.f32.mxu0 0.0
    %4122 = vmatmul.mubr.f32.gmra.mrb[0].mxu0 %v2277
    %v4123 = vpop.f32.mrb[0].mxu0
    %v4124 = vadd.f32 0.0, %v4123
    %v4125 = vpop.f32.mrb[0].mxu0
    %4126 = vmatprep.mubr.f32.mxu0 0.0
    %4127 = vmatmul.mubr.f32.gmra.mrb[0].mxu0 %v2280
    %v4128 = vpop.f32.mrb[0].mxu0
    %v4129 = vadd.f32 0.0, %v4128
    %v4130 = vpop.f32.mrb[0].mxu0
    %4131 = vmatprep.mubr.f32.mxu0 0.0
    %4132 = vmatmul.mubr.f32.gmra.mrb[0].mxu0 %v2282
    %v4133 = vpop.f32.mrb[0].mxu0
    %v4134 = vadd.f32 0.0, %v4133
    %v4135 = vpop.f32.mrb[0].mxu0
    %4136 = vmatprep.mubr.f32.mxu0 0.0
    %4137 = vmatmul.mubr.f32.gmra.mrb[0].mxu0 %v2285
    %v4138 = vpop.f32.mrb[0].mxu0
    %v4139 = vadd.f32 0.0, %v4138
    %v4140 = vpop.f32.mrb[0].mxu0
    %4141 = vmatprep.mubr.f32.mxu0 0.0
    %4142 = vmatmul.mubr.f32.gmra.mrb[0].mxu0 %v2287
    %v4143 = vpop.f32.mrb[0].mxu0
    %v4144 = vadd.f32 0.0, %v4143
    %v4145 = vpop.f32.mrb[0].mxu0
    %4146 = vmatprep.mubr.f32.mxu0 0.0
    %4147 = vmatmul.mubr.f32.gmra.mrb[0].mxu0 %v2290
    %v4148 = vpop.f32.mrb[0].mxu0
    %v4149 = vadd.f32 0.0, %v4148
    %v4150 = vpop.f32.mrb[0].mxu0
    %4151 = vmatprep.mubr.f32.mxu0 0.0
    %4152 = vmatmul.mubr.f32.gmra.mrb[0].mxu0 %v2292
    %v4153 = vpop.f32.mrb[0].mxu0
    %v4154 = vadd.f32 0.0, %v4153
    %v4155 = vpop.f32.mrb[0].mxu0
    %4156 = vmatprep.mubr.f32.mxu0 0.0
    %4157 = vmatmul.mubr.f32.gmra.mrb[0].mxu0 %v2295
    %v4158 = vpop.f32.mrb[0].mxu0
    %v4159 = vadd.f32 0.0, %v4158
    %v4160 = vpop.f32.mrb[0].mxu0
    %4161 = vmatprep.mubr.f32.mxu0 0.0
    %4162 = vmatmul.mubr.f32.gmra.mrb[0].mxu0 %v2297
    %v4163 = vpop.f32.mrb[0].mxu0
    %v4164 = vadd.f32 0.0, %v4163
    %v4165 = vpop.f32.mrb[0].mxu0
    %4166 = vmatprep.mubr.f32.mxu0 0.0
    %4167 = vmatmul.mubr.f32.gmra.mrb[0].mxu0 %v2300
    %v4168 = vpop.f32.mrb[0].mxu0
    %v4169 = vadd.f32 0.0, %v4168
    %v4170 = vpop.f32.mrb[0].mxu0
    %4171 = vmatprep.mubr.f32.mxu0 0.0
    %4172 = vmatmul.mubr.f32.gmra.mrb[0].mxu0 %v2302
    %v4173 = vpop.f32.mrb[0].mxu0
    %v4174 = vadd.f32 0.0, %v4173
    %v4175 = vpop.f32.mrb[0].mxu0
    %4176 = vmatprep.mubr.f32.mxu0 0.0
    %4177 = vmatmul.mubr.f32.gmra.mrb[0].mxu0 %v2305
    %v4178 = vpop.f32.mrb[0].mxu0
    %v4179 = vadd.f32 0.0, %v4178
    %v4180 = vpop.f32.mrb[0].mxu0
    %4181 = vmatprep.mubr.f32.mxu0 0.0
    %4182 = vmatmul.mubr.f32.gmra.mrb[0].mxu0 %v2307
    %v4183 = vpop.f32.mrb[0].mxu0
    %v4184 = vadd.f32 0.0, %v4183
    %v4185 = vpop.f32.mrb[0].mxu0
    %4186 = vmatprep.mubr.f32.mxu0 0.0
    %4187 = vmatmul.mubr.f32.gmra.mrb[0].mxu0 %v2310
    %v4188 = vpop.f32.mrb[0].mxu0
    %v4189 = vadd.f32 0.0, %v4188
    %v4190 = vpop.f32.mrb[0].mxu0
    %4191 = vmatprep.mubr.f32.mxu0 0.0
    %4192 = vmatmul.mubr.f32.gmra.mrb[0].mxu0 %v2312
    %v4193 = vpop.f32.mrb[0].mxu0
    %v4194 = vadd.f32 0.0, %v4193
    %v4195 = vpop.f32.mrb[0].mxu0
    %4196 = vmatprep.mubr.f32.mxu0 0.0
    %4197 = vmatmul.mubr.f32.gmra.mrb[0].mxu0 %v3798
    %v4198 = vpop.f32.mrb[0].mxu0
    %v4199 = vadd.f32 0.0, %v4198
    %v4200 = vpop.f32.mrb[0].mxu0
    %4201 = vmatprep.mubr.f32.mxu0 0.0
    %4202 = vmatmul.mubr.f32.gmra.mrb[0].mxu0 %v3800
    %v4203 = vpop.f32.mrb[0].mxu0
    %v4204 = vadd.f32 0.0, %v4203
    %v4205 = vpop.f32.mrb[0].mxu0
    %4206 = vdwg.mxu0
    %v4207 = vadd.f32 %v3727, %v3889
    %v4208 = vadd.f32 %v3728, %v3894
    %v4209 = vadd.f32 %v3729, %v3899
    %v4210 = vadd.f32 %v3730, %v3904
    %v4211 = vadd.f32 %v3731, %v3909
    %v4212 = vadd.f32 %v3732, %v3914
    %v4213 = vadd.f32 %v3733, %v3919
    %v4214 = vadd.f32 %v3734, %v3924
    %v4215 = vadd.f32 %v3735, %v3929
    %v4216 = vadd.f32 %v3736, %v3934
    %v4217 = vadd.f32 %v3737, %v3939
    %v4218 = vadd.f32 %v3738, %v3944
    %v4219 = vadd.f32 %v3739, %v3949
    %v4220 = vadd.f32 %v3740, %v3954
    %v4221 = vadd.f32 %v3741, %v3959
    %v4222 = vadd.f32 %v3742, %v3964
    %v4223 = vadd.f32 %v3743, %v3969
    %v4224 = vadd.f32 %v3744, %v3974
    %v4225 = vadd.f32 %v3745, %v3979
    %v4226 = vadd.f32 %v3746, %v3984
    %v4227 = vadd.f32 %v3747, %v3989
    %v4228 = vadd.f32 %v3748, %v3994
    %v4229 = vadd.f32 %v3749, %v3999
    %v4230 = vadd.f32 %v3750, %v4004
    %v4231 = vadd.f32 %v3751, %v4009
    %v4232 = vadd.f32 %v3752, %v4014
    %v4233 = vadd.f32 %v3753, %v4019
    %v4234 = vadd.f32 %v3754, %v4024
    %v4235 = vadd.f32 %v3755, %v4029
    %v4236 = vadd.f32 %v3756, %v4034
    %v4237 = vadd.f32 %v3757, %v4039
    %v4238 = vadd.f32 %v3758, %v4044
    %v4239 = vadd.f32 %v3759, %v4049
    %v4240 = vadd.f32 %v3760, %v4054
    %v4241 = vadd.f32 %v3761, %v4059
    %v4242 = vadd.f32 %v3762, %v4064
    %v4243 = vadd.f32 %v3763, %v4069
    %v4244 = vadd.f32 %v3764, %v4074
    %v4245 = vadd.f32 %v3765, %v4079
    %v4246 = vadd.f32 %v3766, %v4084
    %v4247 = vadd.f32 %v3767, %v4089
    %v4248 = vadd.f32 %v3768, %v4094
    %v4249 = vadd.f32 %v3769, %v4099
    %v4250 = vadd.f32 %v3770, %v4104
    %v4251 = vadd.f32 %v3771, %v4109
    %v4252 = vadd.f32 %v3772, %v4114
    %v4253 = vadd.f32 %v3773, %v4119
    %v4254 = vadd.f32 %v3774, %v4124
    %v4255 = vadd.f32 %v3775, %v4129
    %v4256 = vadd.f32 %v3776, %v4134
    %v4257 = vadd.f32 %v3777, %v4139
    %v4258 = vadd.f32 %v3778, %v4144
    %v4259 = vadd.f32 %v3779, %v4149
    %v4260 = vadd.f32 %v3780, %v4154
    %v4261 = vadd.f32 %v3781, %v4159
    %v4262 = vadd.f32 %v3782, %v4164
    %v4263 = vadd.f32 %v3783, %v4169
    %v4264 = vadd.f32 %v3784, %v4174
    %v4265 = vadd.f32 %v3785, %v4179
    %v4266 = vadd.f32 %v3786, %v4184
    %v4267 = vadd.f32 %v3787, %v4189
    %v4268 = vadd.f32 %v3788, %v4194
    %v4269 = vadd.f32 %v3789, %v4199
    %v4270 = vadd.f32 %v3790, %v4204
    %s4271 = scalar_lea.vmem %s3, 768
    %v4272 = vld [vmem:[%s4271] sm:$0xff]
    %v4273 = vld [vmem:[%s4271 + $0x8] sm:$0xff]
    %v4274 = vld [vmem:[%s4271 + $0x10] sm:$0xff]
    %v4275 = vld [vmem:[%s4271 + $0x18] sm:$0xff]
    %v4276 = vld [vmem:[%s4271 + $0x20] sm:$0xff]
    %v4277 = vld [vmem:[%s4271 + $0x28] sm:$0xff]
    %v4278 = vld [vmem:[%s4271 + $0x30] sm:$0xff]
    %v4279 = vld [vmem:[%s4271 + $0x38] sm:$0xff]
    %v4280 = vld [vmem:[%s4271 + $0x40] sm:$0xff]
    %v4281 = vld [vmem:[%s4271 + $0x48] sm:$0xff]
    %v4282 = vld [vmem:[%s4271 + $0x50] sm:$0xff]
    %v4283 = vld [vmem:[%s4271 + $0x58] sm:$0xff]
    %v4284 = vld [vmem:[%s4271 + $0x60] sm:$0xff]
    %v4285 = vld [vmem:[%s4271 + $0x68] sm:$0xff]
    %v4286 = vld [vmem:[%s4271 + $0x70] sm:$0xff]
    %v4287 = vld [vmem:[%s4271 + $0x78] sm:$0xff]
    %4288 = vmatprep.subr.mxu0 0.0
    %4289 = vmatpush1.msra.mxu0 %v4272
    %4290 = vmatprep.subr.mxu0 0.0
    %4291 = vmatpush1.msra.mxu0 %v4273
    %4292 = vmatprep.subr.mxu0 0.0
    %4293 = vmatpush1.msra.mxu0 %v4274
    %4294 = vmatprep.subr.mxu0 0.0
    %4295 = vmatpush1.msra.mxu0 %v4275
    %4296 = vmatprep.subr.mxu0 0.0
    %4297 = vmatpush1.msra.mxu0 %v4276
    %4298 = vmatprep.subr.mxu0 0.0
    %4299 = vmatpush1.msra.mxu0 %v4277
    %4300 = vmatprep.subr.mxu0 0.0
    %4301 = vmatpush1.msra.mxu0 %v4278
    %4302 = vmatprep.subr.mxu0 0.0
    %4303 = vmatpush1.msra.mxu0 %v4279
    %4304 = vmatprep.subr.mxu0 0.0
    %4305 = vmatpush1.msra.mxu0 %v4280
    %4306 = vmatprep.subr.mxu0 0.0
    %4307 = vmatpush1.msra.mxu0 %v4281
    %4308 = vmatprep.subr.mxu0 0.0
    %4309 = vmatpush1.msra.mxu0 %v4282
    %4310 = vmatprep.subr.mxu0 0.0
    %4311 = vmatpush1.msra.mxu0 %v4283
    %4312 = vmatprep.subr.mxu0 0.0
    %4313 = vmatpush1.msra.mxu0 %v4284
    %4314 = vmatprep.subr.mxu0 0.0
    %4315 = vmatpush1.msra.mxu0 %v4285
    %4316 = vmatprep.subr.mxu0 0.0
    %4317 = vmatpush1.msra.mxu0 %v4286
    %4318 = vmatprep.subr.mxu0 0.0
    %4319 = vmatpush1.msra.mxu0 %v4287
    %4320 = vmatprep.subr.mxu0 0.0
    %4321 = vmatpush1.msra.mxu0 0.0
    %4322 = vmatprep.subr.mxu0 0.0
    %4323 = vmatpush1.msra.mxu0 0.0
    %4324 = vmatprep.subr.mxu0 0.0
    %4325 = vmatpush1.msra.mxu0 0.0
    %4326 = vmatprep.subr.mxu0 0.0
    %4327 = vmatpush1.msra.mxu0 0.0
    %4328 = vmatprep.subr.mxu0 0.0
    %4329 = vmatpush1.msra.mxu0 0.0
    %4330 = vmatprep.subr.mxu0 0.0
    %4331 = vmatpush1.msra.mxu0 0.0
    %4332 = vmatprep.subr.mxu0 0.0
    %4333 = vmatpush1.msra.mxu0 0.0
    %4334 = vmatprep.subr.mxu0 0.0
    %4335 = vmatpush1.msra.mxu0 0.0
    %4336 = vmatprep.subr.mxu0 0.0
    %4337 = vmatpush1.msra.mxu0 0.0
    %4338 = vmatprep.subr.mxu0 0.0
    %4339 = vmatpush1.msra.mxu0 0.0
    %4340 = vmatprep.subr.mxu0 0.0
    %4341 = vmatpush1.msra.mxu0 0.0
    %4342 = vmatprep.subr.mxu0 0.0
    %4343 = vmatpush1.msra.mxu0 0.0
    %4344 = vmatprep.subr.mxu0 0.0
    %4345 = vmatpush1.msra.mxu0 0.0
    %4346 = vmatprep.subr.mxu0 0.0
    %4347 = vmatpush1.msra.mxu0 0.0
    %4348 = vmatprep.subr.mxu0 0.0
    %4349 = vmatpush1.msra.mxu0 0.0
    %4350 = vmatprep.subr.mxu0 0.0
    %4351 = vmatpush1.msra.mxu0 0.0
    %4352 = vmatprep.mubr.f32.mxu0 0.0
    %4353 = vmatmul.mubr.f32.gmra.mrb[0].mxu0 %v1010
    %v4354 = vpop.f32.mrb[0].mxu0
    %v4355 = vadd.f32 0.0, %v4354
    %v4356 = vpop.f32.mrb[0].mxu0
    %4357 = vmatprep.mubr.f32.mxu0 0.0
    %4358 = vmatmul.mubr.f32.gmra.mrb[0].mxu0 %v819
    %v4359 = vpop.f32.mrb[0].mxu0
    %v4360 = vadd.f32 0.0, %v4359
    %v4361 = vpop.f32.mrb[0].mxu0
    %4362 = vmatprep.mubr.f32.mxu0 0.0
    %4363 = vmatmul.mubr.f32.gmra.mrb[0].mxu0 %v1011
    %v4364 = vpop.f32.mrb[0].mxu0
    %v4365 = vadd.f32 0.0, %v4364
    %v4366 = vpop.f32.mrb[0].mxu0
    %4367 = vmatprep.mubr.f32.mxu0 0.0
    %4368 = vmatmul.mubr.f32.gmra.mrb[0].mxu0 %v822
    %v4369 = vpop.f32.mrb[0].mxu0
    %v4370 = vadd.f32 0.0, %v4369
    %v4371 = vpop.f32.mrb[0].mxu0
    %4372 = vmatprep.mubr.f32.mxu0 0.0
    %4373 = vmatmul.mubr.f32.gmra.mrb[0].mxu0 %v1012
    %v4374 = vpop.f32.mrb[0].mxu0
    %v4375 = vadd.f32 0.0, %v4374
    %v4376 = vpop.f32.mrb[0].mxu0
    %4377 = vmatprep.mubr.f32.mxu0 0.0
    %4378 = vmatmul.mubr.f32.gmra.mrb[0].mxu0 %v825
    %v4379 = vpop.f32.mrb[0].mxu0
    %v4380 = vadd.f32 0.0, %v4379
    %v4381 = vpop.f32.mrb[0].mxu0
    %4382 = vmatprep.mubr.f32.mxu0 0.0
    %4383 = vmatmul.mubr.f32.gmra.mrb[0].mxu0 %v1013
    %v4384 = vpop.f32.mrb[0].mxu0
    %v4385 = vadd.f32 0.0, %v4384
    %v4386 = vpop.f32.mrb[0].mxu0
    %4387 = vmatprep.mubr.f32.mxu0 0.0
    %4388 = vmatmul.mubr.f32.gmra.mrb[0].mxu0 %v828
    %v4389 = vpop.f32.mrb[0].mxu0
    %v4390 = vadd.f32 0.0, %v4389
    %v4391 = vpop.f32.mrb[0].mxu0
    %4392 = vmatprep.mubr.f32.mxu0 0.0
    %4393 = vmatmul.mubr.f32.gmra.mrb[0].mxu0 %v1014
    %v4394 = vpop.f32.mrb[0].mxu0
    %v4395 = vadd.f32 0.0, %v4394
    %v4396 = vpop.f32.mrb[0].mxu0
    %4397 = vmatprep.mubr.f32.mxu0 0.0
    %4398 = vmatmul.mubr.f32.gmra.mrb[0].mxu0 %v831
    %v4399 = vpop.f32.mrb[0].mxu0
    %v4400 = vadd.f32 0.0, %v4399
    %v4401 = vpop.f32.mrb[0].mxu0
    %4402 = vmatprep.mubr.f32.mxu0 0.0
    %4403 = vmatmul.mubr.f32.gmra.mrb[0].mxu0 %v1015
    %v4404 = vpop.f32.mrb[0].mxu0
    %v4405 = vadd.f32 0.0, %v4404
    %v4406 = vpop.f32.mrb[0].mxu0
    %4407 = vmatprep.mubr.f32.mxu0 0.0
    %4408 = vmatmul.mubr.f32.gmra.mrb[0].mxu0 %v834
    %v4409 = vpop.f32.mrb[0].mxu0
    %v4410 = vadd.f32 0.0, %v4409
    %v4411 = vpop.f32.mrb[0].mxu0
    %4412 = vmatprep.mubr.f32.mxu0 0.0
    %4413 = vmatmul.mubr.f32.gmra.mrb[0].mxu0 %v1016
    %v4414 = vpop.f32.mrb[0].mxu0
    %v4415 = vadd.f32 0.0, %v4414
    %v4416 = vpop.f32.mrb[0].mxu0
    %4417 = vmatprep.mubr.f32.mxu0 0.0
    %4418 = vmatmul.mubr.f32.gmra.mrb[0].mxu0 %v837
    %v4419 = vpop.f32.mrb[0].mxu0
    %v4420 = vadd.f32 0.0, %v4419
    %v4421 = vpop.f32.mrb[0].mxu0
    %4422 = vmatprep.mubr.f32.mxu0 0.0
    %4423 = vmatmul.mubr.f32.gmra.mrb[0].mxu0 %v1017
    %v4424 = vpop.f32.mrb[0].mxu0
    %v4425 = vadd.f32 0.0, %v4424
    %v4426 = vpop.f32.mrb[0].mxu0
    %4427 = vmatprep.mubr.f32.mxu0 0.0
    %4428 = vmatmul.mubr.f32.gmra.mrb[0].mxu0 %v840
    %v4429 = vpop.f32.mrb[0].mxu0
    %v4430 = vadd.f32 0.0, %v4429
    %v4431 = vpop.f32.mrb[0].mxu0
    %4432 = vmatprep.mubr.f32.mxu0 0.0
    %4433 = vmatmul.mubr.f32.gmra.mrb[0].mxu0 %v1018
    %v4434 = vpop.f32.mrb[0].mxu0
    %v4435 = vadd.f32 0.0, %v4434
    %v4436 = vpop.f32.mrb[0].mxu0
    %4437 = vmatprep.mubr.f32.mxu0 0.0
    %4438 = vmatmul.mubr.f32.gmra.mrb[0].mxu0 %v843
    %v4439 = vpop.f32.mrb[0].mxu0
    %v4440 = vadd.f32 0.0, %v4439
    %v4441 = vpop.f32.mrb[0].mxu0
    %4442 = vmatprep.mubr.f32.mxu0 0.0
    %4443 = vmatmul.mubr.f32.gmra.mrb[0].mxu0 %v1019
    %v4444 = vpop.f32.mrb[0].mxu0
    %v4445 = vadd.f32 0.0, %v4444
    %v4446 = vpop.f32.mrb[0].mxu0
    %4447 = vmatprep.mubr.f32.mxu0 0.0
    %4448 = vmatmul.mubr.f32.gmra.mrb[0].mxu0 %v846
    %v4449 = vpop.f32.mrb[0].mxu0
    %v4450 = vadd.f32 0.0, %v4449
    %v4451 = vpop.f32.mrb[0].mxu0
    %4452 = vmatprep.mubr.f32.mxu0 0.0
    %4453 = vmatmul.mubr.f32.gmra.mrb[0].mxu0 %v1020
    %v4454 = vpop.f32.mrb[0].mxu0
    %v4455 = vadd.f32 0.0, %v4454
    %v4456 = vpop.f32.mrb[0].mxu0
    %4457 = vmatprep.mubr.f32.mxu0 0.0
    %4458 = vmatmul.mubr.f32.gmra.mrb[0].mxu0 %v849
    %v4459 = vpop.f32.mrb[0].mxu0
    %v4460 = vadd.f32 0.0, %v4459
    %v4461 = vpop.f32.mrb[0].mxu0
    %4462 = vmatprep.mubr.f32.mxu0 0.0
    %4463 = vmatmul.mubr.f32.gmra.mrb[0].mxu0 %v1021
    %v4464 = vpop.f32.mrb[0].mxu0
    %v4465 = vadd.f32 0.0, %v4464
    %v4466 = vpop.f32.mrb[0].mxu0
    %4467 = vmatprep.mubr.f32.mxu0 0.0
    %4468 = vmatmul.mubr.f32.gmra.mrb[0].mxu0 %v852
    %v4469 = vpop.f32.mrb[0].mxu0
    %v4470 = vadd.f32 0.0, %v4469
    %v4471 = vpop.f32.mrb[0].mxu0
    %4472 = vmatprep.mubr.f32.mxu0 0.0
    %4473 = vmatmul.mubr.f32.gmra.mrb[0].mxu0 %v1022
    %v4474 = vpop.f32.mrb[0].mxu0
    %v4475 = vadd.f32 0.0, %v4474
    %v4476 = vpop.f32.mrb[0].mxu0
    %4477 = vmatprep.mubr.f32.mxu0 0.0
    %4478 = vmatmul.mubr.f32.gmra.mrb[0].mxu0 %v855
    %v4479 = vpop.f32.mrb[0].mxu0
    %v4480 = vadd.f32 0.0, %v4479
    %v4481 = vpop.f32.mrb[0].mxu0
    %4482 = vmatprep.mubr.f32.mxu0 0.0
    %4483 = vmatmul.mubr.f32.gmra.mrb[0].mxu0 %v1023
    %v4484 = vpop.f32.mrb[0].mxu0
    %v4485 = vadd.f32 0.0, %v4484
    %v4486 = vpop.f32.mrb[0].mxu0
    %4487 = vmatprep.mubr.f32.mxu0 0.0
    %4488 = vmatmul.mubr.f32.gmra.mrb[0].mxu0 %v858
    %v4489 = vpop.f32.mrb[0].mxu0
    %v4490 = vadd.f32 0.0, %v4489
    %v4491 = vpop.f32.mrb[0].mxu0
    %4492 = vmatprep.mubr.f32.mxu0 0.0
    %4493 = vmatmul.mubr.f32.gmra.mrb[0].mxu0 %v1024
    %v4494 = vpop.f32.mrb[0].mxu0
    %v4495 = vadd.f32 0.0, %v4494
    %v4496 = vpop.f32.mrb[0].mxu0
    %4497 = vmatprep.mubr.f32.mxu0 0.0
    %4498 = vmatmul.mubr.f32.gmra.mrb[0].mxu0 %v861
    %v4499 = vpop.f32.mrb[0].mxu0
    %v4500 = vadd.f32 0.0, %v4499
    %v4501 = vpop.f32.mrb[0].mxu0
    %4502 = vmatprep.mubr.f32.mxu0 0.0
    %4503 = vmatmul.mubr.f32.gmra.mrb[0].mxu0 %v1008
    %v4504 = vpop.f32.mrb[0].mxu0
    %v4505 = vadd.f32 0.0, %v4504
    %v4506 = vpop.f32.mrb[0].mxu0
    %4507 = vmatprep.mubr.f32.mxu0 0.0
    %4508 = vmatmul.mubr.f32.gmra.mrb[0].mxu0 %v813
    %v4509 = vpop.f32.mrb[0].mxu0
    %v4510 = vadd.f32 0.0, %v4509
    %v4511 = vpop.f32.mrb[0].mxu0
    %4512 = vmatprep.mubr.f32.mxu0 0.0
    %4513 = vmatmul.mubr.f32.gmra.mrb[0].mxu0 %v1026
    %v4514 = vpop.f32.mrb[0].mxu0
    %v4515 = vadd.f32 0.0, %v4514
    %v4516 = vpop.f32.mrb[0].mxu0
    %4517 = vmatprep.mubr.f32.mxu0 0.0
    %4518 = vmatmul.mubr.f32.gmra.mrb[0].mxu0 %v867
    %v4519 = vpop.f32.mrb[0].mxu0
    %v4520 = vadd.f32 0.0, %v4519
    %v4521 = vpop.f32.mrb[0].mxu0
    %4522 = vmatprep.mubr.f32.mxu0 0.0
    %4523 = vmatmul.mubr.f32.gmra.mrb[0].mxu0 %v1027
    %v4524 = vpop.f32.mrb[0].mxu0
    %v4525 = vadd.f32 0.0, %v4524
    %v4526 = vpop.f32.mrb[0].mxu0
    %4527 = vmatprep.mubr.f32.mxu0 0.0
    %4528 = vmatmul.mubr.f32.gmra.mrb[0].mxu0 %v870
    %v4529 = vpop.f32.mrb[0].mxu0
    %v4530 = vadd.f32 0.0, %v4529
    %v4531 = vpop.f32.mrb[0].mxu0
    %4532 = vmatprep.mubr.f32.mxu0 0.0
    %4533 = vmatmul.mubr.f32.gmra.mrb[0].mxu0 %v1028
    %v4534 = vpop.f32.mrb[0].mxu0
    %v4535 = vadd.f32 0.0, %v4534
    %v4536 = vpop.f32.mrb[0].mxu0
    %4537 = vmatprep.mubr.f32.mxu0 0.0
    %4538 = vmatmul.mubr.f32.gmra.mrb[0].mxu0 %v873
    %v4539 = vpop.f32.mrb[0].mxu0
    %v4540 = vadd.f32 0.0, %v4539
    %v4541 = vpop.f32.mrb[0].mxu0
    %4542 = vmatprep.mubr.f32.mxu0 0.0
    %4543 = vmatmul.mubr.f32.gmra.mrb[0].mxu0 %v1029
    %v4544 = vpop.f32.mrb[0].mxu0
    %v4545 = vadd.f32 0.0, %v4544
    %v4546 = vpop.f32.mrb[0].mxu0
    %4547 = vmatprep.mubr.f32.mxu0 0.0
    %4548 = vmatmul.mubr.f32.gmra.mrb[0].mxu0 %v876
    %v4549 = vpop.f32.mrb[0].mxu0
    %v4550 = vadd.f32 0.0, %v4549
    %v4551 = vpop.f32.mrb[0].mxu0
    %4552 = vmatprep.mubr.f32.mxu0 0.0
    %4553 = vmatmul.mubr.f32.gmra.mrb[0].mxu0 %v1030
    %v4554 = vpop.f32.mrb[0].mxu0
    %v4555 = vadd.f32 0.0, %v4554
    %v4556 = vpop.f32.mrb[0].mxu0
    %4557 = vmatprep.mubr.f32.mxu0 0.0
    %4558 = vmatmul.mubr.f32.gmra.mrb[0].mxu0 %v879
    %v4559 = vpop.f32.mrb[0].mxu0
    %v4560 = vadd.f32 0.0, %v4559
    %v4561 = vpop.f32.mrb[0].mxu0
    %4562 = vmatprep.mubr.f32.mxu0 0.0
    %4563 = vmatmul.mubr.f32.gmra.mrb[0].mxu0 %v1031
    %v4564 = vpop.f32.mrb[0].mxu0
    %v4565 = vadd.f32 0.0, %v4564
    %v4566 = vpop.f32.mrb[0].mxu0
    %4567 = vmatprep.mubr.f32.mxu0 0.0
    %4568 = vmatmul.mubr.f32.gmra.mrb[0].mxu0 %v882
    %v4569 = vpop.f32.mrb[0].mxu0
    %v4570 = vadd.f32 0.0, %v4569
    %v4571 = vpop.f32.mrb[0].mxu0
    %4572 = vmatprep.mubr.f32.mxu0 0.0
    %4573 = vmatmul.mubr.f32.gmra.mrb[0].mxu0 %v1032
    %v4574 = vpop.f32.mrb[0].mxu0
    %v4575 = vadd.f32 0.0, %v4574
    %v4576 = vpop.f32.mrb[0].mxu0
    %4577 = vmatprep.mubr.f32.mxu0 0.0
    %4578 = vmatmul.mubr.f32.gmra.mrb[0].mxu0 %v885
    %v4579 = vpop.f32.mrb[0].mxu0
    %v4580 = vadd.f32 0.0, %v4579
    %v4581 = vpop.f32.mrb[0].mxu0
    %4582 = vmatprep.mubr.f32.mxu0 0.0
    %4583 = vmatmul.mubr.f32.gmra.mrb[0].mxu0 %v1033
    %v4584 = vpop.f32.mrb[0].mxu0
    %v4585 = vadd.f32 0.0, %v4584
    %v4586 = vpop.f32.mrb[0].mxu0
    %4587 = vmatprep.mubr.f32.mxu0 0.0
    %4588 = vmatmul.mubr.f32.gmra.mrb[0].mxu0 %v888
    %v4589 = vpop.f32.mrb[0].mxu0
    %v4590 = vadd.f32 0.0, %v4589
    %v4591 = vpop.f32.mrb[0].mxu0
    %4592 = vmatprep.mubr.f32.mxu0 0.0
    %4593 = vmatmul.mubr.f32.gmra.mrb[0].mxu0 %v1034
    %v4594 = vpop.f32.mrb[0].mxu0
    %v4595 = vadd.f32 0.0, %v4594
    %v4596 = vpop.f32.mrb[0].mxu0
    %4597 = vmatprep.mubr.f32.mxu0 0.0
    %4598 = vmatmul.mubr.f32.gmra.mrb[0].mxu0 %v891
    %v4599 = vpop.f32.mrb[0].mxu0
    %v4600 = vadd.f32 0.0, %v4599
    %v4601 = vpop.f32.mrb[0].mxu0
    %4602 = vmatprep.mubr.f32.mxu0 0.0
    %4603 = vmatmul.mubr.f32.gmra.mrb[0].mxu0 %v1035
    %v4604 = vpop.f32.mrb[0].mxu0
    %v4605 = vadd.f32 0.0, %v4604
    %v4606 = vpop.f32.mrb[0].mxu0
    %4607 = vmatprep.mubr.f32.mxu0 0.0
    %4608 = vmatmul.mubr.f32.gmra.mrb[0].mxu0 %v894
    %v4609 = vpop.f32.mrb[0].mxu0
    %v4610 = vadd.f32 0.0, %v4609
    %v4611 = vpop.f32.mrb[0].mxu0
    %4612 = vmatprep.mubr.f32.mxu0 0.0
    %4613 = vmatmul.mubr.f32.gmra.mrb[0].mxu0 %v1036
    %v4614 = vpop.f32.mrb[0].mxu0
    %v4615 = vadd.f32 0.0, %v4614
    %v4616 = vpop.f32.mrb[0].mxu0
    %4617 = vmatprep.mubr.f32.mxu0 0.0
    %4618 = vmatmul.mubr.f32.gmra.mrb[0].mxu0 %v897
    %v4619 = vpop.f32.mrb[0].mxu0
    %v4620 = vadd.f32 0.0, %v4619
    %v4621 = vpop.f32.mrb[0].mxu0
    %4622 = vmatprep.mubr.f32.mxu0 0.0
    %4623 = vmatmul.mubr.f32.gmra.mrb[0].mxu0 %v1037
    %v4624 = vpop.f32.mrb[0].mxu0
    %v4625 = vadd.f32 0.0, %v4624
    %v4626 = vpop.f32.mrb[0].mxu0
    %4627 = vmatprep.mubr.f32.mxu0 0.0
    %4628 = vmatmul.mubr.f32.gmra.mrb[0].mxu0 %v900
    %v4629 = vpop.f32.mrb[0].mxu0
    %v4630 = vadd.f32 0.0, %v4629
    %v4631 = vpop.f32.mrb[0].mxu0
    %4632 = vmatprep.mubr.f32.mxu0 0.0
    %4633 = vmatmul.mubr.f32.gmra.mrb[0].mxu0 %v1038
    %v4634 = vpop.f32.mrb[0].mxu0
    %v4635 = vadd.f32 0.0, %v4634
    %v4636 = vpop.f32.mrb[0].mxu0
    %4637 = vmatprep.mubr.f32.mxu0 0.0
    %4638 = vmatmul.mubr.f32.gmra.mrb[0].mxu0 %v903
    %v4639 = vpop.f32.mrb[0].mxu0
    %v4640 = vadd.f32 0.0, %v4639
    %v4641 = vpop.f32.mrb[0].mxu0
    %4642 = vmatprep.mubr.f32.mxu0 0.0
    %4643 = vmatmul.mubr.f32.gmra.mrb[0].mxu0 %v1039
    %v4644 = vpop.f32.mrb[0].mxu0
    %v4645 = vadd.f32 0.0, %v4644
    %v4646 = vpop.f32.mrb[0].mxu0
    %4647 = vmatprep.mubr.f32.mxu0 0.0
    %4648 = vmatmul.mubr.f32.gmra.mrb[0].mxu0 %v906
    %v4649 = vpop.f32.mrb[0].mxu0
    %v4650 = vadd.f32 0.0, %v4649
    %v4651 = vpop.f32.mrb[0].mxu0
    %4652 = vmatprep.mubr.f32.mxu0 0.0
    %4653 = vmatmul.mubr.f32.gmra.mrb[0].mxu0 %v1040
    %v4654 = vpop.f32.mrb[0].mxu0
    %v4655 = vadd.f32 0.0, %v4654
    %v4656 = vpop.f32.mrb[0].mxu0
    %4657 = vmatprep.mubr.f32.mxu0 0.0
    %4658 = vmatmul.mubr.f32.gmra.mrb[0].mxu0 %v909
    %v4659 = vpop.f32.mrb[0].mxu0
    %v4660 = vadd.f32 0.0, %v4659
    %v4661 = vpop.f32.mrb[0].mxu0
    %4662 = vmatprep.mubr.f32.mxu0 0.0
    %4663 = vmatmul.mubr.f32.gmra.mrb[0].mxu0 %v1008
    %v4664 = vpop.f32.mrb[0].mxu0
    %v4665 = vadd.f32 0.0, %v4664
    %v4666 = vpop.f32.mrb[0].mxu0
    %4667 = vmatprep.mubr.f32.mxu0 0.0
    %4668 = vmatmul.mubr.f32.gmra.mrb[0].mxu0 %v813
    %v4669 = vpop.f32.mrb[0].mxu0
    %v4670 = vadd.f32 0.0, %v4669
    %v4671 = vpop.f32.mrb[0].mxu0
    %4672 = vdwg.mxu0
    %v4673 = vadd.f32 %v4207, %v4355
    %v4674 = vadd.f32 %v4208, %v4360
    %v4675 = vadd.f32 %v4209, %v4365
    %v4676 = vadd.f32 %v4210, %v4370
    %v4677 = vadd.f32 %v4211, %v4375
    %v4678 = vadd.f32 %v4212, %v4380
    %v4679 = vadd.f32 %v4213, %v4385
    %v4680 = vadd.f32 %v4214, %v4390
    %v4681 = vadd.f32 %v4215, %v4395
    %v4682 = vadd.f32 %v4216, %v4400
    %v4683 = vadd.f32 %v4217, %v4405
    %v4684 = vadd.f32 %v4218, %v4410
    %v4685 = vadd.f32 %v4219, %v4415
    %v4686 = vadd.f32 %v4220, %v4420
    %v4687 = vadd.f32 %v4221, %v4425
    %v4688 = vadd.f32 %v4222, %v4430
    %v4689 = vadd.f32 %v4223, %v4435
    %v4690 = vadd.f32 %v4224, %v4440
    %v4691 = vadd.f32 %v4225, %v4445
    %v4692 = vadd.f32 %v4226, %v4450
    %v4693 = vadd.f32 %v4227, %v4455
    %v4694 = vadd.f32 %v4228, %v4460
    %v4695 = vadd.f32 %v4229, %v4465
    %v4696 = vadd.f32 %v4230, %v4470
    %v4697 = vadd.f32 %v4231, %v4475
    %v4698 = vadd.f32 %v4232, %v4480
    %v4699 = vadd.f32 %v4233, %v4485
    %v4700 = vadd.f32 %v4234, %v4490
    %v4701 = vadd.f32 %v4235, %v4495
    %v4702 = vadd.f32 %v4236, %v4500
    %v4703 = vadd.f32 %v4237, %v4505
    %v4704 = vadd.f32 %v4238, %v4510
    %v4705 = vadd.f32 %v4239, %v4515
    %v4706 = vadd.f32 %v4240, %v4520
    %v4707 = vadd.f32 %v4241, %v4525
    %v4708 = vadd.f32 %v4242, %v4530
    %v4709 = vadd.f32 %v4243, %v4535
    %v4710 = vadd.f32 %v4244, %v4540
    %v4711 = vadd.f32 %v4245, %v4545
    %v4712 = vadd.f32 %v4246, %v4550
    %v4713 = vadd.f32 %v4247, %v4555
    %v4714 = vadd.f32 %v4248, %v4560
    %v4715 = vadd.f32 %v4249, %v4565
    %v4716 = vadd.f32 %v4250, %v4570
    %v4717 = vadd.f32 %v4251, %v4575
    %v4718 = vadd.f32 %v4252, %v4580
    %v4719 = vadd.f32 %v4253, %v4585
    %v4720 = vadd.f32 %v4254, %v4590
    %v4721 = vadd.f32 %v4255, %v4595
    %v4722 = vadd.f32 %v4256, %v4600
    %v4723 = vadd.f32 %v4257, %v4605
    %v4724 = vadd.f32 %v4258, %v4610
    %v4725 = vadd.f32 %v4259, %v4615
    %v4726 = vadd.f32 %v4260, %v4620
    %v4727 = vadd.f32 %v4261, %v4625
    %v4728 = vadd.f32 %v4262, %v4630
    %v4729 = vadd.f32 %v4263, %v4635
    %v4730 = vadd.f32 %v4264, %v4640
    %v4731 = vadd.f32 %v4265, %v4645
    %v4732 = vadd.f32 %v4266, %v4650
    %v4733 = vadd.f32 %v4267, %v4655
    %v4734 = vadd.f32 %v4268, %v4660
    %v4735 = vadd.f32 %v4269, %v4665
    %v4736 = vadd.f32 %v4270, %v4670
    %s4737 = scalar_lea.vmem %s3, 896
    %v4738 = vld [vmem:[%s4737] sm:$0xff]
    %v4739 = vld [vmem:[%s4737 + $0x8] sm:$0xff]
    %v4740 = vld [vmem:[%s4737 + $0x10] sm:$0xff]
    %v4741 = vld [vmem:[%s4737 + $0x18] sm:$0xff]
    %v4742 = vld [vmem:[%s4737 + $0x20] sm:$0xff]
    %v4743 = vld [vmem:[%s4737 + $0x28] sm:$0xff]
    %v4744 = vld [vmem:[%s4737 + $0x30] sm:$0xff]
    %v4745 = vld [vmem:[%s4737 + $0x38] sm:$0xff]
    %v4746 = vld [vmem:[%s4737 + $0x40] sm:$0xff]
    %v4747 = vld [vmem:[%s4737 + $0x48] sm:$0xff]
    %v4748 = vld [vmem:[%s4737 + $0x50] sm:$0xff]
    %v4749 = vld [vmem:[%s4737 + $0x58] sm:$0xff]
    %v4750 = vld [vmem:[%s4737 + $0x60] sm:$0xff]
    %v4751 = vld [vmem:[%s4737 + $0x68] sm:$0xff]
    %v4752 = vld [vmem:[%s4737 + $0x70] sm:$0xff]
    %v4753 = vld [vmem:[%s4737 + $0x78] sm:$0xff]
    %4754 = vmatprep.subr.mxu0 0.0
    %4755 = vmatpush1.msra.mxu0 %v4738
    %4756 = vmatprep.subr.mxu0 0.0
    %4757 = vmatpush1.msra.mxu0 %v4739
    %4758 = vmatprep.subr.mxu0 0.0
    %4759 = vmatpush1.msra.mxu0 %v4740
    %4760 = vmatprep.subr.mxu0 0.0
    %4761 = vmatpush1.msra.mxu0 %v4741
    %4762 = vmatprep.subr.mxu0 0.0
    %4763 = vmatpush1.msra.mxu0 %v4742
    %4764 = vmatprep.subr.mxu0 0.0
    %4765 = vmatpush1.msra.mxu0 %v4743
    %4766 = vmatprep.subr.mxu0 0.0
    %4767 = vmatpush1.msra.mxu0 %v4744
    %4768 = vmatprep.subr.mxu0 0.0
    %4769 = vmatpush1.msra.mxu0 %v4745
    %4770 = vmatprep.subr.mxu0 0.0
    %4771 = vmatpush1.msra.mxu0 %v4746
    %4772 = vmatprep.subr.mxu0 0.0
    %4773 = vmatpush1.msra.mxu0 %v4747
    %4774 = vmatprep.subr.mxu0 0.0
    %4775 = vmatpush1.msra.mxu0 %v4748
    %4776 = vmatprep.subr.mxu0 0.0
    %4777 = vmatpush1.msra.mxu0 %v4749
    %4778 = vmatprep.subr.mxu0 0.0
    %4779 = vmatpush1.msra.mxu0 %v4750
    %4780 = vmatprep.subr.mxu0 0.0
    %4781 = vmatpush1.msra.mxu0 %v4751
    %4782 = vmatprep.subr.mxu0 0.0
    %4783 = vmatpush1.msra.mxu0 %v4752
    %4784 = vmatprep.subr.mxu0 0.0
    %4785 = vmatpush1.msra.mxu0 %v4753
    %4786 = vmatprep.subr.mxu0 0.0
    %4787 = vmatpush1.msra.mxu0 0.0
    %4788 = vmatprep.subr.mxu0 0.0
    %4789 = vmatpush1.msra.mxu0 0.0
    %4790 = vmatprep.subr.mxu0 0.0
    %4791 = vmatpush1.msra.mxu0 0.0
    %4792 = vmatprep.subr.mxu0 0.0
    %4793 = vmatpush1.msra.mxu0 0.0
    %4794 = vmatprep.subr.mxu0 0.0
    %4795 = vmatpush1.msra.mxu0 0.0
    %4796 = vmatprep.subr.mxu0 0.0
    %4797 = vmatpush1.msra.mxu0 0.0
    %4798 = vmatprep.subr.mxu0 0.0
    %4799 = vmatpush1.msra.mxu0 0.0
    %4800 = vmatprep.subr.mxu0 0.0
    %4801 = vmatpush1.msra.mxu0 0.0
    %4802 = vmatprep.subr.mxu0 0.0
    %4803 = vmatpush1.msra.mxu0 0.0
    %4804 = vmatprep.subr.mxu0 0.0
    %4805 = vmatpush1.msra.mxu0 0.0
    %4806 = vmatprep.subr.mxu0 0.0
    %4807 = vmatpush1.msra.mxu0 0.0
    %4808 = vmatprep.subr.mxu0 0.0
    %4809 = vmatpush1.msra.mxu0 0.0
    %4810 = vmatprep.subr.mxu0 0.0
    %4811 = vmatpush1.msra.mxu0 0.0
    %4812 = vmatprep.subr.mxu0 0.0
    %4813 = vmatpush1.msra.mxu0 0.0
    %4814 = vmatprep.subr.mxu0 0.0
    %4815 = vmatpush1.msra.mxu0 0.0
    %4816 = vmatprep.subr.mxu0 0.0
    %4817 = vmatpush1.msra.mxu0 0.0
    %4818 = vmatprep.mubr.f32.mxu0 0.0
    %4819 = vmatmul.mubr.f32.gmra.mrb[0].mxu0 %v1165
    %v4820 = vpop.f32.mrb[0].mxu0
    %v4821 = vadd.f32 0.0, %v4820
    %v4822 = vpop.f32.mrb[0].mxu0
    %4823 = vmatprep.mubr.f32.mxu0 0.0
    %4824 = vmatmul.mubr.f32.gmra.mrb[0].mxu0 %v1167
    %v4825 = vpop.f32.mrb[0].mxu0
    %v4826 = vadd.f32 0.0, %v4825
    %v4827 = vpop.f32.mrb[0].mxu0
    %4828 = vmatprep.mubr.f32.mxu0 0.0
    %4829 = vmatmul.mubr.f32.gmra.mrb[0].mxu0 %v1170
    %v4830 = vpop.f32.mrb[0].mxu0
    %v4831 = vadd.f32 0.0, %v4830
    %v4832 = vpop.f32.mrb[0].mxu0
    %4833 = vmatprep.mubr.f32.mxu0 0.0
    %4834 = vmatmul.mubr.f32.gmra.mrb[0].mxu0 %v1172
    %v4835 = vpop.f32.mrb[0].mxu0
    %v4836 = vadd.f32 0.0, %v4835
    %v4837 = vpop.f32.mrb[0].mxu0
    %4838 = vmatprep.mubr.f32.mxu0 0.0
    %4839 = vmatmul.mubr.f32.gmra.mrb[0].mxu0 %v1175
    %v4840 = vpop.f32.mrb[0].mxu0
    %v4841 = vadd.f32 0.0, %v4840
    %v4842 = vpop.f32.mrb[0].mxu0
    %4843 = vmatprep.mubr.f32.mxu0 0.0
    %4844 = vmatmul.mubr.f32.gmra.mrb[0].mxu0 %v1177
    %v4845 = vpop.f32.mrb[0].mxu0
    %v4846 = vadd.f32 0.0, %v4845
    %v4847 = vpop.f32.mrb[0].mxu0
    %4848 = vmatprep.mubr.f32.mxu0 0.0
    %4849 = vmatmul.mubr.f32.gmra.mrb[0].mxu0 %v1180
    %v4850 = vpop.f32.mrb[0].mxu0
    %v4851 = vadd.f32 0.0, %v4850
    %v4852 = vpop.f32.mrb[0].mxu0
    %4853 = vmatprep.mubr.f32.mxu0 0.0
    %4854 = vmatmul.mubr.f32.gmra.mrb[0].mxu0 %v1182
    %v4855 = vpop.f32.mrb[0].mxu0
    %v4856 = vadd.f32 0.0, %v4855
    %v4857 = vpop.f32.mrb[0].mxu0
    %4858 = vmatprep.mubr.f32.mxu0 0.0
    %4859 = vmatmul.mubr.f32.gmra.mrb[0].mxu0 %v1185
    %v4860 = vpop.f32.mrb[0].mxu0
    %v4861 = vadd.f32 0.0, %v4860
    %v4862 = vpop.f32.mrb[0].mxu0
    %4863 = vmatprep.mubr.f32.mxu0 0.0
    %4864 = vmatmul.mubr.f32.gmra.mrb[0].mxu0 %v1187
    %v4865 = vpop.f32.mrb[0].mxu0
    %v4866 = vadd.f32 0.0, %v4865
    %v4867 = vpop.f32.mrb[0].mxu0
    %4868 = vmatprep.mubr.f32.mxu0 0.0
    %4869 = vmatmul.mubr.f32.gmra.mrb[0].mxu0 %v1190
    %v4870 = vpop.f32.mrb[0].mxu0
    %v4871 = vadd.f32 0.0, %v4870
    %v4872 = vpop.f32.mrb[0].mxu0
    %4873 = vmatprep.mubr.f32.mxu0 0.0
    %4874 = vmatmul.mubr.f32.gmra.mrb[0].mxu0 %v1192
    %v4875 = vpop.f32.mrb[0].mxu0
    %v4876 = vadd.f32 0.0, %v4875
    %v4877 = vpop.f32.mrb[0].mxu0
    %4878 = vmatprep.mubr.f32.mxu0 0.0
    %4879 = vmatmul.mubr.f32.gmra.mrb[0].mxu0 %v1195
    %v4880 = vpop.f32.mrb[0].mxu0
    %v4881 = vadd.f32 0.0, %v4880
    %v4882 = vpop.f32.mrb[0].mxu0
    %4883 = vmatprep.mubr.f32.mxu0 0.0
    %4884 = vmatmul.mubr.f32.gmra.mrb[0].mxu0 %v1197
    %v4885 = vpop.f32.mrb[0].mxu0
    %v4886 = vadd.f32 0.0, %v4885
    %v4887 = vpop.f32.mrb[0].mxu0
    %4888 = vmatprep.mubr.f32.mxu0 0.0
    %4889 = vmatmul.mubr.f32.gmra.mrb[0].mxu0 %v1200
    %v4890 = vpop.f32.mrb[0].mxu0
    %v4891 = vadd.f32 0.0, %v4890
    %v4892 = vpop.f32.mrb[0].mxu0
    %4893 = vmatprep.mubr.f32.mxu0 0.0
    %4894 = vmatmul.mubr.f32.gmra.mrb[0].mxu0 %v1202
    %v4895 = vpop.f32.mrb[0].mxu0
    %v4896 = vadd.f32 0.0, %v4895
    %v4897 = vpop.f32.mrb[0].mxu0
    %4898 = vmatprep.mubr.f32.mxu0 0.0
    %4899 = vmatmul.mubr.f32.gmra.mrb[0].mxu0 %v1205
    %v4900 = vpop.f32.mrb[0].mxu0
    %v4901 = vadd.f32 0.0, %v4900
    %v4902 = vpop.f32.mrb[0].mxu0
    %4903 = vmatprep.mubr.f32.mxu0 0.0
    %4904 = vmatmul.mubr.f32.gmra.mrb[0].mxu0 %v1207
    %v4905 = vpop.f32.mrb[0].mxu0
    %v4906 = vadd.f32 0.0, %v4905
    %v4907 = vpop.f32.mrb[0].mxu0
    %4908 = vmatprep.mubr.f32.mxu0 0.0
    %4909 = vmatmul.mubr.f32.gmra.mrb[0].mxu0 %v1210
    %v4910 = vpop.f32.mrb[0].mxu0
    %v4911 = vadd.f32 0.0, %v4910
    %v4912 = vpop.f32.mrb[0].mxu0
    %4913 = vmatprep.mubr.f32.mxu0 0.0
    %4914 = vmatmul.mubr.f32.gmra.mrb[0].mxu0 %v1212
    %v4915 = vpop.f32.mrb[0].mxu0
    %v4916 = vadd.f32 0.0, %v4915
    %v4917 = vpop.f32.mrb[0].mxu0
    %4918 = vmatprep.mubr.f32.mxu0 0.0
    %4919 = vmatmul.mubr.f32.gmra.mrb[0].mxu0 %v1215
    %v4920 = vpop.f32.mrb[0].mxu0
    %v4921 = vadd.f32 0.0, %v4920
    %v4922 = vpop.f32.mrb[0].mxu0
    %4923 = vmatprep.mubr.f32.mxu0 0.0
    %4924 = vmatmul.mubr.f32.gmra.mrb[0].mxu0 %v1217
    %v4925 = vpop.f32.mrb[0].mxu0
    %v4926 = vadd.f32 0.0, %v4925
    %v4927 = vpop.f32.mrb[0].mxu0
    %4928 = vmatprep.mubr.f32.mxu0 0.0
    %4929 = vmatmul.mubr.f32.gmra.mrb[0].mxu0 %v1220
    %v4930 = vpop.f32.mrb[0].mxu0
    %v4931 = vadd.f32 0.0, %v4930
    %v4932 = vpop.f32.mrb[0].mxu0
    %4933 = vmatprep.mubr.f32.mxu0 0.0
    %4934 = vmatmul.mubr.f32.gmra.mrb[0].mxu0 %v1222
    %v4935 = vpop.f32.mrb[0].mxu0
    %v4936 = vadd.f32 0.0, %v4935
    %v4937 = vpop.f32.mrb[0].mxu0
    %4938 = vmatprep.mubr.f32.mxu0 0.0
    %4939 = vmatmul.mubr.f32.gmra.mrb[0].mxu0 %v1225
    %v4940 = vpop.f32.mrb[0].mxu0
    %v4941 = vadd.f32 0.0, %v4940
    %v4942 = vpop.f32.mrb[0].mxu0
    %4943 = vmatprep.mubr.f32.mxu0 0.0
    %4944 = vmatmul.mubr.f32.gmra.mrb[0].mxu0 %v1227
    %v4945 = vpop.f32.mrb[0].mxu0
    %v4946 = vadd.f32 0.0, %v4945
    %v4947 = vpop.f32.mrb[0].mxu0
    %4948 = vmatprep.mubr.f32.mxu0 0.0
    %4949 = vmatmul.mubr.f32.gmra.mrb[0].mxu0 %v1230
    %v4950 = vpop.f32.mrb[0].mxu0
    %v4951 = vadd.f32 0.0, %v4950
    %v4952 = vpop.f32.mrb[0].mxu0
    %4953 = vmatprep.mubr.f32.mxu0 0.0
    %4954 = vmatmul.mubr.f32.gmra.mrb[0].mxu0 %v1232
    %v4955 = vpop.f32.mrb[0].mxu0
    %v4956 = vadd.f32 0.0, %v4955
    %v4957 = vpop.f32.mrb[0].mxu0
    %4958 = vmatprep.mubr.f32.mxu0 0.0
    %4959 = vmatmul.mubr.f32.gmra.mrb[0].mxu0 %v3313
    %v4960 = vpop.f32.mrb[0].mxu0
    %v4961 = vadd.f32 0.0, %v4960
    %v4962 = vpop.f32.mrb[0].mxu0
    %4963 = vmatprep.mubr.f32.mxu0 0.0
    %4964 = vmatmul.mubr.f32.gmra.mrb[0].mxu0 %v3315
    %v4965 = vpop.f32.mrb[0].mxu0
    %v4966 = vadd.f32 0.0, %v4965
    %v4967 = vpop.f32.mrb[0].mxu0
    %4968 = vmatprep.mubr.f32.mxu0 0.0
    %4969 = vmatmul.mubr.f32.gmra.mrb[0].mxu0 %v1155
    %v4970 = vpop.f32.mrb[0].mxu0
    %v4971 = vadd.f32 0.0, %v4970
    %v4972 = vpop.f32.mrb[0].mxu0
    %4973 = vmatprep.mubr.f32.mxu0 0.0
    %4974 = vmatmul.mubr.f32.gmra.mrb[0].mxu0 %v1157
    %v4975 = vpop.f32.mrb[0].mxu0
    %v4976 = vadd.f32 0.0, %v4975
    %v4977 = vpop.f32.mrb[0].mxu0
    %4978 = vmatprep.mubr.f32.mxu0 0.0
    %4979 = vmatmul.mubr.f32.gmra.mrb[0].mxu0 %v1240
    %v4980 = vpop.f32.mrb[0].mxu0
    %v4981 = vadd.f32 0.0, %v4980
    %v4982 = vpop.f32.mrb[0].mxu0
    %4983 = vmatprep.mubr.f32.mxu0 0.0
    %4984 = vmatmul.mubr.f32.gmra.mrb[0].mxu0 %v1242
    %v4985 = vpop.f32.mrb[0].mxu0
    %v4986 = vadd.f32 0.0, %v4985
    %v4987 = vpop.f32.mrb[0].mxu0
    %4988 = vmatprep.mubr.f32.mxu0 0.0
    %4989 = vmatmul.mubr.f32.gmra.mrb[0].mxu0 %v1245
    %v4990 = vpop.f32.mrb[0].mxu0
    %v4991 = vadd.f32 0.0, %v4990
    %v4992 = vpop.f32.mrb[0].mxu0
    %4993 = vmatprep.mubr.f32.mxu0 0.0
    %4994 = vmatmul.mubr.f32.gmra.mrb[0].mxu0 %v1247
    %v4995 = vpop.f32.mrb[0].mxu0
    %v4996 = vadd.f32 0.0, %v4995
    %v4997 = vpop.f32.mrb[0].mxu0
    %4998 = vmatprep.mubr.f32.mxu0 0.0
    %4999 = vmatmul.mubr.f32.gmra.mrb[0].mxu0 %v1250
    %v5000 = vpop.f32.mrb[0].mxu0
    %v5001 = vadd.f32 0.0, %v5000
    %v5002 = vpop.f32.mrb[0].mxu0
    %5003 = vmatprep.mubr.f32.mxu0 0.0
    %5004 = vmatmul.mubr.f32.gmra.mrb[0].mxu0 %v1252
    %v5005 = vpop.f32.mrb[0].mxu0
    %v5006 = vadd.f32 0.0, %v5005
    %v5007 = vpop.f32.mrb[0].mxu0
    %5008 = vmatprep.mubr.f32.mxu0 0.0
    %5009 = vmatmul.mubr.f32.gmra.mrb[0].mxu0 %v1255
    %v5010 = vpop.f32.mrb[0].mxu0
    %v5011 = vadd.f32 0.0, %v5010
    %v5012 = vpop.f32.mrb[0].mxu0
    %5013 = vmatprep.mubr.f32.mxu0 0.0
    %5014 = vmatmul.mubr.f32.gmra.mrb[0].mxu0 %v1257
    %v5015 = vpop.f32.mrb[0].mxu0
    %v5016 = vadd.f32 0.0, %v5015
    %v5017 = vpop.f32.mrb[0].mxu0
    %5018 = vmatprep.mubr.f32.mxu0 0.0
    %5019 = vmatmul.mubr.f32.gmra.mrb[0].mxu0 %v1260
    %v5020 = vpop.f32.mrb[0].mxu0
    %v5021 = vadd.f32 0.0, %v5020
    %v5022 = vpop.f32.mrb[0].mxu0
    %5023 = vmatprep.mubr.f32.mxu0 0.0
    %5024 = vmatmul.mubr.f32.gmra.mrb[0].mxu0 %v1262
    %v5025 = vpop.f32.mrb[0].mxu0
    %v5026 = vadd.f32 0.0, %v5025
    %v5027 = vpop.f32.mrb[0].mxu0
    %5028 = vmatprep.mubr.f32.mxu0 0.0
    %5029 = vmatmul.mubr.f32.gmra.mrb[0].mxu0 %v1265
    %v5030 = vpop.f32.mrb[0].mxu0
    %v5031 = vadd.f32 0.0, %v5030
    %v5032 = vpop.f32.mrb[0].mxu0
    %5033 = vmatprep.mubr.f32.mxu0 0.0
    %5034 = vmatmul.mubr.f32.gmra.mrb[0].mxu0 %v1267
    %v5035 = vpop.f32.mrb[0].mxu0
    %v5036 = vadd.f32 0.0, %v5035
    %v5037 = vpop.f32.mrb[0].mxu0
    %5038 = vmatprep.mubr.f32.mxu0 0.0
    %5039 = vmatmul.mubr.f32.gmra.mrb[0].mxu0 %v1270
    %v5040 = vpop.f32.mrb[0].mxu0
    %v5041 = vadd.f32 0.0, %v5040
    %v5042 = vpop.f32.mrb[0].mxu0
    %5043 = vmatprep.mubr.f32.mxu0 0.0
    %5044 = vmatmul.mubr.f32.gmra.mrb[0].mxu0 %v1272
    %v5045 = vpop.f32.mrb[0].mxu0
    %v5046 = vadd.f32 0.0, %v5045
    %v5047 = vpop.f32.mrb[0].mxu0
    %5048 = vmatprep.mubr.f32.mxu0 0.0
    %5049 = vmatmul.mubr.f32.gmra.mrb[0].mxu0 %v1275
    %v5050 = vpop.f32.mrb[0].mxu0
    %v5051 = vadd.f32 0.0, %v5050
    %v5052 = vpop.f32.mrb[0].mxu0
    %5053 = vmatprep.mubr.f32.mxu0 0.0
    %5054 = vmatmul.mubr.f32.gmra.mrb[0].mxu0 %v1277
    %v5055 = vpop.f32.mrb[0].mxu0
    %v5056 = vadd.f32 0.0, %v5055
    %v5057 = vpop.f32.mrb[0].mxu0
    %5058 = vmatprep.mubr.f32.mxu0 0.0
    %5059 = vmatmul.mubr.f32.gmra.mrb[0].mxu0 %v1280
    %v5060 = vpop.f32.mrb[0].mxu0
    %v5061 = vadd.f32 0.0, %v5060
    %v5062 = vpop.f32.mrb[0].mxu0
    %5063 = vmatprep.mubr.f32.mxu0 0.0
    %5064 = vmatmul.mubr.f32.gmra.mrb[0].mxu0 %v1282
    %v5065 = vpop.f32.mrb[0].mxu0
    %v5066 = vadd.f32 0.0, %v5065
    %v5067 = vpop.f32.mrb[0].mxu0
    %5068 = vmatprep.mubr.f32.mxu0 0.0
    %5069 = vmatmul.mubr.f32.gmra.mrb[0].mxu0 %v1285
    %v5070 = vpop.f32.mrb[0].mxu0
    %v5071 = vadd.f32 0.0, %v5070
    %v5072 = vpop.f32.mrb[0].mxu0
    %5073 = vmatprep.mubr.f32.mxu0 0.0
    %5074 = vmatmul.mubr.f32.gmra.mrb[0].mxu0 %v1287
    %v5075 = vpop.f32.mrb[0].mxu0
    %v5076 = vadd.f32 0.0, %v5075
    %v5077 = vpop.f32.mrb[0].mxu0
    %5078 = vmatprep.mubr.f32.mxu0 0.0
    %5079 = vmatmul.mubr.f32.gmra.mrb[0].mxu0 %v1290
    %v5080 = vpop.f32.mrb[0].mxu0
    %v5081 = vadd.f32 0.0, %v5080
    %v5082 = vpop.f32.mrb[0].mxu0
    %5083 = vmatprep.mubr.f32.mxu0 0.0
    %5084 = vmatmul.mubr.f32.gmra.mrb[0].mxu0 %v1292
    %v5085 = vpop.f32.mrb[0].mxu0
    %v5086 = vadd.f32 0.0, %v5085
    %v5087 = vpop.f32.mrb[0].mxu0
    %5088 = vmatprep.mubr.f32.mxu0 0.0
    %5089 = vmatmul.mubr.f32.gmra.mrb[0].mxu0 %v1295
    %v5090 = vpop.f32.mrb[0].mxu0
    %v5091 = vadd.f32 0.0, %v5090
    %v5092 = vpop.f32.mrb[0].mxu0
    %5093 = vmatprep.mubr.f32.mxu0 0.0
    %5094 = vmatmul.mubr.f32.gmra.mrb[0].mxu0 %v1297
    %v5095 = vpop.f32.mrb[0].mxu0
    %v5096 = vadd.f32 0.0, %v5095
    %v5097 = vpop.f32.mrb[0].mxu0
    %5098 = vmatprep.mubr.f32.mxu0 0.0
    %5099 = vmatmul.mubr.f32.gmra.mrb[0].mxu0 %v1300
    %v5100 = vpop.f32.mrb[0].mxu0
    %v5101 = vadd.f32 0.0, %v5100
    %v5102 = vpop.f32.mrb[0].mxu0
    %5103 = vmatprep.mubr.f32.mxu0 0.0
    %5104 = vmatmul.mubr.f32.gmra.mrb[0].mxu0 %v1302
    %v5105 = vpop.f32.mrb[0].mxu0
    %v5106 = vadd.f32 0.0, %v5105
    %v5107 = vpop.f32.mrb[0].mxu0
    %5108 = vmatprep.mubr.f32.mxu0 0.0
    %5109 = vmatmul.mubr.f32.gmra.mrb[0].mxu0 %v1305
    %v5110 = vpop.f32.mrb[0].mxu0
    %v5111 = vadd.f32 0.0, %v5110
    %v5112 = vpop.f32.mrb[0].mxu0
    %5113 = vmatprep.mubr.f32.mxu0 0.0
    %5114 = vmatmul.mubr.f32.gmra.mrb[0].mxu0 %v1307
    %v5115 = vpop.f32.mrb[0].mxu0
    %v5116 = vadd.f32 0.0, %v5115
    %v5117 = vpop.f32.mrb[0].mxu0
    %5118 = vmatprep.mubr.f32.mxu0 0.0
    %5119 = vmatmul.mubr.f32.gmra.mrb[0].mxu0 %v3318
    %v5120 = vpop.f32.mrb[0].mxu0
    %v5121 = vadd.f32 0.0, %v5120
    %v5122 = vpop.f32.mrb[0].mxu0
    %5123 = vmatprep.mubr.f32.mxu0 0.0
    %5124 = vmatmul.mubr.f32.gmra.mrb[0].mxu0 %v3320
    %v5125 = vpop.f32.mrb[0].mxu0
    %v5126 = vadd.f32 0.0, %v5125
    %v5127 = vpop.f32.mrb[0].mxu0
    %5128 = vmatprep.mubr.f32.mxu0 0.0
    %5129 = vmatmul.mubr.f32.gmra.mrb[0].mxu0 %v1155
    %v5130 = vpop.f32.mrb[0].mxu0
    %v5131 = vadd.f32 0.0, %v5130
    %v5132 = vpop.f32.mrb[0].mxu0
    %5133 = vmatprep.mubr.f32.mxu0 0.0
    %5134 = vmatmul.mubr.f32.gmra.mrb[0].mxu0 %v1157
    %v5135 = vpop.f32.mrb[0].mxu0
    %v5136 = vadd.f32 0.0, %v5135
    %v5137 = vpop.f32.mrb[0].mxu0
    %5138 = vdwg.mxu0
    %v5139 = vadd.f32 %v4673, %v4821
    %v5140 = vadd.f32 %v4674, %v4826
    %v5141 = vadd.f32 %v4675, %v4831
    %v5142 = vadd.f32 %v4676, %v4836
    %v5143 = vadd.f32 %v4677, %v4841
    %v5144 = vadd.f32 %v4678, %v4846
    %v5145 = vadd.f32 %v4679, %v4851
    %v5146 = vadd.f32 %v4680, %v4856
    %v5147 = vadd.f32 %v4681, %v4861
    %v5148 = vadd.f32 %v4682, %v4866
    %v5149 = vadd.f32 %v4683, %v4871
    %v5150 = vadd.f32 %v4684, %v4876
    %v5151 = vadd.f32 %v4685, %v4881
    %v5152 = vadd.f32 %v4686, %v4886
    %v5153 = vadd.f32 %v4687, %v4891
    %v5154 = vadd.f32 %v4688, %v4896
    %v5155 = vadd.f32 %v4689, %v4901
    %v5156 = vadd.f32 %v4690, %v4906
    %v5157 = vadd.f32 %v4691, %v4911
    %v5158 = vadd.f32 %v4692, %v4916
    %v5159 = vadd.f32 %v4693, %v4921
    %v5160 = vadd.f32 %v4694, %v4926
    %v5161 = vadd.f32 %v4695, %v4931
    %v5162 = vadd.f32 %v4696, %v4936
    %v5163 = vadd.f32 %v4697, %v4941
    %v5164 = vadd.f32 %v4698, %v4946
    %v5165 = vadd.f32 %v4699, %v4951
    %v5166 = vadd.f32 %v4700, %v4956
    %v5167 = vadd.f32 %v4701, %v4961
    %v5168 = vadd.f32 %v4702, %v4966
    %v5169 = vadd.f32 %v4703, %v4971
    %v5170 = vadd.f32 %v4704, %v4976
    %v5171 = vadd.f32 %v4705, %v4981
    %v5172 = vadd.f32 %v4706, %v4986
    %v5173 = vadd.f32 %v4707, %v4991
    %v5174 = vadd.f32 %v4708, %v4996
    %v5175 = vadd.f32 %v4709, %v5001
    %v5176 = vadd.f32 %v4710, %v5006
    %v5177 = vadd.f32 %v4711, %v5011
    %v5178 = vadd.f32 %v4712, %v5016
    %v5179 = vadd.f32 %v4713, %v5021
    %v5180 = vadd.f32 %v4714, %v5026
    %v5181 = vadd.f32 %v4715, %v5031
    %v5182 = vadd.f32 %v4716, %v5036
    %v5183 = vadd.f32 %v4717, %v5041
    %v5184 = vadd.f32 %v4718, %v5046
    %v5185 = vadd.f32 %v4719, %v5051
    %v5186 = vadd.f32 %v4720, %v5056
    %v5187 = vadd.f32 %v4721, %v5061
    %v5188 = vadd.f32 %v4722, %v5066
    %v5189 = vadd.f32 %v4723, %v5071
    %v5190 = vadd.f32 %v4724, %v5076
    %v5191 = vadd.f32 %v4725, %v5081
    %v5192 = vadd.f32 %v4726, %v5086
    %v5193 = vadd.f32 %v4727, %v5091
    %v5194 = vadd.f32 %v4728, %v5096
    %v5195 = vadd.f32 %v4729, %v5101
    %v5196 = vadd.f32 %v4730, %v5106
    %v5197 = vadd.f32 %v4731, %v5111
    %v5198 = vadd.f32 %v4732, %v5116
    %v5199 = vadd.f32 %v4733, %v5121
    %v5200 = vadd.f32 %v4734, %v5126
    %v5201 = vadd.f32 %v4735, %v5131
    %v5202 = vadd.f32 %v4736, %v5136
    %s5203 = scalar_lea.vmem %s3, 1024
    %v5204 = vld [vmem:[%s5203] sm:$0xff]
    %v5205 = vld [vmem:[%s5203 + $0x8] sm:$0xff]
    %v5206 = vld [vmem:[%s5203 + $0x10] sm:$0xff]
    %v5207 = vld [vmem:[%s5203 + $0x18] sm:$0xff]
    %v5208 = vld [vmem:[%s5203 + $0x20] sm:$0xff]
    %v5209 = vld [vmem:[%s5203 + $0x28] sm:$0xff]
    %v5210 = vld [vmem:[%s5203 + $0x30] sm:$0xff]
    %v5211 = vld [vmem:[%s5203 + $0x38] sm:$0xff]
    %v5212 = vld [vmem:[%s5203 + $0x40] sm:$0xff]
    %v5213 = vld [vmem:[%s5203 + $0x48] sm:$0xff]
    %v5214 = vld [vmem:[%s5203 + $0x50] sm:$0xff]
    %v5215 = vld [vmem:[%s5203 + $0x58] sm:$0xff]
    %v5216 = vld [vmem:[%s5203 + $0x60] sm:$0xff]
    %v5217 = vld [vmem:[%s5203 + $0x68] sm:$0xff]
    %v5218 = vld [vmem:[%s5203 + $0x70] sm:$0xff]
    %v5219 = vld [vmem:[%s5203 + $0x78] sm:$0xff]
    %5220 = vmatprep.subr.mxu0 0.0
    %5221 = vmatpush1.msra.mxu0 %v5204
    %5222 = vmatprep.subr.mxu0 0.0
    %5223 = vmatpush1.msra.mxu0 %v5205
    %5224 = vmatprep.subr.mxu0 0.0
    %5225 = vmatpush1.msra.mxu0 %v5206
    %5226 = vmatprep.subr.mxu0 0.0
    %5227 = vmatpush1.msra.mxu0 %v5207
    %5228 = vmatprep.subr.mxu0 0.0
    %5229 = vmatpush1.msra.mxu0 %v5208
    %5230 = vmatprep.subr.mxu0 0.0
    %5231 = vmatpush1.msra.mxu0 %v5209
    %5232 = vmatprep.subr.mxu0 0.0
    %5233 = vmatpush1.msra.mxu0 %v5210
    %5234 = vmatprep.subr.mxu0 0.0
    %5235 = vmatpush1.msra.mxu0 %v5211
    %5236 = vmatprep.subr.mxu0 0.0
    %5237 = vmatpush1.msra.mxu0 %v5212
    %5238 = vmatprep.subr.mxu0 0.0
    %5239 = vmatpush1.msra.mxu0 %v5213
    %5240 = vmatprep.subr.mxu0 0.0
    %5241 = vmatpush1.msra.mxu0 %v5214
    %5242 = vmatprep.subr.mxu0 0.0
    %5243 = vmatpush1.msra.mxu0 %v5215
    %5244 = vmatprep.subr.mxu0 0.0
    %5245 = vmatpush1.msra.mxu0 %v5216
    %5246 = vmatprep.subr.mxu0 0.0
    %5247 = vmatpush1.msra.mxu0 %v5217
    %5248 = vmatprep.subr.mxu0 0.0
    %5249 = vmatpush1.msra.mxu0 %v5218
    %5250 = vmatprep.subr.mxu0 0.0
    %5251 = vmatpush1.msra.mxu0 %v5219
    %5252 = vmatprep.subr.mxu0 0.0
    %5253 = vmatpush1.msra.mxu0 0.0
    %5254 = vmatprep.subr.mxu0 0.0
    %5255 = vmatpush1.msra.mxu0 0.0
    %5256 = vmatprep.subr.mxu0 0.0
    %5257 = vmatpush1.msra.mxu0 0.0
    %5258 = vmatprep.subr.mxu0 0.0
    %5259 = vmatpush1.msra.mxu0 0.0
    %5260 = vmatprep.subr.mxu0 0.0
    %5261 = vmatpush1.msra.mxu0 0.0
    %5262 = vmatprep.subr.mxu0 0.0
    %5263 = vmatpush1.msra.mxu0 0.0
    %5264 = vmatprep.subr.mxu0 0.0
    %5265 = vmatpush1.msra.mxu0 0.0
    %5266 = vmatprep.subr.mxu0 0.0
    %5267 = vmatpush1.msra.mxu0 0.0
    %5268 = vmatprep.subr.mxu0 0.0
    %5269 = vmatpush1.msra.mxu0 0.0
    %5270 = vmatprep.subr.mxu0 0.0
    %5271 = vmatpush1.msra.mxu0 0.0
    %5272 = vmatprep.subr.mxu0 0.0
    %5273 = vmatpush1.msra.mxu0 0.0
    %5274 = vmatprep.subr.mxu0 0.0
    %5275 = vmatpush1.msra.mxu0 0.0
    %5276 = vmatprep.subr.mxu0 0.0
    %5277 = vmatpush1.msra.mxu0 0.0
    %5278 = vmatprep.subr.mxu0 0.0
    %5279 = vmatpush1.msra.mxu0 0.0
    %5280 = vmatprep.subr.mxu0 0.0
    %5281 = vmatpush1.msra.mxu0 0.0
    %5282 = vmatprep.subr.mxu0 0.0
    %5283 = vmatpush1.msra.mxu0 0.0
    %5284 = vmatprep.mubr.f32.mxu0 0.0
    %5285 = vmatmul.mubr.f32.gmra.mrb[0].mxu0 %v2170
    %v5286 = vpop.f32.mrb[0].mxu0
    %v5287 = vadd.f32 0.0, %v5286
    %v5288 = vpop.f32.mrb[0].mxu0
    %5289 = vmatprep.mubr.f32.mxu0 0.0
    %5290 = vmatmul.mubr.f32.gmra.mrb[0].mxu0 %v2172
    %v5291 = vpop.f32.mrb[0].mxu0
    %v5292 = vadd.f32 0.0, %v5291
    %v5293 = vpop.f32.mrb[0].mxu0
    %5294 = vmatprep.mubr.f32.mxu0 0.0
    %5295 = vmatmul.mubr.f32.gmra.mrb[0].mxu0 %v2175
    %v5296 = vpop.f32.mrb[0].mxu0
    %v5297 = vadd.f32 0.0, %v5296
    %v5298 = vpop.f32.mrb[0].mxu0
    %5299 = vmatprep.mubr.f32.mxu0 0.0
    %5300 = vmatmul.mubr.f32.gmra.mrb[0].mxu0 %v2177
    %v5301 = vpop.f32.mrb[0].mxu0
    %v5302 = vadd.f32 0.0, %v5301
    %v5303 = vpop.f32.mrb[0].mxu0
    %5304 = vmatprep.mubr.f32.mxu0 0.0
    %5305 = vmatmul.mubr.f32.gmra.mrb[0].mxu0 %v2180
    %v5306 = vpop.f32.mrb[0].mxu0
    %v5307 = vadd.f32 0.0, %v5306
    %v5308 = vpop.f32.mrb[0].mxu0
    %5309 = vmatprep.mubr.f32.mxu0 0.0
    %5310 = vmatmul.mubr.f32.gmra.mrb[0].mxu0 %v2182
    %v5311 = vpop.f32.mrb[0].mxu0
    %v5312 = vadd.f32 0.0, %v5311
    %v5313 = vpop.f32.mrb[0].mxu0
    %5314 = vmatprep.mubr.f32.mxu0 0.0
    %5315 = vmatmul.mubr.f32.gmra.mrb[0].mxu0 %v2185
    %v5316 = vpop.f32.mrb[0].mxu0
    %v5317 = vadd.f32 0.0, %v5316
    %v5318 = vpop.f32.mrb[0].mxu0
    %5319 = vmatprep.mubr.f32.mxu0 0.0
    %5320 = vmatmul.mubr.f32.gmra.mrb[0].mxu0 %v2187
    %v5321 = vpop.f32.mrb[0].mxu0
    %v5322 = vadd.f32 0.0, %v5321
    %v5323 = vpop.f32.mrb[0].mxu0
    %5324 = vmatprep.mubr.f32.mxu0 0.0
    %5325 = vmatmul.mubr.f32.gmra.mrb[0].mxu0 %v2190
    %v5326 = vpop.f32.mrb[0].mxu0
    %v5327 = vadd.f32 0.0, %v5326
    %v5328 = vpop.f32.mrb[0].mxu0
    %5329 = vmatprep.mubr.f32.mxu0 0.0
    %5330 = vmatmul.mubr.f32.gmra.mrb[0].mxu0 %v2192
    %v5331 = vpop.f32.mrb[0].mxu0
    %v5332 = vadd.f32 0.0, %v5331
    %v5333 = vpop.f32.mrb[0].mxu0
    %5334 = vmatprep.mubr.f32.mxu0 0.0
    %5335 = vmatmul.mubr.f32.gmra.mrb[0].mxu0 %v2195
    %v5336 = vpop.f32.mrb[0].mxu0
    %v5337 = vadd.f32 0.0, %v5336
    %v5338 = vpop.f32.mrb[0].mxu0
    %5339 = vmatprep.mubr.f32.mxu0 0.0
    %5340 = vmatmul.mubr.f32.gmra.mrb[0].mxu0 %v2197
    %v5341 = vpop.f32.mrb[0].mxu0
    %v5342 = vadd.f32 0.0, %v5341
    %v5343 = vpop.f32.mrb[0].mxu0
    %5344 = vmatprep.mubr.f32.mxu0 0.0
    %5345 = vmatmul.mubr.f32.gmra.mrb[0].mxu0 %v2200
    %v5346 = vpop.f32.mrb[0].mxu0
    %v5347 = vadd.f32 0.0, %v5346
    %v5348 = vpop.f32.mrb[0].mxu0
    %5349 = vmatprep.mubr.f32.mxu0 0.0
    %5350 = vmatmul.mubr.f32.gmra.mrb[0].mxu0 %v2202
    %v5351 = vpop.f32.mrb[0].mxu0
    %v5352 = vadd.f32 0.0, %v5351
    %v5353 = vpop.f32.mrb[0].mxu0
    %5354 = vmatprep.mubr.f32.mxu0 0.0
    %5355 = vmatmul.mubr.f32.gmra.mrb[0].mxu0 %v2205
    %v5356 = vpop.f32.mrb[0].mxu0
    %v5357 = vadd.f32 0.0, %v5356
    %v5358 = vpop.f32.mrb[0].mxu0
    %5359 = vmatprep.mubr.f32.mxu0 0.0
    %5360 = vmatmul.mubr.f32.gmra.mrb[0].mxu0 %v2207
    %v5361 = vpop.f32.mrb[0].mxu0
    %v5362 = vadd.f32 0.0, %v5361
    %v5363 = vpop.f32.mrb[0].mxu0
    %5364 = vmatprep.mubr.f32.mxu0 0.0
    %5365 = vmatmul.mubr.f32.gmra.mrb[0].mxu0 %v2210
    %v5366 = vpop.f32.mrb[0].mxu0
    %v5367 = vadd.f32 0.0, %v5366
    %v5368 = vpop.f32.mrb[0].mxu0
    %5369 = vmatprep.mubr.f32.mxu0 0.0
    %5370 = vmatmul.mubr.f32.gmra.mrb[0].mxu0 %v2212
    %v5371 = vpop.f32.mrb[0].mxu0
    %v5372 = vadd.f32 0.0, %v5371
    %v5373 = vpop.f32.mrb[0].mxu0
    %5374 = vmatprep.mubr.f32.mxu0 0.0
    %5375 = vmatmul.mubr.f32.gmra.mrb[0].mxu0 %v2215
    %v5376 = vpop.f32.mrb[0].mxu0
    %v5377 = vadd.f32 0.0, %v5376
    %v5378 = vpop.f32.mrb[0].mxu0
    %5379 = vmatprep.mubr.f32.mxu0 0.0
    %5380 = vmatmul.mubr.f32.gmra.mrb[0].mxu0 %v2217
    %v5381 = vpop.f32.mrb[0].mxu0
    %v5382 = vadd.f32 0.0, %v5381
    %v5383 = vpop.f32.mrb[0].mxu0
    %5384 = vmatprep.mubr.f32.mxu0 0.0
    %5385 = vmatmul.mubr.f32.gmra.mrb[0].mxu0 %v2220
    %v5386 = vpop.f32.mrb[0].mxu0
    %v5387 = vadd.f32 0.0, %v5386
    %v5388 = vpop.f32.mrb[0].mxu0
    %5389 = vmatprep.mubr.f32.mxu0 0.0
    %5390 = vmatmul.mubr.f32.gmra.mrb[0].mxu0 %v2222
    %v5391 = vpop.f32.mrb[0].mxu0
    %v5392 = vadd.f32 0.0, %v5391
    %v5393 = vpop.f32.mrb[0].mxu0
    %5394 = vmatprep.mubr.f32.mxu0 0.0
    %5395 = vmatmul.mubr.f32.gmra.mrb[0].mxu0 %v2225
    %v5396 = vpop.f32.mrb[0].mxu0
    %v5397 = vadd.f32 0.0, %v5396
    %v5398 = vpop.f32.mrb[0].mxu0
    %5399 = vmatprep.mubr.f32.mxu0 0.0
    %5400 = vmatmul.mubr.f32.gmra.mrb[0].mxu0 %v2227
    %v5401 = vpop.f32.mrb[0].mxu0
    %v5402 = vadd.f32 0.0, %v5401
    %v5403 = vpop.f32.mrb[0].mxu0
    %5404 = vmatprep.mubr.f32.mxu0 0.0
    %5405 = vmatmul.mubr.f32.gmra.mrb[0].mxu0 %v2230
    %v5406 = vpop.f32.mrb[0].mxu0
    %v5407 = vadd.f32 0.0, %v5406
    %v5408 = vpop.f32.mrb[0].mxu0
    %5409 = vmatprep.mubr.f32.mxu0 0.0
    %5410 = vmatmul.mubr.f32.gmra.mrb[0].mxu0 %v2232
    %v5411 = vpop.f32.mrb[0].mxu0
    %v5412 = vadd.f32 0.0, %v5411
    %v5413 = vpop.f32.mrb[0].mxu0
    %5414 = vmatprep.mubr.f32.mxu0 0.0
    %5415 = vmatmul.mubr.f32.gmra.mrb[0].mxu0 %v2235
    %v5416 = vpop.f32.mrb[0].mxu0
    %v5417 = vadd.f32 0.0, %v5416
    %v5418 = vpop.f32.mrb[0].mxu0
    %5419 = vmatprep.mubr.f32.mxu0 0.0
    %5420 = vmatmul.mubr.f32.gmra.mrb[0].mxu0 %v2237
    %v5421 = vpop.f32.mrb[0].mxu0
    %v5422 = vadd.f32 0.0, %v5421
    %v5423 = vpop.f32.mrb[0].mxu0
    %5424 = vmatprep.mubr.f32.mxu0 0.0
    %5425 = vmatmul.mubr.f32.gmra.mrb[0].mxu0 %v3793
    %v5426 = vpop.f32.mrb[0].mxu0
    %v5427 = vadd.f32 0.0, %v5426
    %v5428 = vpop.f32.mrb[0].mxu0
    %5429 = vmatprep.mubr.f32.mxu0 0.0
    %5430 = vmatmul.mubr.f32.gmra.mrb[0].mxu0 %v3795
    %v5431 = vpop.f32.mrb[0].mxu0
    %v5432 = vadd.f32 0.0, %v5431
    %v5433 = vpop.f32.mrb[0].mxu0
    %5434 = vmatprep.mubr.f32.mxu0 0.0
    %5435 = vmatmul.mubr.f32.gmra.mrb[0].mxu0 %v2160
    %v5436 = vpop.f32.mrb[0].mxu0
    %v5437 = vadd.f32 0.0, %v5436
    %v5438 = vpop.f32.mrb[0].mxu0
    %5439 = vmatprep.mubr.f32.mxu0 0.0
    %5440 = vmatmul.mubr.f32.gmra.mrb[0].mxu0 %v2162
    %v5441 = vpop.f32.mrb[0].mxu0
    %v5442 = vadd.f32 0.0, %v5441
    %v5443 = vpop.f32.mrb[0].mxu0
    %5444 = vmatprep.mubr.f32.mxu0 0.0
    %5445 = vmatmul.mubr.f32.gmra.mrb[0].mxu0 %v2245
    %v5446 = vpop.f32.mrb[0].mxu0
    %v5447 = vadd.f32 0.0, %v5446
    %v5448 = vpop.f32.mrb[0].mxu0
    %5449 = vmatprep.mubr.f32.mxu0 0.0
    %5450 = vmatmul.mubr.f32.gmra.mrb[0].mxu0 %v2247
    %v5451 = vpop.f32.mrb[0].mxu0
    %v5452 = vadd.f32 0.0, %v5451
    %v5453 = vpop.f32.mrb[0].mxu0
    %5454 = vmatprep.mubr.f32.mxu0 0.0
    %5455 = vmatmul.mubr.f32.gmra.mrb[0].mxu0 %v2250
    %v5456 = vpop.f32.mrb[0].mxu0
    %v5457 = vadd.f32 0.0, %v5456
    %v5458 = vpop.f32.mrb[0].mxu0
    %5459 = vmatprep.mubr.f32.mxu0 0.0
    %5460 = vmatmul.mubr.f32.gmra.mrb[0].mxu0 %v2252
    %v5461 = vpop.f32.mrb[0].mxu0
    %v5462 = vadd.f32 0.0, %v5461
    %v5463 = vpop.f32.mrb[0].mxu0
    %5464 = vmatprep.mubr.f32.mxu0 0.0
    %5465 = vmatmul.mubr.f32.gmra.mrb[0].mxu0 %v2255
    %v5466 = vpop.f32.mrb[0].mxu0
    %v5467 = vadd.f32 0.0, %v5466
    %v5468 = vpop.f32.mrb[0].mxu0
    %5469 = vmatprep.mubr.f32.mxu0 0.0
    %5470 = vmatmul.mubr.f32.gmra.mrb[0].mxu0 %v2257
    %v5471 = vpop.f32.mrb[0].mxu0
    %v5472 = vadd.f32 0.0, %v5471
    %v5473 = vpop.f32.mrb[0].mxu0
    %5474 = vmatprep.mubr.f32.mxu0 0.0
    %5475 = vmatmul.mubr.f32.gmra.mrb[0].mxu0 %v2260
    %v5476 = vpop.f32.mrb[0].mxu0
    %v5477 = vadd.f32 0.0, %v5476
    %v5478 = vpop.f32.mrb[0].mxu0
    %5479 = vmatprep.mubr.f32.mxu0 0.0
    %5480 = vmatmul.mubr.f32.gmra.mrb[0].mxu0 %v2262
    %v5481 = vpop.f32.mrb[0].mxu0
    %v5482 = vadd.f32 0.0, %v5481
    %v5483 = vpop.f32.mrb[0].mxu0
    %5484 = vmatprep.mubr.f32.mxu0 0.0
    %5485 = vmatmul.mubr.f32.gmra.mrb[0].mxu0 %v2265
    %v5486 = vpop.f32.mrb[0].mxu0
    %v5487 = vadd.f32 0.0, %v5486
    %v5488 = vpop.f32.mrb[0].mxu0
    %5489 = vmatprep.mubr.f32.mxu0 0.0
    %5490 = vmatmul.mubr.f32.gmra.mrb[0].mxu0 %v2267
    %v5491 = vpop.f32.mrb[0].mxu0
    %v5492 = vadd.f32 0.0, %v5491
    %v5493 = vpop.f32.mrb[0].mxu0
    %5494 = vmatprep.mubr.f32.mxu0 0.0
    %5495 = vmatmul.mubr.f32.gmra.mrb[0].mxu0 %v2270
    %v5496 = vpop.f32.mrb[0].mxu0
    %v5497 = vadd.f32 0.0, %v5496
    %v5498 = vpop.f32.mrb[0].mxu0
    %5499 = vmatprep.mubr.f32.mxu0 0.0
    %5500 = vmatmul.mubr.f32.gmra.mrb[0].mxu0 %v2272
    %v5501 = vpop.f32.mrb[0].mxu0
    %v5502 = vadd.f32 0.0, %v5501
    %v5503 = vpop.f32.mrb[0].mxu0
    %5504 = vmatprep.mubr.f32.mxu0 0.0
    %5505 = vmatmul.mubr.f32.gmra.mrb[0].mxu0 %v2275
    %v5506 = vpop.f32.mrb[0].mxu0
    %v5507 = vadd.f32 0.0, %v5506
    %v5508 = vpop.f32.mrb[0].mxu0
    %5509 = vmatprep.mubr.f32.mxu0 0.0
    %5510 = vmatmul.mubr.f32.gmra.mrb[0].mxu0 %v2277
    %v5511 = vpop.f32.mrb[0].mxu0
    %v5512 = vadd.f32 0.0, %v5511
    %v5513 = vpop.f32.mrb[0].mxu0
    %5514 = vmatprep.mubr.f32.mxu0 0.0
    %5515 = vmatmul.mubr.f32.gmra.mrb[0].mxu0 %v2280
    %v5516 = vpop.f32.mrb[0].mxu0
    %v5517 = vadd.f32 0.0, %v5516
    %v5518 = vpop.f32.mrb[0].mxu0
    %5519 = vmatprep.mubr.f32.mxu0 0.0
    %5520 = vmatmul.mubr.f32.gmra.mrb[0].mxu0 %v2282
    %v5521 = vpop.f32.mrb[0].mxu0
    %v5522 = vadd.f32 0.0, %v5521
    %v5523 = vpop.f32.mrb[0].mxu0
    %5524 = vmatprep.mubr.f32.mxu0 0.0
    %5525 = vmatmul.mubr.f32.gmra.mrb[0].mxu0 %v2285
    %v5526 = vpop.f32.mrb[0].mxu0
    %v5527 = vadd.f32 0.0, %v5526
    %v5528 = vpop.f32.mrb[0].mxu0
    %5529 = vmatprep.mubr.f32.mxu0 0.0
    %5530 = vmatmul.mubr.f32.gmra.mrb[0].mxu0 %v2287
    %v5531 = vpop.f32.mrb[0].mxu0
    %v5532 = vadd.f32 0.0, %v5531
    %v5533 = vpop.f32.mrb[0].mxu0
    %5534 = vmatprep.mubr.f32.mxu0 0.0
    %5535 = vmatmul.mubr.f32.gmra.mrb[0].mxu0 %v2290
    %v5536 = vpop.f32.mrb[0].mxu0
    %v5537 = vadd.f32 0.0, %v5536
    %v5538 = vpop.f32.mrb[0].mxu0
    %5539 = vmatprep.mubr.f32.mxu0 0.0
    %5540 = vmatmul.mubr.f32.gmra.mrb[0].mxu0 %v2292
    %v5541 = vpop.f32.mrb[0].mxu0
    %v5542 = vadd.f32 0.0, %v5541
    %v5543 = vpop.f32.mrb[0].mxu0
    %5544 = vmatprep.mubr.f32.mxu0 0.0
    %5545 = vmatmul.mubr.f32.gmra.mrb[0].mxu0 %v2295
    %v5546 = vpop.f32.mrb[0].mxu0
    %v5547 = vadd.f32 0.0, %v5546
    %v5548 = vpop.f32.mrb[0].mxu0
    %5549 = vmatprep.mubr.f32.mxu0 0.0
    %5550 = vmatmul.mubr.f32.gmra.mrb[0].mxu0 %v2297
    %v5551 = vpop.f32.mrb[0].mxu0
    %v5552 = vadd.f32 0.0, %v5551
    %v5553 = vpop.f32.mrb[0].mxu0
    %5554 = vmatprep.mubr.f32.mxu0 0.0
    %5555 = vmatmul.mubr.f32.gmra.mrb[0].mxu0 %v2300
    %v5556 = vpop.f32.mrb[0].mxu0
    %v5557 = vadd.f32 0.0, %v5556
    %v5558 = vpop.f32.mrb[0].mxu0
    %5559 = vmatprep.mubr.f32.mxu0 0.0
    %5560 = vmatmul.mubr.f32.gmra.mrb[0].mxu0 %v2302
    %v5561 = vpop.f32.mrb[0].mxu0
    %v5562 = vadd.f32 0.0, %v5561
    %v5563 = vpop.f32.mrb[0].mxu0
    %5564 = vmatprep.mubr.f32.mxu0 0.0
    %5565 = vmatmul.mubr.f32.gmra.mrb[0].mxu0 %v2305
    %v5566 = vpop.f32.mrb[0].mxu0
    %v5567 = vadd.f32 0.0, %v5566
    %v5568 = vpop.f32.mrb[0].mxu0
    %5569 = vmatprep.mubr.f32.mxu0 0.0
    %5570 = vmatmul.mubr.f32.gmra.mrb[0].mxu0 %v2307
    %v5571 = vpop.f32.mrb[0].mxu0
    %v5572 = vadd.f32 0.0, %v5571
    %v5573 = vpop.f32.mrb[0].mxu0
    %5574 = vmatprep.mubr.f32.mxu0 0.0
    %5575 = vmatmul.mubr.f32.gmra.mrb[0].mxu0 %v2310
    %v5576 = vpop.f32.mrb[0].mxu0
    %v5577 = vadd.f32 0.0, %v5576
    %v5578 = vpop.f32.mrb[0].mxu0
    %5579 = vmatprep.mubr.f32.mxu0 0.0
    %5580 = vmatmul.mubr.f32.gmra.mrb[0].mxu0 %v2312
    %v5581 = vpop.f32.mrb[0].mxu0
    %v5582 = vadd.f32 0.0, %v5581
    %v5583 = vpop.f32.mrb[0].mxu0
    %5584 = vmatprep.mubr.f32.mxu0 0.0
    %5585 = vmatmul.mubr.f32.gmra.mrb[0].mxu0 %v3798
    %v5586 = vpop.f32.mrb[0].mxu0
    %v5587 = vadd.f32 0.0, %v5586
    %v5588 = vpop.f32.mrb[0].mxu0
    %5589 = vmatprep.mubr.f32.mxu0 0.0
    %5590 = vmatmul.mubr.f32.gmra.mrb[0].mxu0 %v3800
    %v5591 = vpop.f32.mrb[0].mxu0
    %v5592 = vadd.f32 0.0, %v5591
    %v5593 = vpop.f32.mrb[0].mxu0
    %5594 = vmatprep.mubr.f32.mxu0 0.0
    %5595 = vmatmul.mubr.f32.gmra.mrb[0].mxu0 %v2160
    %v5596 = vpop.f32.mrb[0].mxu0
    %v5597 = vadd.f32 0.0, %v5596
    %v5598 = vpop.f32.mrb[0].mxu0
    %5599 = vmatprep.mubr.f32.mxu0 0.0
    %5600 = vmatmul.mubr.f32.gmra.mrb[0].mxu0 %v2162
    %v5601 = vpop.f32.mrb[0].mxu0
    %v5602 = vadd.f32 0.0, %v5601
    %v5603 = vpop.f32.mrb[0].mxu0
    %5604 = vdwg.mxu0
    %v5605 = vadd.f32 %v5139, %v5287
    %v5606 = vadd.f32 %v5140, %v5292
    %v5607 = vadd.f32 %v5141, %v5297
    %v5608 = vadd.f32 %v5142, %v5302
    %v5609 = vadd.f32 %v5143, %v5307
    %v5610 = vadd.f32 %v5144, %v5312
    %v5611 = vadd.f32 %v5145, %v5317
    %v5612 = vadd.f32 %v5146, %v5322
    %v5613 = vadd.f32 %v5147, %v5327
    %v5614 = vadd.f32 %v5148, %v5332
    %v5615 = vadd.f32 %v5149, %v5337
    %v5616 = vadd.f32 %v5150, %v5342
    %v5617 = vadd.f32 %v5151, %v5347
    %v5618 = vadd.f32 %v5152, %v5352
    %v5619 = vadd.f32 %v5153, %v5357
    %v5620 = vadd.f32 %v5154, %v5362
    %v5621 = vadd.f32 %v5155, %v5367
    %v5622 = vadd.f32 %v5156, %v5372
    %v5623 = vadd.f32 %v5157, %v5377
    %v5624 = vadd.f32 %v5158, %v5382
    %v5625 = vadd.f32 %v5159, %v5387
    %v5626 = vadd.f32 %v5160, %v5392
    %v5627 = vadd.f32 %v5161, %v5397
    %v5628 = vadd.f32 %v5162, %v5402
    %v5629 = vadd.f32 %v5163, %v5407
    %v5630 = vadd.f32 %v5164, %v5412
    %v5631 = vadd.f32 %v5165, %v5417
    %v5632 = vadd.f32 %v5166, %v5422
    %v5633 = vadd.f32 %v5167, %v5427
    %v5634 = vadd.f32 %v5168, %v5432
    %v5635 = vadd.f32 %v5169, %v5437
    %v5636 = vadd.f32 %v5170, %v5442
    %v5637 = vadd.f32 %v5171, %v5447
    %v5638 = vadd.f32 %v5172, %v5452
    %v5639 = vadd.f32 %v5173, %v5457
    %v5640 = vadd.f32 %v5174, %v5462
    %v5641 = vadd.f32 %v5175, %v5467
    %v5642 = vadd.f32 %v5176, %v5472
    %v5643 = vadd.f32 %v5177, %v5477
    %v5644 = vadd.f32 %v5178, %v5482
    %v5645 = vadd.f32 %v5179, %v5487
    %v5646 = vadd.f32 %v5180, %v5492
    %v5647 = vadd.f32 %v5181, %v5497
    %v5648 = vadd.f32 %v5182, %v5502
    %v5649 = vadd.f32 %v5183, %v5507
    %v5650 = vadd.f32 %v5184, %v5512
    %v5651 = vadd.f32 %v5185, %v5517
    %v5652 = vadd.f32 %v5186, %v5522
    %v5653 = vadd.f32 %v5187, %v5527
    %v5654 = vadd.f32 %v5188, %v5532
    %v5655 = vadd.f32 %v5189, %v5537
    %v5656 = vadd.f32 %v5190, %v5542
    %v5657 = vadd.f32 %v5191, %v5547
    %v5658 = vadd.f32 %v5192, %v5552
    %v5659 = vadd.f32 %v5193, %v5557
    %v5660 = vadd.f32 %v5194, %v5562
    %v5661 = vadd.f32 %v5195, %v5567
    %v5662 = vadd.f32 %v5196, %v5572
    %v5663 = vadd.f32 %v5197, %v5577
    %v5664 = vadd.f32 %v5198, %v5582
    %v5665 = vadd.f32 %v5199, %v5587
    %v5666 = vadd.f32 %v5200, %v5592
    %v5667 = vadd.f32 %v5201, %v5597
    %v5668 = vadd.f32 %v5202, %v5602
    %v5669 = vld [vmem:[%s4] sm:$0x1]
    %v5671 = vlaneseq
    %v5672 = vshrl.u32 %v5671, 7
    %v5673 = vsub.s32 0, %v5672
    %v5674 = vrot.slane %v5669, %v5673
    %v5676 = vadd.f32 %v5605, %v5674
    %v5677 = vadd.f32 %v5606, %v5674
    %v5678 = vadd.f32 %v5607, %v5674
    %v5679 = vadd.f32 %v5608, %v5674
    %v5680 = vadd.f32 %v5609, %v5674
    %v5681 = vadd.f32 %v5610, %v5674
    %v5682 = vadd.f32 %v5611, %v5674
    %v5683 = vadd.f32 %v5612, %v5674
    %v5684 = vadd.f32 %v5613, %v5674
    %v5685 = vadd.f32 %v5614, %v5674
    %v5686 = vadd.f32 %v5615, %v5674
    %v5687 = vadd.f32 %v5616, %v5674
    %v5688 = vadd.f32 %v5617, %v5674
    %v5689 = vadd.f32 %v5618, %v5674
    %v5690 = vadd.f32 %v5619, %v5674
    %v5691 = vadd.f32 %v5620, %v5674
    %v5692 = vadd.f32 %v5621, %v5674
    %v5693 = vadd.f32 %v5622, %v5674
    %v5694 = vadd.f32 %v5623, %v5674
    %v5695 = vadd.f32 %v5624, %v5674
    %v5696 = vadd.f32 %v5625, %v5674
    %v5697 = vadd.f32 %v5626, %v5674
    %v5698 = vadd.f32 %v5627, %v5674
    %v5699 = vadd.f32 %v5628, %v5674
    %v5700 = vadd.f32 %v5629, %v5674
    %v5701 = vadd.f32 %v5630, %v5674
    %v5702 = vadd.f32 %v5631, %v5674
    %v5703 = vadd.f32 %v5632, %v5674
    %v5704 = vadd.f32 %v5633, %v5674
    %v5705 = vadd.f32 %v5634, %v5674
    %v5706 = vadd.f32 %v5635, %v5674
    %v5707 = vadd.f32 %v5636, %v5674
    %v5708 = vadd.f32 %v5637, %v5674
    %v5709 = vadd.f32 %v5638, %v5674
    %v5710 = vadd.f32 %v5639, %v5674
    %v5711 = vadd.f32 %v5640, %v5674
    %v5712 = vadd.f32 %v5641, %v5674
    %v5713 = vadd.f32 %v5642, %v5674
    %v5714 = vadd.f32 %v5643, %v5674
    %v5715 = vadd.f32 %v5644, %v5674
    %v5716 = vadd.f32 %v5645, %v5674
    %v5717 = vadd.f32 %v5646, %v5674
    %v5718 = vadd.f32 %v5647, %v5674
    %v5719 = vadd.f32 %v5648, %v5674
    %v5720 = vadd.f32 %v5649, %v5674
    %v5721 = vadd.f32 %v5650, %v5674
    %v5722 = vadd.f32 %v5651, %v5674
    %v5723 = vadd.f32 %v5652, %v5674
    %v5724 = vadd.f32 %v5653, %v5674
    %v5725 = vadd.f32 %v5654, %v5674
    %v5726 = vadd.f32 %v5655, %v5674
    %v5727 = vadd.f32 %v5656, %v5674
    %v5728 = vadd.f32 %v5657, %v5674
    %v5729 = vadd.f32 %v5658, %v5674
    %v5730 = vadd.f32 %v5659, %v5674
    %v5731 = vadd.f32 %v5660, %v5674
    %v5732 = vadd.f32 %v5661, %v5674
    %v5733 = vadd.f32 %v5662, %v5674
    %v5734 = vadd.f32 %v5663, %v5674
    %v5735 = vadd.f32 %v5664, %v5674
    %v5736 = vadd.f32 %v5665, %v5674
    %v5737 = vadd.f32 %v5666, %v5674
    %v5738 = vadd.f32 %v5667, %v5674
    %v5739 = vadd.f32 %v5668, %v5674
    %v5740 = vmax.f32 %v5676, 0.0
    %v5741 = vmax.f32 %v5677, 0.0
    %v5742 = vmax.f32 %v5678, 0.0
    %v5743 = vmax.f32 %v5679, 0.0
    %v5744 = vmax.f32 %v5680, 0.0
    %v5745 = vmax.f32 %v5681, 0.0
    %v5746 = vmax.f32 %v5682, 0.0
    %v5747 = vmax.f32 %v5683, 0.0
    %v5748 = vmax.f32 %v5684, 0.0
    %v5749 = vmax.f32 %v5685, 0.0
    %v5750 = vmax.f32 %v5686, 0.0
    %v5751 = vmax.f32 %v5687, 0.0
    %v5752 = vmax.f32 %v5688, 0.0
    %v5753 = vmax.f32 %v5689, 0.0
    %v5754 = vmax.f32 %v5690, 0.0
    %v5755 = vmax.f32 %v5691, 0.0
    %v5756 = vmax.f32 %v5692, 0.0
    %v5757 = vmax.f32 %v5693, 0.0
    %v5758 = vmax.f32 %v5694, 0.0
    %v5759 = vmax.f32 %v5695, 0.0
    %v5760 = vmax.f32 %v5696, 0.0
    %v5761 = vmax.f32 %v5697, 0.0
    %v5762 = vmax.f32 %v5698, 0.0
    %v5763 = vmax.f32 %v5699, 0.0
    %v5764 = vmax.f32 %v5700, 0.0
    %v5765 = vmax.f32 %v5701, 0.0
    %v5766 = vmax.f32 %v5702, 0.0
    %v5767 = vmax.f32 %v5703, 0.0
    %v5768 = vmax.f32 %v5704, 0.0
    %v5769 = vmax.f32 %v5705, 0.0
    %v5770 = vmax.f32 %v5706, 0.0
    %v5771 = vmax.f32 %v5707, 0.0
    %v5772 = vmax.f32 %v5708, 0.0
    %v5773 = vmax.f32 %v5709, 0.0
    %v5774 = vmax.f32 %v5710, 0.0
    %v5775 = vmax.f32 %v5711, 0.0
    %v5776 = vmax.f32 %v5712, 0.0
    %v5777 = vmax.f32 %v5713, 0.0
    %v5778 = vmax.f32 %v5714, 0.0
    %v5779 = vmax.f32 %v5715, 0.0
    %v5780 = vmax.f32 %v5716, 0.0
    %v5781 = vmax.f32 %v5717, 0.0
    %v5782 = vmax.f32 %v5718, 0.0
    %v5783 = vmax.f32 %v5719, 0.0
    %v5784 = vmax.f32 %v5720, 0.0
    %v5785 = vmax.f32 %v5721, 0.0
    %v5786 = vmax.f32 %v5722, 0.0
    %v5787 = vmax.f32 %v5723, 0.0
    %v5788 = vmax.f32 %v5724, 0.0
    %v5789 = vmax.f32 %v5725, 0.0
    %v5790 = vmax.f32 %v5726, 0.0
    %v5791 = vmax.f32 %v5727, 0.0
    %v5792 = vmax.f32 %v5728, 0.0
    %v5793 = vmax.f32 %v5729, 0.0
    %v5794 = vmax.f32 %v5730, 0.0
    %v5795 = vmax.f32 %v5731, 0.0
    %v5796 = vmax.f32 %v5732, 0.0
    %v5797 = vmax.f32 %v5733, 0.0
    %v5798 = vmax.f32 %v5734, 0.0
    %v5799 = vmax.f32 %v5735, 0.0
    %v5800 = vmax.f32 %v5736, 0.0
    %v5801 = vmax.f32 %v5737, 0.0
    %v5802 = vmax.f32 %v5738, 0.0
    %v5803 = vmax.f32 %v5739, 0.0
    %vm5804 = vcmask 64512
    %5805 = vst.msk [vmem:[%s8] sm:$0xff] %vm5804, %v5740
    %5806 = vst.msk [vmem:[%s8 + $0x8] sm:$0xff] %vm5804, %v5741
    %5807 = vst.msk [vmem:[%s8 + $0x10] sm:$0xff] %vm5804, %v5742
    %5808 = vst.msk [vmem:[%s8 + $0x18] sm:$0xff] %vm5804, %v5743
    %5809 = vst.msk [vmem:[%s8 + $0x20] sm:$0xff] %vm5804, %v5744
    %5810 = vst.msk [vmem:[%s8 + $0x28] sm:$0xff] %vm5804, %v5745
    %5811 = vst.msk [vmem:[%s8 + $0x30] sm:$0xff] %vm5804, %v5746
    %5812 = vst.msk [vmem:[%s8 + $0x38] sm:$0xff] %vm5804, %v5747
    %5813 = vst.msk [vmem:[%s8 + $0x40] sm:$0xff] %vm5804, %v5748
    %5814 = vst.msk [vmem:[%s8 + $0x48] sm:$0xff] %vm5804, %v5749
    %5815 = vst.msk [vmem:[%s8 + $0x50] sm:$0xff] %vm5804, %v5750
    %5816 = vst.msk [vmem:[%s8 + $0x58] sm:$0xff] %vm5804, %v5751
    %5817 = vst.msk [vmem:[%s8 + $0x60] sm:$0xff] %vm5804, %v5752
    %5818 = vst.msk [vmem:[%s8 + $0x68] sm:$0xff] %vm5804, %v5753
    %5819 = vst.msk [vmem:[%s8 + $0x70] sm:$0xff] %vm5804, %v5754
    %5820 = vst.msk [vmem:[%s8 + $0x78] sm:$0xff] %vm5804, %v5755
    %5821 = vst.msk [vmem:[%s8 + $0x80] sm:$0xff] %vm5804, %v5756
    %5822 = vst.msk [vmem:[%s8 + $0x88] sm:$0xff] %vm5804, %v5757
    %5823 = vst.msk [vmem:[%s8 + $0x90] sm:$0xff] %vm5804, %v5758
    %5824 = vst.msk [vmem:[%s8 + $0x98] sm:$0xff] %vm5804, %v5759
    %5825 = vst.msk [vmem:[%s8 + $0xa0] sm:$0xff] %vm5804, %v5760
    %5826 = vst.msk [vmem:[%s8 + $0xa8] sm:$0xff] %vm5804, %v5761
    %5827 = vst.msk [vmem:[%s8 + $0xb0] sm:$0xff] %vm5804, %v5762
    %5828 = vst.msk [vmem:[%s8 + $0xb8] sm:$0xff] %vm5804, %v5763
    %5829 = vst.msk [vmem:[%s8 + $0xc0] sm:$0xff] %vm5804, %v5764
    %5830 = vst.msk [vmem:[%s8 + $0xc8] sm:$0xff] %vm5804, %v5765
    %5831 = vst.msk [vmem:[%s8 + $0xd0] sm:$0xff] %vm5804, %v5766
    %5832 = vst.msk [vmem:[%s8 + $0xd8] sm:$0xff] %vm5804, %v5767
    %5833 = vst.msk [vmem:[%s8 + $0xe0] sm:$0xff] %vm5804, %v5768
    %5834 = vst.msk [vmem:[%s8 + $0xe8] sm:$0xff] %vm5804, %v5769
    %5835 = vst.msk [vmem:[%s8 + $0xf0] sm:$0xff] %vm5804, %v5770
    %5836 = vst.msk [vmem:[%s8 + $0xf8] sm:$0xff] %vm5804, %v5771
    %5837 = vst.msk [vmem:[%s8 + $0x100] sm:$0xff] %vm5804, %v5772
    %5838 = vst.msk [vmem:[%s8 + $0x108] sm:$0xff] %vm5804, %v5773
    %5839 = vst.msk [vmem:[%s8 + $0x110] sm:$0xff] %vm5804, %v5774
    %5840 = vst.msk [vmem:[%s8 + $0x118] sm:$0xff] %vm5804, %v5775
    %5841 = vst.msk [vmem:[%s8 + $0x120] sm:$0xff] %vm5804, %v5776
    %5842 = vst.msk [vmem:[%s8 + $0x128] sm:$0xff] %vm5804, %v5777
    %5843 = vst.msk [vmem:[%s8 + $0x130] sm:$0xff] %vm5804, %v5778
    %5844 = vst.msk [vmem:[%s8 + $0x138] sm:$0xff] %vm5804, %v5779
    %5845 = vst.msk [vmem:[%s8 + $0x140] sm:$0xff] %vm5804, %v5780
    %5846 = vst.msk [vmem:[%s8 + $0x148] sm:$0xff] %vm5804, %v5781
    %5847 = vst.msk [vmem:[%s8 + $0x150] sm:$0xff] %vm5804, %v5782
    %5848 = vst.msk [vmem:[%s8 + $0x158] sm:$0xff] %vm5804, %v5783
    %5849 = vst.msk [vmem:[%s8 + $0x160] sm:$0xff] %vm5804, %v5784
    %5850 = vst.msk [vmem:[%s8 + $0x168] sm:$0xff] %vm5804, %v5785
    %5851 = vst.msk [vmem:[%s8 + $0x170] sm:$0xff] %vm5804, %v5786
    %5852 = vst.msk [vmem:[%s8 + $0x178] sm:$0xff] %vm5804, %v5787
    %5853 = vst.msk [vmem:[%s8 + $0x180] sm:$0xff] %vm5804, %v5788
    %5854 = vst.msk [vmem:[%s8 + $0x188] sm:$0xff] %vm5804, %v5789
    %5855 = vst.msk [vmem:[%s8 + $0x190] sm:$0xff] %vm5804, %v5790
    %5856 = vst.msk [vmem:[%s8 + $0x198] sm:$0xff] %vm5804, %v5791
    %5857 = vst.msk [vmem:[%s8 + $0x1a0] sm:$0xff] %vm5804, %v5792
    %5858 = vst.msk [vmem:[%s8 + $0x1a8] sm:$0xff] %vm5804, %v5793
    %5859 = vst.msk [vmem:[%s8 + $0x1b0] sm:$0xff] %vm5804, %v5794
    %5860 = vst.msk [vmem:[%s8 + $0x1b8] sm:$0xff] %vm5804, %v5795
    %5861 = vst.msk [vmem:[%s8 + $0x1c0] sm:$0xff] %vm5804, %v5796
    %5862 = vst.msk [vmem:[%s8 + $0x1c8] sm:$0xff] %vm5804, %v5797
    %5863 = vst.msk [vmem:[%s8 + $0x1d0] sm:$0xff] %vm5804, %v5798
    %5864 = vst.msk [vmem:[%s8 + $0x1d8] sm:$0xff] %vm5804, %v5799
    %5865 = vst.msk [vmem:[%s8 + $0x1e0] sm:$0xff] %vm5804, %v5800
    %5866 = vst.msk [vmem:[%s8 + $0x1e8] sm:$0xff] %vm5804, %v5801
    %5867 = vst.msk [vmem:[%s8 + $0x1f0] sm:$0xff] %vm5804, %v5802
    %5868 = vst.msk [vmem:[%s8 + $0x1f8] sm:$0xff] %vm5804, %v5803
    %v5869 = vld [vmem:[%s5] sm:$0xff]
    %v5870 = vld [vmem:[%s5 + $0x8] sm:$0xff]
    %v5871 = vld [vmem:[%s5 + $0x10] sm:$0xff]
    %v5872 = vld [vmem:[%s5 + $0x18] sm:$0xff]
    %v5873 = vld [vmem:[%s5 + $0x20] sm:$0xff]
    %v5874 = vld [vmem:[%s5 + $0x28] sm:$0xff]
    %v5875 = vld [vmem:[%s5 + $0x30] sm:$0xff]
    %v5876 = vld [vmem:[%s5 + $0x38] sm:$0xff]
    %v5877 = vld [vmem:[%s5 + $0x40] sm:$0xff]
    %v5878 = vld [vmem:[%s5 + $0x48] sm:$0xff]
    %v5879 = vld [vmem:[%s5 + $0x50] sm:$0xff]
    %v5880 = vld [vmem:[%s5 + $0x58] sm:$0xff]
    %v5881 = vld [vmem:[%s5 + $0x60] sm:$0xff]
    %v5882 = vld [vmem:[%s5 + $0x68] sm:$0xff]
    %v5883 = vld [vmem:[%s5 + $0x70] sm:$0xff]
    %v5884 = vld [vmem:[%s5 + $0x78] sm:$0xff]
    %v5885 = vld [vmem:[%s0] sm:$0xff]
    %v5886 = vld [vmem:[%s0 + $0x8] sm:$0xff]
    %v5887 = vld [vmem:[%s0 + $0x10] sm:$0xff]
    %v5888 = vld [vmem:[%s0 + $0x18] sm:$0xff]
    %v5889 = vld [vmem:[%s0 + $0x20] sm:$0xff]
    %v5890 = vld [vmem:[%s0 + $0x28] sm:$0xff]
    %v5891 = vld [vmem:[%s0 + $0x30] sm:$0xff]
    %v5892 = vld [vmem:[%s0 + $0x38] sm:$0xff]
    %v5893 = vld [vmem:[%s0 + $0x40] sm:$0xff]
    %v5894 = vld [vmem:[%s0 + $0x48] sm:$0xff]
    %v5895 = vld [vmem:[%s0 + $0x50] sm:$0xff]
    %v5896 = vld [vmem:[%s0 + $0x58] sm:$0xff]
    %v5897 = vld [vmem:[%s0 + $0x60] sm:$0xff]
    %v5898 = vld [vmem:[%s0 + $0x68] sm:$0xff]
    %v5899 = vld [vmem:[%s0 + $0x70] sm:$0xff]
    %v5900 = vld [vmem:[%s0 + $0x78] sm:$0xff]
    %v5901 = vld [vmem:[%s0 + $0x80] sm:$0xff]
    %v5902 = vld [vmem:[%s0 + $0x88] sm:$0xff]
    %v5903 = vld [vmem:[%s0 + $0x90] sm:$0xff]
    %v5904 = vld [vmem:[%s0 + $0x98] sm:$0xff]
    %v5905 = vld [vmem:[%s0 + $0xa0] sm:$0xff]
    %v5906 = vld [vmem:[%s0 + $0xa8] sm:$0xff]
    %v5907 = vld [vmem:[%s0 + $0xb0] sm:$0xff]
    %v5908 = vld [vmem:[%s0 + $0xb8] sm:$0xff]
    %v5909 = vld [vmem:[%s0 + $0xc0] sm:$0xff]
    %v5910 = vld [vmem:[%s0 + $0xc8] sm:$0xff]
    %v5911 = vld [vmem:[%s0 + $0xd0] sm:$0xff]
    %v5912 = vld [vmem:[%s0 + $0xd8] sm:$0xff]
    %v5913 = vld [vmem:[%s0 + $0xe0] sm:$0xff]
    %v5914 = vld [vmem:[%s0 + $0xe8] sm:$0xff]
    %v5915 = vld [vmem:[%s0 + $0xf0] sm:$0xff]
    %v5916 = vld [vmem:[%s0 + $0xf8] sm:$0xff]
    %v5917 = vld [vmem:[%s0 + $0x100] sm:$0xff]
    %v5918 = vld [vmem:[%s0 + $0x108] sm:$0xff]
    %v5919 = vld [vmem:[%s0 + $0x110] sm:$0xff]
    %v5920 = vld [vmem:[%s0 + $0x118] sm:$0xff]
    %v5921 = vld [vmem:[%s0 + $0x120] sm:$0xff]
    %v5922 = vld [vmem:[%s0 + $0x128] sm:$0xff]
    %v5923 = vld [vmem:[%s0 + $0x130] sm:$0xff]
    %v5924 = vld [vmem:[%s0 + $0x138] sm:$0xff]
    %v5925 = vld [vmem:[%s0 + $0x140] sm:$0xff]
    %v5926 = vld [vmem:[%s0 + $0x148] sm:$0xff]
    %v5927 = vld [vmem:[%s0 + $0x150] sm:$0xff]
    %v5928 = vld [vmem:[%s0 + $0x158] sm:$0xff]
    %v5929 = vld [vmem:[%s0 + $0x160] sm:$0xff]
    %v5930 = vld [vmem:[%s0 + $0x168] sm:$0xff]
    %v5931 = vld [vmem:[%s0 + $0x170] sm:$0xff]
    %v5932 = vld [vmem:[%s0 + $0x178] sm:$0xff]
    %v5933 = vld [vmem:[%s0 + $0x180] sm:$0xff]
    %v5934 = vld [vmem:[%s0 + $0x188] sm:$0xff]
    %v5935 = vld [vmem:[%s0 + $0x190] sm:$0xff]
    %v5936 = vld [vmem:[%s0 + $0x198] sm:$0xff]
    %v5937 = vld [vmem:[%s0 + $0x1a0] sm:$0xff]
    %v5938 = vld [vmem:[%s0 + $0x1a8] sm:$0xff]
    %v5939 = vld [vmem:[%s0 + $0x1b0] sm:$0xff]
    %v5940 = vld [vmem:[%s0 + $0x1b8] sm:$0xff]
    %v5941 = vld [vmem:[%s0 + $0x1c0] sm:$0xff]
    %v5942 = vld [vmem:[%s0 + $0x1c8] sm:$0xff]
    %v5943 = vld [vmem:[%s0 + $0x1d0] sm:$0xff]
    %v5944 = vld [vmem:[%s0 + $0x1d8] sm:$0xff]
    %v5945 = vld [vmem:[%s0 + $0x1e0] sm:$0xff]
    %v5946 = vld [vmem:[%s0 + $0x1e8] sm:$0xff]
    %v5947 = vld [vmem:[%s0 + $0x1f0] sm:$0xff]
    %v5948 = vld [vmem:[%s0 + $0x1f8] sm:$0xff]
    %v5949 = vld [vmem:[%s6] sm:$0x1]
    %v5951 = vlaneseq
    %v5952 = vshrl.u32 %v5951, 7
    %v5953 = vsub.s32 0, %v5952
    %v5954 = vrot.slane %v5949, %v5953
    %5956 = vmatprep.subr.mxu0 0.0
    %5957 = vmatpush1.msra.mxu0 %v5869
    %5958 = vmatprep.subr.mxu0 0.0
    %5959 = vmatpush1.msra.mxu0 %v5870
    %5960 = vmatprep.subr.mxu0 0.0
    %5961 = vmatpush1.msra.mxu0 %v5871
    %5962 = vmatprep.subr.mxu0 0.0
    %5963 = vmatpush1.msra.mxu0 %v5872
    %5964 = vmatprep.subr.mxu0 0.0
    %5965 = vmatpush1.msra.mxu0 %v5873
    %5966 = vmatprep.subr.mxu0 0.0
    %5967 = vmatpush1.msra.mxu0 %v5874
    %5968 = vmatprep.subr.mxu0 0.0
    %5969 = vmatpush1.msra.mxu0 %v5875
    %5970 = vmatprep.subr.mxu0 0.0
    %5971 = vmatpush1.msra.mxu0 %v5876
    %5972 = vmatprep.subr.mxu0 0.0
    %5973 = vmatpush1.msra.mxu0 %v5877
    %5974 = vmatprep.subr.mxu0 0.0
    %5975 = vmatpush1.msra.mxu0 %v5878
    %5976 = vmatprep.subr.mxu0 0.0
    %5977 = vmatpush1.msra.mxu0 %v5879
    %5978 = vmatprep.subr.mxu0 0.0
    %5979 = vmatpush1.msra.mxu0 %v5880
    %5980 = vmatprep.subr.mxu0 0.0
    %5981 = vmatpush1.msra.mxu0 %v5881
    %5982 = vmatprep.subr.mxu0 0.0
    %5983 = vmatpush1.msra.mxu0 %v5882
    %5984 = vmatprep.subr.mxu0 0.0
    %5985 = vmatpush1.msra.mxu0 %v5883
    %5986 = vmatprep.subr.mxu0 0.0
    %5987 = vmatpush1.msra.mxu0 %v5884
    %5988 = vmatprep.subr.mxu0 0.0
    %5989 = vmatpush1.msra.mxu0 0.0
    %5990 = vmatprep.subr.mxu0 0.0
    %5991 = vmatpush1.msra.mxu0 0.0
    %5992 = vmatprep.subr.mxu0 0.0
    %5993 = vmatpush1.msra.mxu0 0.0
    %5994 = vmatprep.subr.mxu0 0.0
    %5995 = vmatpush1.msra.mxu0 0.0
    %5996 = vmatprep.subr.mxu0 0.0
    %5997 = vmatpush1.msra.mxu0 0.0
    %5998 = vmatprep.subr.mxu0 0.0
    %5999 = vmatpush1.msra.mxu0 0.0
    %6000 = vmatprep.subr.mxu0 0.0
    %6001 = vmatpush1.msra.mxu0 0.0
    %6002 = vmatprep.subr.mxu0 0.0
    %6003 = vmatpush1.msra.mxu0 0.0
    %6004 = vmatprep.subr.mxu0 0.0
    %6005 = vmatpush1.msra.mxu0 0.0
    %6006 = vmatprep.subr.mxu0 0.0
    %6007 = vmatpush1.msra.mxu0 0.0
    %6008 = vmatprep.subr.mxu0 0.0
    %6009 = vmatpush1.msra.mxu0 0.0
    %6010 = vmatprep.subr.mxu0 0.0
    %6011 = vmatpush1.msra.mxu0 0.0
    %6012 = vmatprep.subr.mxu0 0.0
    %6013 = vmatpush1.msra.mxu0 0.0
    %6014 = vmatprep.subr.mxu0 0.0
    %6015 = vmatpush1.msra.mxu0 0.0
    %6016 = vmatprep.subr.mxu0 0.0
    %6017 = vmatpush1.msra.mxu0 0.0
    %6018 = vmatprep.subr.mxu0 0.0
    %6019 = vmatpush1.msra.mxu0 0.0
    %6020 = vmatprep.mubr.f32.mxu0 0.0
    %6021 = vmatmul.mubr.f32.gmra.mrb[0].mxu0 %v5740
    %v6022 = vpop.f32.mrb[0].mxu0
    %v6023 = vadd.f32 %v5954, %v6022
    %v6024 = vpop.f32.mrb[0].mxu0
    %6025 = vmatprep.mubr.f32.mxu0 0.0
    %6026 = vmatmul.mubr.f32.gmra.mrb[0].mxu0 %v5741
    %v6027 = vpop.f32.mrb[0].mxu0
    %v6028 = vadd.f32 %v5954, %v6027
    %v6029 = vpop.f32.mrb[0].mxu0
    %6030 = vmatprep.mubr.f32.mxu0 0.0
    %6031 = vmatmul.mubr.f32.gmra.mrb[0].mxu0 %v5742
    %v6032 = vpop.f32.mrb[0].mxu0
    %v6033 = vadd.f32 %v5954, %v6032
    %v6034 = vpop.f32.mrb[0].mxu0
    %6035 = vmatprep.mubr.f32.mxu0 0.0
    %6036 = vmatmul.mubr.f32.gmra.mrb[0].mxu0 %v5743
    %v6037 = vpop.f32.mrb[0].mxu0
    %v6038 = vadd.f32 %v5954, %v6037
    %v6039 = vpop.f32.mrb[0].mxu0
    %6040 = vmatprep.mubr.f32.mxu0 0.0
    %6041 = vmatmul.mubr.f32.gmra.mrb[0].mxu0 %v5744
    %v6042 = vpop.f32.mrb[0].mxu0
    %v6043 = vadd.f32 %v5954, %v6042
    %v6044 = vpop.f32.mrb[0].mxu0
    %6045 = vmatprep.mubr.f32.mxu0 0.0
    %6046 = vmatmul.mubr.f32.gmra.mrb[0].mxu0 %v5745
    %v6047 = vpop.f32.mrb[0].mxu0
    %v6048 = vadd.f32 %v5954, %v6047
    %v6049 = vpop.f32.mrb[0].mxu0
    %6050 = vmatprep.mubr.f32.mxu0 0.0
    %6051 = vmatmul.mubr.f32.gmra.mrb[0].mxu0 %v5746
    %v6052 = vpop.f32.mrb[0].mxu0
    %v6053 = vadd.f32 %v5954, %v6052
    %v6054 = vpop.f32.mrb[0].mxu0
    %6055 = vmatprep.mubr.f32.mxu0 0.0
    %6056 = vmatmul.mubr.f32.gmra.mrb[0].mxu0 %v5747
    %v6057 = vpop.f32.mrb[0].mxu0
    %v6058 = vadd.f32 %v5954, %v6057
    %v6059 = vpop.f32.mrb[0].mxu0
    %6060 = vmatprep.mubr.f32.mxu0 0.0
    %6061 = vmatmul.mubr.f32.gmra.mrb[0].mxu0 %v5748
    %v6062 = vpop.f32.mrb[0].mxu0
    %v6063 = vadd.f32 %v5954, %v6062
    %v6064 = vpop.f32.mrb[0].mxu0
    %6065 = vmatprep.mubr.f32.mxu0 0.0
    %6066 = vmatmul.mubr.f32.gmra.mrb[0].mxu0 %v5749
    %v6067 = vpop.f32.mrb[0].mxu0
    %v6068 = vadd.f32 %v5954, %v6067
    %v6069 = vpop.f32.mrb[0].mxu0
    %6070 = vmatprep.mubr.f32.mxu0 0.0
    %6071 = vmatmul.mubr.f32.gmra.mrb[0].mxu0 %v5750
    %v6072 = vpop.f32.mrb[0].mxu0
    %v6073 = vadd.f32 %v5954, %v6072
    %v6074 = vpop.f32.mrb[0].mxu0
    %6075 = vmatprep.mubr.f32.mxu0 0.0
    %6076 = vmatmul.mubr.f32.gmra.mrb[0].mxu0 %v5751
    %v6077 = vpop.f32.mrb[0].mxu0
    %v6078 = vadd.f32 %v5954, %v6077
    %v6079 = vpop.f32.mrb[0].mxu0
    %6080 = vmatprep.mubr.f32.mxu0 0.0
    %6081 = vmatmul.mubr.f32.gmra.mrb[0].mxu0 %v5752
    %v6082 = vpop.f32.mrb[0].mxu0
    %v6083 = vadd.f32 %v5954, %v6082
    %v6084 = vpop.f32.mrb[0].mxu0
    %6085 = vmatprep.mubr.f32.mxu0 0.0
    %6086 = vmatmul.mubr.f32.gmra.mrb[0].mxu0 %v5753
    %v6087 = vpop.f32.mrb[0].mxu0
    %v6088 = vadd.f32 %v5954, %v6087
    %v6089 = vpop.f32.mrb[0].mxu0
    %6090 = vmatprep.mubr.f32.mxu0 0.0
    %6091 = vmatmul.mubr.f32.gmra.mrb[0].mxu0 %v5754
    %v6092 = vpop.f32.mrb[0].mxu0
    %v6093 = vadd.f32 %v5954, %v6092
    %v6094 = vpop.f32.mrb[0].mxu0
    %6095 = vmatprep.mubr.f32.mxu0 0.0
    %6096 = vmatmul.mubr.f32.gmra.mrb[0].mxu0 %v5755
    %v6097 = vpop.f32.mrb[0].mxu0
    %v6098 = vadd.f32 %v5954, %v6097
    %v6099 = vpop.f32.mrb[0].mxu0
    %6100 = vmatprep.mubr.f32.mxu0 0.0
    %6101 = vmatmul.mubr.f32.gmra.mrb[0].mxu0 %v5756
    %v6102 = vpop.f32.mrb[0].mxu0
    %v6103 = vadd.f32 %v5954, %v6102
    %v6104 = vpop.f32.mrb[0].mxu0
    %6105 = vmatprep.mubr.f32.mxu0 0.0
    %6106 = vmatmul.mubr.f32.gmra.mrb[0].mxu0 %v5757
    %v6107 = vpop.f32.mrb[0].mxu0
    %v6108 = vadd.f32 %v5954, %v6107
    %v6109 = vpop.f32.mrb[0].mxu0
    %6110 = vmatprep.mubr.f32.mxu0 0.0
    %6111 = vmatmul.mubr.f32.gmra.mrb[0].mxu0 %v5758
    %v6112 = vpop.f32.mrb[0].mxu0
    %v6113 = vadd.f32 %v5954, %v6112
    %v6114 = vpop.f32.mrb[0].mxu0
    %6115 = vmatprep.mubr.f32.mxu0 0.0
    %6116 = vmatmul.mubr.f32.gmra.mrb[0].mxu0 %v5759
    %v6117 = vpop.f32.mrb[0].mxu0
    %v6118 = vadd.f32 %v5954, %v6117
    %v6119 = vpop.f32.mrb[0].mxu0
    %6120 = vmatprep.mubr.f32.mxu0 0.0
    %6121 = vmatmul.mubr.f32.gmra.mrb[0].mxu0 %v5760
    %v6122 = vpop.f32.mrb[0].mxu0
    %v6123 = vadd.f32 %v5954, %v6122
    %v6124 = vpop.f32.mrb[0].mxu0
    %6125 = vmatprep.mubr.f32.mxu0 0.0
    %6126 = vmatmul.mubr.f32.gmra.mrb[0].mxu0 %v5761
    %v6127 = vpop.f32.mrb[0].mxu0
    %v6128 = vadd.f32 %v5954, %v6127
    %v6129 = vpop.f32.mrb[0].mxu0
    %6130 = vmatprep.mubr.f32.mxu0 0.0
    %6131 = vmatmul.mubr.f32.gmra.mrb[0].mxu0 %v5762
    %v6132 = vpop.f32.mrb[0].mxu0
    %v6133 = vadd.f32 %v5954, %v6132
    %v6134 = vpop.f32.mrb[0].mxu0
    %6135 = vmatprep.mubr.f32.mxu0 0.0
    %6136 = vmatmul.mubr.f32.gmra.mrb[0].mxu0 %v5763
    %v6137 = vpop.f32.mrb[0].mxu0
    %v6138 = vadd.f32 %v5954, %v6137
    %v6139 = vpop.f32.mrb[0].mxu0
    %6140 = vmatprep.mubr.f32.mxu0 0.0
    %6141 = vmatmul.mubr.f32.gmra.mrb[0].mxu0 %v5764
    %v6142 = vpop.f32.mrb[0].mxu0
    %v6143 = vadd.f32 %v5954, %v6142
    %v6144 = vpop.f32.mrb[0].mxu0
    %6145 = vmatprep.mubr.f32.mxu0 0.0
    %6146 = vmatmul.mubr.f32.gmra.mrb[0].mxu0 %v5765
    %v6147 = vpop.f32.mrb[0].mxu0
    %v6148 = vadd.f32 %v5954, %v6147
    %v6149 = vpop.f32.mrb[0].mxu0
    %6150 = vmatprep.mubr.f32.mxu0 0.0
    %6151 = vmatmul.mubr.f32.gmra.mrb[0].mxu0 %v5766
    %v6152 = vpop.f32.mrb[0].mxu0
    %v6153 = vadd.f32 %v5954, %v6152
    %v6154 = vpop.f32.mrb[0].mxu0
    %6155 = vmatprep.mubr.f32.mxu0 0.0
    %6156 = vmatmul.mubr.f32.gmra.mrb[0].mxu0 %v5767
    %v6157 = vpop.f32.mrb[0].mxu0
    %v6158 = vadd.f32 %v5954, %v6157
    %v6159 = vpop.f32.mrb[0].mxu0
    %6160 = vmatprep.mubr.f32.mxu0 0.0
    %6161 = vmatmul.mubr.f32.gmra.mrb[0].mxu0 %v5768
    %v6162 = vpop.f32.mrb[0].mxu0
    %v6163 = vadd.f32 %v5954, %v6162
    %v6164 = vpop.f32.mrb[0].mxu0
    %6165 = vmatprep.mubr.f32.mxu0 0.0
    %6166 = vmatmul.mubr.f32.gmra.mrb[0].mxu0 %v5769
    %v6167 = vpop.f32.mrb[0].mxu0
    %v6168 = vadd.f32 %v5954, %v6167
    %v6169 = vpop.f32.mrb[0].mxu0
    %6170 = vmatprep.mubr.f32.mxu0 0.0
    %6171 = vmatmul.mubr.f32.gmra.mrb[0].mxu0 %v5770
    %v6172 = vpop.f32.mrb[0].mxu0
    %v6173 = vadd.f32 %v5954, %v6172
    %v6174 = vpop.f32.mrb[0].mxu0
    %6175 = vmatprep.mubr.f32.mxu0 0.0
    %6176 = vmatmul.mubr.f32.gmra.mrb[0].mxu0 %v5771
    %v6177 = vpop.f32.mrb[0].mxu0
    %v6178 = vadd.f32 %v5954, %v6177
    %v6179 = vpop.f32.mrb[0].mxu0
    %6180 = vmatprep.mubr.f32.mxu0 0.0
    %6181 = vmatmul.mubr.f32.gmra.mrb[0].mxu0 %v5772
    %v6182 = vpop.f32.mrb[0].mxu0
    %v6183 = vadd.f32 %v5954, %v6182
    %v6184 = vpop.f32.mrb[0].mxu0
    %6185 = vmatprep.mubr.f32.mxu0 0.0
    %6186 = vmatmul.mubr.f32.gmra.mrb[0].mxu0 %v5773
    %v6187 = vpop.f32.mrb[0].mxu0
    %v6188 = vadd.f32 %v5954, %v6187
    %v6189 = vpop.f32.mrb[0].mxu0
    %6190 = vmatprep.mubr.f32.mxu0 0.0
    %6191 = vmatmul.mubr.f32.gmra.mrb[0].mxu0 %v5774
    %v6192 = vpop.f32.mrb[0].mxu0
    %v6193 = vadd.f32 %v5954, %v6192
    %v6194 = vpop.f32.mrb[0].mxu0
    %6195 = vmatprep.mubr.f32.mxu0 0.0
    %6196 = vmatmul.mubr.f32.gmra.mrb[0].mxu0 %v5775
    %v6197 = vpop.f32.mrb[0].mxu0
    %v6198 = vadd.f32 %v5954, %v6197
    %v6199 = vpop.f32.mrb[0].mxu0
    %6200 = vmatprep.mubr.f32.mxu0 0.0
    %6201 = vmatmul.mubr.f32.gmra.mrb[0].mxu0 %v5776
    %v6202 = vpop.f32.mrb[0].mxu0
    %v6203 = vadd.f32 %v5954, %v6202
    %v6204 = vpop.f32.mrb[0].mxu0
    %6205 = vmatprep.mubr.f32.mxu0 0.0
    %6206 = vmatmul.mubr.f32.gmra.mrb[0].mxu0 %v5777
    %v6207 = vpop.f32.mrb[0].mxu0
    %v6208 = vadd.f32 %v5954, %v6207
    %v6209 = vpop.f32.mrb[0].mxu0
    %6210 = vmatprep.mubr.f32.mxu0 0.0
    %6211 = vmatmul.mubr.f32.gmra.mrb[0].mxu0 %v5778
    %v6212 = vpop.f32.mrb[0].mxu0
    %v6213 = vadd.f32 %v5954, %v6212
    %v6214 = vpop.f32.mrb[0].mxu0
    %6215 = vmatprep.mubr.f32.mxu0 0.0
    %6216 = vmatmul.mubr.f32.gmra.mrb[0].mxu0 %v5779
    %v6217 = vpop.f32.mrb[0].mxu0
    %v6218 = vadd.f32 %v5954, %v6217
    %v6219 = vpop.f32.mrb[0].mxu0
    %6220 = vmatprep.mubr.f32.mxu0 0.0
    %6221 = vmatmul.mubr.f32.gmra.mrb[0].mxu0 %v5780
    %v6222 = vpop.f32.mrb[0].mxu0
    %v6223 = vadd.f32 %v5954, %v6222
    %v6224 = vpop.f32.mrb[0].mxu0
    %6225 = vmatprep.mubr.f32.mxu0 0.0
    %6226 = vmatmul.mubr.f32.gmra.mrb[0].mxu0 %v5781
    %v6227 = vpop.f32.mrb[0].mxu0
    %v6228 = vadd.f32 %v5954, %v6227
    %v6229 = vpop.f32.mrb[0].mxu0
    %6230 = vmatprep.mubr.f32.mxu0 0.0
    %6231 = vmatmul.mubr.f32.gmra.mrb[0].mxu0 %v5782
    %v6232 = vpop.f32.mrb[0].mxu0
    %v6233 = vadd.f32 %v5954, %v6232
    %v6234 = vpop.f32.mrb[0].mxu0
    %6235 = vmatprep.mubr.f32.mxu0 0.0
    %6236 = vmatmul.mubr.f32.gmra.mrb[0].mxu0 %v5783
    %v6237 = vpop.f32.mrb[0].mxu0
    %v6238 = vadd.f32 %v5954, %v6237
    %v6239 = vpop.f32.mrb[0].mxu0
    %6240 = vmatprep.mubr.f32.mxu0 0.0
    %6241 = vmatmul.mubr.f32.gmra.mrb[0].mxu0 %v5784
    %v6242 = vpop.f32.mrb[0].mxu0
    %v6243 = vadd.f32 %v5954, %v6242
    %v6244 = vpop.f32.mrb[0].mxu0
    %6245 = vmatprep.mubr.f32.mxu0 0.0
    %6246 = vmatmul.mubr.f32.gmra.mrb[0].mxu0 %v5785
    %v6247 = vpop.f32.mrb[0].mxu0
    %v6248 = vadd.f32 %v5954, %v6247
    %v6249 = vpop.f32.mrb[0].mxu0
    %6250 = vmatprep.mubr.f32.mxu0 0.0
    %6251 = vmatmul.mubr.f32.gmra.mrb[0].mxu0 %v5786
    %v6252 = vpop.f32.mrb[0].mxu0
    %v6253 = vadd.f32 %v5954, %v6252
    %v6254 = vpop.f32.mrb[0].mxu0
    %6255 = vmatprep.mubr.f32.mxu0 0.0
    %6256 = vmatmul.mubr.f32.gmra.mrb[0].mxu0 %v5787
    %v6257 = vpop.f32.mrb[0].mxu0
    %v6258 = vadd.f32 %v5954, %v6257
    %v6259 = vpop.f32.mrb[0].mxu0
    %6260 = vmatprep.mubr.f32.mxu0 0.0
    %6261 = vmatmul.mubr.f32.gmra.mrb[0].mxu0 %v5788
    %v6262 = vpop.f32.mrb[0].mxu0
    %v6263 = vadd.f32 %v5954, %v6262
    %v6264 = vpop.f32.mrb[0].mxu0
    %6265 = vmatprep.mubr.f32.mxu0 0.0
    %6266 = vmatmul.mubr.f32.gmra.mrb[0].mxu0 %v5789
    %v6267 = vpop.f32.mrb[0].mxu0
    %v6268 = vadd.f32 %v5954, %v6267
    %v6269 = vpop.f32.mrb[0].mxu0
    %6270 = vmatprep.mubr.f32.mxu0 0.0
    %6271 = vmatmul.mubr.f32.gmra.mrb[0].mxu0 %v5790
    %v6272 = vpop.f32.mrb[0].mxu0
    %v6273 = vadd.f32 %v5954, %v6272
    %v6274 = vpop.f32.mrb[0].mxu0
    %6275 = vmatprep.mubr.f32.mxu0 0.0
    %6276 = vmatmul.mubr.f32.gmra.mrb[0].mxu0 %v5791
    %v6277 = vpop.f32.mrb[0].mxu0
    %v6278 = vadd.f32 %v5954, %v6277
    %v6279 = vpop.f32.mrb[0].mxu0
    %6280 = vmatprep.mubr.f32.mxu0 0.0
    %6281 = vmatmul.mubr.f32.gmra.mrb[0].mxu0 %v5792
    %v6282 = vpop.f32.mrb[0].mxu0
    %v6283 = vadd.f32 %v5954, %v6282
    %v6284 = vpop.f32.mrb[0].mxu0
    %6285 = vmatprep.mubr.f32.mxu0 0.0
    %6286 = vmatmul.mubr.f32.gmra.mrb[0].mxu0 %v5793
    %v6287 = vpop.f32.mrb[0].mxu0
    %v6288 = vadd.f32 %v5954, %v6287
    %v6289 = vpop.f32.mrb[0].mxu0
    %6290 = vmatprep.mubr.f32.mxu0 0.0
    %6291 = vmatmul.mubr.f32.gmra.mrb[0].mxu0 %v5794
    %v6292 = vpop.f32.mrb[0].mxu0
    %v6293 = vadd.f32 %v5954, %v6292
    %v6294 = vpop.f32.mrb[0].mxu0
    %6295 = vmatprep.mubr.f32.mxu0 0.0
    %6296 = vmatmul.mubr.f32.gmra.mrb[0].mxu0 %v5795
    %v6297 = vpop.f32.mrb[0].mxu0
    %v6298 = vadd.f32 %v5954, %v6297
    %v6299 = vpop.f32.mrb[0].mxu0
    %6300 = vmatprep.mubr.f32.mxu0 0.0
    %6301 = vmatmul.mubr.f32.gmra.mrb[0].mxu0 %v5796
    %v6302 = vpop.f32.mrb[0].mxu0
    %v6303 = vadd.f32 %v5954, %v6302
    %v6304 = vpop.f32.mrb[0].mxu0
    %6305 = vmatprep.mubr.f32.mxu0 0.0
    %6306 = vmatmul.mubr.f32.gmra.mrb[0].mxu0 %v5797
    %v6307 = vpop.f32.mrb[0].mxu0
    %v6308 = vadd.f32 %v5954, %v6307
    %v6309 = vpop.f32.mrb[0].mxu0
    %6310 = vmatprep.mubr.f32.mxu0 0.0
    %6311 = vmatmul.mubr.f32.gmra.mrb[0].mxu0 %v5798
    %v6312 = vpop.f32.mrb[0].mxu0
    %v6313 = vadd.f32 %v5954, %v6312
    %v6314 = vpop.f32.mrb[0].mxu0
    %6315 = vmatprep.mubr.f32.mxu0 0.0
    %6316 = vmatmul.mubr.f32.gmra.mrb[0].mxu0 %v5799
    %v6317 = vpop.f32.mrb[0].mxu0
    %v6318 = vadd.f32 %v5954, %v6317
    %v6319 = vpop.f32.mrb[0].mxu0
    %6320 = vmatprep.mubr.f32.mxu0 0.0
    %6321 = vmatmul.mubr.f32.gmra.mrb[0].mxu0 %v5800
    %v6322 = vpop.f32.mrb[0].mxu0
    %v6323 = vadd.f32 %v5954, %v6322
    %v6324 = vpop.f32.mrb[0].mxu0
    %6325 = vmatprep.mubr.f32.mxu0 0.0
    %6326 = vmatmul.mubr.f32.gmra.mrb[0].mxu0 %v5801
    %v6327 = vpop.f32.mrb[0].mxu0
    %v6328 = vadd.f32 %v5954, %v6327
    %v6329 = vpop.f32.mrb[0].mxu0
    %6330 = vmatprep.mubr.f32.mxu0 0.0
    %6331 = vmatmul.mubr.f32.gmra.mrb[0].mxu0 %v5802
    %v6332 = vpop.f32.mrb[0].mxu0
    %v6333 = vadd.f32 %v5954, %v6332
    %v6334 = vpop.f32.mrb[0].mxu0
    %6335 = vmatprep.mubr.f32.mxu0 0.0
    %6336 = vmatmul.mubr.f32.gmra.mrb[0].mxu0 %v5803
    %v6337 = vpop.f32.mrb[0].mxu0
    %v6338 = vadd.f32 %v5954, %v6337
    %v6339 = vpop.f32.mrb[0].mxu0
    %6340 = vdwg.mxu0
    %v6341 = vadd.f32 %v6023, %v5885
    %v6342 = vadd.f32 %v6028, %v5886
    %v6343 = vadd.f32 %v6033, %v5887
    %v6344 = vadd.f32 %v6038, %v5888
    %v6345 = vadd.f32 %v6043, %v5889
    %v6346 = vadd.f32 %v6048, %v5890
    %v6347 = vadd.f32 %v6053, %v5891
    %v6348 = vadd.f32 %v6058, %v5892
    %v6349 = vadd.f32 %v6063, %v5893
    %v6350 = vadd.f32 %v6068, %v5894
    %v6351 = vadd.f32 %v6073, %v5895
    %v6352 = vadd.f32 %v6078, %v5896
    %v6353 = vadd.f32 %v6083, %v5897
    %v6354 = vadd.f32 %v6088, %v5898
    %v6355 = vadd.f32 %v6093, %v5899
    %v6356 = vadd.f32 %v6098, %v5900
    %v6357 = vadd.f32 %v6103, %v5901
    %v6358 = vadd.f32 %v6108, %v5902
    %v6359 = vadd.f32 %v6113, %v5903
    %v6360 = vadd.f32 %v6118, %v5904
    %v6361 = vadd.f32 %v6123, %v5905
    %v6362 = vadd.f32 %v6128, %v5906
    %v6363 = vadd.f32 %v6133, %v5907
    %v6364 = vadd.f32 %v6138, %v5908
    %v6365 = vadd.f32 %v6143, %v5909
    %v6366 = vadd.f32 %v6148, %v5910
    %v6367 = vadd.f32 %v6153, %v5911
    %v6368 = vadd.f32 %v6158, %v5912
    %v6369 = vadd.f32 %v6163, %v5913
    %v6370 = vadd.f32 %v6168, %v5914
    %v6371 = vadd.f32 %v6173, %v5915
    %v6372 = vadd.f32 %v6178, %v5916
    %v6373 = vadd.f32 %v6183, %v5917
    %v6374 = vadd.f32 %v6188, %v5918
    %v6375 = vadd.f32 %v6193, %v5919
    %v6376 = vadd.f32 %v6198, %v5920
    %v6377 = vadd.f32 %v6203, %v5921
    %v6378 = vadd.f32 %v6208, %v5922
    %v6379 = vadd.f32 %v6213, %v5923
    %v6380 = vadd.f32 %v6218, %v5924
    %v6381 = vadd.f32 %v6223, %v5925
    %v6382 = vadd.f32 %v6228, %v5926
    %v6383 = vadd.f32 %v6233, %v5927
    %v6384 = vadd.f32 %v6238, %v5928
    %v6385 = vadd.f32 %v6243, %v5929
    %v6386 = vadd.f32 %v6248, %v5930
    %v6387 = vadd.f32 %v6253, %v5931
    %v6388 = vadd.f32 %v6258, %v5932
    %v6389 = vadd.f32 %v6263, %v5933
    %v6390 = vadd.f32 %v6268, %v5934
    %v6391 = vadd.f32 %v6273, %v5935
    %v6392 = vadd.f32 %v6278, %v5936
    %v6393 = vadd.f32 %v6283, %v5937
    %v6394 = vadd.f32 %v6288, %v5938
    %v6395 = vadd.f32 %v6293, %v5939
    %v6396 = vadd.f32 %v6298, %v5940
    %v6397 = vadd.f32 %v6303, %v5941
    %v6398 = vadd.f32 %v6308, %v5942
    %v6399 = vadd.f32 %v6313, %v5943
    %v6400 = vadd.f32 %v6318, %v5944
    %v6401 = vadd.f32 %v6323, %v5945
    %v6402 = vadd.f32 %v6328, %v5946
    %v6403 = vadd.f32 %v6333, %v5947
    %v6404 = vadd.f32 %v6338, %v5948
    %v6405 = vmax.f32 %v6341, 0.0
    %v6406 = vmax.f32 %v6342, 0.0
    %v6407 = vmax.f32 %v6343, 0.0
    %v6408 = vmax.f32 %v6344, 0.0
    %v6409 = vmax.f32 %v6345, 0.0
    %v6410 = vmax.f32 %v6346, 0.0
    %v6411 = vmax.f32 %v6347, 0.0
    %v6412 = vmax.f32 %v6348, 0.0
    %v6413 = vmax.f32 %v6349, 0.0
    %v6414 = vmax.f32 %v6350, 0.0
    %v6415 = vmax.f32 %v6351, 0.0
    %v6416 = vmax.f32 %v6352, 0.0
    %v6417 = vmax.f32 %v6353, 0.0
    %v6418 = vmax.f32 %v6354, 0.0
    %v6419 = vmax.f32 %v6355, 0.0
    %v6420 = vmax.f32 %v6356, 0.0
    %v6421 = vmax.f32 %v6357, 0.0
    %v6422 = vmax.f32 %v6358, 0.0
    %v6423 = vmax.f32 %v6359, 0.0
    %v6424 = vmax.f32 %v6360, 0.0
    %v6425 = vmax.f32 %v6361, 0.0
    %v6426 = vmax.f32 %v6362, 0.0
    %v6427 = vmax.f32 %v6363, 0.0
    %v6428 = vmax.f32 %v6364, 0.0
    %v6429 = vmax.f32 %v6365, 0.0
    %v6430 = vmax.f32 %v6366, 0.0
    %v6431 = vmax.f32 %v6367, 0.0
    %v6432 = vmax.f32 %v6368, 0.0
    %v6433 = vmax.f32 %v6369, 0.0
    %v6434 = vmax.f32 %v6370, 0.0
    %v6435 = vmax.f32 %v6371, 0.0
    %v6436 = vmax.f32 %v6372, 0.0
    %v6437 = vmax.f32 %v6373, 0.0
    %v6438 = vmax.f32 %v6374, 0.0
    %v6439 = vmax.f32 %v6375, 0.0
    %v6440 = vmax.f32 %v6376, 0.0
    %v6441 = vmax.f32 %v6377, 0.0
    %v6442 = vmax.f32 %v6378, 0.0
    %v6443 = vmax.f32 %v6379, 0.0
    %v6444 = vmax.f32 %v6380, 0.0
    %v6445 = vmax.f32 %v6381, 0.0
    %v6446 = vmax.f32 %v6382, 0.0
    %v6447 = vmax.f32 %v6383, 0.0
    %v6448 = vmax.f32 %v6384, 0.0
    %v6449 = vmax.f32 %v6385, 0.0
    %v6450 = vmax.f32 %v6386, 0.0
    %v6451 = vmax.f32 %v6387, 0.0
    %v6452 = vmax.f32 %v6388, 0.0
    %v6453 = vmax.f32 %v6389, 0.0
    %v6454 = vmax.f32 %v6390, 0.0
    %v6455 = vmax.f32 %v6391, 0.0
    %v6456 = vmax.f32 %v6392, 0.0
    %v6457 = vmax.f32 %v6393, 0.0
    %v6458 = vmax.f32 %v6394, 0.0
    %v6459 = vmax.f32 %v6395, 0.0
    %v6460 = vmax.f32 %v6396, 0.0
    %v6461 = vmax.f32 %v6397, 0.0
    %v6462 = vmax.f32 %v6398, 0.0
    %v6463 = vmax.f32 %v6399, 0.0
    %v6464 = vmax.f32 %v6400, 0.0
    %v6465 = vmax.f32 %v6401, 0.0
    %v6466 = vmax.f32 %v6402, 0.0
    %v6467 = vmax.f32 %v6403, 0.0
    %v6468 = vmax.f32 %v6404, 0.0
    %6469 = vst.msk [vmem:[#allocation2] sm:$0xff] %vm104, %v6405
    %6470 = vst.msk [vmem:[#allocation2 + $0x8] sm:$0xff] %vm104, %v6406
    %6471 = vst.msk [vmem:[#allocation2 + $0x10] sm:$0xff] %vm104, %v6407
    %6472 = vst.msk [vmem:[#allocation2 + $0x18] sm:$0xff] %vm104, %v6408
    %6473 = vst.msk [vmem:[#allocation2 + $0x20] sm:$0xff] %vm104, %v6409
    %6474 = vst.msk [vmem:[#allocation2 + $0x28] sm:$0xff] %vm104, %v6410
    %6475 = vst.msk [vmem:[#allocation2 + $0x30] sm:$0xff] %vm104, %v6411
    %6476 = vst.msk [vmem:[#allocation2 + $0x38] sm:$0xff] %vm104, %v6412
    %6477 = vst.msk [vmem:[#allocation2 + $0x40] sm:$0xff] %vm104, %v6413
    %6478 = vst.msk [vmem:[#allocation2 + $0x48] sm:$0xff] %vm104, %v6414
    %6479 = vst.msk [vmem:[#allocation2 + $0x50] sm:$0xff] %vm104, %v6415
    %6480 = vst.msk [vmem:[#allocation2 + $0x58] sm:$0xff] %vm104, %v6416
    %6481 = vst.msk [vmem:[#allocation2 + $0x60] sm:$0xff] %vm104, %v6417
    %6482 = vst.msk [vmem:[#allocation2 + $0x68] sm:$0xff] %vm104, %v6418
    %6483 = vst.msk [vmem:[#allocation2 + $0x70] sm:$0xff] %vm104, %v6419
    %6484 = vst.msk [vmem:[#allocation2 + $0x78] sm:$0xff] %vm104, %v6420
    %6485 = vst.msk [vmem:[#allocation2 + $0x80] sm:$0xff] %vm104, %v6421
    %6486 = vst.msk [vmem:[#allocation2 + $0x88] sm:$0xff] %vm104, %v6422
    %6487 = vst.msk [vmem:[#allocation2 + $0x90] sm:$0xff] %vm104, %v6423
    %6488 = vst.msk [vmem:[#allocation2 + $0x98] sm:$0xff] %vm104, %v6424
    %6489 = vst.msk [vmem:[#allocation2 + $0xa0] sm:$0xff] %vm104, %v6425
    %6490 = vst.msk [vmem:[#allocation2 + $0xa8] sm:$0xff] %vm104, %v6426
    %6491 = vst.msk [vmem:[#allocation2 + $0xb0] sm:$0xff] %vm104, %v6427
    %6492 = vst.msk [vmem:[#allocation2 + $0xb8] sm:$0xff] %vm104, %v6428
    %6493 = vst.msk [vmem:[#allocation2 + $0xc0] sm:$0xff] %vm104, %v6429
    %6494 = vst.msk [vmem:[#allocation2 + $0xc8] sm:$0xff] %vm104, %v6430
    %6495 = vst.msk [vmem:[#allocation2 + $0xd0] sm:$0xff] %vm104, %v6431
    %6496 = vst.msk [vmem:[#allocation2 + $0xd8] sm:$0xff] %vm104, %v6432
    %6497 = vst.msk [vmem:[#allocation2 + $0xe0] sm:$0xff] %vm104, %v6433
    %6498 = vst.msk [vmem:[#allocation2 + $0xe8] sm:$0xff] %vm104, %v6434
    %6499 = vst.msk [vmem:[#allocation2 + $0xf0] sm:$0xff] %vm104, %v6435
    %6500 = vst.msk [vmem:[#allocation2 + $0xf8] sm:$0xff] %vm104, %v6436
    %6501 = vst.msk [vmem:[#allocation2 + $0x100] sm:$0xff] %vm104, %v6437
    %6502 = vst.msk [vmem:[#allocation2 + $0x108] sm:$0xff] %vm104, %v6438
    %6503 = vst.msk [vmem:[#allocation2 + $0x110] sm:$0xff] %vm104, %v6439
    %6504 = vst.msk [vmem:[#allocation2 + $0x118] sm:$0xff] %vm104, %v6440
    %6505 = vst.msk [vmem:[#allocation2 + $0x120] sm:$0xff] %vm104, %v6441
    %6506 = vst.msk [vmem:[#allocation2 + $0x128] sm:$0xff] %vm104, %v6442
    %6507 = vst.msk [vmem:[#allocation2 + $0x130] sm:$0xff] %vm104, %v6443
    %6508 = vst.msk [vmem:[#allocation2 + $0x138] sm:$0xff] %vm104, %v6444
    %6509 = vst.msk [vmem:[#allocation2 + $0x140] sm:$0xff] %vm104, %v6445
    %6510 = vst.msk [vmem:[#allocation2 + $0x148] sm:$0xff] %vm104, %v6446
    %6511 = vst.msk [vmem:[#allocation2 + $0x150] sm:$0xff] %vm104, %v6447
    %6512 = vst.msk [vmem:[#allocation2 + $0x158] sm:$0xff] %vm104, %v6448
    %6513 = vst.msk [vmem:[#allocation2 + $0x160] sm:$0xff] %vm104, %v6449
    %6514 = vst.msk [vmem:[#allocation2 + $0x168] sm:$0xff] %vm104, %v6450
    %6515 = vst.msk [vmem:[#allocation2 + $0x170] sm:$0xff] %vm104, %v6451
    %6516 = vst.msk [vmem:[#allocation2 + $0x178] sm:$0xff] %vm104, %v6452
    %6517 = vst.msk [vmem:[#allocation2 + $0x180] sm:$0xff] %vm104, %v6453
    %6518 = vst.msk [vmem:[#allocation2 + $0x188] sm:$0xff] %vm104, %v6454
    %6519 = vst.msk [vmem:[#allocation2 + $0x190] sm:$0xff] %vm104, %v6455
    %6520 = vst.msk [vmem:[#allocation2 + $0x198] sm:$0xff] %vm104, %v6456
    %6521 = vst.msk [vmem:[#allocation2 + $0x1a0] sm:$0xff] %vm104, %v6457
    %6522 = vst.msk [vmem:[#allocation2 + $0x1a8] sm:$0xff] %vm104, %v6458
    %6523 = vst.msk [vmem:[#allocation2 + $0x1b0] sm:$0xff] %vm104, %v6459
    %6524 = vst.msk [vmem:[#allocation2 + $0x1b8] sm:$0xff] %vm104, %v6460
    %6525 = vst.msk [vmem:[#allocation2 + $0x1c0] sm:$0xff] %vm104, %v6461
    %6526 = vst.msk [vmem:[#allocation2 + $0x1c8] sm:$0xff] %vm104, %v6462
    %6527 = vst.msk [vmem:[#allocation2 + $0x1d0] sm:$0xff] %vm104, %v6463
    %6528 = vst.msk [vmem:[#allocation2 + $0x1d8] sm:$0xff] %vm104, %v6464
    %6529 = vst.msk [vmem:[#allocation2 + $0x1e0] sm:$0xff] %vm104, %v6465
    %6530 = vst.msk [vmem:[#allocation2 + $0x1e8] sm:$0xff] %vm104, %v6466
    %6531 = vst.msk [vmem:[#allocation2 + $0x1f0] sm:$0xff] %vm104, %v6467
    %6532 = vst.msk [vmem:[#allocation2 + $0x1f8] sm:$0xff] %vm104, %v6468
    // Predicated region
    $region30: #{conv_block_forward.1} parent=1 // pred_check
      _
    $region31: #{conv_block_forward.1} parent=1 // pred_check_branch
      %6534 = sbr.rel (0) target = $region33
    $region32: #{conv_block_forward.1} parent=1 // pred_region
      %s6536 = ssub.s32 8192, 8192
      %6537 = vsyncadd [#allocation3], %s6536
      %s6538 = sshll.u32 [#allocation2], 4
      %s6539 = int_to_ptr.vmem [resolvable:$true] %s6538
      %6544 = dma.vmem_to_hbm [thread:$0]  %s6539, 8192, %s7, [#allocation3], 128, 128, 8
    $region33: #{conv_block_forward.1} parent=1 // pred_fallthru
      _
    // Predicated region
    $region34: #{conv_block_forward.1} parent=1 // pred_check
      _
    $region35: #{conv_block_forward.1} parent=1 // pred_check_branch
      %6546 = sbr.rel (0) target = $region37
    $region36: #{conv_block_forward.1} parent=1 // pred_region
      _
    $region37: #{conv_block_forward.1} parent=1 // pred_fallthru
      _
    // Predicated region
    $region38: #{conv_block_forward.1} parent=1 // pred_check
      _
    $region39: #{conv_block_forward.1} parent=1 // pred_check_branch
      %6548 = sbr.rel (0) target = $region41
    $region40: #{conv_block_forward.1} parent=1 // pred_region
      %6549 = dma.done [#allocation3], 8192
    $region41: #{conv_block_forward.1} parent=1 // pred_fallthru
      _
    // Predicated region
    $region42: #{conv_block_forward.1} parent=1 // pred_check
      _
    $region43: #{conv_block_forward.1} parent=1 // pred_check_branch
      %6551 = sbr.rel (0) target = $region45
    $region44: #{conv_block_forward.1} parent=1 // pred_region
      _
    $region45: #{conv_block_forward.1} parent=1 // pred_fallthru
      _
    %6552 = vsyncpa [#allocation3], 1

</llo_original>
